<compile_context>
chip_gen: v7x
topology: tpu7x:2x2x1
jax: 0.10.0
libtpu: 0.0.40
codegen_flags: <defaults>
</compile_context>

<pallas_src>
import functools
import math

import jax
import jax.numpy as jnp
from jax.experimental import pallas as pl
from jax.experimental.pallas import tpu as pltpu

# ----------------------------- configuration --------------------------------
B, S = 2, 8                  # batch, sequence length
HIDDEN = 32                  # bert hidden_size == pinyin_dim == glyph_dim
NUM_HEADS = 4                # scaled-down from 12 / 8 heads
HEAD_DIM = HIDDEN // NUM_HEADS
FFN_DIM = 64                 # scaled-down intermediate size
VOCAB = 64                   # bert vocab_size (also glyph embedding rows)
PINYIN_VOCAB = 32
MAX_POS = 64
TYPE_VOCAB = 2
GLYPH_DIM = 768
LABEL_NUM = 16               # megec_vocab.num_labels  (synthetic)
DTAG_NUM = 4                 # megec_vocab.num_dtags   (synthetic)
TAG_ERROR_INDEX = 1
BERT_LAYERS = 2
PINYIN_LAYERS = 3
LABEL_LOSS_WEIGHT = 0.5
LN_EPS_BERT = 1e-12          # HF BertConfig layer_norm_eps
LN_EPS_TORCH = 1e-5          # nn.LayerNorm / nn.TransformerEncoderLayer default

# head-output slab layout (lane-dense single (BS, 128) store)
SLAB_W = 128
COL_LL, COL_LD, COL_PL, COL_PD = 0, 16, 32, 48
COL_MAXP, COL_MAXI, COL_LOSS = 64, 65, 66


# ------------------------------ in-kernel helpers ----------------------------
def _gelu(x):
    # TODO(synk): PyTorch uses exact erf-GELU; tanh approximation used here
    # (Mosaic-safe transcendental path).
    c = math.sqrt(2.0 / math.pi)
    return 0.5 * x * (1.0 + jnp.tanh(c * (x + 0.044715 * x * x * x)))


def _ln_rows(x, g, b, eps):
    mu = jnp.mean(x, axis=-1, keepdims=True)
    var = jnp.mean(jnp.square(x - mu), axis=-1, keepdims=True)
    return (x - mu) * jax.lax.rsqrt(var + eps) * g + b


def _softmax_rows(x, approx):
    x = x - jnp.max(x, axis=-1, keepdims=True)
    e = jnp.exp(x)
    s = jnp.sum(e, axis=-1, keepdims=True)
    if approx:
        return e * pl.reciprocal(s, approx=True)
    return e / s


def _dot_bf16(a, b):
    # bf16 MXU operands, f32 accumulation.
    return jnp.dot(a.astype(jnp.bfloat16), b.astype(jnp.bfloat16),
                   preferred_element_type=jnp.float32)


def _encoder_layer(x, bias, qkv_w, qkv_b, o_w, o_b, ln1, f1_w, f1_b, f2_w, f2_b,
                   ln2, *, pre_ln, eps, num_heads, scale):
    """One encoder layer (post-LN BERT style or pre-LN torch style)."""
    H = x.shape[-1]
    d = H // num_heads
    ln1_g, ln1_b = ln1[0:1, :], ln1[1:2, :]
    ln2_g, ln2_b = ln2[0:1, :], ln2[1:2, :]

    attn_in = _ln_rows(x, ln1_g, ln1_b, eps) if pre_ln else x

    # one wide fused QKV projection; per-head score/ctx on static lane slices;
    # single concatenated output projection.
    qkv = _dot_bf16(attn_in, qkv_w) + qkv_b                       # (BS, 3H)
    ctx = []
    for h in range(num_heads):
        q = qkv[:, h * d:(h + 1) * d]
        k = qkv[:, H + h * d:H + (h + 1) * d]
        v = qkv[:, 2 * H + h * d:2 * H + (h + 1) * d]
        s = _dot_bf16(q, k.T) * scale + bias
        p = _softmax_rows(s, approx=True)
        ctx.append(_dot_bf16(p, v))
    ctx = jnp.concatenate(ctx, axis=-1)                           # (BS, H)
    attn = _dot_bf16(ctx, o_w) + o_b

    if pre_ln:
        # x = x + attn(LN1(x)); x = x + FFN(LN2(x))
        x1 = x + attn
        ffn_in = _ln_rows(x1, ln2_g, ln2_b, eps)
        hmid = _gelu(_dot_bf16(ffn_in, f1_w) + f1_b)
        return x1 + _dot_bf16(hmid, f2_w) + f2_b
    # x = LN1(x + attn); out = LN2(x + FFN(x))
    x1 = _ln_rows(x + attn, ln1_g, ln1_b, eps)
    hmid = _gelu(_dot_bf16(x1, f1_w) + f1_b)
    return _ln_rows(x1 + _dot_bf16(hmid, f2_w) + f2_b, ln2_g, ln2_b, eps)


# ------------------------------ Pallas kernels -------------------------------
def _bert_branch_kernel(embsum_ref, add2_ref, bias_ref, embln_ref, resw_ref,
                        resb_ref, qkvw_ref, qkvb_ref, ow_ref, ob_ref, ln1_ref,
                        f1w_ref, f1b_ref, f2w_ref, f2b_ref, ln2_ref,
                        base_ref, res_ref, x_scr, *, num_heads, eps, scale):
    """BERT branch: embed-prep at l==0, then one post-LN layer per grid step."""
    l = pl.program_id(0)

    @pl.when(l == 0)
    def _():
        g, b = embln_ref[0:1, :], embln_ref[1:2, :]
        hanzi = _ln_rows(embsum_ref[...], g, b, eps)
        res_ref[...] = _dot_bf16(hanzi, resw_ref[...]) + resb_ref[...]
        # re-embedding of inputs_embeds (+pos +type0) inside BertModel
        x_scr[...] = _ln_rows(hanzi + add2_ref[...], g, b, eps)

    out = _encoder_layer(
        x_scr[...], bias_ref[...],
        qkvw_ref[0], qkvb_ref[0], ow_ref[0], ob_ref[0], ln1_ref[0],
        f1w_ref[0], f1b_ref[0], f2w_ref[0], f2b_ref[0], ln2_ref[0],
        pre_ln=False, eps=eps, num_heads=num_heads, scale=scale)
    x_scr[...] = out

    @pl.when(l == pl.num_programs(0) - 1)
    def _():
        base_ref[...] = out


def _pinyin_branch_kernel(pyemb_ref, bias_ref, qkvw_ref, qkvb_ref, ow_ref,
                          ob_ref, ln1_ref, f1w_ref, f1b_ref, f2w_ref, f2b_ref,
                          ln2_ref, out_ref, x_scr, *, num_heads, eps, scale):
    """Pinyin branch: one pre-LN torch encoder layer per grid step."""
    l = pl.program_id(0)

    @pl.when(l == 0)
    def _():
        x_scr[...] = pyemb_ref[...]

    out = _encoder_layer(
        x_scr[...], bias_ref[...],
        qkvw_ref[0], qkvb_ref[0], ow_ref[0], ob_ref[0], ln1_ref[0],
        f1w_ref[0], f1b_ref[0], f2w_ref[0], f2b_ref[0], ln2_ref[0],
        pre_ln=True, eps=eps, num_heads=num_heads, scale=scale)
    x_scr[...] = out

    @pl.when(l == pl.num_programs(0) - 1)
    def _():
        out_ref[...] = out


def _head_kernel(base_ref, res_ref, pin_ref, gly_ref,
                 gw1_ref, gb1_ref, gw2_ref, gb2_ref, gw3_ref, gb3_ref,
                 pln_ref, gecw_ref, gecb_ref, detw_ref, detb_ref,
                 maskcol_ref, labels_ref, dtags_ref, slab_ref,
                 *, tag_error_index, label_w, batch, seq, pin_ln_eps):
    bs = base_ref.shape[0]

    # glyph MLP (768 -> 128 -> 64 -> H), fused
    h = _gelu(_dot_bf16(gly_ref[...], gw1_ref[...]) + gb1_ref[...])
    h = _gelu(_dot_bf16(h, gw2_ref[...]) + gb2_ref[...])
    glyph = _dot_bf16(h, gw3_ref[...]) + gb3_ref[...]

    base = base_ref[...]
    pin = _ln_rows(pin_ref[...], pln_ref[0:1, :], pln_ref[1:2, :], pin_ln_eps)
    merged = res_ref[...] + base + pin + glyph

    logits_l = _dot_bf16(merged, gecw_ref[...]) + gecb_ref[...]
    logits_d = _dot_bf16(base, detw_ref[...]) + detb_ref[...]

    # exact softmax for returned probabilities (approx only used in attention)
    lp = _softmax_rows(logits_l, approx=False)
    dp = _softmax_rows(logits_d, approx=False)

    # err_probs = d_probs[:, :, tag_error_index] * mask ; per-batch max / argmax
    dcols = jax.lax.broadcasted_iota(jnp.int32, dp.shape, 1)
    err = jnp.sum(jnp.where(dcols == tag_error_index, dp, 0.0),
                  axis=-1, keepdims=True) * maskcol_ref[...]        # (BS, 1)

    rows = jax.lax.broadcasted_iota(jnp.int32, (seq, 1), 0).astype(jnp.float32)
    mx_parts, idx_parts = [], []
    for b in range(batch):
        blk = err[b * seq:(b + 1) * seq, :]                        # (S, 1)
        mx = jnp.max(blk, axis=0, keepdims=True)
        idx = jnp.min(jnp.where(blk == mx, rows, float(seq)),
                      axis=0, keepdims=True)                        # first max
        mx_parts.append(mx)
        idx_parts.append(idx)
    maxp = jnp.concatenate(mx_parts, axis=0)                        # (batch, 1)
    maxi = jnp.concatenate(idx_parts, axis=0)                       # (batch, 1)

    # masked cross-entropy (ignore_index = -1, mean over valid tokens)
    def _ce(logits, tgt):
        m = jnp.max(logits, axis=-1, keepdims=True)
        lse = jnp.log(jnp.sum(jnp.exp(logits - m), axis=-1, keepdims=True)) + m
        cols = jax.lax.broadcasted_iota(jnp.int32, logits.shape, 1)
        picked = jnp.sum(jnp.where(cols == tgt, logits, 0.0),
                         axis=-1, keepdims=True)
        valid = (tgt != -1).astype(jnp.float32)
        per = (lse - picked) * valid                                # (BS, 1)
        tot = jnp.sum(per, axis=0, keepdims=True)
        cnt = jnp.sum(valid, axis=0, keepdims=True)
        return tot / jnp.maximum(cnt, 1.0)                          # (1, 1)

    loss = (label_w * _ce(logits_l, labels_ref[...])
            + (1.0 - label_w) * _ce(logits_d, dtags_ref[...]))

    # pack all outputs into one lane-dense (BS, 128) slab -> single wide store
    def _rows_pad(a):
        return jnp.concatenate(
            [a, jnp.zeros((bs - a.shape[0], a.shape[1]), jnp.float32)], axis=0)

    parts = []
    used = 0

    def _put(a, width):
        nonlocal used
        parts.append(a.astype(jnp.float32))
        if width > a.shape[1]:
            parts.append(jnp.zeros((bs, width - a.shape[1]), jnp.float32))
        used += width

    _put(logits_l, COL_LD - COL_LL)
    _put(logits_d, COL_PL - COL_LD)
    _put(lp, COL_PD - COL_PL)
    _put(dp, COL_MAXP - COL_PD)
    _put(_rows_pad(maxp), 1)
    _put(_rows_pad(maxi), 1)
    _put(_rows_pad(loss), 1)
    parts.append(jnp.zeros((bs, SLAB_W - used), jnp.float32))
    slab_ref[...] = jnp.concatenate(parts, axis=1)


# ----------------------------- pallas_call helpers ----------------------------
def _spec_full(shape):
    nd = len(shape)
    return pl.BlockSpec(tuple(shape), lambda l, _n=nd: (0,) * _n)


def _spec_layer(shape):
    nd = len(shape)
    return pl.BlockSpec((1,) + tuple(shape[1:]),
                        lambda l, _n=nd: (l,) + (0,) * (_n - 1))


_LAYER_KEYS = ("qkv_w", "qkv_b", "o_w", "o_b", "ln1",
               "f1_w", "f1_b", "f2_w", "f2_b", "ln2")


def _branch_call(kernel, full_inputs, layer_params, num_layers, out_shapes):
    layer_inputs = [layer_params[k] for k in _LAYER_KEYS]
    inputs = list(full_inputs) + layer_inputs
    in_specs = ([_spec_full(a.shape) for a in full_inputs]
                + [_spec_layer(a.shape) for a in layer_inputs])
    single = not isinstance(out_shapes, (list, tuple))
    outs = (out_shapes,) if single else tuple(out_shapes)
    result = pl.pallas_call(
        kernel,
        out_shape=outs,
        grid=(num_layers,),
        in_specs=in_specs,
        out_specs=tuple(_spec_full(o.shape) for o in outs),
        scratch_shapes=[pltpu.VMEM(outs[0].shape, jnp.float32)],
        compiler_params=pltpu.CompilerParams(dimension_semantics=("arbitrary",)),
    )(*inputs)
    return result[0] if single else result


def _bert_branch(params, emb_sum, add2, bias):
    BS, H = emb_sum.shape
    kernel = functools.partial(_bert_branch_kernel, num_heads=NUM_HEADS,
                               eps=LN_EPS_BERT, scale=1.0 / math.sqrt(HEAD_DIM))
    return _branch_call(
        kernel,
        [emb_sum, add2, bias, params["bert"]["emb"]["ln"],
         params["res"]["w"], params["res"]["b"]],
        params["bert"]["layers"], BERT_LAYERS,
        [jax.ShapeDtypeStruct((BS, H), jnp.float32),
         jax.ShapeDtypeStruct((BS, H), jnp.float32)])


def _pinyin_branch(params, py_emb, bias):
    BS, H = py_emb.shape
    kernel = functools.partial(_pinyin_branch_kernel, num_heads=NUM_HEADS,
                               eps=LN_EPS_TORCH, scale=1.0 / math.sqrt(HEAD_DIM))
    return _branch_call(
        kernel, [py_emb, bias], params["pinyin"]["layers"], PINYIN_LAYERS,
        jax.ShapeDtypeStruct((BS, H), jnp.float32))


def _head_call(params, base_out, res_out, pinyin_out, glyph_in, mask_col,
               labels, dtags, batch, seq):
    BS = base_out.shape[0]
    g = params["glyph"]
    kernel = functools.partial(
        _head_kernel, tag_error_index=TAG_ERROR_INDEX, label_w=LABEL_LOSS_WEIGHT,
        batch=batch, seq=seq, pin_ln_eps=LN_EPS_TORCH)
    inputs = [base_out, res_out, pinyin_out, glyph_in,
              g["w1"], g["b1"], g["w2"], g["b2"], g["w3"], g["b3"],
              params["pinyin"]["ln"],
              params["gec"]["w"], params["gec"]["b"],
              params["detect"]["w"], params["detect"]["b"],
              mask_col, labels, dtags]
    return pl.pallas_call(
        kernel,
        out_shape=jax.ShapeDtypeStruct((BS, SLAB_W), jnp.float32),
        grid=(1,),
        in_specs=[_spec_full(a.shape) for a in inputs],
        out_specs=_spec_full((BS, SLAB_W)),
        compiler_params=pltpu.CompilerParams(dimension_semantics=("arbitrary",)),
    )(*inputs)


# ------------------------------ full forward ---------------------------------
@functools.partial(jax.jit, static_argnames=("is_test",))
def mectec_forward(params, input_ids, type_ids, mask, pinyin_ids,
                   label_ids=None, dtag_ids=None, is_test=False):
    Bn, Sn = input_ids.shape
    BS = Bn * Sn
    H = HIDDEN
    emb = params["bert"]["emb"]

    # --- XLA glue: embedding gathers (no clean Pallas equivalent) -------------
    pos = emb["pos_emb"][:Sn]                                       # (S, H)
    emb_sum = (emb["word_emb"][input_ids] + pos[None, :, :]
               + emb["type_emb"][type_ids]).reshape(BS, H)
    add2 = jnp.broadcast_to(pos + emb["type_emb"][0][None, :],
                            (Bn, Sn, H)).reshape(BS, H)

    # shared additive attention biases (block-diagonal batch mask [+ padding]).
    # TODO(synk): at production sizes compute these in-kernel from iota + mask
    # and tile the attention (tq/tk grid, online softmax) instead of (BS,BS).
    mask_f = mask.astype(jnp.float32)
    batch_of = jnp.arange(BS, dtype=jnp.int32) // Sn
    cross = jnp.where(batch_of[:, None] == batch_of[None, :],
                      0.0, -1e9).astype(jnp.float32)                # (BS, BS)
    bert_bias = cross + (1.0 - mask_f.reshape(1, BS)) * -1e4
    pinyin_bias = cross

    # fused BERT branch (embed-prep + res proj + 2 post-LN layers, 1 call)
    base_out, res_out = _bert_branch(params, emb_sum, add2, bert_bias)
    # TODO(synk): BERT pooler output is discarded by the PyTorch forward; not computed.

    # fused pinyin branch (3 pre-LN layers, 1 call; final LN folded into head)
    py_emb = params["pinyin"]["emb"][pinyin_ids].reshape(BS, H)
    pinyin_out = _pinyin_branch(params, py_emb, pinyin_bias)
    # TODO(synk): on v7x the BERT and pinyin branches are independent and could
    # be dispatched to the two TensorCores (pl.core_map); kept sequential here.

    # fused head (glyph MLP + merge + logits + softmax + err stats + CE losses)
    glyph_in = params["glyph"]["emb"][input_ids].reshape(BS, GLYPH_DIM)
    lbl = (label_ids if label_ids is not None
           else jnp.full((Bn, Sn), -1, jnp.int32)).reshape(BS, 1).astype(jnp.int32)
    dtg = (dtag_ids if dtag_ids is not None
           else jnp.full((Bn, Sn), -1, jnp.int32)).reshape(BS, 1).astype(jnp.int32)
    slab = _head_call(params, base_out, res_out, pinyin_out, glyph_in,
                      mask_f.reshape(BS, 1), lbl, dtg, Bn, Sn)

    out = {"logits_labels": slab[:, COL_LL:COL_LL + LABEL_NUM].reshape(Bn, Sn, LABEL_NUM),
           "logits_d_tags": slab[:, COL_LD:COL_LD + DTAG_NUM].reshape(Bn, Sn, DTAG_NUM)}
    if is_test:
        out["class_probabilities_labels"] = (
            slab[:, COL_PL:COL_PL + LABEL_NUM].reshape(Bn, Sn, LABEL_NUM))
        out["class_probabilities_d_tags"] = (
            slab[:, COL_PD:COL_PD + DTAG_NUM].reshape(Bn, Sn, DTAG_NUM))
        out["max_error_probability"] = slab[:Bn, COL_MAXP]
        out["max_error_index"] = slab[:Bn, COL_MAXI].astype(jnp.int32)
    if label_ids is not None and dtag_ids is not None:
        out["loss_total"] = slab[0, COL_LOSS]
    return out


# ------------------------- deterministic parameter init ----------------------
def _lin(key, fan_in, fan_out):
    return {"w": (jax.random.normal(key, (fan_in, fan_out), jnp.float32)
                  * 0.02).astype(jnp.bfloat16),
            "b": jnp.zeros((1, fan_out), jnp.float32)}


def _stacked_layer_params(key, num_layers, h, ffn):
    def one_layer(k):
        ks = jax.random.split(k, 6)

        def n(kk, shape):
            return jax.random.normal(kk, shape, jnp.float32) * 0.02

        return dict(
            qkv_w=jnp.concatenate([n(ks[0], (h, h)), n(ks[1], (h, h)),
                                   n(ks[2], (h, h))], axis=1),
            o_w=n(ks[3], (h, h)),
            f1_w=n(ks[4], (h, ffn)),
            f2_w=n(ks[5], (ffn, h)))

    per = [one_layer(k) for k in jax.random.split(key, num_layers)]
    stack = lambda name: jnp.stack([p[name] for p in per], axis=0)
    ln = jnp.tile(jnp.stack([jnp.ones((h,), jnp.float32),
                             jnp.zeros((h,), jnp.float32)])[None], (num_layers, 1, 1))
    return {
        "qkv_w": stack("qkv_w").astype(jnp.bfloat16),     # (L, H, 3H)
        "qkv_b": jnp.zeros((num_layers, 1, 3 * h), jnp.float32),
        "o_w": stack("o_w").astype(jnp.bfloat16),         # (L, H, H)
        "o_b": jnp.zeros((num_layers, 1, h), jnp.float32),
        "ln1": ln,                                        # (L, 2, H) [gamma;beta]
        "f1_w": stack("f1_w").astype(jnp.bfloat16),       # (L, H, F)
        "f1_b": jnp.zeros((num_layers, 1, ffn), jnp.float32),
        "f2_w": stack("f2_w").astype(jnp.bfloat16),       # (L, F, H)
        "f2_b": jnp.zeros((num_layers, 1, h), jnp.float32),
        "ln2": ln,
    }


def init_params(key):
    keys = iter(jax.random.split(key, 16))
    ln2 = jnp.stack([jnp.ones((HIDDEN,), jnp.float32),
                     jnp.zeros((HIDDEN,), jnp.float32)])
    bert_emb = {
        "word_emb": jax.random.normal(next(keys), (VOCAB, HIDDEN), jnp.float32) * 0.02,
        "pos_emb": jax.random.normal(next(keys), (MAX_POS, HIDDEN), jnp.float32) * 0.02,
        "type_emb": jax.random.normal(next(keys), (TYPE_VOCAB, HIDDEN), jnp.float32) * 0.02,
        "ln": ln2,
    }
    pinyin_emb = (jax.random.normal(next(keys), (PINYIN_VOCAB, HIDDEN), jnp.float32)
                  * 0.02).at[0].set(0.0)                  # padding_idx = pad_id (row 0)
    g1 = _lin(next(keys), GLYPH_DIM, 128)
    g2 = _lin(next(keys), 128, 64)
    g3 = _lin(next(keys), 64, HIDDEN)
    glyph = {
        "emb": jax.random.normal(next(keys), (VOCAB, GLYPH_DIM), jnp.float32) * 0.02,
        "w1": g1["w"], "b1": g1["b"],
        "w2": g2["w"], "b2": g2["b"],
        "w3": g3["w"], "b3": g3["b"],
    }
    return {
        "bert": {"emb": bert_emb,
                 "layers": _stacked_layer_params(next(keys), BERT_LAYERS,
                                                 HIDDEN, FFN_DIM)},
        "pinyin": {"emb": pinyin_emb,
                   "layers": _stacked_layer_params(next(keys), PINYIN_LAYERS,
                                                   HIDDEN, FFN_DIM),
                   "ln": ln2},
        "glyph": glyph,
        "res": _lin(next(keys), HIDDEN, HIDDEN),
        "detect": _lin(next(keys), HIDDEN, DTAG_NUM),
        "gec": _lin(next(keys), HIDDEN, LABEL_NUM),
    }


# ----------------------------------- main ------------------------------------
if __name__ == "__main__":
    root = jax.random.PRNGKey(0)
    k_param, k_ids, k_py, k_lbl, k_dtag = jax.random.split(root, 5)

    params = init_params(k_param)

    input_ids = jax.random.randint(k_ids, (B, S), 0, VOCAB, dtype=jnp.int32)
    type_ids = jnp.zeros((B, S), jnp.int32)
    pinyin_ids = jax.random.randint(k_py, (B, S), 1, PINYIN_VOCAB, dtype=jnp.int32)
    mask = jnp.ones((B, S), jnp.float32).at[1, S - 2:].set(0.0)  # pad last 2 of batch 1
    label_ids = jax.random.randint(k_lbl, (B, S), 0, LABEL_NUM, dtype=jnp.int32)
    label_ids = jnp.where(mask > 0, label_ids, -1)
    dtag_ids = jax.random.randint(k_dtag, (B, S), 0, DTAG_NUM, dtype=jnp.int32)
    dtag_ids = jnp.where(mask > 0, dtag_ids, -1)

    out = mectec_forward(params, input_ids, type_ids, mask, pinyin_ids,
                         label_ids=label_ids, dtag_ids=dtag_ids, is_test=True)

    jax.block_until_ready(out["logits_labels"])
    jax.block_until_ready(out["logits_d_tags"])
    jax.block_until_ready(out["class_probabilities_labels"])
    jax.block_until_ready(out["max_error_probability"])
    jax.block_until_ready(out["loss_total"])

    assert out["logits_labels"].shape == (B, S, LABEL_NUM)
    assert out["logits_d_tags"].shape == (B, S, DTAG_NUM)
    assert out["class_probabilities_d_tags"].shape == (B, S, DTAG_NUM)
    assert out["max_error_probability"].shape == (B,)
    assert out["max_error_index"].shape == (B,)
    assert out["loss_total"].shape == ()
    assert bool(jnp.isfinite(out["loss_total"]))

    print("KERNEL_OK")
</pallas_src>

<mosaic_0001>
module attributes {stable_mosaic.version = 11 : i64} {
  func.func @_bert_branch_kernel(%arg0: i32, %arg1: memref<16x32xf32, #tpu.memory_space<vmem>>, %arg2: memref<16x32xf32, #tpu.memory_space<vmem>>, %arg3: memref<16x16xf32, #tpu.memory_space<vmem>>, %arg4: memref<2x32xf32, #tpu.memory_space<vmem>>, %arg5: memref<32x32xbf16, #tpu.memory_space<vmem>>, %arg6: memref<1x32xf32, #tpu.memory_space<vmem>>, %arg7: memref<1x32x96xbf16, #tpu.memory_space<vmem>>, %arg8: memref<1x1x96xf32, #tpu.memory_space<vmem>>, %arg9: memref<1x32x32xbf16, #tpu.memory_space<vmem>>, %arg10: memref<1x1x32xf32, #tpu.memory_space<vmem>>, %arg11: memref<1x2x32xf32, #tpu.memory_space<vmem>>, %arg12: memref<1x32x64xbf16, #tpu.memory_space<vmem>>, %arg13: memref<1x1x64xf32, #tpu.memory_space<vmem>>, %arg14: memref<1x64x32xbf16, #tpu.memory_space<vmem>>, %arg15: memref<1x1x32xf32, #tpu.memory_space<vmem>>, %arg16: memref<1x2x32xf32, #tpu.memory_space<vmem>>, %arg17: memref<16x32xf32, #tpu.memory_space<vmem>>, %arg18: memref<16x32xf32, #tpu.memory_space<vmem>>, %arg19: memref<16x32xf32, #tpu.memory_space<vmem>>) attributes {dimension_semantics = [#tpu.dimension_semantics<arbitrary>], iteration_bounds = array<i64: 2>, scalar_prefetch = 0 : i64, scratch_operands = 1 : i64, tpu.core_type = #tpu.core_type<tc>, window_params = [{pipeline_mode = #tpu.pipeline_mode<synchronous>, transform_indices = @transform_0, window_bounds = array<i64: 16, 32>}, {pipeline_mode = #tpu.pipeline_mode<synchronous>, transform_indices = @transform_1, window_bounds = array<i64: 16, 32>}, {pipeline_mode = #tpu.pipeline_mode<synchronous>, transform_indices = @transform_2, window_bounds = array<i64: 16, 16>}, {pipeline_mode = #tpu.pipeline_mode<synchronous>, transform_indices = @transform_3, window_bounds = array<i64: 2, 32>}, {pipeline_mode = #tpu.pipeline_mode<synchronous>, transform_indices = @transform_4, window_bounds = array<i64: 32, 32>}, {pipeline_mode = #tpu.pipeline_mode<synchronous>, transform_indices = @transform_5, window_bounds = array<i64: 1, 32>}, {transform_indices = @transform_6, window_bounds = array<i64: 1, 32, 96>}, {transform_indices = @transform_7, window_bounds = array<i64: 1, 1, 96>}, {transform_indices = @transform_8, window_bounds = array<i64: 1, 32, 32>}, {transform_indices = @transform_9, window_bounds = array<i64: 1, 1, 32>}, {transform_indices = @transform_10, window_bounds = array<i64: 1, 2, 32>}, {transform_indices = @transform_11, window_bounds = array<i64: 1, 32, 64>}, {transform_indices = @transform_12, window_bounds = array<i64: 1, 1, 64>}, {transform_indices = @transform_13, window_bounds = array<i64: 1, 64, 32>}, {transform_indices = @transform_14, window_bounds = array<i64: 1, 1, 32>}, {transform_indices = @transform_15, window_bounds = array<i64: 1, 2, 32>}, {pipeline_mode = #tpu.pipeline_mode<synchronous>, transform_indices = @transform_16, window_bounds = array<i64: 16, 32>}, {pipeline_mode = #tpu.pipeline_mode<synchronous>, transform_indices = @transform_17, window_bounds = array<i64: 16, 32>}]} {
    %c0_i32 = arith.constant 0 : i32
    %0 = arith.cmpi eq, %arg0, %c0_i32 : i32
    %1 = arith.extui %0 : i1 to i32
    %c0_i32_0 = arith.constant 0 : i32
    %2 = arith.cmpi ne, %1, %c0_i32_0 : i32
    scf.if %2 {
      %c0_74 = arith.constant 0 : index
      %c0_75 = arith.constant 0 : index
      %201 = vector.load %arg4[%c0_74, %c0_75] : memref<2x32xf32, #tpu.memory_space<vmem>>, vector<1x32xf32>
      %c1 = arith.constant 1 : index
      %c0_76 = arith.constant 0 : index
      %202 = vector.load %arg4[%c1, %c0_76] : memref<2x32xf32, #tpu.memory_space<vmem>>, vector<1x32xf32>
      %c0_77 = arith.constant 0 : index
      %c0_78 = arith.constant 0 : index
      %203 = vector.load %arg1[%c0_77, %c0_78] : memref<16x32xf32, #tpu.memory_space<vmem>>, vector<16x32xf32>
      %cst_79 = arith.constant dense<0.000000e+00> : vector<16xf32>
      %204 = vector.multi_reduction <add>, %203, %cst_79 [1] : vector<16x32xf32> to vector<16xf32>
      %205 = vector.shape_cast %204 : vector<16xf32> to vector<16x1xf32>
      %cst_80 = arith.constant 3.200000e+01 : f32
      %206 = vector.broadcast %cst_80 : f32 to vector<16x1xf32>
      %207 = arith.divf %205, %206 : vector<16x1xf32>
      %208 = vector.broadcast %207 : vector<16x1xf32> to vector<16x32xf32>
      %209 = arith.subf %203, %208 : vector<16x32xf32>
      %210 = arith.mulf %209, %209 : vector<16x32xf32>
      %cst_81 = arith.constant dense<0.000000e+00> : vector<16xf32>
      %211 = vector.multi_reduction <add>, %210, %cst_81 [1] : vector<16x32xf32> to vector<16xf32>
      %212 = vector.shape_cast %211 : vector<16xf32> to vector<16x1xf32>
      %cst_82 = arith.constant 3.200000e+01 : f32
      %213 = vector.broadcast %cst_82 : f32 to vector<16x1xf32>
      %214 = arith.divf %212, %213 : vector<16x1xf32>
      %215 = vector.broadcast %207 : vector<16x1xf32> to vector<16x32xf32>
      %216 = arith.subf %203, %215 : vector<16x32xf32>
      %cst_83 = arith.constant 9.99999996E-13 : f32
      %217 = vector.broadcast %cst_83 : f32 to vector<16x1xf32>
      %218 = arith.addf %214, %217 : vector<16x1xf32>
      %219 = math.rsqrt %218 : vector<16x1xf32>
      %220 = vector.broadcast %219 : vector<16x1xf32> to vector<16x32xf32>
      %221 = arith.mulf %216, %220 : vector<16x32xf32>
      %222 = vector.broadcast %201 : vector<1x32xf32> to vector<16x32xf32>
      %223 = arith.mulf %221, %222 : vector<16x32xf32>
      %224 = vector.broadcast %202 : vector<1x32xf32> to vector<16x32xf32>
      %225 = arith.addf %223, %224 : vector<16x32xf32>
      %c0_84 = arith.constant 0 : index
      %c0_85 = arith.constant 0 : index
      %226 = vector.load %arg5[%c0_84, %c0_85] : memref<32x32xbf16, #tpu.memory_space<vmem>>, vector<32x32xbf16>
      %227 = arith.truncf %225 : vector<16x32xf32> to vector<16x32xbf16>
      %cst_86 = arith.constant dense<0.000000e+00> : vector<16x32xf32>
      %228 = tpu.matmul %227, %226, %cst_86 {dimension_numbers = #tpu.dot_dimension_numbers<[1], [0], [0], [1], [0, 0, 1, 1], [], []>} : vector<16x32xbf16>, vector<32x32xbf16>, vector<16x32xf32> -> vector<16x32xf32>
      %c0_87 = arith.constant 0 : index
      %c0_88 = arith.constant 0 : index
      %229 = vector.load %arg6[%c0_87, %c0_88] : memref<1x32xf32, #tpu.memory_space<vmem>>, vector<1x32xf32>
      %230 = vector.broadcast %229 : vector<1x32xf32> to vector<16x32xf32>
      %231 = arith.addf %228, %230 : vector<16x32xf32>
      %c0_89 = arith.constant 0 : index
      %c0_90 = arith.constant 0 : index
      %232 = vector.load %arg18[%c0_89, %c0_90] : memref<16x32xf32, #tpu.memory_space<vmem>>, vector<16x32xf32>
      tpu.vector_store %arg18[%c0_89, %c0_90], %231 {strides = array<i32>} : memref<16x32xf32, #tpu.memory_space<vmem>>, vector<16x32xf32>,
      %c0_91 = arith.constant 0 : index
      %c0_92 = arith.constant 0 : index
      %233 = vector.load %arg2[%c0_91, %c0_92] : memref<16x32xf32, #tpu.memory_space<vmem>>, vector<16x32xf32>
      %234 = arith.addf %225, %233 : vector<16x32xf32>
      %cst_93 = arith.constant dense<0.000000e+00> : vector<16xf32>
      %235 = vector.multi_reduction <add>, %234, %cst_93 [1] : vector<16x32xf32> to vector<16xf32>
      %236 = vector.shape_cast %235 : vector<16xf32> to vector<16x1xf32>
      %cst_94 = arith.constant 3.200000e+01 : f32
      %237 = vector.broadcast %cst_94 : f32 to vector<16x1xf32>
      %238 = arith.divf %236, %237 : vector<16x1xf32>
      %239 = vector.broadcast %238 : vector<16x1xf32> to vector<16x32xf32>
      %240 = arith.subf %234, %239 : vector<16x32xf32>
      %241 = arith.mulf %240, %240 : vector<16x32xf32>
      %cst_95 = arith.constant dense<0.000000e+00> : vector<16xf32>
      %242 = vector.multi_reduction <add>, %241, %cst_95 [1] : vector<16x32xf32> to vector<16xf32>
      %243 = vector.shape_cast %242 : vector<16xf32> to vector<16x1xf32>
      %cst_96 = arith.constant 3.200000e+01 : f32
      %244 = vector.broadcast %cst_96 : f32 to vector<16x1xf32>
      %245 = arith.divf %243, %244 : vector<16x1xf32>
      %246 = vector.broadcast %238 : vector<16x1xf32> to vector<16x32xf32>
      %247 = arith.subf %234, %246 : vector<16x32xf32>
      %cst_97 = arith.constant 9.99999996E-13 : f32
      %248 = vector.broadcast %cst_97 : f32 to vector<16x1xf32>
      %249 = arith.addf %245, %248 : vector<16x1xf32>
      %250 = math.rsqrt %249 : vector<16x1xf32>
      %251 = vector.broadcast %250 : vector<16x1xf32> to vector<16x32xf32>
      %252 = arith.mulf %247, %251 : vector<16x32xf32>
      %253 = vector.broadcast %201 : vector<1x32xf32> to vector<16x32xf32>
      %254 = arith.mulf %252, %253 : vector<16x32xf32>
      %255 = vector.broadcast %202 : vector<1x32xf32> to vector<16x32xf32>
      %256 = arith.addf %254, %255 : vector<16x32xf32>
      %c0_98 = arith.constant 0 : index
      %c0_99 = arith.constant 0 : index
      %257 = vector.load %arg19[%c0_98, %c0_99] : memref<16x32xf32, #tpu.memory_space<vmem>>, vector<16x32xf32>
      tpu.vector_store %arg19[%c0_98, %c0_99], %256 {strides = array<i32>} : memref<16x32xf32, #tpu.memory_space<vmem>>, vector<16x32xf32>,
    } else {
    }
    %c0 = arith.constant 0 : index
    %c0_1 = arith.constant 0 : index
    %3 = vector.load %arg19[%c0, %c0_1] : memref<16x32xf32, #tpu.memory_space<vmem>>, vector<16x32xf32>
    %c0_2 = arith.constant 0 : index
    %c0_3 = arith.constant 0 : index
    %4 = vector.load %arg3[%c0_2, %c0_3] : memref<16x16xf32, #tpu.memory_space<vmem>>, vector<16x16xf32>
    %c0_4 = arith.constant 0 : index
    %c0_5 = arith.constant 0 : index
    %c0_6 = arith.constant 0 : index
    %5 = vector.load %arg7[%c0_4, %c0_5, %c0_6] : memref<1x32x96xbf16, #tpu.memory_space<vmem>>, vector<1x32x96xbf16>
    %6 = vector.shape_cast %5 : vector<1x32x96xbf16> to vector<32x96xbf16>
    %c0_7 = arith.constant 0 : index
    %c0_8 = arith.constant 0 : index
    %c0_9 = arith.constant 0 : index
    %7 = vector.load %arg8[%c0_7, %c0_8, %c0_9] : memref<1x1x96xf32, #tpu.memory_space<vmem>>, vector<1x1x96xf32>
    %8 = vector.shape_cast %7 : vector<1x1x96xf32> to vector<1x96xf32>
    %c0_10 = arith.constant 0 : index
    %c0_11 = arith.constant 0 : index
    %c0_12 = arith.constant 0 : index
    %9 = vector.load %arg9[%c0_10, %c0_11, %c0_12] : memref<1x32x32xbf16, #tpu.memory_space<vmem>>, vector<1x32x32xbf16>
    %10 = vector.shape_cast %9 : vector<1x32x32xbf16> to vector<32x32xbf16>
    %c0_13 = arith.constant 0 : index
    %c0_14 = arith.constant 0 : index
    %c0_15 = arith.constant 0 : index
    %11 = vector.load %arg10[%c0_13, %c0_14, %c0_15] : memref<1x1x32xf32, #tpu.memory_space<vmem>>, vector<1x1x32xf32>
    %12 = vector.shape_cast %11 : vector<1x1x32xf32> to vector<1x32xf32>
    %c0_16 = arith.constant 0 : index
    %c0_17 = arith.constant 0 : index
    %c0_18 = arith.constant 0 : index
    %13 = vector.load %arg11[%c0_16, %c0_17, %c0_18] : memref<1x2x32xf32, #tpu.memory_space<vmem>>, vector<1x2x32xf32>
    %14 = vector.shape_cast %13 : vector<1x2x32xf32> to vector<2x32xf32>
    %c0_19 = arith.constant 0 : index
    %c0_20 = arith.constant 0 : index
    %c0_21 = arith.constant 0 : index
    %15 = vector.load %arg12[%c0_19, %c0_20, %c0_21] : memref<1x32x64xbf16, #tpu.memory_space<vmem>>, vector<1x32x64xbf16>
    %16 = vector.shape_cast %15 : vector<1x32x64xbf16> to vector<32x64xbf16>
    %c0_22 = arith.constant 0 : index
    %c0_23 = arith.constant 0 : index
    %c0_24 = arith.constant 0 : index
    %17 = vector.load %arg13[%c0_22, %c0_23, %c0_24] : memref<1x1x64xf32, #tpu.memory_space<vmem>>, vector<1x1x64xf32>
    %18 = vector.shape_cast %17 : vector<1x1x64xf32> to vector<1x64xf32>
    %c0_25 = arith.constant 0 : index
    %c0_26 = arith.constant 0 : index
    %c0_27 = arith.constant 0 : index
    %19 = vector.load %arg14[%c0_25, %c0_26, %c0_27] : memref<1x64x32xbf16, #tpu.memory_space<vmem>>, vector<1x64x32xbf16>
    %20 = vector.shape_cast %19 : vector<1x64x32xbf16> to vector<64x32xbf16>
    %c0_28 = arith.constant 0 : index
    %c0_29 = arith.constant 0 : index
    %c0_30 = arith.constant 0 : index
    %21 = vector.load %arg15[%c0_28, %c0_29, %c0_30] : memref<1x1x32xf32, #tpu.memory_space<vmem>>, vector<1x1x32xf32>
    %22 = vector.shape_cast %21 : vector<1x1x32xf32> to vector<1x32xf32>
    %c0_31 = arith.constant 0 : index
    %c0_32 = arith.constant 0 : index
    %c0_33 = arith.constant 0 : index
    %23 = vector.load %arg16[%c0_31, %c0_32, %c0_33] : memref<1x2x32xf32, #tpu.memory_space<vmem>>, vector<1x2x32xf32>
    %24 = vector.shape_cast %23 : vector<1x2x32xf32> to vector<2x32xf32>
    %25 = vector.extract_strided_slice %14 {offsets = [0, 0], sizes = [1, 32], strides = [1, 1]} : vector<2x32xf32> to vector<1x32xf32>
    %26 = vector.extract_strided_slice %14 {offsets = [1, 0], sizes = [1, 32], strides = [1, 1]} : vector<2x32xf32> to vector<1x32xf32>
    %27 = vector.extract_strided_slice %24 {offsets = [0, 0], sizes = [1, 32], strides = [1, 1]} : vector<2x32xf32> to vector<1x32xf32>
    %28 = vector.extract_strided_slice %24 {offsets = [1, 0], sizes = [1, 32], strides = [1, 1]} : vector<2x32xf32> to vector<1x32xf32>
    %29 = arith.truncf %3 : vector<16x32xf32> to vector<16x32xbf16>
    %cst = arith.constant dense<0.000000e+00> : vector<16x96xf32>
    %30 = tpu.matmul %29, %6, %cst {dimension_numbers = #tpu.dot_dimension_numbers<[1], [0], [0], [1], [0, 0, 1, 1], [], []>} : vector<16x32xbf16>, vector<32x96xbf16>, vector<16x96xf32> -> vector<16x96xf32>
    %31 = vector.broadcast %8 : vector<1x96xf32> to vector<16x96xf32>
    %32 = arith.addf %30, %31 : vector<16x96xf32>
    %33 = vector.extract_strided_slice %32 {offsets = [0, 0], sizes = [16, 8], strides = [1, 1]} : vector<16x96xf32> to vector<16x8xf32>
    %34 = vector.extract_strided_slice %32 {offsets = [0, 32], sizes = [16, 8], strides = [1, 1]} : vector<16x96xf32> to vector<16x8xf32>
    %35 = vector.extract_strided_slice %32 {offsets = [0, 64], sizes = [16, 8], strides = [1, 1]} : vector<16x96xf32> to vector<16x8xf32>
    %36 = tpu.transpose %34, [1, 0] : vector<16x8xf32> -> vector<8x16xf32>
    %37 = arith.truncf %33 : vector<16x8xf32> to vector<16x8xbf16>
    %38 = arith.truncf %36 : vector<8x16xf32> to vector<8x16xbf16>
    %cst_34 = arith.constant dense<0.000000e+00> : vector<16x16xf32>
    %39 = tpu.matmul %37, %38, %cst_34 {dimension_numbers = #tpu.dot_dimension_numbers<[1], [0], [0], [1], [0, 0, 1, 1], [], []>} : vector<16x8xbf16>, vector<8x16xbf16>, vector<16x16xf32> -> vector<16x16xf32>
    %cst_35 = arith.constant 0.353553385 : f32
    %40 = vector.broadcast %cst_35 : f32 to vector<16x16xf32>
    %41 = arith.mulf %39, %40 : vector<16x16xf32>
    %42 = arith.addf %41, %4 : vector<16x16xf32>
    %cst_36 = arith.constant dense<0xFF800000> : vector<16xf32>
    %43 = vector.multi_reduction <maximumf>, %42, %cst_36 [1] : vector<16x16xf32> to vector<16xf32>
    %44 = vector.shape_cast %43 : vector<16xf32> to vector<16x1xf32>
    %45 = vector.broadcast %44 : vector<16x1xf32> to vector<16x16xf32>
    %46 = arith.subf %42, %45 : vector<16x16xf32>
    %47 = math.exp %46 : vector<16x16xf32>
    %cst_37 = arith.constant dense<0.000000e+00> : vector<16xf32>
    %48 = vector.multi_reduction <add>, %47, %cst_37 [1] : vector<16x16xf32> to vector<16xf32>
    %49 = vector.shape_cast %48 : vector<16xf32> to vector<16x1xf32>
    %50 = tpu.reciprocal %49 {approx = true} : vector<16x1xf32> -> vector<16x1xf32>
    %51 = vector.broadcast %50 : vector<16x1xf32> to vector<16x16xf32>
    %52 = arith.mulf %47, %51 : vector<16x16xf32>
    %53 = arith.truncf %52 : vector<16x16xf32> to vector<16x16xbf16>
    %54 = arith.truncf %35 : vector<16x8xf32> to vector<16x8xbf16>
    %cst_38 = arith.constant dense<0.000000e+00> : vector<16x8xf32>
    %55 = tpu.matmul %53, %54, %cst_38 {dimension_numbers = #tpu.dot_dimension_numbers<[1], [0], [0], [1], [0, 0, 1, 1], [], []>} : vector<16x16xbf16>, vector<16x8xbf16>, vector<16x8xf32> -> vector<16x8xf32>
    %56 = vector.extract_strided_slice %32 {offsets = [0, 8], sizes = [16, 8], strides = [1, 1]} : vector<16x96xf32> to vector<16x8xf32>
    %57 = vector.extract_strided_slice %32 {offsets = [0, 40], sizes = [16, 8], strides = [1, 1]} : vector<16x96xf32> to vector<16x8xf32>
    %58 = vector.extract_strided_slice %32 {offsets = [0, 72], sizes = [16, 8], strides = [1, 1]} : vector<16x96xf32> to vector<16x8xf32>
    %59 = tpu.transpose %57, [1, 0] : vector<16x8xf32> -> vector<8x16xf32>
    %60 = arith.truncf %56 : vector<16x8xf32> to vector<16x8xbf16>
    %61 = arith.truncf %59 : vector<8x16xf32> to vector<8x16xbf16>
    %cst_39 = arith.constant dense<0.000000e+00> : vector<16x16xf32>
    %62 = tpu.matmul %60, %61, %cst_39 {dimension_numbers = #tpu.dot_dimension_numbers<[1], [0], [0], [1], [0, 0, 1, 1], [], []>} : vector<16x8xbf16>, vector<8x16xbf16>, vector<16x16xf32> -> vector<16x16xf32>
    %cst_40 = arith.constant 0.353553385 : f32
    %63 = vector.broadcast %cst_40 : f32 to vector<16x16xf32>
    %64 = arith.mulf %62, %63 : vector<16x16xf32>
    %65 = arith.addf %64, %4 : vector<16x16xf32>
    %cst_41 = arith.constant dense<0xFF800000> : vector<16xf32>
    %66 = vector.multi_reduction <maximumf>, %65, %cst_41 [1] : vector<16x16xf32> to vector<16xf32>
    %67 = vector.shape_cast %66 : vector<16xf32> to vector<16x1xf32>
    %68 = vector.broadcast %67 : vector<16x1xf32> to vector<16x16xf32>
    %69 = arith.subf %65, %68 : vector<16x16xf32>
    %70 = math.exp %69 : vector<16x16xf32>
    %cst_42 = arith.constant dense<0.000000e+00> : vector<16xf32>
    %71 = vector.multi_reduction <add>, %70, %cst_42 [1] : vector<16x16xf32> to vector<16xf32>
    %72 = vector.shape_cast %71 : vector<16xf32> to vector<16x1xf32>
    %73 = tpu.reciprocal %72 {approx = true} : vector<16x1xf32> -> vector<16x1xf32>
    %74 = vector.broadcast %73 : vector<16x1xf32> to vector<16x16xf32>
    %75 = arith.mulf %70, %74 : vector<16x16xf32>
    %76 = arith.truncf %75 : vector<16x16xf32> to vector<16x16xbf16>
    %77 = arith.truncf %58 : vector<16x8xf32> to vector<16x8xbf16>
    %cst_43 = arith.constant dense<0.000000e+00> : vector<16x8xf32>
    %78 = tpu.matmul %76, %77, %cst_43 {dimension_numbers = #tpu.dot_dimension_numbers<[1], [0], [0], [1], [0, 0, 1, 1], [], []>} : vector<16x16xbf16>, vector<16x8xbf16>, vector<16x8xf32> -> vector<16x8xf32>
    %79 = vector.extract_strided_slice %32 {offsets = [0, 16], sizes = [16, 8], strides = [1, 1]} : vector<16x96xf32> to vector<16x8xf32>
    %80 = vector.extract_strided_slice %32 {offsets = [0, 48], sizes = [16, 8], strides = [1, 1]} : vector<16x96xf32> to vector<16x8xf32>
    %81 = vector.extract_strided_slice %32 {offsets = [0, 80], sizes = [16, 8], strides = [1, 1]} : vector<16x96xf32> to vector<16x8xf32>
    %82 = tpu.transpose %80, [1, 0] : vector<16x8xf32> -> vector<8x16xf32>
    %83 = arith.truncf %79 : vector<16x8xf32> to vector<16x8xbf16>
    %84 = arith.truncf %82 : vector<8x16xf32> to vector<8x16xbf16>
    %cst_44 = arith.constant dense<0.000000e+00> : vector<16x16xf32>
    %85 = tpu.matmul %83, %84, %cst_44 {dimension_numbers = #tpu.dot_dimension_numbers<[1], [0], [0], [1], [0, 0, 1, 1], [], []>} : vector<16x8xbf16>, vector<8x16xbf16>, vector<16x16xf32> -> vector<16x16xf32>
    %cst_45 = arith.constant 0.353553385 : f32
    %86 = vector.broadcast %cst_45 : f32 to vector<16x16xf32>
    %87 = arith.mulf %85, %86 : vector<16x16xf32>
    %88 = arith.addf %87, %4 : vector<16x16xf32>
    %cst_46 = arith.constant dense<0xFF800000> : vector<16xf32>
    %89 = vector.multi_reduction <maximumf>, %88, %cst_46 [1] : vector<16x16xf32> to vector<16xf32>
    %90 = vector.shape_cast %89 : vector<16xf32> to vector<16x1xf32>
    %91 = vector.broadcast %90 : vector<16x1xf32> to vector<16x16xf32>
    %92 = arith.subf %88, %91 : vector<16x16xf32>
    %93 = math.exp %92 : vector<16x16xf32>
    %cst_47 = arith.constant dense<0.000000e+00> : vector<16xf32>
    %94 = vector.multi_reduction <add>, %93, %cst_47 [1] : vector<16x16xf32> to vector<16xf32>
    %95 = vector.shape_cast %94 : vector<16xf32> to vector<16x1xf32>
    %96 = tpu.reciprocal %95 {approx = true} : vector<16x1xf32> -> vector<16x1xf32>
    %97 = vector.broadcast %96 : vector<16x1xf32> to vector<16x16xf32>
    %98 = arith.mulf %93, %97 : vector<16x16xf32>
    %99 = arith.truncf %98 : vector<16x16xf32> to vector<16x16xbf16>
    %100 = arith.truncf %81 : vector<16x8xf32> to vector<16x8xbf16>
    %cst_48 = arith.constant dense<0.000000e+00> : vector<16x8xf32>
    %101 = tpu.matmul %99, %100, %cst_48 {dimension_numbers = #tpu.dot_dimension_numbers<[1], [0], [0], [1], [0, 0, 1, 1], [], []>} : vector<16x16xbf16>, vector<16x8xbf16>, vector<16x8xf32> -> vector<16x8xf32>
    %102 = vector.extract_strided_slice %32 {offsets = [0, 24], sizes = [16, 8], strides = [1, 1]} : vector<16x96xf32> to vector<16x8xf32>
    %103 = vector.extract_strided_slice %32 {offsets = [0, 56], sizes = [16, 8], strides = [1, 1]} : vector<16x96xf32> to vector<16x8xf32>
    %104 = vector.extract_strided_slice %32 {offsets = [0, 88], sizes = [16, 8], strides = [1, 1]} : vector<16x96xf32> to vector<16x8xf32>
    %105 = tpu.transpose %103, [1, 0] : vector<16x8xf32> -> vector<8x16xf32>
    %106 = arith.truncf %102 : vector<16x8xf32> to vector<16x8xbf16>
    %107 = arith.truncf %105 : vector<8x16xf32> to vector<8x16xbf16>
    %cst_49 = arith.constant dense<0.000000e+00> : vector<16x16xf32>
    %108 = tpu.matmul %106, %107, %cst_49 {dimension_numbers = #tpu.dot_dimension_numbers<[1], [0], [0], [1], [0, 0, 1, 1], [], []>} : vector<16x8xbf16>, vector<8x16xbf16>, vector<16x16xf32> -> vector<16x16xf32>
    %cst_50 = arith.constant 0.353553385 : f32
    %109 = vector.broadcast %cst_50 : f32 to vector<16x16xf32>
    %110 = arith.mulf %108, %109 : vector<16x16xf32>
    %111 = arith.addf %110, %4 : vector<16x16xf32>
    %cst_51 = arith.constant dense<0xFF800000> : vector<16xf32>
    %112 = vector.multi_reduction <maximumf>, %111, %cst_51 [1] : vector<16x16xf32> to vector<16xf32>
    %113 = vector.shape_cast %112 : vector<16xf32> to vector<16x1xf32>
    %114 = vector.broadcast %113 : vector<16x1xf32> to vector<16x16xf32>
    %115 = arith.subf %111, %114 : vector<16x16xf32>
    %116 = math.exp %115 : vector<16x16xf32>
    %cst_52 = arith.constant dense<0.000000e+00> : vector<16xf32>
    %117 = vector.multi_reduction <add>, %116, %cst_52 [1] : vector<16x16xf32> to vector<16xf32>
    %118 = vector.shape_cast %117 : vector<16xf32> to vector<16x1xf32>
    %119 = tpu.reciprocal %118 {approx = true} : vector<16x1xf32> -> vector<16x1xf32>
    %120 = vector.broadcast %119 : vector<16x1xf32> to vector<16x16xf32>
    %121 = arith.mulf %116, %120 : vector<16x16xf32>
    %122 = arith.truncf %121 : vector<16x16xf32> to vector<16x16xbf16>
    %123 = arith.truncf %104 : vector<16x8xf32> to vector<16x8xbf16>
    %cst_53 = arith.constant dense<0.000000e+00> : vector<16x8xf32>
    %124 = tpu.matmul %122, %123, %cst_53 {dimension_numbers = #tpu.dot_dimension_numbers<[1], [0], [0], [1], [0, 0, 1, 1], [], []>} : vector<16x16xbf16>, vector<16x8xbf16>, vector<16x8xf32> -> vector<16x8xf32>
    %125 = tpu.concatenate %55, %78, %101, %124 in 1 : vector<16x8xf32>, vector<16x8xf32>, vector<16x8xf32>, vector<16x8xf32> -> vector<16x32xf32>
    %126 = arith.truncf %125 : vector<16x32xf32> to vector<16x32xbf16>
    %cst_54 = arith.constant dense<0.000000e+00> : vector<16x32xf32>
    %127 = tpu.matmul %126, %10, %cst_54 {dimension_numbers = #tpu.dot_dimension_numbers<[1], [0], [0], [1], [0, 0, 1, 1], [], []>} : vector<16x32xbf16>, vector<32x32xbf16>, vector<16x32xf32> -> vector<16x32xf32>
    %128 = vector.broadcast %12 : vector<1x32xf32> to vector<16x32xf32>
    %129 = arith.addf %127, %128 : vector<16x32xf32>
    %130 = arith.addf %3, %129 : vector<16x32xf32>
    %cst_55 = arith.constant dense<0.000000e+00> : vector<16xf32>
    %131 = vector.multi_reduction <add>, %130, %cst_55 [1] : vector<16x32xf32> to vector<16xf32>
    %132 = vector.shape_cast %131 : vector<16xf32> to vector<16x1xf32>
    %cst_56 = arith.constant 3.200000e+01 : f32
    %133 = vector.broadcast %cst_56 : f32 to vector<16x1xf32>
    %134 = arith.divf %132, %133 : vector<16x1xf32>
    %135 = vector.broadcast %134 : vector<16x1xf32> to vector<16x32xf32>
    %136 = arith.subf %130, %135 : vector<16x32xf32>
    %137 = arith.mulf %136, %136 : vector<16x32xf32>
    %cst_57 = arith.constant dense<0.000000e+00> : vector<16xf32>
    %138 = vector.multi_reduction <add>, %137, %cst_57 [1] : vector<16x32xf32> to vector<16xf32>
    %139 = vector.shape_cast %138 : vector<16xf32> to vector<16x1xf32>
    %cst_58 = arith.constant 3.200000e+01 : f32
    %140 = vector.broadcast %cst_58 : f32 to vector<16x1xf32>
    %141 = arith.divf %139, %140 : vector<16x1xf32>
    %142 = vector.broadcast %134 : vector<16x1xf32> to vector<16x32xf32>
    %143 = arith.subf %130, %142 : vector<16x32xf32>
    %cst_59 = arith.constant 9.99999996E-13 : f32
    %144 = vector.broadcast %cst_59 : f32 to vector<16x1xf32>
    %145 = arith.addf %141, %144 : vector<16x1xf32>
    %146 = math.rsqrt %145 : vector<16x1xf32>
    %147 = vector.broadcast %146 : vector<16x1xf32> to vector<16x32xf32>
    %148 = arith.mulf %143, %147 : vector<16x32xf32>
    %149 = vector.broadcast %25 : vector<1x32xf32> to vector<16x32xf32>
    %150 = arith.mulf %148, %149 : vector<16x32xf32>
    %151 = vector.broadcast %26 : vector<1x32xf32> to vector<16x32xf32>
    %152 = arith.addf %150, %151 : vector<16x32xf32>
    %153 = arith.truncf %152 : vector<16x32xf32> to vector<16x32xbf16>
    %cst_60 = arith.constant dense<0.000000e+00> : vector<16x64xf32>
    %154 = tpu.matmul %153, %16, %cst_60 {dimension_numbers = #tpu.dot_dimension_numbers<[1], [0], [0], [1], [0, 0, 1, 1], [], []>} : vector<16x32xbf16>, vector<32x64xbf16>, vector<16x64xf32> -> vector<16x64xf32>
    %155 = vector.broadcast %18 : vector<1x64xf32> to vector<16x64xf32>
    %156 = arith.addf %154, %155 : vector<16x64xf32>
    %cst_61 = arith.constant 5.000000e-01 : f32
    %157 = vector.broadcast %cst_61 : f32 to vector<16x64xf32>
    %158 = arith.mulf %157, %156 : vector<16x64xf32>
    %cst_62 = arith.constant 4.471500e-02 : f32
    %159 = vector.broadcast %cst_62 : f32 to vector<16x64xf32>
    %160 = arith.mulf %159, %156 : vector<16x64xf32>
    %161 = arith.mulf %160, %156 : vector<16x64xf32>
    %162 = arith.mulf %161, %156 : vector<16x64xf32>
    %163 = arith.addf %156, %162 : vector<16x64xf32>
    %cst_63 = arith.constant 0.797884583 : f32
    %164 = vector.broadcast %cst_63 : f32 to vector<16x64xf32>
    %165 = arith.mulf %164, %163 : vector<16x64xf32>
    %166 = math.tanh %165 : vector<16x64xf32>
    %cst_64 = arith.constant 1.000000e+00 : f32
    %167 = vector.broadcast %cst_64 : f32 to vector<16x64xf32>
    %168 = arith.addf %167, %166 : vector<16x64xf32>
    %169 = arith.mulf %158, %168 : vector<16x64xf32>
    %170 = arith.truncf %169 : vector<16x64xf32> to vector<16x64xbf16>
    %cst_65 = arith.constant dense<0.000000e+00> : vector<16x32xf32>
    %171 = tpu.matmul %170, %20, %cst_65 {dimension_numbers = #tpu.dot_dimension_numbers<[1], [0], [0], [1], [0, 0, 1, 1], [], []>} : vector<16x64xbf16>, vector<64x32xbf16>, vector<16x32xf32> -> vector<16x32xf32>
    %172 = arith.addf %152, %171 : vector<16x32xf32>
    %173 = vector.broadcast %22 : vector<1x32xf32> to vector<16x32xf32>
    %174 = arith.addf %172, %173 : vector<16x32xf32>
    %cst_66 = arith.constant dense<0.000000e+00> : vector<16xf32>
    %175 = vector.multi_reduction <add>, %174, %cst_66 [1] : vector<16x32xf32> to vector<16xf32>
    %176 = vector.shape_cast %175 : vector<16xf32> to vector<16x1xf32>
    %cst_67 = arith.constant 3.200000e+01 : f32
    %177 = vector.broadcast %cst_67 : f32 to vector<16x1xf32>
    %178 = arith.divf %176, %177 : vector<16x1xf32>
    %179 = vector.broadcast %178 : vector<16x1xf32> to vector<16x32xf32>
    %180 = arith.subf %174, %179 : vector<16x32xf32>
    %181 = arith.mulf %180, %180 : vector<16x32xf32>
    %cst_68 = arith.constant dense<0.000000e+00> : vector<16xf32>
    %182 = vector.multi_reduction <add>, %181, %cst_68 [1] : vector<16x32xf32> to vector<16xf32>
    %183 = vector.shape_cast %182 : vector<16xf32> to vector<16x1xf32>
    %cst_69 = arith.constant 3.200000e+01 : f32
    %184 = vector.broadcast %cst_69 : f32 to vector<16x1xf32>
    %185 = arith.divf %183, %184 : vector<16x1xf32>
    %186 = vector.broadcast %178 : vector<16x1xf32> to vector<16x32xf32>
    %187 = arith.subf %174, %186 : vector<16x32xf32>
    %cst_70 = arith.constant 9.99999996E-13 : f32
    %188 = vector.broadcast %cst_70 : f32 to vector<16x1xf32>
    %189 = arith.addf %185, %188 : vector<16x1xf32>
    %190 = math.rsqrt %189 : vector<16x1xf32>
    %191 = vector.broadcast %190 : vector<16x1xf32> to vector<16x32xf32>
    %192 = arith.mulf %187, %191 : vector<16x32xf32>
    %193 = vector.broadcast %27 : vector<1x32xf32> to vector<16x32xf32>
    %194 = arith.mulf %192, %193 : vector<16x32xf32>
    %195 = vector.broadcast %28 : vector<1x32xf32> to vector<16x32xf32>
    %196 = arith.addf %194, %195 : vector<16x32xf32>
    %c0_71 = arith.constant 0 : index
    %c0_72 = arith.constant 0 : index
    %197 = vector.load %arg19[%c0_71, %c0_72] : memref<16x32xf32, #tpu.memory_space<vmem>>, vector<16x32xf32>
    tpu.vector_store %arg19[%c0_71, %c0_72], %196 {strides = array<i32>} : memref<16x32xf32, #tpu.memory_space<vmem>>, vector<16x32xf32>,
    %c1_i32 = arith.constant 1 : i32
    %198 = arith.cmpi eq, %arg0, %c1_i32 : i32
    %199 = arith.extui %198 : i1 to i32
    %c0_i32_73 = arith.constant 0 : i32
    %200 = arith.cmpi ne, %199, %c0_i32_73 : i32
    scf.if %200 {
      %c0_74 = arith.constant 0 : index
      %c0_75 = arith.constant 0 : index
      %201 = vector.load %arg17[%c0_74, %c0_75] : memref<16x32xf32, #tpu.memory_space<vmem>>, vector<16x32xf32>
      tpu.vector_store %arg17[%c0_74, %c0_75], %196 {strides = array<i32>} : memref<16x32xf32, #tpu.memory_space<vmem>>, vector<16x32xf32>,
    } else {
    }
    return
  }
  func.func @transform_0(%arg0: i32) -> (i32, i32) {
    %c0_i32 = arith.constant 0 : i32
    %c0_i32_0 = arith.constant 0 : i32
    %c0_i32_1 = arith.constant 0 : i32
    return %c0_i32, %c0_i32_0 : i32, i32
  }
  func.func @transform_1(%arg0: i32) -> (i32, i32) {
    %c0_i32 = arith.constant 0 : i32
    %c0_i32_0 = arith.constant 0 : i32
    %c0_i32_1 = arith.constant 0 : i32
    return %c0_i32, %c0_i32_0 : i32, i32
  }
  func.func @transform_2(%arg0: i32) -> (i32, i32) {
    %c0_i32 = arith.constant 0 : i32
    %c0_i32_0 = arith.constant 0 : i32
    %c0_i32_1 = arith.constant 0 : i32
    return %c0_i32, %c0_i32_0 : i32, i32
  }
  func.func @transform_3(%arg0: i32) -> (i32, i32) {
    %c0_i32 = arith.constant 0 : i32
    %c0_i32_0 = arith.constant 0 : i32
    %c0_i32_1 = arith.constant 0 : i32
    return %c0_i32, %c0_i32_0 : i32, i32
  }
  func.func @transform_4(%arg0: i32) -> (i32, i32) {
    %c0_i32 = arith.constant 0 : i32
    %c0_i32_0 = arith.constant 0 : i32
    %c0_i32_1 = arith.constant 0 : i32
    return %c0_i32, %c0_i32_0 : i32, i32
  }
  func.func @transform_5(%arg0: i32) -> (i32, i32) {
    %c0_i32 = arith.constant 0 : i32
    %c0_i32_0 = arith.constant 0 : i32
    %c0_i32_1 = arith.constant 0 : i32
    return %c0_i32, %c0_i32_0 : i32, i32
  }
  func.func @transform_6(%arg0: i32) -> (i32, i32, i32) {
    %c0_i32 = arith.constant 0 : i32
    %c0_i32_0 = arith.constant 0 : i32
    %c0_i32_1 = arith.constant 0 : i32
    return %arg0, %c0_i32, %c0_i32_0 : i32, i32, i32
  }
  func.func @transform_7(%arg0: i32) -> (i32, i32, i32) {
    %c0_i32 = arith.constant 0 : i32
    %c0_i32_0 = arith.constant 0 : i32
    %c0_i32_1 = arith.constant 0 : i32
    return %arg0, %c0_i32, %c0_i32_0 : i32, i32, i32
  }
  func.func @transform_8(%arg0: i32) -> (i32, i32, i32) {
    %c0_i32 = arith.constant 0 : i32
    %c0_i32_0 = arith.constant 0 : i32
    %c0_i32_1 = arith.constant 0 : i32
    return %arg0, %c0_i32, %c0_i32_0 : i32, i32, i32
  }
  func.func @transform_9(%arg0: i32) -> (i32, i32, i32) {
    %c0_i32 = arith.constant 0 : i32
    %c0_i32_0 = arith.constant 0 : i32
    %c0_i32_1 = arith.constant 0 : i32
    return %arg0, %c0_i32, %c0_i32_0 : i32, i32, i32
  }
  func.func @transform_10(%arg0: i32) -> (i32, i32, i32) {
    %c0_i32 = arith.constant 0 : i32
    %c0_i32_0 = arith.constant 0 : i32
    %c0_i32_1 = arith.constant 0 : i32
    return %arg0, %c0_i32, %c0_i32_0 : i32, i32, i32
  }
  func.func @transform_11(%arg0: i32) -> (i32, i32, i32) {
    %c0_i32 = arith.constant 0 : i32
    %c0_i32_0 = arith.constant 0 : i32
    %c0_i32_1 = arith.constant 0 : i32
    return %arg0, %c0_i32, %c0_i32_0 : i32, i32, i32
  }
  func.func @transform_12(%arg0: i32) -> (i32, i32, i32) {
    %c0_i32 = arith.constant 0 : i32
    %c0_i32_0 = arith.constant 0 : i32
    %c0_i32_1 = arith.constant 0 : i32
    return %arg0, %c0_i32, %c0_i32_0 : i32, i32, i32
  }
  func.func @transform_13(%arg0: i32) -> (i32, i32, i32) {
    %c0_i32 = arith.constant 0 : i32
    %c0_i32_0 = arith.constant 0 : i32
    %c0_i32_1 = arith.constant 0 : i32
    return %arg0, %c0_i32, %c0_i32_0 : i32, i32, i32
  }
  func.func @transform_14(%arg0: i32) -> (i32, i32, i32) {
    %c0_i32 = arith.constant 0 : i32
    %c0_i32_0 = arith.constant 0 : i32
    %c0_i32_1 = arith.constant 0 : i32
    return %arg0, %c0_i32, %c0_i32_0 : i32, i32, i32
  }
  func.func @transform_15(%arg0: i32) -> (i32, i32, i32) {
    %c0_i32 = arith.constant 0 : i32
    %c0_i32_0 = arith.constant 0 : i32
    %c0_i32_1 = arith.constant 0 : i32
    return %arg0, %c0_i32, %c0_i32_0 : i32, i32, i32
  }
  func.func @transform_16(%arg0: i32) -> (i32, i32) {
    %c0_i32 = arith.constant 0 : i32
    %c0_i32_0 = arith.constant 0 : i32
    %c0_i32_1 = arith.constant 0 : i32
    return %c0_i32, %c0_i32_0 : i32, i32
  }
  func.func @transform_17(%arg0: i32) -> (i32, i32) {
    %c0_i32 = arith.constant 0 : i32
    %c0_i32_0 = arith.constant 0 : i32
    %c0_i32_1 = arith.constant 0 : i32
    return %c0_i32, %c0_i32_0 : i32, i32
  }
}

module attributes {stable_mosaic.version = 11 : i64} {
  func.func @_pinyin_branch_kernel(%arg0: i32, %arg1: memref<16x32xf32, #tpu.memory_space<vmem>>, %arg2: memref<16x16xf32, #tpu.memory_space<vmem>>, %arg3: memref<1x32x96xbf16, #tpu.memory_space<vmem>>, %arg4: memref<1x1x96xf32, #tpu.memory_space<vmem>>, %arg5: memref<1x32x32xbf16, #tpu.memory_space<vmem>>, %arg6: memref<1x1x32xf32, #tpu.memory_space<vmem>>, %arg7: memref<1x2x32xf32, #tpu.memory_space<vmem>>, %arg8: memref<1x32x64xbf16, #tpu.memory_space<vmem>>, %arg9: memref<1x1x64xf32, #tpu.memory_space<vmem>>, %arg10: memref<1x64x32xbf16, #tpu.memory_space<vmem>>, %arg11: memref<1x1x32xf32, #tpu.memory_space<vmem>>, %arg12: memref<1x2x32xf32, #tpu.memory_space<vmem>>, %arg13: memref<16x32xf32, #tpu.memory_space<vmem>>, %arg14: memref<16x32xf32, #tpu.memory_space<vmem>>) attributes {dimension_semantics = [#tpu.dimension_semantics<arbitrary>], iteration_bounds = array<i64: 3>, scalar_prefetch = 0 : i64, scratch_operands = 1 : i64, tpu.core_type = #tpu.core_type<tc>, window_params = [{pipeline_mode = #tpu.pipeline_mode<synchronous>, transform_indices = @transform_0, window_bounds = array<i64: 16, 32>}, {pipeline_mode = #tpu.pipeline_mode<synchronous>, transform_indices = @transform_1, window_bounds = array<i64: 16, 16>}, {transform_indices = @transform_2, window_bounds = array<i64: 1, 32, 96>}, {transform_indices = @transform_3, window_bounds = array<i64: 1, 1, 96>}, {transform_indices = @transform_4, window_bounds = array<i64: 1, 32, 32>}, {transform_indices = @transform_5, window_bounds = array<i64: 1, 1, 32>}, {transform_indices = @transform_6, window_bounds = array<i64: 1, 2, 32>}, {transform_indices = @transform_7, window_bounds = array<i64: 1, 32, 64>}, {transform_indices = @transform_8, window_bounds = array<i64: 1, 1, 64>}, {transform_indices = @transform_9, window_bounds = array<i64: 1, 64, 32>}, {transform_indices = @transform_10, window_bounds = array<i64: 1, 1, 32>}, {transform_indices = @transform_11, window_bounds = array<i64: 1, 2, 32>}, {pipeline_mode = #tpu.pipeline_mode<synchronous>, transform_indices = @transform_12, window_bounds = array<i64: 16, 32>}]} {
    %c0_i32 = arith.constant 0 : i32
    %0 = arith.cmpi eq, %arg0, %c0_i32 : i32
    %1 = arith.extui %0 : i1 to i32
    %c0_i32_0 = arith.constant 0 : i32
    %2 = arith.cmpi ne, %1, %c0_i32_0 : i32
    scf.if %2 {
      %c0_74 = arith.constant 0 : index
      %c0_75 = arith.constant 0 : index
      %201 = vector.load %arg1[%c0_74, %c0_75] : memref<16x32xf32, #tpu.memory_space<vmem>>, vector<16x32xf32>
      %c0_76 = arith.constant 0 : index
      %c0_77 = arith.constant 0 : index
      %202 = vector.load %arg14[%c0_76, %c0_77] : memref<16x32xf32, #tpu.memory_space<vmem>>, vector<16x32xf32>
      tpu.vector_store %arg14[%c0_76, %c0_77], %201 {strides = array<i32>} : memref<16x32xf32, #tpu.memory_space<vmem>>, vector<16x32xf32>,
    } else {
    }
    %c0 = arith.constant 0 : index
    %c0_1 = arith.constant 0 : index
    %3 = vector.load %arg14[%c0, %c0_1] : memref<16x32xf32, #tpu.memory_space<vmem>>, vector<16x32xf32>
    %c0_2 = arith.constant 0 : index
    %c0_3 = arith.constant 0 : index
    %4 = vector.load %arg2[%c0_2, %c0_3] : memref<16x16xf32, #tpu.memory_space<vmem>>, vector<16x16xf32>
    %c0_4 = arith.constant 0 : index
    %c0_5 = arith.constant 0 : index
    %c0_6 = arith.constant 0 : index
    %5 = vector.load %arg3[%c0_4, %c0_5, %c0_6] : memref<1x32x96xbf16, #tpu.memory_space<vmem>>, vector<1x32x96xbf16>
    %6 = vector.shape_cast %5 : vector<1x32x96xbf16> to vector<32x96xbf16>
    %c0_7 = arith.constant 0 : index
    %c0_8 = arith.constant 0 : index
    %c0_9 = arith.constant 0 : index
    %7 = vector.load %arg4[%c0_7, %c0_8, %c0_9] : memref<1x1x96xf32, #tpu.memory_space<vmem>>, vector<1x1x96xf32>
    %8 = vector.shape_cast %7 : vector<1x1x96xf32> to vector<1x96xf32>
    %c0_10 = arith.constant 0 : index
    %c0_11 = arith.constant 0 : index
    %c0_12 = arith.constant 0 : index
    %9 = vector.load %arg5[%c0_10, %c0_11, %c0_12] : memref<1x32x32xbf16, #tpu.memory_space<vmem>>, vector<1x32x32xbf16>
    %10 = vector.shape_cast %9 : vector<1x32x32xbf16> to vector<32x32xbf16>
    %c0_13 = arith.constant 0 : index
    %c0_14 = arith.constant 0 : index
    %c0_15 = arith.constant 0 : index
    %11 = vector.load %arg6[%c0_13, %c0_14, %c0_15] : memref<1x1x32xf32, #tpu.memory_space<vmem>>, vector<1x1x32xf32>
    %12 = vector.shape_cast %11 : vector<1x1x32xf32> to vector<1x32xf32>
    %c0_16 = arith.constant 0 : index
    %c0_17 = arith.constant 0 : index
    %c0_18 = arith.constant 0 : index
    %13 = vector.load %arg7[%c0_16, %c0_17, %c0_18] : memref<1x2x32xf32, #tpu.memory_space<vmem>>, vector<1x2x32xf32>
    %14 = vector.shape_cast %13 : vector<1x2x32xf32> to vector<2x32xf32>
    %c0_19 = arith.constant 0 : index
    %c0_20 = arith.constant 0 : index
    %c0_21 = arith.constant 0 : index
    %15 = vector.load %arg8[%c0_19, %c0_20, %c0_21] : memref<1x32x64xbf16, #tpu.memory_space<vmem>>, vector<1x32x64xbf16>
    %16 = vector.shape_cast %15 : vector<1x32x64xbf16> to vector<32x64xbf16>
    %c0_22 = arith.constant 0 : index
    %c0_23 = arith.constant 0 : index
    %c0_24 = arith.constant 0 : index
    %17 = vector.load %arg9[%c0_22, %c0_23, %c0_24] : memref<1x1x64xf32, #tpu.memory_space<vmem>>, vector<1x1x64xf32>
    %18 = vector.shape_cast %17 : vector<1x1x64xf32> to vector<1x64xf32>
    %c0_25 = arith.constant 0 : index
    %c0_26 = arith.constant 0 : index
    %c0_27 = arith.constant 0 : index
    %19 = vector.load %arg10[%c0_25, %c0_26, %c0_27] : memref<1x64x32xbf16, #tpu.memory_space<vmem>>, vector<1x64x32xbf16>
    %20 = vector.shape_cast %19 : vector<1x64x32xbf16> to vector<64x32xbf16>
    %c0_28 = arith.constant 0 : index
    %c0_29 = arith.constant 0 : index
    %c0_30 = arith.constant 0 : index
    %21 = vector.load %arg11[%c0_28, %c0_29, %c0_30] : memref<1x1x32xf32, #tpu.memory_space<vmem>>, vector<1x1x32xf32>
    %22 = vector.shape_cast %21 : vector<1x1x32xf32> to vector<1x32xf32>
    %c0_31 = arith.constant 0 : index
    %c0_32 = arith.constant 0 : index
    %c0_33 = arith.constant 0 : index
    %23 = vector.load %arg12[%c0_31, %c0_32, %c0_33] : memref<1x2x32xf32, #tpu.memory_space<vmem>>, vector<1x2x32xf32>
    %24 = vector.shape_cast %23 : vector<1x2x32xf32> to vector<2x32xf32>
    %25 = vector.extract_strided_slice %14 {offsets = [0, 0], sizes = [1, 32], strides = [1, 1]} : vector<2x32xf32> to vector<1x32xf32>
    %26 = vector.extract_strided_slice %14 {offsets = [1, 0], sizes = [1, 32], strides = [1, 1]} : vector<2x32xf32> to vector<1x32xf32>
    %27 = vector.extract_strided_slice %24 {offsets = [0, 0], sizes = [1, 32], strides = [1, 1]} : vector<2x32xf32> to vector<1x32xf32>
    %28 = vector.extract_strided_slice %24 {offsets = [1, 0], sizes = [1, 32], strides = [1, 1]} : vector<2x32xf32> to vector<1x32xf32>
    %cst = arith.constant dense<0.000000e+00> : vector<16xf32>
    %29 = vector.multi_reduction <add>, %3, %cst [1] : vector<16x32xf32> to vector<16xf32>
    %30 = vector.shape_cast %29 : vector<16xf32> to vector<16x1xf32>
    %cst_34 = arith.constant 3.200000e+01 : f32
    %31 = vector.broadcast %cst_34 : f32 to vector<16x1xf32>
    %32 = arith.divf %30, %31 : vector<16x1xf32>
    %33 = vector.broadcast %32 : vector<16x1xf32> to vector<16x32xf32>
    %34 = arith.subf %3, %33 : vector<16x32xf32>
    %35 = arith.mulf %34, %34 : vector<16x32xf32>
    %cst_35 = arith.constant dense<0.000000e+00> : vector<16xf32>
    %36 = vector.multi_reduction <add>, %35, %cst_35 [1] : vector<16x32xf32> to vector<16xf32>
    %37 = vector.shape_cast %36 : vector<16xf32> to vector<16x1xf32>
    %cst_36 = arith.constant 3.200000e+01 : f32
    %38 = vector.broadcast %cst_36 : f32 to vector<16x1xf32>
    %39 = arith.divf %37, %38 : vector<16x1xf32>
    %40 = vector.broadcast %32 : vector<16x1xf32> to vector<16x32xf32>
    %41 = arith.subf %3, %40 : vector<16x32xf32>
    %cst_37 = arith.constant 9.99999974E-6 : f32
    %42 = vector.broadcast %cst_37 : f32 to vector<16x1xf32>
    %43 = arith.addf %39, %42 : vector<16x1xf32>
    %44 = math.rsqrt %43 : vector<16x1xf32>
    %45 = vector.broadcast %44 : vector<16x1xf32> to vector<16x32xf32>
    %46 = arith.mulf %41, %45 : vector<16x32xf32>
    %47 = vector.broadcast %25 : vector<1x32xf32> to vector<16x32xf32>
    %48 = arith.mulf %46, %47 : vector<16x32xf32>
    %49 = vector.broadcast %26 : vector<1x32xf32> to vector<16x32xf32>
    %50 = arith.addf %48, %49 : vector<16x32xf32>
    %51 = arith.truncf %50 : vector<16x32xf32> to vector<16x32xbf16>
    %cst_38 = arith.constant dense<0.000000e+00> : vector<16x96xf32>
    %52 = tpu.matmul %51, %6, %cst_38 {dimension_numbers = #tpu.dot_dimension_numbers<[1], [0], [0], [1], [0, 0, 1, 1], [], []>} : vector<16x32xbf16>, vector<32x96xbf16>, vector<16x96xf32> -> vector<16x96xf32>
    %53 = vector.broadcast %8 : vector<1x96xf32> to vector<16x96xf32>
    %54 = arith.addf %52, %53 : vector<16x96xf32>
    %55 = vector.extract_strided_slice %54 {offsets = [0, 0], sizes = [16, 8], strides = [1, 1]} : vector<16x96xf32> to vector<16x8xf32>
    %56 = vector.extract_strided_slice %54 {offsets = [0, 32], sizes = [16, 8], strides = [1, 1]} : vector<16x96xf32> to vector<16x8xf32>
    %57 = vector.extract_strided_slice %54 {offsets = [0, 64], sizes = [16, 8], strides = [1, 1]} : vector<16x96xf32> to vector<16x8xf32>
    %58 = tpu.transpose %56, [1, 0] : vector<16x8xf32> -> vector<8x16xf32>
    %59 = arith.truncf %55 : vector<16x8xf32> to vector<16x8xbf16>
    %60 = arith.truncf %58 : vector<8x16xf32> to vector<8x16xbf16>
    %cst_39 = arith.constant dense<0.000000e+00> : vector<16x16xf32>
    %61 = tpu.matmul %59, %60, %cst_39 {dimension_numbers = #tpu.dot_dimension_numbers<[1], [0], [0], [1], [0, 0, 1, 1], [], []>} : vector<16x8xbf16>, vector<8x16xbf16>, vector<16x16xf32> -> vector<16x16xf32>
    %cst_40 = arith.constant 0.353553385 : f32
    %62 = vector.broadcast %cst_40 : f32 to vector<16x16xf32>
    %63 = arith.mulf %61, %62 : vector<16x16xf32>
    %64 = arith.addf %63, %4 : vector<16x16xf32>
    %cst_41 = arith.constant dense<0xFF800000> : vector<16xf32>
    %65 = vector.multi_reduction <maximumf>, %64, %cst_41 [1] : vector<16x16xf32> to vector<16xf32>
    %66 = vector.shape_cast %65 : vector<16xf32> to vector<16x1xf32>
    %67 = vector.broadcast %66 : vector<16x1xf32> to vector<16x16xf32>
    %68 = arith.subf %64, %67 : vector<16x16xf32>
    %69 = math.exp %68 : vector<16x16xf32>
    %cst_42 = arith.constant dense<0.000000e+00> : vector<16xf32>
    %70 = vector.multi_reduction <add>, %69, %cst_42 [1] : vector<16x16xf32> to vector<16xf32>
    %71 = vector.shape_cast %70 : vector<16xf32> to vector<16x1xf32>
    %72 = tpu.reciprocal %71 {approx = true} : vector<16x1xf32> -> vector<16x1xf32>
    %73 = vector.broadcast %72 : vector<16x1xf32> to vector<16x16xf32>
    %74 = arith.mulf %69, %73 : vector<16x16xf32>
    %75 = arith.truncf %74 : vector<16x16xf32> to vector<16x16xbf16>
    %76 = arith.truncf %57 : vector<16x8xf32> to vector<16x8xbf16>
    %cst_43 = arith.constant dense<0.000000e+00> : vector<16x8xf32>
    %77 = tpu.matmul %75, %76, %cst_43 {dimension_numbers = #tpu.dot_dimension_numbers<[1], [0], [0], [1], [0, 0, 1, 1], [], []>} : vector<16x16xbf16>, vector<16x8xbf16>, vector<16x8xf32> -> vector<16x8xf32>
    %78 = vector.extract_strided_slice %54 {offsets = [0, 8], sizes = [16, 8], strides = [1, 1]} : vector<16x96xf32> to vector<16x8xf32>
    %79 = vector.extract_strided_slice %54 {offsets = [0, 40], sizes = [16, 8], strides = [1, 1]} : vector<16x96xf32> to vector<16x8xf32>
    %80 = vector.extract_strided_slice %54 {offsets = [0, 72], sizes = [16, 8], strides = [1, 1]} : vector<16x96xf32> to vector<16x8xf32>
    %81 = tpu.transpose %79, [1, 0] : vector<16x8xf32> -> vector<8x16xf32>
    %82 = arith.truncf %78 : vector<16x8xf32> to vector<16x8xbf16>
    %83 = arith.truncf %81 : vector<8x16xf32> to vector<8x16xbf16>
    %cst_44 = arith.constant dense<0.000000e+00> : vector<16x16xf32>
    %84 = tpu.matmul %82, %83, %cst_44 {dimension_numbers = #tpu.dot_dimension_numbers<[1], [0], [0], [1], [0, 0, 1, 1], [], []>} : vector<16x8xbf16>, vector<8x16xbf16>, vector<16x16xf32> -> vector<16x16xf32>
    %cst_45 = arith.constant 0.353553385 : f32
    %85 = vector.broadcast %cst_45 : f32 to vector<16x16xf32>
    %86 = arith.mulf %84, %85 : vector<16x16xf32>
    %87 = arith.addf %86, %4 : vector<16x16xf32>
    %cst_46 = arith.constant dense<0xFF800000> : vector<16xf32>
    %88 = vector.multi_reduction <maximumf>, %87, %cst_46 [1] : vector<16x16xf32> to vector<16xf32>
    %89 = vector.shape_cast %88 : vector<16xf32> to vector<16x1xf32>
    %90 = vector.broadcast %89 : vector<16x1xf32> to vector<16x16xf32>
    %91 = arith.subf %87, %90 : vector<16x16xf32>
    %92 = math.exp %91 : vector<16x16xf32>
    %cst_47 = arith.constant dense<0.000000e+00> : vector<16xf32>
    %93 = vector.multi_reduction <add>, %92, %cst_47 [1] : vector<16x16xf32> to vector<16xf32>
    %94 = vector.shape_cast %93 : vector<16xf32> to vector<16x1xf32>
    %95 = tpu.reciprocal %94 {approx = true} : vector<16x1xf32> -> vector<16x1xf32>
    %96 = vector.broadcast %95 : vector<16x1xf32> to vector<16x16xf32>
    %97 = arith.mulf %92, %96 : vector<16x16xf32>
    %98 = arith.truncf %97 : vector<16x16xf32> to vector<16x16xbf16>
    %99 = arith.truncf %80 : vector<16x8xf32> to vector<16x8xbf16>
    %cst_48 = arith.constant dense<0.000000e+00> : vector<16x8xf32>
    %100 = tpu.matmul %98, %99, %cst_48 {dimension_numbers = #tpu.dot_dimension_numbers<[1], [0], [0], [1], [0, 0, 1, 1], [], []>} : vector<16x16xbf16>, vector<16x8xbf16>, vector<16x8xf32> -> vector<16x8xf32>
    %101 = vector.extract_strided_slice %54 {offsets = [0, 16], sizes = [16, 8], strides = [1, 1]} : vector<16x96xf32> to vector<16x8xf32>
    %102 = vector.extract_strided_slice %54 {offsets = [0, 48], sizes = [16, 8], strides = [1, 1]} : vector<16x96xf32> to vector<16x8xf32>
    %103 = vector.extract_strided_slice %54 {offsets = [0, 80], sizes = [16, 8], strides = [1, 1]} : vector<16x96xf32> to vector<16x8xf32>
    %104 = tpu.transpose %102, [1, 0] : vector<16x8xf32> -> vector<8x16xf32>
    %105 = arith.truncf %101 : vector<16x8xf32> to vector<16x8xbf16>
    %106 = arith.truncf %104 : vector<8x16xf32> to vector<8x16xbf16>
    %cst_49 = arith.constant dense<0.000000e+00> : vector<16x16xf32>
    %107 = tpu.matmul %105, %106, %cst_49 {dimension_numbers = #tpu.dot_dimension_numbers<[1], [0], [0], [1], [0, 0, 1, 1], [], []>} : vector<16x8xbf16>, vector<8x16xbf16>, vector<16x16xf32> -> vector<16x16xf32>
    %cst_50 = arith.constant 0.353553385 : f32
    %108 = vector.broadcast %cst_50 : f32 to vector<16x16xf32>
    %109 = arith.mulf %107, %108 : vector<16x16xf32>
    %110 = arith.addf %109, %4 : vector<16x16xf32>
    %cst_51 = arith.constant dense<0xFF800000> : vector<16xf32>
    %111 = vector.multi_reduction <maximumf>, %110, %cst_51 [1] : vector<16x16xf32> to vector<16xf32>
    %112 = vector.shape_cast %111 : vector<16xf32> to vector<16x1xf32>
    %113 = vector.broadcast %112 : vector<16x1xf32> to vector<16x16xf32>
    %114 = arith.subf %110, %113 : vector<16x16xf32>
    %115 = math.exp %114 : vector<16x16xf32>
    %cst_52 = arith.constant dense<0.000000e+00> : vector<16xf32>
    %116 = vector.multi_reduction <add>, %115, %cst_52 [1] : vector<16x16xf32> to vector<16xf32>
    %117 = vector.shape_cast %116 : vector<16xf32> to vector<16x1xf32>
    %118 = tpu.reciprocal %117 {approx = true} : vector<16x1xf32> -> vector<16x1xf32>
    %119 = vector.broadcast %118 : vector<16x1xf32> to vector<16x16xf32>
    %120 = arith.mulf %115, %119 : vector<16x16xf32>
    %121 = arith.truncf %120 : vector<16x16xf32> to vector<16x16xbf16>
    %122 = arith.truncf %103 : vector<16x8xf32> to vector<16x8xbf16>
    %cst_53 = arith.constant dense<0.000000e+00> : vector<16x8xf32>
    %123 = tpu.matmul %121, %122, %cst_53 {dimension_numbers = #tpu.dot_dimension_numbers<[1], [0], [0], [1], [0, 0, 1, 1], [], []>} : vector<16x16xbf16>, vector<16x8xbf16>, vector<16x8xf32> -> vector<16x8xf32>
    %124 = vector.extract_strided_slice %54 {offsets = [0, 24], sizes = [16, 8], strides = [1, 1]} : vector<16x96xf32> to vector<16x8xf32>
    %125 = vector.extract_strided_slice %54 {offsets = [0, 56], sizes = [16, 8], strides = [1, 1]} : vector<16x96xf32> to vector<16x8xf32>
    %126 = vector.extract_strided_slice %54 {offsets = [0, 88], sizes = [16, 8], strides = [1, 1]} : vector<16x96xf32> to vector<16x8xf32>
    %127 = tpu.transpose %125, [1, 0] : vector<16x8xf32> -> vector<8x16xf32>
    %128 = arith.truncf %124 : vector<16x8xf32> to vector<16x8xbf16>
    %129 = arith.truncf %127 : vector<8x16xf32> to vector<8x16xbf16>
    %cst_54 = arith.constant dense<0.000000e+00> : vector<16x16xf32>
    %130 = tpu.matmul %128, %129, %cst_54 {dimension_numbers = #tpu.dot_dimension_numbers<[1], [0], [0], [1], [0, 0, 1, 1], [], []>} : vector<16x8xbf16>, vector<8x16xbf16>, vector<16x16xf32> -> vector<16x16xf32>
    %cst_55 = arith.constant 0.353553385 : f32
    %131 = vector.broadcast %cst_55 : f32 to vector<16x16xf32>
    %132 = arith.mulf %130, %131 : vector<16x16xf32>
    %133 = arith.addf %132, %4 : vector<16x16xf32>
    %cst_56 = arith.constant dense<0xFF800000> : vector<16xf32>
    %134 = vector.multi_reduction <maximumf>, %133, %cst_56 [1] : vector<16x16xf32> to vector<16xf32>
    %135 = vector.shape_cast %134 : vector<16xf32> to vector<16x1xf32>
    %136 = vector.broadcast %135 : vector<16x1xf32> to vector<16x16xf32>
    %137 = arith.subf %133, %136 : vector<16x16xf32>
    %138 = math.exp %137 : vector<16x16xf32>
    %cst_57 = arith.constant dense<0.000000e+00> : vector<16xf32>
    %139 = vector.multi_reduction <add>, %138, %cst_57 [1] : vector<16x16xf32> to vector<16xf32>
    %140 = vector.shape_cast %139 : vector<16xf32> to vector<16x1xf32>
    %141 = tpu.reciprocal %140 {approx = true} : vector<16x1xf32> -> vector<16x1xf32>
    %142 = vector.broadcast %141 : vector<16x1xf32> to vector<16x16xf32>
    %143 = arith.mulf %138, %142 : vector<16x16xf32>
    %144 = arith.truncf %143 : vector<16x16xf32> to vector<16x16xbf16>
    %145 = arith.truncf %126 : vector<16x8xf32> to vector<16x8xbf16>
    %cst_58 = arith.constant dense<0.000000e+00> : vector<16x8xf32>
    %146 = tpu.matmul %144, %145, %cst_58 {dimension_numbers = #tpu.dot_dimension_numbers<[1], [0], [0], [1], [0, 0, 1, 1], [], []>} : vector<16x16xbf16>, vector<16x8xbf16>, vector<16x8xf32> -> vector<16x8xf32>
    %147 = tpu.concatenate %77, %100, %123, %146 in 1 : vector<16x8xf32>, vector<16x8xf32>, vector<16x8xf32>, vector<16x8xf32> -> vector<16x32xf32>
    %148 = arith.truncf %147 : vector<16x32xf32> to vector<16x32xbf16>
    %cst_59 = arith.constant dense<0.000000e+00> : vector<16x32xf32>
    %149 = tpu.matmul %148, %10, %cst_59 {dimension_numbers = #tpu.dot_dimension_numbers<[1], [0], [0], [1], [0, 0, 1, 1], [], []>} : vector<16x32xbf16>, vector<32x32xbf16>, vector<16x32xf32> -> vector<16x32xf32>
    %150 = vector.broadcast %12 : vector<1x32xf32> to vector<16x32xf32>
    %151 = arith.addf %149, %150 : vector<16x32xf32>
    %152 = arith.addf %3, %151 : vector<16x32xf32>
    %cst_60 = arith.constant dense<0.000000e+00> : vector<16xf32>
    %153 = vector.multi_reduction <add>, %152, %cst_60 [1] : vector<16x32xf32> to vector<16xf32>
    %154 = vector.shape_cast %153 : vector<16xf32> to vector<16x1xf32>
    %cst_61 = arith.constant 3.200000e+01 : f32
    %155 = vector.broadcast %cst_61 : f32 to vector<16x1xf32>
    %156 = arith.divf %154, %155 : vector<16x1xf32>
    %157 = vector.broadcast %156 : vector<16x1xf32> to vector<16x32xf32>
    %158 = arith.subf %152, %157 : vector<16x32xf32>
    %159 = arith.mulf %158, %158 : vector<16x32xf32>
    %cst_62 = arith.constant dense<0.000000e+00> : vector<16xf32>
    %160 = vector.multi_reduction <add>, %159, %cst_62 [1] : vector<16x32xf32> to vector<16xf32>
    %161 = vector.shape_cast %160 : vector<16xf32> to vector<16x1xf32>
    %cst_63 = arith.constant 3.200000e+01 : f32
    %162 = vector.broadcast %cst_63 : f32 to vector<16x1xf32>
    %163 = arith.divf %161, %162 : vector<16x1xf32>
    %164 = vector.broadcast %156 : vector<16x1xf32> to vector<16x32xf32>
    %165 = arith.subf %152, %164 : vector<16x32xf32>
    %cst_64 = arith.constant 9.99999974E-6 : f32
    %166 = vector.broadcast %cst_64 : f32 to vector<16x1xf32>
    %167 = arith.addf %163, %166 : vector<16x1xf32>
    %168 = math.rsqrt %167 : vector<16x1xf32>
    %169 = vector.broadcast %168 : vector<16x1xf32> to vector<16x32xf32>
    %170 = arith.mulf %165, %169 : vector<16x32xf32>
    %171 = vector.broadcast %27 : vector<1x32xf32> to vector<16x32xf32>
    %172 = arith.mulf %170, %171 : vector<16x32xf32>
    %173 = vector.broadcast %28 : vector<1x32xf32> to vector<16x32xf32>
    %174 = arith.addf %172, %173 : vector<16x32xf32>
    %175 = arith.truncf %174 : vector<16x32xf32> to vector<16x32xbf16>
    %cst_65 = arith.constant dense<0.000000e+00> : vector<16x64xf32>
    %176 = tpu.matmul %175, %16, %cst_65 {dimension_numbers = #tpu.dot_dimension_numbers<[1], [0], [0], [1], [0, 0, 1, 1], [], []>} : vector<16x32xbf16>, vector<32x64xbf16>, vector<16x64xf32> -> vector<16x64xf32>
    %177 = vector.broadcast %18 : vector<1x64xf32> to vector<16x64xf32>
    %178 = arith.addf %176, %177 : vector<16x64xf32>
    %cst_66 = arith.constant 5.000000e-01 : f32
    %179 = vector.broadcast %cst_66 : f32 to vector<16x64xf32>
    %180 = arith.mulf %179, %178 : vector<16x64xf32>
    %cst_67 = arith.constant 4.471500e-02 : f32
    %181 = vector.broadcast %cst_67 : f32 to vector<16x64xf32>
    %182 = arith.mulf %181, %178 : vector<16x64xf32>
    %183 = arith.mulf %182, %178 : vector<16x64xf32>
    %184 = arith.mulf %183, %178 : vector<16x64xf32>
    %185 = arith.addf %178, %184 : vector<16x64xf32>
    %cst_68 = arith.constant 0.797884583 : f32
    %186 = vector.broadcast %cst_68 : f32 to vector<16x64xf32>
    %187 = arith.mulf %186, %185 : vector<16x64xf32>
    %188 = math.tanh %187 : vector<16x64xf32>
    %cst_69 = arith.constant 1.000000e+00 : f32
    %189 = vector.broadcast %cst_69 : f32 to vector<16x64xf32>
    %190 = arith.addf %189, %188 : vector<16x64xf32>
    %191 = arith.mulf %180, %190 : vector<16x64xf32>
    %192 = arith.truncf %191 : vector<16x64xf32> to vector<16x64xbf16>
    %cst_70 = arith.constant dense<0.000000e+00> : vector<16x32xf32>
    %193 = tpu.matmul %192, %20, %cst_70 {dimension_numbers = #tpu.dot_dimension_numbers<[1], [0], [0], [1], [0, 0, 1, 1], [], []>} : vector<16x64xbf16>, vector<64x32xbf16>, vector<16x32xf32> -> vector<16x32xf32>
    %194 = arith.addf %152, %193 : vector<16x32xf32>
    %195 = vector.broadcast %22 : vector<1x32xf32> to vector<16x32xf32>
    %196 = arith.addf %194, %195 : vector<16x32xf32>
    %c0_71 = arith.constant 0 : index
    %c0_72 = arith.constant 0 : index
    %197 = vector.load %arg14[%c0_71, %c0_72] : memref<16x32xf32, #tpu.memory_space<vmem>>, vector<16x32xf32>
    tpu.vector_store %arg14[%c0_71, %c0_72], %196 {strides = array<i32>} : memref<16x32xf32, #tpu.memory_space<vmem>>, vector<16x32xf32>,
    %c2_i32 = arith.constant 2 : i32
    %198 = arith.cmpi eq, %arg0, %c2_i32 : i32
    %199 = arith.extui %198 : i1 to i32
    %c0_i32_73 = arith.constant 0 : i32
    %200 = arith.cmpi ne, %199, %c0_i32_73 : i32
    scf.if %200 {
      %c0_74 = arith.constant 0 : index
      %c0_75 = arith.constant 0 : index
      %201 = vector.load %arg13[%c0_74, %c0_75] : memref<16x32xf32, #tpu.memory_space<vmem>>, vector<16x32xf32>
      tpu.vector_store %arg13[%c0_74, %c0_75], %196 {strides = array<i32>} : memref<16x32xf32, #tpu.memory_space<vmem>>, vector<16x32xf32>,
    } else {
    }
    return
  }
  func.func @transform_0(%arg0: i32) -> (i32, i32) {
    %c0_i32 = arith.constant 0 : i32
    %c0_i32_0 = arith.constant 0 : i32
    %c0_i32_1 = arith.constant 0 : i32
    return %c0_i32, %c0_i32_0 : i32, i32
  }
  func.func @transform_1(%arg0: i32) -> (i32, i32) {
    %c0_i32 = arith.constant 0 : i32
    %c0_i32_0 = arith.constant 0 : i32
    %c0_i32_1 = arith.constant 0 : i32
    return %c0_i32, %c0_i32_0 : i32, i32
  }
  func.func @transform_2(%arg0: i32) -> (i32, i32, i32) {
    %c0_i32 = arith.constant 0 : i32
    %c0_i32_0 = arith.constant 0 : i32
    %c0_i32_1 = arith.constant 0 : i32
    return %arg0, %c0_i32, %c0_i32_0 : i32, i32, i32
  }
  func.func @transform_3(%arg0: i32) -> (i32, i32, i32) {
    %c0_i32 = arith.constant 0 : i32
    %c0_i32_0 = arith.constant 0 : i32
    %c0_i32_1 = arith.constant 0 : i32
    return %arg0, %c0_i32, %c0_i32_0 : i32, i32, i32
  }
  func.func @transform_4(%arg0: i32) -> (i32, i32, i32) {
    %c0_i32 = arith.constant 0 : i32
    %c0_i32_0 = arith.constant 0 : i32
    %c0_i32_1 = arith.constant 0 : i32
    return %arg0, %c0_i32, %c0_i32_0 : i32, i32, i32
  }
  func.func @transform_5(%arg0: i32) -> (i32, i32, i32) {
    %c0_i32 = arith.constant 0 : i32
    %c0_i32_0 = arith.constant 0 : i32
    %c0_i32_1 = arith.constant 0 : i32
    return %arg0, %c0_i32, %c0_i32_0 : i32, i32, i32
  }
  func.func @transform_6(%arg0: i32) -> (i32, i32, i32) {
    %c0_i32 = arith.constant 0 : i32
    %c0_i32_0 = arith.constant 0 : i32
    %c0_i32_1 = arith.constant 0 : i32
    return %arg0, %c0_i32, %c0_i32_0 : i32, i32, i32
  }
  func.func @transform_7(%arg0: i32) -> (i32, i32, i32) {
    %c0_i32 = arith.constant 0 : i32
    %c0_i32_0 = arith.constant 0 : i32
    %c0_i32_1 = arith.constant 0 : i32
    return %arg0, %c0_i32, %c0_i32_0 : i32, i32, i32
  }
  func.func @transform_8(%arg0: i32) -> (i32, i32, i32) {
    %c0_i32 = arith.constant 0 : i32
    %c0_i32_0 = arith.constant 0 : i32
    %c0_i32_1 = arith.constant 0 : i32
    return %arg0, %c0_i32, %c0_i32_0 : i32, i32, i32
  }
  func.func @transform_9(%arg0: i32) -> (i32, i32, i32) {
    %c0_i32 = arith.constant 0 : i32
    %c0_i32_0 = arith.constant 0 : i32
    %c0_i32_1 = arith.constant 0 : i32
    return %arg0, %c0_i32, %c0_i32_0 : i32, i32, i32
  }
  func.func @transform_10(%arg0: i32) -> (i32, i32, i32) {
    %c0_i32 = arith.constant 0 : i32
    %c0_i32_0 = arith.constant 0 : i32
    %c0_i32_1 = arith.constant 0 : i32
    return %arg0, %c0_i32, %c0_i32_0 : i32, i32, i32
  }
  func.func @transform_11(%arg0: i32) -> (i32, i32, i32) {
    %c0_i32 = arith.constant 0 : i32
    %c0_i32_0 = arith.constant 0 : i32
    %c0_i32_1 = arith.constant 0 : i32
    return %arg0, %c0_i32, %c0_i32_0 : i32, i32, i32
  }
  func.func @transform_12(%arg0: i32) -> (i32, i32) {
    %c0_i32 = arith.constant 0 : i32
    %c0_i32_0 = arith.constant 0 : i32
    %c0_i32_1 = arith.constant 0 : i32
    return %c0_i32, %c0_i32_0 : i32, i32
  }
}

module attributes {stable_mosaic.version = 11 : i64} {
  func.func @_head_kernel(%arg0: i32, %arg1: memref<16x32xf32, #tpu.memory_space<vmem>>, %arg2: memref<16x32xf32, #tpu.memory_space<vmem>>, %arg3: memref<16x32xf32, #tpu.memory_space<vmem>>, %arg4: memref<16x768xf32, #tpu.memory_space<vmem>>, %arg5: memref<768x128xbf16, #tpu.memory_space<vmem>>, %arg6: memref<1x128xf32, #tpu.memory_space<vmem>>, %arg7: memref<128x64xbf16, #tpu.memory_space<vmem>>, %arg8: memref<1x64xf32, #tpu.memory_space<vmem>>, %arg9: memref<64x32xbf16, #tpu.memory_space<vmem>>, %arg10: memref<1x32xf32, #tpu.memory_space<vmem>>, %arg11: memref<2x32xf32, #tpu.memory_space<vmem>>, %arg12: memref<32x16xbf16, #tpu.memory_space<vmem>>, %arg13: memref<1x16xf32, #tpu.memory_space<vmem>>, %arg14: memref<32x4xbf16, #tpu.memory_space<vmem>>, %arg15: memref<1x4xf32, #tpu.memory_space<vmem>>, %arg16: memref<16x1xf32, #tpu.memory_space<vmem>>, %arg17: memref<16x1xi32, #tpu.memory_space<vmem>>, %arg18: memref<16x1xi32, #tpu.memory_space<vmem>>, %arg19: memref<16x128xf32, #tpu.memory_space<vmem>>) attributes {dimension_semantics = [#tpu.dimension_semantics<arbitrary>], iteration_bounds = array<i64: 1>, scalar_prefetch = 0 : i64, scratch_operands = 0 : i64, tpu.core_type = #tpu.core_type<tc>, window_params = [{pipeline_mode = #tpu.pipeline_mode<synchronous>, transform_indices = @transform_0, window_bounds = array<i64: 16, 32>}, {pipeline_mode = #tpu.pipeline_mode<synchronous>, transform_indices = @transform_1, window_bounds = array<i64: 16, 32>}, {pipeline_mode = #tpu.pipeline_mode<synchronous>, transform_indices = @transform_2, window_bounds = array<i64: 16, 32>}, {pipeline_mode = #tpu.pipeline_mode<synchronous>, transform_indices = @transform_3, window_bounds = array<i64: 16, 768>}, {pipeline_mode = #tpu.pipeline_mode<synchronous>, transform_indices = @transform_4, window_bounds = array<i64: 768, 128>}, {pipeline_mode = #tpu.pipeline_mode<synchronous>, transform_indices = @transform_5, window_bounds = array<i64: 1, 128>}, {pipeline_mode = #tpu.pipeline_mode<synchronous>, transform_indices = @transform_6, window_bounds = array<i64: 128, 64>}, {pipeline_mode = #tpu.pipeline_mode<synchronous>, transform_indices = @transform_7, window_bounds = array<i64: 1, 64>}, {pipeline_mode = #tpu.pipeline_mode<synchronous>, transform_indices = @transform_8, window_bounds = array<i64: 64, 32>}, {pipeline_mode = #tpu.pipeline_mode<synchronous>, transform_indices = @transform_9, window_bounds = array<i64: 1, 32>}, {pipeline_mode = #tpu.pipeline_mode<synchronous>, transform_indices = @transform_10, window_bounds = array<i64: 2, 32>}, {pipeline_mode = #tpu.pipeline_mode<synchronous>, transform_indices = @transform_11, window_bounds = array<i64: 32, 16>}, {pipeline_mode = #tpu.pipeline_mode<synchronous>, transform_indices = @transform_12, window_bounds = array<i64: 1, 16>}, {pipeline_mode = #tpu.pipeline_mode<synchronous>, transform_indices = @transform_13, window_bounds = array<i64: 32, 4>}, {pipeline_mode = #tpu.pipeline_mode<synchronous>, transform_indices = @transform_14, window_bounds = array<i64: 1, 4>}, {pipeline_mode = #tpu.pipeline_mode<synchronous>, transform_indices = @transform_15, window_bounds = array<i64: 16, 1>}, {pipeline_mode = #tpu.pipeline_mode<synchronous>, transform_indices = @transform_16, window_bounds = array<i64: 16, 1>}, {pipeline_mode = #tpu.pipeline_mode<synchronous>, transform_indices = @transform_17, window_bounds = array<i64: 16, 1>}, {pipeline_mode = #tpu.pipeline_mode<synchronous>, transform_indices = @transform_18, window_bounds = array<i64: 16, 128>}]} {
    %c0 = arith.constant 0 : index
    %c0_0 = arith.constant 0 : index
    %0 = vector.load %arg4[%c0, %c0_0] : memref<16x768xf32, #tpu.memory_space<vmem>>, vector<16x768xf32>
    %c0_1 = arith.constant 0 : index
    %c0_2 = arith.constant 0 : index
    %1 = vector.load %arg5[%c0_1, %c0_2] : memref<768x128xbf16, #tpu.memory_space<vmem>>, vector<768x128xbf16>
    %2 = arith.truncf %0 : vector<16x768xf32> to vector<16x768xbf16>
    %cst = arith.constant dense<0.000000e+00> : vector<16x128xf32>
    %3 = tpu.matmul %2, %1, %cst {dimension_numbers = #tpu.dot_dimension_numbers<[1], [0], [0], [1], [0, 0, 1, 1], [], []>} : vector<16x768xbf16>, vector<768x128xbf16>, vector<16x128xf32> -> vector<16x128xf32>
    %c0_3 = arith.constant 0 : index
    %c0_4 = arith.constant 0 : index
    %4 = vector.load %arg6[%c0_3, %c0_4] : memref<1x128xf32, #tpu.memory_space<vmem>>, vector<1x128xf32>
    %5 = vector.broadcast %4 : vector<1x128xf32> to vector<16x128xf32>
    %6 = arith.addf %3, %5 : vector<16x128xf32>
    %cst_5 = arith.constant 5.000000e-01 : f32
    %7 = vector.broadcast %cst_5 : f32 to vector<16x128xf32>
    %8 = arith.mulf %7, %6 : vector<16x128xf32>
    %cst_6 = arith.constant 4.471500e-02 : f32
    %9 = vector.broadcast %cst_6 : f32 to vector<16x128xf32>
    %10 = arith.mulf %9, %6 : vector<16x128xf32>
    %11 = arith.mulf %10, %6 : vector<16x128xf32>
    %12 = arith.mulf %11, %6 : vector<16x128xf32>
    %13 = arith.addf %6, %12 : vector<16x128xf32>
    %cst_7 = arith.constant 0.797884583 : f32
    %14 = vector.broadcast %cst_7 : f32 to vector<16x128xf32>
    %15 = arith.mulf %14, %13 : vector<16x128xf32>
    %16 = math.tanh %15 : vector<16x128xf32>
    %cst_8 = arith.constant 1.000000e+00 : f32
    %17 = vector.broadcast %cst_8 : f32 to vector<16x128xf32>
    %18 = arith.addf %17, %16 : vector<16x128xf32>
    %19 = arith.mulf %8, %18 : vector<16x128xf32>
    %c0_9 = arith.constant 0 : index
    %c0_10 = arith.constant 0 : index
    %20 = vector.load %arg7[%c0_9, %c0_10] : memref<128x64xbf16, #tpu.memory_space<vmem>>, vector<128x64xbf16>
    %21 = arith.truncf %19 : vector<16x128xf32> to vector<16x128xbf16>
    %cst_11 = arith.constant dense<0.000000e+00> : vector<16x64xf32>
    %22 = tpu.matmul %21, %20, %cst_11 {dimension_numbers = #tpu.dot_dimension_numbers<[1], [0], [0], [1], [0, 0, 1, 1], [], []>} : vector<16x128xbf16>, vector<128x64xbf16>, vector<16x64xf32> -> vector<16x64xf32>
    %c0_12 = arith.constant 0 : index
    %c0_13 = arith.constant 0 : index
    %23 = vector.load %arg8[%c0_12, %c0_13] : memref<1x64xf32, #tpu.memory_space<vmem>>, vector<1x64xf32>
    %24 = vector.broadcast %23 : vector<1x64xf32> to vector<16x64xf32>
    %25 = arith.addf %22, %24 : vector<16x64xf32>
    %cst_14 = arith.constant 5.000000e-01 : f32
    %26 = vector.broadcast %cst_14 : f32 to vector<16x64xf32>
    %27 = arith.mulf %26, %25 : vector<16x64xf32>
    %cst_15 = arith.constant 4.471500e-02 : f32
    %28 = vector.broadcast %cst_15 : f32 to vector<16x64xf32>
    %29 = arith.mulf %28, %25 : vector<16x64xf32>
    %30 = arith.mulf %29, %25 : vector<16x64xf32>
    %31 = arith.mulf %30, %25 : vector<16x64xf32>
    %32 = arith.addf %25, %31 : vector<16x64xf32>
    %cst_16 = arith.constant 0.797884583 : f32
    %33 = vector.broadcast %cst_16 : f32 to vector<16x64xf32>
    %34 = arith.mulf %33, %32 : vector<16x64xf32>
    %35 = math.tanh %34 : vector<16x64xf32>
    %cst_17 = arith.constant 1.000000e+00 : f32
    %36 = vector.broadcast %cst_17 : f32 to vector<16x64xf32>
    %37 = arith.addf %36, %35 : vector<16x64xf32>
    %38 = arith.mulf %27, %37 : vector<16x64xf32>
    %c0_18 = arith.constant 0 : index
    %c0_19 = arith.constant 0 : index
    %39 = vector.load %arg9[%c0_18, %c0_19] : memref<64x32xbf16, #tpu.memory_space<vmem>>, vector<64x32xbf16>
    %40 = arith.truncf %38 : vector<16x64xf32> to vector<16x64xbf16>
    %cst_20 = arith.constant dense<0.000000e+00> : vector<16x32xf32>
    %41 = tpu.matmul %40, %39, %cst_20 {dimension_numbers = #tpu.dot_dimension_numbers<[1], [0], [0], [1], [0, 0, 1, 1], [], []>} : vector<16x64xbf16>, vector<64x32xbf16>, vector<16x32xf32> -> vector<16x32xf32>
    %c0_21 = arith.constant 0 : index
    %c0_22 = arith.constant 0 : index
    %42 = vector.load %arg10[%c0_21, %c0_22] : memref<1x32xf32, #tpu.memory_space<vmem>>, vector<1x32xf32>
    %43 = vector.broadcast %42 : vector<1x32xf32> to vector<16x32xf32>
    %44 = arith.addf %41, %43 : vector<16x32xf32>
    %c0_23 = arith.constant 0 : index
    %c0_24 = arith.constant 0 : index
    %45 = vector.load %arg1[%c0_23, %c0_24] : memref<16x32xf32, #tpu.memory_space<vmem>>, vector<16x32xf32>
    %c0_25 = arith.constant 0 : index
    %c0_26 = arith.constant 0 : index
    %46 = vector.load %arg3[%c0_25, %c0_26] : memref<16x32xf32, #tpu.memory_space<vmem>>, vector<16x32xf32>
    %c0_27 = arith.constant 0 : index
    %c0_28 = arith.constant 0 : index
    %47 = vector.load %arg11[%c0_27, %c0_28] : memref<2x32xf32, #tpu.memory_space<vmem>>, vector<1x32xf32>
    %c1 = arith.constant 1 : index
    %c0_29 = arith.constant 0 : index
    %48 = vector.load %arg11[%c1, %c0_29] : memref<2x32xf32, #tpu.memory_space<vmem>>, vector<1x32xf32>
    %cst_30 = arith.constant dense<0.000000e+00> : vector<16xf32>
    %49 = vector.multi_reduction <add>, %46, %cst_30 [1] : vector<16x32xf32> to vector<16xf32>
    %50 = vector.shape_cast %49 : vector<16xf32> to vector<16x1xf32>
    %cst_31 = arith.constant 3.200000e+01 : f32
    %51 = vector.broadcast %cst_31 : f32 to vector<16x1xf32>
    %52 = arith.divf %50, %51 : vector<16x1xf32>
    %53 = vector.broadcast %52 : vector<16x1xf32> to vector<16x32xf32>
    %54 = arith.subf %46, %53 : vector<16x32xf32>
    %55 = arith.mulf %54, %54 : vector<16x32xf32>
    %cst_32 = arith.constant dense<0.000000e+00> : vector<16xf32>
    %56 = vector.multi_reduction <add>, %55, %cst_32 [1] : vector<16x32xf32> to vector<16xf32>
    %57 = vector.shape_cast %56 : vector<16xf32> to vector<16x1xf32>
    %cst_33 = arith.constant 3.200000e+01 : f32
    %58 = vector.broadcast %cst_33 : f32 to vector<16x1xf32>
    %59 = arith.divf %57, %58 : vector<16x1xf32>
    %60 = vector.broadcast %52 : vector<16x1xf32> to vector<16x32xf32>
    %61 = arith.subf %46, %60 : vector<16x32xf32>
    %cst_34 = arith.constant 9.99999974E-6 : f32
    %62 = vector.broadcast %cst_34 : f32 to vector<16x1xf32>
    %63 = arith.addf %59, %62 : vector<16x1xf32>
    %64 = math.rsqrt %63 : vector<16x1xf32>
    %65 = vector.broadcast %64 : vector<16x1xf32> to vector<16x32xf32>
    %66 = arith.mulf %61, %65 : vector<16x32xf32>
    %67 = vector.broadcast %47 : vector<1x32xf32> to vector<16x32xf32>
    %68 = arith.mulf %66, %67 : vector<16x32xf32>
    %69 = vector.broadcast %48 : vector<1x32xf32> to vector<16x32xf32>
    %70 = arith.addf %68, %69 : vector<16x32xf32>
    %c0_35 = arith.constant 0 : index
    %c0_36 = arith.constant 0 : index
    %71 = vector.load %arg2[%c0_35, %c0_36] : memref<16x32xf32, #tpu.memory_space<vmem>>, vector<16x32xf32>
    %72 = arith.addf %71, %45 : vector<16x32xf32>
    %73 = arith.addf %72, %70 : vector<16x32xf32>
    %74 = arith.addf %73, %44 : vector<16x32xf32>
    %c0_37 = arith.constant 0 : index
    %c0_38 = arith.constant 0 : index
    %75 = vector.load %arg12[%c0_37, %c0_38] : memref<32x16xbf16, #tpu.memory_space<vmem>>, vector<32x16xbf16>
    %76 = arith.truncf %74 : vector<16x32xf32> to vector<16x32xbf16>
    %cst_39 = arith.constant dense<0.000000e+00> : vector<16x16xf32>
    %77 = tpu.matmul %76, %75, %cst_39 {dimension_numbers = #tpu.dot_dimension_numbers<[1], [0], [0], [1], [0, 0, 1, 1], [], []>} : vector<16x32xbf16>, vector<32x16xbf16>, vector<16x16xf32> -> vector<16x16xf32>
    %c0_40 = arith.constant 0 : index
    %c0_41 = arith.constant 0 : index
    %78 = vector.load %arg13[%c0_40, %c0_41] : memref<1x16xf32, #tpu.memory_space<vmem>>, vector<1x16xf32>
    %79 = vector.broadcast %78 : vector<1x16xf32> to vector<16x16xf32>
    %80 = arith.addf %77, %79 : vector<16x16xf32>
    %c0_42 = arith.constant 0 : index
    %c0_43 = arith.constant 0 : index
    %81 = vector.load %arg14[%c0_42, %c0_43] : memref<32x4xbf16, #tpu.memory_space<vmem>>, vector<32x4xbf16>
    %82 = arith.truncf %45 : vector<16x32xf32> to vector<16x32xbf16>
    %cst_44 = arith.constant dense<0.000000e+00> : vector<16x4xf32>
    %83 = tpu.matmul %82, %81, %cst_44 {dimension_numbers = #tpu.dot_dimension_numbers<[1], [0], [0], [1], [0, 0, 1, 1], [], []>} : vector<16x32xbf16>, vector<32x4xbf16>, vector<16x4xf32> -> vector<16x4xf32>
    %c0_45 = arith.constant 0 : index
    %c0_46 = arith.constant 0 : index
    %84 = vector.load %arg15[%c0_45, %c0_46] : memref<1x4xf32, #tpu.memory_space<vmem>>, vector<1x4xf32>
    %85 = vector.broadcast %84 : vector<1x4xf32> to vector<16x4xf32>
    %86 = arith.addf %83, %85 : vector<16x4xf32>
    %cst_47 = arith.constant dense<0xFF800000> : vector<16xf32>
    %87 = vector.multi_reduction <maximumf>, %80, %cst_47 [1] : vector<16x16xf32> to vector<16xf32>
    %88 = vector.shape_cast %87 : vector<16xf32> to vector<16x1xf32>
    %89 = vector.broadcast %88 : vector<16x1xf32> to vector<16x16xf32>
    %90 = arith.subf %80, %89 : vector<16x16xf32>
    %91 = math.exp %90 : vector<16x16xf32>
    %cst_48 = arith.constant dense<0.000000e+00> : vector<16xf32>
    %92 = vector.multi_reduction <add>, %91, %cst_48 [1] : vector<16x16xf32> to vector<16xf32>
    %93 = vector.shape_cast %92 : vector<16xf32> to vector<16x1xf32>
    %94 = vector.broadcast %93 : vector<16x1xf32> to vector<16x16xf32>
    %95 = arith.divf %91, %94 : vector<16x16xf32>
    %cst_49 = arith.constant dense<0xFF800000> : vector<16xf32>
    %96 = vector.multi_reduction <maximumf>, %86, %cst_49 [1] : vector<16x4xf32> to vector<16xf32>
    %97 = vector.shape_cast %96 : vector<16xf32> to vector<16x1xf32>
    %98 = vector.broadcast %97 : vector<16x1xf32> to vector<16x4xf32>
    %99 = arith.subf %86, %98 : vector<16x4xf32>
    %100 = math.exp %99 : vector<16x4xf32>
    %cst_50 = arith.constant dense<0.000000e+00> : vector<16xf32>
    %101 = vector.multi_reduction <add>, %100, %cst_50 [1] : vector<16x4xf32> to vector<16xf32>
    %102 = vector.shape_cast %101 : vector<16xf32> to vector<16x1xf32>
    %103 = vector.broadcast %102 : vector<16x1xf32> to vector<16x4xf32>
    %104 = arith.divf %100, %103 : vector<16x4xf32>
    %105 = tpu.iota {dimensions = array<i32: 1>} : vector<16x4xi32>
    %c1_i32 = arith.constant 1 : i32
    %106 = vector.broadcast %c1_i32 : i32 to vector<16x4xi32>
    %107 = arith.cmpi eq, %105, %106 : vector<16x4xi32>
    %cst_51 = arith.constant 0.000000e+00 : f32
    %108 = vector.broadcast %cst_51 : f32 to vector<16x4xf32>
    %109 = arith.select %107, %104, %108 : vector<16x4xi1>, vector<16x4xf32>
    %cst_52 = arith.constant dense<0.000000e+00> : vector<16xf32>
    %110 = vector.multi_reduction <add>, %109, %cst_52 [1] : vector<16x4xf32> to vector<16xf32>
    %111 = vector.shape_cast %110 : vector<16xf32> to vector<16x1xf32>
    %c0_53 = arith.constant 0 : index
    %c0_54 = arith.constant 0 : index
    %112 = vector.load %arg16[%c0_53, %c0_54] : memref<16x1xf32, #tpu.memory_space<vmem>>, vector<16x1xf32>
    %113 = arith.mulf %111, %112 : vector<16x1xf32>
    %114 = tpu.iota {dimensions = array<i32: 0>} : vector<8x1xi32>
    %115 = arith.sitofp %114 : vector<8x1xi32> to vector<8x1xf32>
    %116 = vector.extract_strided_slice %113 {offsets = [0, 0], sizes = [8, 1], strides = [1, 1]} : vector<16x1xf32> to vector<8x1xf32>
    %cst_55 = arith.constant dense<0xFF800000> : vector<1xf32>
    %117 = vector.multi_reduction <maximumf>, %116, %cst_55 [0] : vector<8x1xf32> to vector<1xf32>
    %118 = vector.shape_cast %117 : vector<1xf32> to vector<1x1xf32>
    %119 = vector.broadcast %118 : vector<1x1xf32> to vector<8x1xf32>
    %120 = arith.cmpf oeq, %116, %119 : vector<8x1xf32>
    %cst_56 = arith.constant 8.000000e+00 : f32
    %121 = vector.broadcast %cst_56 : f32 to vector<8x1xf32>
    %122 = arith.select %120, %115, %121 : vector<8x1xi1>, vector<8x1xf32>
    %cst_57 = arith.constant dense<0x7F800000> : vector<1xf32>
    %123 = vector.multi_reduction <minimumf>, %122, %cst_57 [0] : vector<8x1xf32> to vector<1xf32>
    %124 = vector.shape_cast %123 : vector<1xf32> to vector<1x1xf32>
    %125 = vector.extract_strided_slice %113 {offsets = [8, 0], sizes = [8, 1], strides = [1, 1]} : vector<16x1xf32> to vector<8x1xf32>
    %cst_58 = arith.constant dense<0xFF800000> : vector<1xf32>
    %126 = vector.multi_reduction <maximumf>, %125, %cst_58 [0] : vector<8x1xf32> to vector<1xf32>
    %127 = vector.shape_cast %126 : vector<1xf32> to vector<1x1xf32>
    %128 = vector.broadcast %127 : vector<1x1xf32> to vector<8x1xf32>
    %129 = arith.cmpf oeq, %125, %128 : vector<8x1xf32>
    %cst_59 = arith.constant 8.000000e+00 : f32
    %130 = vector.broadcast %cst_59 : f32 to vector<8x1xf32>
    %131 = arith.select %129, %115, %130 : vector<8x1xi1>, vector<8x1xf32>
    %cst_60 = arith.constant dense<0x7F800000> : vector<1xf32>
    %132 = vector.multi_reduction <minimumf>, %131, %cst_60 [0] : vector<8x1xf32> to vector<1xf32>
    %133 = vector.shape_cast %132 : vector<1xf32> to vector<1x1xf32>
    %134 = tpu.concatenate %118, %127 in 0 : vector<1x1xf32>, vector<1x1xf32> -> vector<2x1xf32>
    %135 = tpu.concatenate %124, %133 in 0 : vector<1x1xf32>, vector<1x1xf32> -> vector<2x1xf32>
    %c0_61 = arith.constant 0 : index
    %c0_62 = arith.constant 0 : index
    %136 = vector.load %arg17[%c0_61, %c0_62] : memref<16x1xi32, #tpu.memory_space<vmem>>, vector<16x1xi32>
    %cst_63 = arith.constant dense<0xFF800000> : vector<16xf32>
    %137 = vector.multi_reduction <maximumf>, %80, %cst_63 [1] : vector<16x16xf32> to vector<16xf32>
    %138 = vector.shape_cast %137 : vector<16xf32> to vector<16x1xf32>
    %139 = vector.broadcast %138 : vector<16x1xf32> to vector<16x16xf32>
    %140 = arith.subf %80, %139 : vector<16x16xf32>
    %141 = math.exp %140 : vector<16x16xf32>
    %cst_64 = arith.constant dense<0.000000e+00> : vector<16xf32>
    %142 = vector.multi_reduction <add>, %141, %cst_64 [1] : vector<16x16xf32> to vector<16xf32>
    %143 = vector.shape_cast %142 : vector<16xf32> to vector<16x1xf32>
    %144 = math.log %143 : vector<16x1xf32>
    %145 = arith.addf %144, %138 : vector<16x1xf32>
    %146 = tpu.iota {dimensions = array<i32: 1>} : vector<16x16xi32>
    %147 = vector.broadcast %136 : vector<16x1xi32> to vector<16x16xi32>
    %148 = arith.cmpi eq, %146, %147 : vector<16x16xi32>
    %cst_65 = arith.constant 0.000000e+00 : f32
    %149 = vector.broadcast %cst_65 : f32 to vector<16x16xf32>
    %150 = arith.select %148, %80, %149 : vector<16x16xi1>, vector<16x16xf32>
    %cst_66 = arith.constant dense<0.000000e+00> : vector<16xf32>
    %151 = vector.multi_reduction <add>, %150, %cst_66 [1] : vector<16x16xf32> to vector<16xf32>
    %152 = vector.shape_cast %151 : vector<16xf32> to vector<16x1xf32>
    %c-1_i32 = arith.constant -1 : i32
    %153 = vector.broadcast %c-1_i32 : i32 to vector<16x1xi32>
    %154 = arith.cmpi ne, %136, %153 : vector<16x1xi32>
    %155 = arith.extui %154 : vector<16x1xi1> to vector<16x1xi32>
    %156 = arith.sitofp %155 : vector<16x1xi32> to vector<16x1xf32>
    %157 = arith.subf %145, %152 : vector<16x1xf32>
    %158 = arith.mulf %157, %156 : vector<16x1xf32>
    %cst_67 = arith.constant dense<0.000000e+00> : vector<1xf32>
    %159 = vector.multi_reduction <add>, %158, %cst_67 [0] : vector<16x1xf32> to vector<1xf32>
    %160 = vector.shape_cast %159 : vector<1xf32> to vector<1x1xf32>
    %cst_68 = arith.constant dense<0.000000e+00> : vector<1xf32>
    %161 = vector.multi_reduction <add>, %156, %cst_68 [0] : vector<16x1xf32> to vector<1xf32>
    %162 = vector.shape_cast %161 : vector<1xf32> to vector<1x1xf32>
    %cst_69 = arith.constant 1.000000e+00 : f32
    %163 = vector.broadcast %cst_69 : f32 to vector<1x1xf32>
    %164 = arith.maximumf %162, %163 : vector<1x1xf32>
    %165 = arith.divf %160, %164 : vector<1x1xf32>
    %cst_70 = arith.constant 5.000000e-01 : f32
    %166 = vector.broadcast %cst_70 : f32 to vector<1x1xf32>
    %167 = arith.mulf %166, %165 : vector<1x1xf32>
    %c0_71 = arith.constant 0 : index
    %c0_72 = arith.constant 0 : index
    %168 = vector.load %arg18[%c0_71, %c0_72] : memref<16x1xi32, #tpu.memory_space<vmem>>, vector<16x1xi32>
    %cst_73 = arith.constant dense<0xFF800000> : vector<16xf32>
    %169 = vector.multi_reduction <maximumf>, %86, %cst_73 [1] : vector<16x4xf32> to vector<16xf32>
    %170 = vector.shape_cast %169 : vector<16xf32> to vector<16x1xf32>
    %171 = vector.broadcast %170 : vector<16x1xf32> to vector<16x4xf32>
    %172 = arith.subf %86, %171 : vector<16x4xf32>
    %173 = math.exp %172 : vector<16x4xf32>
    %cst_74 = arith.constant dense<0.000000e+00> : vector<16xf32>
    %174 = vector.multi_reduction <add>, %173, %cst_74 [1] : vector<16x4xf32> to vector<16xf32>
    %175 = vector.shape_cast %174 : vector<16xf32> to vector<16x1xf32>
    %176 = math.log %175 : vector<16x1xf32>
    %177 = arith.addf %176, %170 : vector<16x1xf32>
    %178 = tpu.iota {dimensions = array<i32: 1>} : vector<16x4xi32>
    %179 = vector.broadcast %168 : vector<16x1xi32> to vector<16x4xi32>
    %180 = arith.cmpi eq, %178, %179 : vector<16x4xi32>
    %cst_75 = arith.constant 0.000000e+00 : f32
    %181 = vector.broadcast %cst_75 : f32 to vector<16x4xf32>
    %182 = arith.select %180, %86, %181 : vector<16x4xi1>, vector<16x4xf32>
    %cst_76 = arith.constant dense<0.000000e+00> : vector<16xf32>
    %183 = vector.multi_reduction <add>, %182, %cst_76 [1] : vector<16x4xf32> to vector<16xf32>
    %184 = vector.shape_cast %183 : vector<16xf32> to vector<16x1xf32>
    %c-1_i32_77 = arith.constant -1 : i32
    %185 = vector.broadcast %c-1_i32_77 : i32 to vector<16x1xi32>
    %186 = arith.cmpi ne, %168, %185 : vector<16x1xi32>
    %187 = arith.extui %186 : vector<16x1xi1> to vector<16x1xi32>
    %188 = arith.sitofp %187 : vector<16x1xi32> to vector<16x1xf32>
    %189 = arith.subf %177, %184 : vector<16x1xf32>
    %190 = arith.mulf %189, %188 : vector<16x1xf32>
    %cst_78 = arith.constant dense<0.000000e+00> : vector<1xf32>
    %191 = vector.multi_reduction <add>, %190, %cst_78 [0] : vector<16x1xf32> to vector<1xf32>
    %192 = vector.shape_cast %191 : vector<1xf32> to vector<1x1xf32>
    %cst_79 = arith.constant dense<0.000000e+00> : vector<1xf32>
    %193 = vector.multi_reduction <add>, %188, %cst_79 [0] : vector<16x1xf32> to vector<1xf32>
    %194 = vector.shape_cast %193 : vector<1xf32> to vector<1x1xf32>
    %cst_80 = arith.constant 1.000000e+00 : f32
    %195 = vector.broadcast %cst_80 : f32 to vector<1x1xf32>
    %196 = arith.maximumf %194, %195 : vector<1x1xf32>
    %197 = arith.divf %192, %196 : vector<1x1xf32>
    %cst_81 = arith.constant 5.000000e-01 : f32
    %198 = vector.broadcast %cst_81 : f32 to vector<1x1xf32>
    %199 = arith.mulf %198, %197 : vector<1x1xf32>
    %200 = arith.addf %167, %199 : vector<1x1xf32>
    %cst_82 = arith.constant 0.000000e+00 : f32
    %201 = vector.broadcast %cst_82 : f32 to vector<16x12xf32>
    %cst_83 = arith.constant 0.000000e+00 : f32
    %202 = vector.broadcast %cst_83 : f32 to vector<16x12xf32>
    %cst_84 = arith.constant 0.000000e+00 : f32
    %203 = vector.broadcast %cst_84 : f32 to vector<14x1xf32>
    %204 = tpu.concatenate %134, %203 in 0 : vector<2x1xf32>, vector<14x1xf32> -> vector<16x1xf32>
    %cst_85 = arith.constant 0.000000e+00 : f32
    %205 = vector.broadcast %cst_85 : f32 to vector<14x1xf32>
    %206 = tpu.concatenate %135, %205 in 0 : vector<2x1xf32>, vector<14x1xf32> -> vector<16x1xf32>
    %cst_86 = arith.constant 0.000000e+00 : f32
    %207 = vector.broadcast %cst_86 : f32 to vector<15x1xf32>
    %208 = tpu.concatenate %200, %207 in 0 : vector<1x1xf32>, vector<15x1xf32> -> vector<16x1xf32>
    %cst_87 = arith.constant 0.000000e+00 : f32
    %209 = vector.broadcast %cst_87 : f32 to vector<16x61xf32>
    %210 = tpu.concatenate %80, %86, %201, %95, %104, %202, %204, %206, %208, %209 in 1 : vector<16x16xf32>, vector<16x4xf32>, vector<16x12xf32>, vector<16x16xf32>, vector<16x4xf32>, vector<16x12xf32>, vector<16x1xf32>, vector<16x1xf32>, vector<16x1xf32>, vector<16x61xf32> -> vector<16x128xf32>
    %c0_88 = arith.constant 0 : index
    %c0_89 = arith.constant 0 : index
    %211 = vector.load %arg19[%c0_88, %c0_89] : memref<16x128xf32, #tpu.memory_space<vmem>>, vector<16x128xf32>
    tpu.vector_store %arg19[%c0_88, %c0_89], %210 {strides = array<i32>} : memref<16x128xf32, #tpu.memory_space<vmem>>, vector<16x128xf32>,
    return
  }
  func.func @transform_0(%arg0: i32) -> (i32, i32) {
    %c0_i32 = arith.constant 0 : i32
    %c0_i32_0 = arith.constant 0 : i32
    %c0_i32_1 = arith.constant 0 : i32
    return %c0_i32, %c0_i32_0 : i32, i32
  }
  func.func @transform_1(%arg0: i32) -> (i32, i32) {
    %c0_i32 = arith.constant 0 : i32
    %c0_i32_0 = arith.constant 0 : i32
    %c0_i32_1 = arith.constant 0 : i32
    return %c0_i32, %c0_i32_0 : i32, i32
  }
  func.func @transform_2(%arg0: i32) -> (i32, i32) {
    %c0_i32 = arith.constant 0 : i32
    %c0_i32_0 = arith.constant 0 : i32
    %c0_i32_1 = arith.constant 0 : i32
    return %c0_i32, %c0_i32_0 : i32, i32
  }
  func.func @transform_3(%arg0: i32) -> (i32, i32) {
    %c0_i32 = arith.constant 0 : i32
    %c0_i32_0 = arith.constant 0 : i32
    %c0_i32_1 = arith.constant 0 : i32
    return %c0_i32, %c0_i32_0 : i32, i32
  }
  func.func @transform_4(%arg0: i32) -> (i32, i32) {
    %c0_i32 = arith.constant 0 : i32
    %c0_i32_0 = arith.constant 0 : i32
    %c0_i32_1 = arith.constant 0 : i32
    return %c0_i32, %c0_i32_0 : i32, i32
  }
  func.func @transform_5(%arg0: i32) -> (i32, i32) {
    %c0_i32 = arith.constant 0 : i32
    %c0_i32_0 = arith.constant 0 : i32
    %c0_i32_1 = arith.constant 0 : i32
    return %c0_i32, %c0_i32_0 : i32, i32
  }
  func.func @transform_6(%arg0: i32) -> (i32, i32) {
    %c0_i32 = arith.constant 0 : i32
    %c0_i32_0 = arith.constant 0 : i32
    %c0_i32_1 = arith.constant 0 : i32
    return %c0_i32, %c0_i32_0 : i32, i32
  }
  func.func @transform_7(%arg0: i32) -> (i32, i32) {
    %c0_i32 = arith.constant 0 : i32
    %c0_i32_0 = arith.constant 0 : i32
    %c0_i32_1 = arith.constant 0 : i32
    return %c0_i32, %c0_i32_0 : i32, i32
  }
  func.func @transform_8(%arg0: i32) -> (i32, i32) {
    %c0_i32 = arith.constant 0 : i32
    %c0_i32_0 = arith.constant 0 : i32
    %c0_i32_1 = arith.constant 0 : i32
    return %c0_i32, %c0_i32_0 : i32, i32
  }
  func.func @transform_9(%arg0: i32) -> (i32, i32) {
    %c0_i32 = arith.constant 0 : i32
    %c0_i32_0 = arith.constant 0 : i32
    %c0_i32_1 = arith.constant 0 : i32
    return %c0_i32, %c0_i32_0 : i32, i32
  }
  func.func @transform_10(%arg0: i32) -> (i32, i32) {
    %c0_i32 = arith.constant 0 : i32
    %c0_i32_0 = arith.constant 0 : i32
    %c0_i32_1 = arith.constant 0 : i32
    return %c0_i32, %c0_i32_0 : i32, i32
  }
  func.func @transform_11(%arg0: i32) -> (i32, i32) {
    %c0_i32 = arith.constant 0 : i32
    %c0_i32_0 = arith.constant 0 : i32
    %c0_i32_1 = arith.constant 0 : i32
    return %c0_i32, %c0_i32_0 : i32, i32
  }
  func.func @transform_12(%arg0: i32) -> (i32, i32) {
    %c0_i32 = arith.constant 0 : i32
    %c0_i32_0 = arith.constant 0 : i32
    %c0_i32_1 = arith.constant 0 : i32
    return %c0_i32, %c0_i32_0 : i32, i32
  }
  func.func @transform_13(%arg0: i32) -> (i32, i32) {
    %c0_i32 = arith.constant 0 : i32
    %c0_i32_0 = arith.constant 0 : i32
    %c0_i32_1 = arith.constant 0 : i32
    return %c0_i32, %c0_i32_0 : i32, i32
  }
  func.func @transform_14(%arg0: i32) -> (i32, i32) {
    %c0_i32 = arith.constant 0 : i32
    %c0_i32_0 = arith.constant 0 : i32
    %c0_i32_1 = arith.constant 0 : i32
    return %c0_i32, %c0_i32_0 : i32, i32
  }
  func.func @transform_15(%arg0: i32) -> (i32, i32) {
    %c0_i32 = arith.constant 0 : i32
    %c0_i32_0 = arith.constant 0 : i32
    %c0_i32_1 = arith.constant 0 : i32
    return %c0_i32, %c0_i32_0 : i32, i32
  }
  func.func @transform_16(%arg0: i32) -> (i32, i32) {
    %c0_i32 = arith.constant 0 : i32
    %c0_i32_0 = arith.constant 0 : i32
    %c0_i32_1 = arith.constant 0 : i32
    return %c0_i32, %c0_i32_0 : i32, i32
  }
  func.func @transform_17(%arg0: i32) -> (i32, i32) {
    %c0_i32 = arith.constant 0 : i32
    %c0_i32_0 = arith.constant 0 : i32
    %c0_i32_1 = arith.constant 0 : i32
    return %c0_i32, %c0_i32_0 : i32, i32
  }
  func.func @transform_18(%arg0: i32) -> (i32, i32) {
    %c0_i32 = arith.constant 0 : i32
    %c0_i32_0 = arith.constant 0 : i32
    %c0_i32_1 = arith.constant 0 : i32
    return %c0_i32, %c0_i32_0 : i32, i32
  }
}

</mosaic_0001>

<llo_original>
// kernel: mectec_forward.3
$region0: #{mectec_forward.3}
  #allocation0 [shape = 'u32[]', space=smem, size = 0x4, offset = 0x4, fixed_abs, tag = 'smem constant byte address 0x4 - core index']
  #allocation1 [shape = 'u32[144,128]{1,0:T(1,128)}', space=vmem, size = 0x12000, scoped, tag = 'internal scratch']
  #allocation2 [shape = 'f32[16,32]{1,0:T(8,128)}', space=vmem, size = 0x2000, scoped, tag = 'scratch operand']
  %s0 = inlined_call_operand.vmem [shape: f32[16,32], index: 0, kind: input, shape index: {}]
  %s1 = inlined_call_operand.vmem [shape: f32[16,32], index: 1, kind: input, shape index: {}]
  %s2 = inlined_call_operand.vmem [shape: f32[16,16], index: 2, kind: input, shape index: {}]
  %s3 = inlined_call_operand.vmem [shape: f32[2,32], index: 3, kind: input, shape index: {}]
  %s4 = inlined_call_operand.vmem [shape: bf16[32,32], index: 4, kind: input, shape index: {}]
  %s5 = inlined_call_operand.vmem [shape: f32[1,32], index: 5, kind: input, shape index: {}]
  %s6 = inlined_call_operand.vmem [shape: bf16[2,32,96], index: 6, kind: input, shape index: {}]
  %s7 = inlined_call_operand.vmem [shape: f32[2,1,96], index: 7, kind: input, shape index: {}]
  %s8 = inlined_call_operand.vmem [shape: bf16[2,32,32], index: 8, kind: input, shape index: {}]
  %s9 = inlined_call_operand.vmem [shape: f32[2,1,32], index: 9, kind: input, shape index: {}]
  %s10 = inlined_call_operand.vmem [shape: f32[2,2,32], index: 10, kind: input, shape index: {}]
  %s11 = inlined_call_operand.vmem [shape: bf16[2,32,64], index: 11, kind: input, shape index: {}]
  %s12 = inlined_call_operand.vmem [shape: f32[2,1,64], index: 12, kind: input, shape index: {}]
  %s13 = inlined_call_operand.vmem [shape: bf16[2,64,32], index: 13, kind: input, shape index: {}]
  %s14 = inlined_call_operand.vmem [shape: f32[2,1,32], index: 14, kind: input, shape index: {}]
  %s15 = inlined_call_operand.vmem [shape: f32[2,2,32], index: 15, kind: input, shape index: {}]
  %s16 = inlined_call_operand.vmem [shape: f32[16,32], index: 16, kind: output, shape index: {0}]
  %s17 = inlined_call_operand.vmem [shape: f32[16,32], index: 17, kind: output, shape index: {1}]
  %18 = xla_tuple %s16, %s17
  %s19 = sld [smem:[#allocation0]]
  $region113: #{mectec_forward.3} parent=0
    _
  %s21 = ssub.s32 1, %s19
  %s22 = scalar_select 0, %s21, %s19
  loop: start=0, step=1, limit=4
  $region2: #{mectec_forward.3} parent=0 // loop_pre_header
    _
  $region3: #{mectec_forward.3} parent=0 // loop_header
    %s24 = sphi 0, %s28
    %p25 = scmp.ge.s32.totalorder %s24, 4
    %s32 = sphi 0, %s32
    %s34 = sphi 0, %s32
    %s35 = sphi 0, %s34
    %s49 = sphi 0, %s35
    %s53 = sphi 0, %s53
    %s55 = sphi 0, %s53
    %s56 = sphi 0, %s55
    %s70 = sphi 0, %s56
    %s74 = sphi 0, %s74
    %s76 = sphi 0, %s74
    %s77 = sphi 0, %s76
    %s91 = sphi 0, %s77
    %s95 = sphi 0, %s95
    %s97 = sphi 0, %s95
    %s98 = sphi 0, %s97
    %s112 = sphi 0, %s98
    %s116 = sphi 0, %s116
    %s118 = sphi 0, %s116
    %s119 = sphi 0, %s118
    %s133 = sphi 0, %s119
    %s137 = sphi 0, %s137
    %s139 = sphi 0, %s137
    %s140 = sphi 0, %s139
    %s154 = sphi 0, %s140
    %s160 = sphi 0, %s162
    %s163 = sphi 0, %s160
    %s164 = sphi 0, %s163
    %s180 = sphi 0, %s164
    %s186 = sphi 0, %s188
    %s189 = sphi 0, %s186
    %s190 = sphi 0, %s189
    %s206 = sphi 0, %s190
    %s212 = sphi 0, %s214
    %s215 = sphi 0, %s212
    %s216 = sphi 0, %s215
    %s232 = sphi 0, %s216
    %s238 = sphi 0, %s240
    %s241 = sphi 0, %s238
    %s242 = sphi 0, %s241
    %s258 = sphi 0, %s242
    %s264 = sphi 0, %s266
    %s267 = sphi 0, %s264
    %s268 = sphi 0, %s267
    %s284 = sphi 0, %s268
    %s290 = sphi 0, %s292
    %s293 = sphi 0, %s290
    %s294 = sphi 0, %s293
    %s310 = sphi 0, %s294
    %s316 = sphi 0, %s318
    %s319 = sphi 0, %s316
    %s320 = sphi 0, %s319
    %s336 = sphi 0, %s320
    %s342 = sphi 0, %s344
    %s345 = sphi 0, %s342
    %s346 = sphi 0, %s345
    %s362 = sphi 0, %s346
    %s368 = sphi 0, %s370
    %s371 = sphi 0, %s368
    %s372 = sphi 0, %s371
    %s388 = sphi 0, %s372
    %s394 = sphi 0, %s396
    %s397 = sphi 0, %s394
    %s398 = sphi 0, %s397
    %s414 = sphi 0, %s398
    %s418 = sphi 0, %s418
    %s420 = sphi 0, %s418
    %s421 = sphi 0, %s420
    %s435 = sphi 0, %s421
    %s439 = sphi 0, %s439
    %s441 = sphi 0, %s439
    %s442 = sphi 0, %s441
    %s456 = sphi 0, %s442
  $region4: #{mectec_forward.3} parent=0 // loop_header_branch
    %27 = sbr.rel (%p25) target = $region8
  $region5: #{mectec_forward.3} parent=0 // loop_body
    %s29 = ssub.s32 %s24, 1
    %s30 = ssub.s32 %s24, 2
    %s31 = sadd.s32 %s24, 1
    %s33 = sadd.s32 %s32, 1
    %p36 = scmp.eq.s32.totalorder %s24, 1
    %p37 = scmp.ne.s32.totalorder %s32, %s34
    %p38 = scmp.eq.s32.totalorder %s24, 0
    %p39 = por %p37, %p38
    %p40 = scmp.ne.s32.totalorder %s32, %s34
    %p41 = scmp.eq.s32.totalorder %s29, 1
    %p42 = por %p40, %p41
    %p43 = scmp.ne.s32.totalorder %s34, %s35
    %p44 = scmp.eq.s32.totalorder %s29, 0
    %p45 = por %p43, %p44
    %p46 = scmp.ne.s32.totalorder %s34, %s35
    %p47 = scmp.eq.s32.totalorder %s30, 1
    %p48 = por %p46, %p47
    %p50 = scmp.ne.s32.totalorder %s35, %s49
    %p51 = scmp.eq.s32.totalorder %s30, 0
    %p52 = por %p50, %p51
    %s54 = sadd.s32 %s53, 1
    %p57 = scmp.eq.s32.totalorder %s24, 1
    %p58 = scmp.ne.s32.totalorder %s53, %s55
    %p59 = scmp.eq.s32.totalorder %s24, 0
    %p60 = por %p58, %p59
    %p61 = scmp.ne.s32.totalorder %s53, %s55
    %p62 = scmp.eq.s32.totalorder %s29, 1
    %p63 = por %p61, %p62
    %p64 = scmp.ne.s32.totalorder %s55, %s56
    %p65 = scmp.eq.s32.totalorder %s29, 0
    %p66 = por %p64, %p65
    %p67 = scmp.ne.s32.totalorder %s55, %s56
    %p68 = scmp.eq.s32.totalorder %s30, 1
    %p69 = por %p67, %p68
    %p71 = scmp.ne.s32.totalorder %s56, %s70
    %p72 = scmp.eq.s32.totalorder %s30, 0
    %p73 = por %p71, %p72
    %s75 = sadd.s32 %s74, 1
    %p78 = scmp.eq.s32.totalorder %s24, 1
    %p79 = scmp.ne.s32.totalorder %s74, %s76
    %p80 = scmp.eq.s32.totalorder %s24, 0
    %p81 = por %p79, %p80
    %p82 = scmp.ne.s32.totalorder %s74, %s76
    %p83 = scmp.eq.s32.totalorder %s29, 1
    %p84 = por %p82, %p83
    %p85 = scmp.ne.s32.totalorder %s76, %s77
    %p86 = scmp.eq.s32.totalorder %s29, 0
    %p87 = por %p85, %p86
    %p88 = scmp.ne.s32.totalorder %s76, %s77
    %p89 = scmp.eq.s32.totalorder %s30, 1
    %p90 = por %p88, %p89
    %p92 = scmp.ne.s32.totalorder %s77, %s91
    %p93 = scmp.eq.s32.totalorder %s30, 0
    %p94 = por %p92, %p93
    %s96 = sadd.s32 %s95, 1
    %p99 = scmp.eq.s32.totalorder %s24, 1
    %p100 = scmp.ne.s32.totalorder %s95, %s97
    %p101 = scmp.eq.s32.totalorder %s24, 0
    %p102 = por %p100, %p101
    %p103 = scmp.ne.s32.totalorder %s95, %s97
    %p104 = scmp.eq.s32.totalorder %s29, 1
    %p105 = por %p103, %p104
    %p106 = scmp.ne.s32.totalorder %s97, %s98
    %p107 = scmp.eq.s32.totalorder %s29, 0
    %p108 = por %p106, %p107
    %p109 = scmp.ne.s32.totalorder %s97, %s98
    %p110 = scmp.eq.s32.totalorder %s30, 1
    %p111 = por %p109, %p110
    %p113 = scmp.ne.s32.totalorder %s98, %s112
    %p114 = scmp.eq.s32.totalorder %s30, 0
    %p115 = por %p113, %p114
    %s117 = sadd.s32 %s116, 1
    %p120 = scmp.eq.s32.totalorder %s24, 1
    %p121 = scmp.ne.s32.totalorder %s116, %s118
    %p122 = scmp.eq.s32.totalorder %s24, 0
    %p123 = por %p121, %p122
    %p124 = scmp.ne.s32.totalorder %s116, %s118
    %p125 = scmp.eq.s32.totalorder %s29, 1
    %p126 = por %p124, %p125
    %p127 = scmp.ne.s32.totalorder %s118, %s119
    %p128 = scmp.eq.s32.totalorder %s29, 0
    %p129 = por %p127, %p128
    %p130 = scmp.ne.s32.totalorder %s118, %s119
    %p131 = scmp.eq.s32.totalorder %s30, 1
    %p132 = por %p130, %p131
    %p134 = scmp.ne.s32.totalorder %s119, %s133
    %p135 = scmp.eq.s32.totalorder %s30, 0
    %p136 = por %p134, %p135
    %s138 = sadd.s32 %s137, 1
    %p141 = scmp.eq.s32.totalorder %s24, 1
    %p142 = scmp.ne.s32.totalorder %s137, %s139
    %p143 = scmp.eq.s32.totalorder %s24, 0
    %p144 = por %p142, %p143
    %p145 = scmp.ne.s32.totalorder %s137, %s139
    %p146 = scmp.eq.s32.totalorder %s29, 1
    %p147 = por %p145, %p146
    %p148 = scmp.ne.s32.totalorder %s139, %s140
    %p149 = scmp.eq.s32.totalorder %s29, 0
    %p150 = por %p148, %p149
    %p151 = scmp.ne.s32.totalorder %s139, %s140
    %p152 = scmp.eq.s32.totalorder %s30, 1
    %p153 = por %p151, %p152
    %p155 = scmp.ne.s32.totalorder %s140, %s154
    %p156 = scmp.eq.s32.totalorder %s30, 0
    %p157 = por %p155, %p156
    %s158 = ssub.s32 %s24, %s31
    %p159 = scmp.eq.s32.totalorder %s158, 0
    %s161 = sadd.s32 %s160, 1
    %s162 = scalar_select %p159, %s160, %s161
    %p165 = pneg %p159
    %p166 = scmp.eq.s32.totalorder %s24, 1
    %p167 = por %p165, %p166
    %p168 = scmp.ne.s32.totalorder %s160, %s163
    %p169 = scmp.eq.s32.totalorder %s24, 0
    %p170 = por %p168, %p169
    %p171 = scmp.ne.s32.totalorder %s160, %s163
    %p172 = scmp.eq.s32.totalorder %s29, 1
    %p173 = por %p171, %p172
    %p174 = scmp.ne.s32.totalorder %s163, %s164
    %p175 = scmp.eq.s32.totalorder %s29, 0
    %p176 = por %p174, %p175
    %p177 = scmp.ne.s32.totalorder %s163, %s164
    %p178 = scmp.eq.s32.totalorder %s30, 1
    %p179 = por %p177, %p178
    %p181 = scmp.ne.s32.totalorder %s164, %s180
    %p182 = scmp.eq.s32.totalorder %s30, 0
    %p183 = por %p181, %p182
    %s184 = ssub.s32 %s24, %s31
    %p185 = scmp.eq.s32.totalorder %s184, 0
    %s187 = sadd.s32 %s186, 1
    %s188 = scalar_select %p185, %s186, %s187
    %p191 = pneg %p185
    %p192 = scmp.eq.s32.totalorder %s24, 1
    %p193 = por %p191, %p192
    %p194 = scmp.ne.s32.totalorder %s186, %s189
    %p195 = scmp.eq.s32.totalorder %s24, 0
    %p196 = por %p194, %p195
    %p197 = scmp.ne.s32.totalorder %s186, %s189
    %p198 = scmp.eq.s32.totalorder %s29, 1
    %p199 = por %p197, %p198
    %p200 = scmp.ne.s32.totalorder %s189, %s190
    %p201 = scmp.eq.s32.totalorder %s29, 0
    %p202 = por %p200, %p201
    %p203 = scmp.ne.s32.totalorder %s189, %s190
    %p204 = scmp.eq.s32.totalorder %s30, 1
    %p205 = por %p203, %p204
    %p207 = scmp.ne.s32.totalorder %s190, %s206
    %p208 = scmp.eq.s32.totalorder %s30, 0
    %p209 = por %p207, %p208
    %s210 = ssub.s32 %s24, %s31
    %p211 = scmp.eq.s32.totalorder %s210, 0
    %s213 = sadd.s32 %s212, 1
    %s214 = scalar_select %p211, %s212, %s213
    %p217 = pneg %p211
    %p218 = scmp.eq.s32.totalorder %s24, 1
    %p219 = por %p217, %p218
    %p220 = scmp.ne.s32.totalorder %s212, %s215
    %p221 = scmp.eq.s32.totalorder %s24, 0
    %p222 = por %p220, %p221
    %p223 = scmp.ne.s32.totalorder %s212, %s215
    %p224 = scmp.eq.s32.totalorder %s29, 1
    %p225 = por %p223, %p224
    %p226 = scmp.ne.s32.totalorder %s215, %s216
    %p227 = scmp.eq.s32.totalorder %s29, 0
    %p228 = por %p226, %p227
    %p229 = scmp.ne.s32.totalorder %s215, %s216
    %p230 = scmp.eq.s32.totalorder %s30, 1
    %p231 = por %p229, %p230
    %p233 = scmp.ne.s32.totalorder %s216, %s232
    %p234 = scmp.eq.s32.totalorder %s30, 0
    %p235 = por %p233, %p234
    %s236 = ssub.s32 %s24, %s31
    %p237 = scmp.eq.s32.totalorder %s236, 0
    %s239 = sadd.s32 %s238, 1
    %s240 = scalar_select %p237, %s238, %s239
    %p243 = pneg %p237
    %p244 = scmp.eq.s32.totalorder %s24, 1
    %p245 = por %p243, %p244
    %p246 = scmp.ne.s32.totalorder %s238, %s241
    %p247 = scmp.eq.s32.totalorder %s24, 0
    %p248 = por %p246, %p247
    %p249 = scmp.ne.s32.totalorder %s238, %s241
    %p250 = scmp.eq.s32.totalorder %s29, 1
    %p251 = por %p249, %p250
    %p252 = scmp.ne.s32.totalorder %s241, %s242
    %p253 = scmp.eq.s32.totalorder %s29, 0
    %p254 = por %p252, %p253
    %p255 = scmp.ne.s32.totalorder %s241, %s242
    %p256 = scmp.eq.s32.totalorder %s30, 1
    %p257 = por %p255, %p256
    %p259 = scmp.ne.s32.totalorder %s242, %s258
    %p260 = scmp.eq.s32.totalorder %s30, 0
    %p261 = por %p259, %p260
    %s262 = ssub.s32 %s24, %s31
    %p263 = scmp.eq.s32.totalorder %s262, 0
    %s265 = sadd.s32 %s264, 1
    %s266 = scalar_select %p263, %s264, %s265
    %p269 = pneg %p263
    %p270 = scmp.eq.s32.totalorder %s24, 1
    %p271 = por %p269, %p270
    %p272 = scmp.ne.s32.totalorder %s264, %s267
    %p273 = scmp.eq.s32.totalorder %s24, 0
    %p274 = por %p272, %p273
    %p275 = scmp.ne.s32.totalorder %s264, %s267
    %p276 = scmp.eq.s32.totalorder %s29, 1
    %p277 = por %p275, %p276
    %p278 = scmp.ne.s32.totalorder %s267, %s268
    %p279 = scmp.eq.s32.totalorder %s29, 0
    %p280 = por %p278, %p279
    %p281 = scmp.ne.s32.totalorder %s267, %s268
    %p282 = scmp.eq.s32.totalorder %s30, 1
    %p283 = por %p281, %p282
    %p285 = scmp.ne.s32.totalorder %s268, %s284
    %p286 = scmp.eq.s32.totalorder %s30, 0
    %p287 = por %p285, %p286
    %s288 = ssub.s32 %s24, %s31
    %p289 = scmp.eq.s32.totalorder %s288, 0
    %s291 = sadd.s32 %s290, 1
    %s292 = scalar_select %p289, %s290, %s291
    %p295 = pneg %p289
    %p296 = scmp.eq.s32.totalorder %s24, 1
    %p297 = por %p295, %p296
    %p298 = scmp.ne.s32.totalorder %s290, %s293
    %p299 = scmp.eq.s32.totalorder %s24, 0
    %p300 = por %p298, %p299
    %p301 = scmp.ne.s32.totalorder %s290, %s293
    %p302 = scmp.eq.s32.totalorder %s29, 1
    %p303 = por %p301, %p302
    %p304 = scmp.ne.s32.totalorder %s293, %s294
    %p305 = scmp.eq.s32.totalorder %s29, 0
    %p306 = por %p304, %p305
    %p307 = scmp.ne.s32.totalorder %s293, %s294
    %p308 = scmp.eq.s32.totalorder %s30, 1
    %p309 = por %p307, %p308
    %p311 = scmp.ne.s32.totalorder %s294, %s310
    %p312 = scmp.eq.s32.totalorder %s30, 0
    %p313 = por %p311, %p312
    %s314 = ssub.s32 %s24, %s31
    %p315 = scmp.eq.s32.totalorder %s314, 0
    %s317 = sadd.s32 %s316, 1
    %s318 = scalar_select %p315, %s316, %s317
    %p321 = pneg %p315
    %p322 = scmp.eq.s32.totalorder %s24, 1
    %p323 = por %p321, %p322
    %p324 = scmp.ne.s32.totalorder %s316, %s319
    %p325 = scmp.eq.s32.totalorder %s24, 0
    %p326 = por %p324, %p325
    %p327 = scmp.ne.s32.totalorder %s316, %s319
    %p328 = scmp.eq.s32.totalorder %s29, 1
    %p329 = por %p327, %p328
    %p330 = scmp.ne.s32.totalorder %s319, %s320
    %p331 = scmp.eq.s32.totalorder %s29, 0
    %p332 = por %p330, %p331
    %p333 = scmp.ne.s32.totalorder %s319, %s320
    %p334 = scmp.eq.s32.totalorder %s30, 1
    %p335 = por %p333, %p334
    %p337 = scmp.ne.s32.totalorder %s320, %s336
    %p338 = scmp.eq.s32.totalorder %s30, 0
    %p339 = por %p337, %p338
    %s340 = ssub.s32 %s24, %s31
    %p341 = scmp.eq.s32.totalorder %s340, 0
    %s343 = sadd.s32 %s342, 1
    %s344 = scalar_select %p341, %s342, %s343
    %p347 = pneg %p341
    %p348 = scmp.eq.s32.totalorder %s24, 1
    %p349 = por %p347, %p348
    %p350 = scmp.ne.s32.totalorder %s342, %s345
    %p351 = scmp.eq.s32.totalorder %s24, 0
    %p352 = por %p350, %p351
    %p353 = scmp.ne.s32.totalorder %s342, %s345
    %p354 = scmp.eq.s32.totalorder %s29, 1
    %p355 = por %p353, %p354
    %p356 = scmp.ne.s32.totalorder %s345, %s346
    %p357 = scmp.eq.s32.totalorder %s29, 0
    %p358 = por %p356, %p357
    %p359 = scmp.ne.s32.totalorder %s345, %s346
    %p360 = scmp.eq.s32.totalorder %s30, 1
    %p361 = por %p359, %p360
    %p363 = scmp.ne.s32.totalorder %s346, %s362
    %p364 = scmp.eq.s32.totalorder %s30, 0
    %p365 = por %p363, %p364
    %s366 = ssub.s32 %s24, %s31
    %p367 = scmp.eq.s32.totalorder %s366, 0
    %s369 = sadd.s32 %s368, 1
    %s370 = scalar_select %p367, %s368, %s369
    %p373 = pneg %p367
    %p374 = scmp.eq.s32.totalorder %s24, 1
    %p375 = por %p373, %p374
    %p376 = scmp.ne.s32.totalorder %s368, %s371
    %p377 = scmp.eq.s32.totalorder %s24, 0
    %p378 = por %p376, %p377
    %p379 = scmp.ne.s32.totalorder %s368, %s371
    %p380 = scmp.eq.s32.totalorder %s29, 1
    %p381 = por %p379, %p380
    %p382 = scmp.ne.s32.totalorder %s371, %s372
    %p383 = scmp.eq.s32.totalorder %s29, 0
    %p384 = por %p382, %p383
    %p385 = scmp.ne.s32.totalorder %s371, %s372
    %p386 = scmp.eq.s32.totalorder %s30, 1
    %p387 = por %p385, %p386
    %p389 = scmp.ne.s32.totalorder %s372, %s388
    %p390 = scmp.eq.s32.totalorder %s30, 0
    %p391 = por %p389, %p390
    %s392 = ssub.s32 %s24, %s31
    %p393 = scmp.eq.s32.totalorder %s392, 0
    %s395 = sadd.s32 %s394, 1
    %s396 = scalar_select %p393, %s394, %s395
    %p399 = pneg %p393
    %p400 = scmp.eq.s32.totalorder %s24, 1
    %p401 = por %p399, %p400
    %p402 = scmp.ne.s32.totalorder %s394, %s397
    %p403 = scmp.eq.s32.totalorder %s24, 0
    %p404 = por %p402, %p403
    %p405 = scmp.ne.s32.totalorder %s394, %s397
    %p406 = scmp.eq.s32.totalorder %s29, 1
    %p407 = por %p405, %p406
    %p408 = scmp.ne.s32.totalorder %s397, %s398
    %p409 = scmp.eq.s32.totalorder %s29, 0
    %p410 = por %p408, %p409
    %p411 = scmp.ne.s32.totalorder %s397, %s398
    %p412 = scmp.eq.s32.totalorder %s30, 1
    %p413 = por %p411, %p412
    %p415 = scmp.ne.s32.totalorder %s398, %s414
    %p416 = scmp.eq.s32.totalorder %s30, 0
    %p417 = por %p415, %p416
    %s419 = sadd.s32 %s418, 1
    %p422 = scmp.eq.s32.totalorder %s24, 1
    %p423 = scmp.ne.s32.totalorder %s418, %s420
    %p424 = scmp.eq.s32.totalorder %s24, 0
    %p425 = por %p423, %p424
    %p426 = scmp.ne.s32.totalorder %s418, %s420
    %p427 = scmp.eq.s32.totalorder %s29, 1
    %p428 = por %p426, %p427
    %p429 = scmp.ne.s32.totalorder %s420, %s421
    %p430 = scmp.eq.s32.totalorder %s29, 0
    %p431 = por %p429, %p430
    %p432 = scmp.ne.s32.totalorder %s420, %s421
    %p433 = scmp.eq.s32.totalorder %s30, 1
    %p434 = por %p432, %p433
    %p436 = scmp.ne.s32.totalorder %s421, %s435
    %p437 = scmp.eq.s32.totalorder %s30, 0
    %p438 = por %p436, %p437
    %s440 = sadd.s32 %s439, 1
    %p443 = scmp.eq.s32.totalorder %s24, 1
    %p444 = scmp.ne.s32.totalorder %s439, %s441
    %p445 = scmp.eq.s32.totalorder %s24, 0
    %p446 = por %p444, %p445
    %p447 = scmp.ne.s32.totalorder %s439, %s441
    %p448 = scmp.eq.s32.totalorder %s29, 1
    %p449 = por %p447, %p448
    %p450 = scmp.ne.s32.totalorder %s441, %s442
    %p451 = scmp.eq.s32.totalorder %s29, 0
    %p452 = por %p450, %p451
    %p453 = scmp.ne.s32.totalorder %s441, %s442
    %p454 = scmp.eq.s32.totalorder %s30, 1
    %p455 = por %p453, %p454
    %p457 = scmp.ne.s32.totalorder %s442, %s456
    %p458 = scmp.eq.s32.totalorder %s30, 0
    %p459 = por %p457, %p458
    %p460 = scmp.le.s32.totalorder 1, %s24
    %p461 = scmp.lt.s32.totalorder %s24, 3
    %p462 = pnand %p460, %p461
    %p463 = pneg %p462
    // Predicated region
    $region9: #{mectec_forward.3} parent=5 // pred_check
      _
    $region10: #{mectec_forward.3} parent=5 // pred_check_branch
      %465 = sbr.rel (%p462) target = $region12
    $region11: #{mectec_forward.3} parent=5 // pred_region
      %s466 = ssub.s32 %s24, 1
      // Predicated region
      $region13: #{mectec_forward.3} parent=11 // pred_check
        %p467 = pneg %p45
      $region14: #{mectec_forward.3} parent=11 // pred_check_branch
        %469 = sbr.rel (%p467) target = $region16
      $region15: #{mectec_forward.3} parent=11 // pred_region
        _
      $region16: #{mectec_forward.3} parent=11 // pred_fallthru
        _
      // Predicated region
      $region17: #{mectec_forward.3} parent=11 // pred_check
        %p470 = pneg %p66
      $region18: #{mectec_forward.3} parent=11 // pred_check_branch
        %472 = sbr.rel (%p470) target = $region20
      $region19: #{mectec_forward.3} parent=11 // pred_region
        _
      $region20: #{mectec_forward.3} parent=11 // pred_fallthru
        _
      // Predicated region
      $region21: #{mectec_forward.3} parent=11 // pred_check
        %p473 = pneg %p87
      $region22: #{mectec_forward.3} parent=11 // pred_check_branch
        %475 = sbr.rel (%p473) target = $region24
      $region23: #{mectec_forward.3} parent=11 // pred_region
        _
      $region24: #{mectec_forward.3} parent=11 // pred_fallthru
        _
      // Predicated region
      $region25: #{mectec_forward.3} parent=11 // pred_check
        %p476 = pneg %p108
      $region26: #{mectec_forward.3} parent=11 // pred_check_branch
        %478 = sbr.rel (%p476) target = $region28
      $region27: #{mectec_forward.3} parent=11 // pred_region
        _
      $region28: #{mectec_forward.3} parent=11 // pred_fallthru
        _
      // Predicated region
      $region29: #{mectec_forward.3} parent=11 // pred_check
        %p479 = pneg %p129
      $region30: #{mectec_forward.3} parent=11 // pred_check_branch
        %481 = sbr.rel (%p479) target = $region32
      $region31: #{mectec_forward.3} parent=11 // pred_region
        _
      $region32: #{mectec_forward.3} parent=11 // pred_fallthru
        _
      // Predicated region
      $region33: #{mectec_forward.3} parent=11 // pred_check
        %p482 = pneg %p150
      $region34: #{mectec_forward.3} parent=11 // pred_check_branch
        %484 = sbr.rel (%p482) target = $region36
      $region35: #{mectec_forward.3} parent=11 // pred_region
        _
      $region36: #{mectec_forward.3} parent=11 // pred_fallthru
        _
    $region12: #{mectec_forward.3} parent=5 // pred_fallthru
      _
    %p485 = scmp.lt.s32.totalorder %s24, 2
    // Predicated region
    $region37: #{mectec_forward.3} parent=5 // pred_check
      %p486 = pneg %p485
    $region38: #{mectec_forward.3} parent=5 // pred_check_branch
      %488 = sbr.rel (%p486) target = $region40
    $region39: #{mectec_forward.3} parent=5 // pred_region
      // Predicated region
      $region41: #{mectec_forward.3} parent=39 // pred_check
        %p489 = pneg %p170
      $region42: #{mectec_forward.3} parent=39 // pred_check_branch
        %491 = sbr.rel (%p489) target = $region44
      $region43: #{mectec_forward.3} parent=39 // pred_region
        %p492 = scmp.lt.s32.totalorder %s24, 1
        %s493 = scalar_select %p492, %s24, 1
        %s494 = smul.addr %s493, 4
        %s495 = smul.addr %s494, 4
        %s496 = scalar_lea.vmem %s6, %s495
      $region44: #{mectec_forward.3} parent=39 // pred_fallthru
        _
      // Predicated region
      $region45: #{mectec_forward.3} parent=39 // pred_check
        %p497 = pneg %p196
      $region46: #{mectec_forward.3} parent=39 // pred_check_branch
        %499 = sbr.rel (%p497) target = $region48
      $region47: #{mectec_forward.3} parent=39 // pred_region
        %p500 = scmp.lt.s32.totalorder %s24, 1
        %s501 = scalar_select %p500, %s24, 1
        %s502 = scalar_lea.vmem %s7, %s501
      $region48: #{mectec_forward.3} parent=39 // pred_fallthru
        _
      // Predicated region
      $region49: #{mectec_forward.3} parent=39 // pred_check
        %p503 = pneg %p222
      $region50: #{mectec_forward.3} parent=39 // pred_check_branch
        %505 = sbr.rel (%p503) target = $region52
      $region51: #{mectec_forward.3} parent=39 // pred_region
        %p506 = scmp.lt.s32.totalorder %s24, 1
        %s507 = scalar_select %p506, %s24, 1
        %s508 = smul.addr %s507, 4
        %s509 = smul.addr %s508, 4
        %s510 = scalar_lea.vmem %s8, %s509
      $region52: #{mectec_forward.3} parent=39 // pred_fallthru
        _
      // Predicated region
      $region53: #{mectec_forward.3} parent=39 // pred_check
        %p511 = pneg %p248
      $region54: #{mectec_forward.3} parent=39 // pred_check_branch
        %513 = sbr.rel (%p511) target = $region56
      $region55: #{mectec_forward.3} parent=39 // pred_region
        %p514 = scmp.lt.s32.totalorder %s24, 1
        %s515 = scalar_select %p514, %s24, 1
        %s516 = scalar_lea.vmem %s9, %s515
      $region56: #{mectec_forward.3} parent=39 // pred_fallthru
        _
      // Predicated region
      $region57: #{mectec_forward.3} parent=39 // pred_check
        %p517 = pneg %p274
      $region58: #{mectec_forward.3} parent=39 // pred_check_branch
        %519 = sbr.rel (%p517) target = $region60
      $region59: #{mectec_forward.3} parent=39 // pred_region
        %p520 = scmp.lt.s32.totalorder %s24, 1
        %s521 = scalar_select %p520, %s24, 1
        %s522 = smul.addr %s521, 2
        %s523 = scalar_lea.vmem %s10, %s522
      $region60: #{mectec_forward.3} parent=39 // pred_fallthru
        _
      // Predicated region
      $region61: #{mectec_forward.3} parent=39 // pred_check
        %p524 = pneg %p300
      $region62: #{mectec_forward.3} parent=39 // pred_check_branch
        %526 = sbr.rel (%p524) target = $region64
      $region63: #{mectec_forward.3} parent=39 // pred_region
        %p527 = scmp.lt.s32.totalorder %s24, 1
        %s528 = scalar_select %p527, %s24, 1
        %s529 = smul.addr %s528, 4
        %s530 = smul.addr %s529, 4
        %s531 = scalar_lea.vmem %s11, %s530
      $region64: #{mectec_forward.3} parent=39 // pred_fallthru
        _
      // Predicated region
      $region65: #{mectec_forward.3} parent=39 // pred_check
        %p532 = pneg %p326
      $region66: #{mectec_forward.3} parent=39 // pred_check_branch
        %534 = sbr.rel (%p532) target = $region68
      $region67: #{mectec_forward.3} parent=39 // pred_region
        %p535 = scmp.lt.s32.totalorder %s24, 1
        %s536 = scalar_select %p535, %s24, 1
        %s537 = scalar_lea.vmem %s12, %s536
      $region68: #{mectec_forward.3} parent=39 // pred_fallthru
        _
      // Predicated region
      $region69: #{mectec_forward.3} parent=39 // pred_check
        %p538 = pneg %p352
      $region70: #{mectec_forward.3} parent=39 // pred_check_branch
        %540 = sbr.rel (%p538) target = $region72
      $region71: #{mectec_forward.3} parent=39 // pred_region
        %p541 = scmp.lt.s32.totalorder %s24, 1
        %s542 = scalar_select %p541, %s24, 1
        %s543 = smul.addr %s542, 8
        %s544 = smul.addr %s543, 4
        %s545 = scalar_lea.vmem %s13, %s544
      $region72: #{mectec_forward.3} parent=39 // pred_fallthru
        _
      // Predicated region
      $region73: #{mectec_forward.3} parent=39 // pred_check
        %p546 = pneg %p378
      $region74: #{mectec_forward.3} parent=39 // pred_check_branch
        %548 = sbr.rel (%p546) target = $region76
      $region75: #{mectec_forward.3} parent=39 // pred_region
        %p549 = scmp.lt.s32.totalorder %s24, 1
        %s550 = scalar_select %p549, %s24, 1
        %s551 = scalar_lea.vmem %s14, %s550
      $region76: #{mectec_forward.3} parent=39 // pred_fallthru
        _
      // Predicated region
      $region77: #{mectec_forward.3} parent=39 // pred_check
        %p552 = pneg %p404
      $region78: #{mectec_forward.3} parent=39 // pred_check_branch
        %554 = sbr.rel (%p552) target = $region80
      $region79: #{mectec_forward.3} parent=39 // pred_region
        %p555 = scmp.lt.s32.totalorder %s24, 1
        %s556 = scalar_select %p555, %s24, 1
        %s557 = smul.addr %s556, 2
        %s558 = scalar_lea.vmem %s15, %s557
      $region80: #{mectec_forward.3} parent=39 // pred_fallthru
        _
    $region40: #{mectec_forward.3} parent=5 // pred_fallthru
      _
    %p559 = scmp.le.s32.totalorder 1, %s24
    %p560 = scmp.lt.s32.totalorder %s24, 3
    %p561 = pnand %p559, %p560
    %p562 = pneg %p561
    // Predicated region
    $region81: #{mectec_forward.3} parent=5 // pred_check
      _
    $region82: #{mectec_forward.3} parent=5 // pred_check_branch
      %564 = sbr.rel (%p561) target = $region84
    $region83: #{mectec_forward.3} parent=5 // pred_region
      %s565 = ssub.s32 %s24, 1
      %p566 = pneg %p45
      %p567 = pneg %p42
      %p568 = pneg %p66
      %p569 = pneg %p63
      %p570 = pneg %p87
      %p571 = pneg %p84
      %p572 = pneg %p108
      %p573 = pneg %p105
      %p574 = pneg %p129
      %p575 = pneg %p126
      %p576 = pneg %p150
      %p577 = pneg %p147
      %p578 = scmp.lt.s32.totalorder %s29, 1
      %s579 = scalar_select %p578, %s29, 1
      %s580 = smul.addr %s579, 4
      %s581 = smul.addr %s580, 4
      %s582 = scalar_lea.vmem %s6, %s581
      %p583 = pneg %p176
      %p584 = pneg %p173
      %p585 = scmp.lt.s32.totalorder %s29, 1
      %s586 = scalar_select %p585, %s29, 1
      %s587 = scalar_lea.vmem %s7, %s586
      %p588 = pneg %p202
      %p589 = pneg %p199
      %p590 = scmp.lt.s32.totalorder %s29, 1
      %s591 = scalar_select %p590, %s29, 1
      %s592 = smul.addr %s591, 4
      %s593 = smul.addr %s592, 4
      %s594 = scalar_lea.vmem %s8, %s593
      %p595 = pneg %p228
      %p596 = pneg %p225
      %p597 = scmp.lt.s32.totalorder %s29, 1
      %s598 = scalar_select %p597, %s29, 1
      %s599 = scalar_lea.vmem %s9, %s598
      %p600 = pneg %p254
      %p601 = pneg %p251
      %p602 = scmp.lt.s32.totalorder %s29, 1
      %s603 = scalar_select %p602, %s29, 1
      %s604 = smul.addr %s603, 2
      %s605 = scalar_lea.vmem %s10, %s604
      %p606 = pneg %p280
      %p607 = pneg %p277
      %p608 = scmp.lt.s32.totalorder %s29, 1
      %s609 = scalar_select %p608, %s29, 1
      %s610 = smul.addr %s609, 4
      %s611 = smul.addr %s610, 4
      %s612 = scalar_lea.vmem %s11, %s611
      %p613 = pneg %p306
      %p614 = pneg %p303
      %p615 = scmp.lt.s32.totalorder %s29, 1
      %s616 = scalar_select %p615, %s29, 1
      %s617 = scalar_lea.vmem %s12, %s616
      %p618 = pneg %p332
      %p619 = pneg %p329
      %p620 = scmp.lt.s32.totalorder %s29, 1
      %s621 = scalar_select %p620, %s29, 1
      %s622 = smul.addr %s621, 8
      %s623 = smul.addr %s622, 4
      %s624 = scalar_lea.vmem %s13, %s623
      %p625 = pneg %p358
      %p626 = pneg %p355
      %p627 = scmp.lt.s32.totalorder %s29, 1
      %s628 = scalar_select %p627, %s29, 1
      %s629 = scalar_lea.vmem %s14, %s628
      %p630 = pneg %p384
      %p631 = pneg %p381
      %p632 = scmp.lt.s32.totalorder %s29, 1
      %s633 = scalar_select %p632, %s29, 1
      %s634 = smul.addr %s633, 2
      %s635 = scalar_lea.vmem %s15, %s634
      %p636 = pneg %p410
      %p637 = pneg %p407
      %p638 = pneg %p431
      %p639 = pneg %p428
      %p640 = pneg %p452
      %p641 = pneg %p449
      %p642 = scmp.lt.s32.totalorder %s29, 1
      %s643 = scalar_select %p642, %s29, 1
      %s644 = smul.addr %s643, 4
      %s645 = smul.addr %s644, 4
      %s646 = scalar_lea.vmem %s6, %s645
      %p647 = scmp.lt.s32.totalorder %s29, 1
      %s648 = scalar_select %p647, %s29, 1
      %s649 = scalar_lea.vmem %s7, %s648
      %p650 = scmp.lt.s32.totalorder %s29, 1
      %s651 = scalar_select %p650, %s29, 1
      %s652 = smul.addr %s651, 4
      %s653 = smul.addr %s652, 4
      %s654 = scalar_lea.vmem %s8, %s653
      %p655 = scmp.lt.s32.totalorder %s29, 1
      %s656 = scalar_select %p655, %s29, 1
      %s657 = scalar_lea.vmem %s9, %s656
      %p658 = scmp.lt.s32.totalorder %s29, 1
      %s659 = scalar_select %p658, %s29, 1
      %s660 = smul.addr %s659, 2
      %s661 = scalar_lea.vmem %s10, %s660
      %p662 = scmp.lt.s32.totalorder %s29, 1
      %s663 = scalar_select %p662, %s29, 1
      %s664 = smul.addr %s663, 4
      %s665 = smul.addr %s664, 4
      %s666 = scalar_lea.vmem %s11, %s665
      %p667 = scmp.lt.s32.totalorder %s29, 1
      %s668 = scalar_select %p667, %s29, 1
      %s669 = scalar_lea.vmem %s12, %s668
      %p670 = scmp.lt.s32.totalorder %s29, 1
      %s671 = scalar_select %p670, %s29, 1
      %s672 = smul.addr %s671, 8
      %s673 = smul.addr %s672, 4
      %s674 = scalar_lea.vmem %s13, %s673
      %p675 = scmp.lt.s32.totalorder %s29, 1
      %s676 = scalar_select %p675, %s29, 1
      %s677 = scalar_lea.vmem %s14, %s676
      %p678 = scmp.lt.s32.totalorder %s29, 1
      %s679 = scalar_select %p678, %s29, 1
      %s680 = smul.addr %s679, 2
      %s681 = scalar_lea.vmem %s15, %s680
      %p683 = scmp.eq.s32.totalorder %s29, 0
      // Predicated region
      $region85: #{mectec_forward.3} parent=83 // pred_check
        %p684 = pneg %p683
      $region86: #{mectec_forward.3} parent=83 // pred_check_branch
        %686 = sbr.rel (%p684) target = $region88
      $region87: #{mectec_forward.3} parent=83 // pred_region
        %v687 = vld [vmem:[%s3] sm:$0x1]
        %v688 = vld [vmem:[%s3 + $0x1] sm:$0x1]
        %v689 = vld [vmem:[%s0] sm:$0xff]
        %v690 = vld [vmem:[%s0 + $0x8] sm:$0xff]
        %vm691 = vcmask 261120
        %v692 = vsel %vm691, %v689, 0.0
        %693 = vadd.xlane.f32.xlu0 %v692
        %v694 = vpop.xlane.xlu0 %693
        %v695 = vsel %vm691, %v690, 0.0
        %696 = vadd.xlane.f32.xlu0 %v695
        %v697 = vpop.xlane.xlu0 %696
        %v698 = vrcp.pop 32.0
        %v699 = vmul.f32 %v694, %v698
        %v700 = vmul.f32 %v697, %v698
        %v701 = vsub.f32 %v689, %v699
        %v702 = vsub.f32 %v690, %v700
        %v703 = vmul.f32 %v701, %v701
        %v704 = vmul.f32 %v702, %v702
        %v705 = vsel %vm691, %v703, 0.0
        %706 = vadd.xlane.f32.xlu0 %v705
        %v707 = vpop.xlane.xlu0 %706
        %v708 = vsel %vm691, %v704, 0.0
        %709 = vadd.xlane.f32.xlu0 %v708
        %v710 = vpop.xlane.xlu0 %709
        %v711 = vmul.f32 %v707, %v698
        %v712 = vmul.f32 %v710, %v698
        %v713 = vadd.f32 %v711, 1e-12
        %v714 = vadd.f32 %v712, 1e-12
        %v715 = vrsqrt.pop %v713
        %v716 = vrsqrt.pop %v714
        %v717 = vmul.f32 %v701, %v715
        %v718 = vmul.f32 %v702, %v716
        %v719 = vlaneseq
        %v720 = vshrl.u32 %v719, 7
        %v721 = vsub.s32 0, %v720
        %v722 = vrot.slane %v687, %v721
        %v723 = vmul.f32 %v717, %v722
        %v724 = vmul.f32 %v718, %v722
        %v725 = vlaneseq
        %v726 = vshrl.u32 %v725, 7
        %v727 = vsub.s32 0, %v726
        %v728 = vrot.slane %v688, %v727
        %v729 = vadd.f32 %v723, %v728
        %v730 = vadd.f32 %v724, %v728
        %v731 = vld [vmem:[%s4] sm:$0xf]
        %v732 = vld [vmem:[%s4 + $0x4] sm:$0xf]
        %v733 = vld [vmem:[%s4 + $0x8] sm:$0xf]
        %v734 = vld [vmem:[%s4 + $0xc] sm:$0xf]
        %v735 = vpack.c.bf16 %v730, %v729
        %v736 = vld [vmem:[%s5] sm:$0x1]
        %v738 = vlaneseq
        %v739 = vshrl.u32 %v738, 7
        %v740 = vsub.s32 0, %v739
        %v741 = vrot.slane %v736, %v740
        %v747 = vunpack.c.l.b16 %v731
        %v748 = vunpack.c.l.b16 %v732
        %v749 = vunpack.c.l.b16 %v733
        %v750 = vunpack.c.l.b16 %v734
        %v751 = vpack.c.b16 %v748, %v747
        %v752 = vpack.c.b16 %v750, %v749
        %v756 = vsel %vm691, %v735, 0
        %758 = vmatprep.subr.bf16.mxu0 0
        %759 = vmatpush1.bf16.msra.mxu0 %v751
        %760 = vmatprep.subr.bf16.mxu0 0
        %761 = vmatpush1.bf16.msra.mxu0 %v752
        %762 = vmatprep.subr.bf16.mxu0 0
        %763 = vmatpush1.bf16.msra.mxu0 0
        %764 = vmatprep.subr.bf16.mxu0 0
        %765 = vmatpush1.bf16.msra.mxu0 0
        %766 = vmatprep.subr.bf16.mxu0 0
        %767 = vmatpush1.bf16.msra.mxu0 0
        %768 = vmatprep.subr.bf16.mxu0 0
        %769 = vmatpush1.bf16.msra.mxu0 0
        %770 = vmatprep.subr.bf16.mxu0 0
        %771 = vmatpush1.bf16.msra.mxu0 0
        %772 = vmatprep.subr.bf16.mxu0 0
        %773 = vmatpush1.bf16.msra.mxu0 0
        %774 = vmatprep.subr.bf16.mxu0 0
        %775 = vmatpush1.bf16.msra.mxu0 0
        %776 = vmatprep.subr.bf16.mxu0 0
        %777 = vmatpush1.bf16.msra.mxu0 0
        %778 = vmatprep.subr.bf16.mxu0 0
        %779 = vmatpush1.bf16.msra.mxu0 0
        %780 = vmatprep.subr.bf16.mxu0 0
        %781 = vmatpush1.bf16.msra.mxu0 0
        %782 = vmatprep.subr.bf16.mxu0 0
        %783 = vmatpush1.bf16.msra.mxu0 0
        %784 = vmatprep.subr.bf16.mxu0 0
        %785 = vmatpush1.bf16.msra.mxu0 0
        %786 = vmatprep.subr.bf16.mxu0 0
        %787 = vmatpush1.bf16.msra.mxu0 0
        %788 = vmatprep.subr.bf16.mxu0 0
        %789 = vmatpush1.bf16.msra.mxu0 0
        %790 = vmatprep.mubr.bf16.mxu0 0
        %791 = vmatmul.mubr.bf16.gmra.mrb[0].mxu0 %v756
        %v792 = vpop.f32.mrb[0].mxu0
        %v793 = vadd.f32 %v741, %v792
        %v794 = vpop.f32.mrb[0].mxu0
        %v795 = vpop.f32.mrb[0].mxu0
        %v796 = vadd.f32 %v741, %v795
        %v797 = vpop.f32.mrb[0].mxu0
        %798 = vdwg.mxu0
        %799 = vst.msk [vmem:[%s17] sm:$0xff] %vm691, %v793
        %800 = vst.msk [vmem:[%s17 + $0x8] sm:$0xff] %vm691, %v796
        %v801 = vld [vmem:[%s1] sm:$0xff]
        %v802 = vld [vmem:[%s1 + $0x8] sm:$0xff]
        %v803 = vadd.f32 %v729, %v801
        %v804 = vadd.f32 %v730, %v802
        %v805 = vsel %vm691, %v803, 0.0
        %806 = vadd.xlane.f32.xlu0 %v805
        %v807 = vpop.xlane.xlu0 %806
        %v808 = vsel %vm691, %v804, 0.0
        %809 = vadd.xlane.f32.xlu0 %v808
        %v810 = vpop.xlane.xlu0 %809
        %v811 = vmul.f32 %v807, %v698
        %v812 = vmul.f32 %v810, %v698
        %v813 = vsub.f32 %v803, %v811
        %v814 = vsub.f32 %v804, %v812
        %v815 = vmul.f32 %v813, %v813
        %v816 = vmul.f32 %v814, %v814
        %v817 = vsel %vm691, %v815, 0.0
        %818 = vadd.xlane.f32.xlu0 %v817
        %v819 = vpop.xlane.xlu0 %818
        %v820 = vsel %vm691, %v816, 0.0
        %821 = vadd.xlane.f32.xlu0 %v820
        %v822 = vpop.xlane.xlu0 %821
        %v823 = vmul.f32 %v819, %v698
        %v824 = vmul.f32 %v822, %v698
        %v825 = vadd.f32 %v823, 1e-12
        %v826 = vadd.f32 %v824, 1e-12
        %v827 = vrsqrt.pop %v825
        %v828 = vrsqrt.pop %v826
        %v829 = vmul.f32 %v813, %v827
        %v830 = vmul.f32 %v814, %v828
        %v831 = vmul.f32 %v829, %v722
        %v832 = vmul.f32 %v830, %v722
        %v833 = vadd.f32 %v831, %v728
        %v834 = vadd.f32 %v832, %v728
        %835 = vst.msk [vmem:[#allocation2] sm:$0xff] %vm691, %v833
        %836 = vst.msk [vmem:[#allocation2 + $0x8] sm:$0xff] %vm691, %v834
      $region88: #{mectec_forward.3} parent=83 // pred_fallthru
        _
      %v837 = vld [vmem:[#allocation2] sm:$0xff]
      %v838 = vld [vmem:[#allocation2 + $0x8] sm:$0xff]
      %v839 = vld [vmem:[%s2] sm:$0xff]
      %v840 = vld [vmem:[%s2 + $0x8] sm:$0xff]
      %v841 = vld [vmem:[%s646] sm:$0xf]
      %v842 = vld [vmem:[%s646 + $0x4] sm:$0xf]
      %v843 = vld [vmem:[%s646 + $0x8] sm:$0xf]
      %v844 = vld [vmem:[%s646 + $0xc] sm:$0xf]
      %v845 = vld [vmem:[%s649] sm:$0x1]
      %v846 = vld [vmem:[%s654] sm:$0xf]
      %v847 = vld [vmem:[%s654 + $0x4] sm:$0xf]
      %v848 = vld [vmem:[%s654 + $0x8] sm:$0xf]
      %v849 = vld [vmem:[%s654 + $0xc] sm:$0xf]
      %v850 = vld [vmem:[%s657] sm:$0x1]
      %v851 = vld [vmem:[%s661] sm:$0x3]
      %v852 = vld [vmem:[%s666] sm:$0xf]
      %v853 = vld [vmem:[%s666 + $0x4] sm:$0xf]
      %v854 = vld [vmem:[%s666 + $0x8] sm:$0xf]
      %v855 = vld [vmem:[%s666 + $0xc] sm:$0xf]
      %v856 = vld [vmem:[%s669] sm:$0x1]
      %v857 = vld [vmem:[%s674] sm:$0xf]
      %v858 = vld [vmem:[%s674 + $0x4] sm:$0xf]
      %v859 = vld [vmem:[%s674 + $0x8] sm:$0xf]
      %v860 = vld [vmem:[%s674 + $0xc] sm:$0xf]
      %v861 = vld [vmem:[%s674 + $0x10] sm:$0xf]
      %v862 = vld [vmem:[%s674 + $0x14] sm:$0xf]
      %v863 = vld [vmem:[%s674 + $0x18] sm:$0xf]
      %v864 = vld [vmem:[%s674 + $0x1c] sm:$0xf]
      %v865 = vld [vmem:[%s677] sm:$0x1]
      %v866 = vld [vmem:[%s681] sm:$0x3]
      %v867 = vpack.c.bf16 %v838, %v837
      %v869 = vlaneseq
      %v870 = vshrl.u32 %v869, 7
      %v871 = vsub.s32 0, %v870
      %v872 = vrot.slane %v845, %v871
      %v878 = vunpack.c.l.b16 %v841
      %v879 = vunpack.c.l.b16 %v842
      %v880 = vunpack.c.l.b16 %v843
      %v881 = vunpack.c.l.b16 %v844
      %v882 = vpack.c.b16 %v879, %v878
      %v883 = vpack.c.b16 %v881, %v880
      %vm886 = vcmask 261120
      %v888 = vsel %vm886, %v867, 0
      %890 = vmatprep.subr.bf16.mxu0 0
      %891 = vmatpush1.bf16.msra.mxu0 %v882
      %892 = vmatprep.subr.bf16.mxu0 0
      %893 = vmatpush1.bf16.msra.mxu0 %v883
      %894 = vmatprep.subr.bf16.mxu0 0
      %895 = vmatpush1.bf16.msra.mxu0 0
      %896 = vmatprep.subr.bf16.mxu0 0
      %897 = vmatpush1.bf16.msra.mxu0 0
      %898 = vmatprep.subr.bf16.mxu0 0
      %899 = vmatpush1.bf16.msra.mxu0 0
      %900 = vmatprep.subr.bf16.mxu0 0
      %901 = vmatpush1.bf16.msra.mxu0 0
      %902 = vmatprep.subr.bf16.mxu0 0
      %903 = vmatpush1.bf16.msra.mxu0 0
      %904 = vmatprep.subr.bf16.mxu0 0
      %905 = vmatpush1.bf16.msra.mxu0 0
      %906 = vmatprep.subr.bf16.mxu0 0
      %907 = vmatpush1.bf16.msra.mxu0 0
      %908 = vmatprep.subr.bf16.mxu0 0
      %909 = vmatpush1.bf16.msra.mxu0 0
      %910 = vmatprep.subr.bf16.mxu0 0
      %911 = vmatpush1.bf16.msra.mxu0 0
      %912 = vmatprep.subr.bf16.mxu0 0
      %913 = vmatpush1.bf16.msra.mxu0 0
      %914 = vmatprep.subr.bf16.mxu0 0
      %915 = vmatpush1.bf16.msra.mxu0 0
      %916 = vmatprep.subr.bf16.mxu0 0
      %917 = vmatpush1.bf16.msra.mxu0 0
      %918 = vmatprep.subr.bf16.mxu0 0
      %919 = vmatpush1.bf16.msra.mxu0 0
      %920 = vmatprep.subr.bf16.mxu0 0
      %921 = vmatpush1.bf16.msra.mxu0 0
      %922 = vmatprep.mubr.bf16.mxu0 0
      %923 = vmatmul.mubr.bf16.gmra.mrb[0].mxu0 %v888
      %v924 = vpop.f32.mrb[0].mxu0
      %v925 = vadd.f32 %v872, %v924
      %v926 = vpop.f32.mrb[0].mxu0
      %v927 = vpop.f32.mrb[0].mxu0
      %v928 = vadd.f32 %v872, %v927
      %v929 = vpop.f32.mrb[0].mxu0
      %930 = vdwg.mxu0
      %933 = vrot.lane.b32.xlu0 %v925, 96
      %v934 = vpop.permute.xlu0 %933
      %935 = vrot.lane.b32.xlu0 %v928, 96
      %v936 = vpop.permute.xlu0 %935
      %939 = vxpose.xlu0.b32.start [1/16] %v934, 128
      %940 = vxpose.xlu0.b32.cont [2/16] %v936, 128
      %941 = vxpose.xlu0.b32.cont [3/16] 0.0, 128
      %942 = vxpose.xlu0.b32.cont [4/16] 0.0, 128
      %943 = vxpose.xlu0.b32.cont [5/16] 0.0, 128
      %944 = vxpose.xlu0.b32.cont [6/16] 0.0, 128
      %945 = vxpose.xlu0.b32.cont [7/16] 0.0, 128
      %946 = vxpose.xlu0.b32.cont [8/16] 0.0, 128
      %947 = vxpose.xlu0.b32.cont [9/16] 0.0, 128
      %948 = vxpose.xlu0.b32.cont [10/16] 0.0, 128
      %949 = vxpose.xlu0.b32.cont [11/16] 0.0, 128
      %950 = vxpose.xlu0.b32.cont [12/16] 0.0, 128
      %951 = vxpose.xlu0.b32.cont [13/16] 0.0, 128
      %952 = vxpose.xlu0.b32.cont [14/16] 0.0, 128
      %953 = vxpose.xlu0.b32.cont [15/16] 0.0, 128
      %954 = vxpose.xlu0.b32.end [16/16] 0.0, 128
      %v955 = vpop.trf.xlu0
      %v956 = vpop.trf.xlu0
      %v957 = vpop.trf.xlu0
      %v958 = vpop.trf.xlu0
      %v959 = vpop.trf.xlu0
      %v960 = vpop.trf.xlu0
      %v961 = vpop.trf.xlu0
      %v962 = vpop.trf.xlu0
      %v963 = vpop.trf.xlu0
      %v964 = vpop.trf.xlu0
      %v965 = vpop.trf.xlu0
      %v966 = vpop.trf.xlu0
      %v967 = vpop.trf.xlu0
      %v968 = vpop.trf.xlu0
      %v969 = vpop.trf.xlu0
      %v970 = vpop.trf.xlu0
      %v971 = vpack.c.bf16 %v928, %v925
      %v972 = vpack.c.bf16 %v955, %v955
      %vm973 = vcmask 64512
      %v975 = vsel %vm973, %v971, 0
      %vm977 = vcmask 1043456
      %v979 = vsel %vm977, %v972, 0
      %981 = vmatprep.subr.bf16.mxu0 0
      %982 = vmatpush1.bf16.msra.mxu0 %v979
      %983 = vmatprep.subr.bf16.mxu0 0
      %984 = vmatpush1.bf16.msra.mxu0 0
      %985 = vmatprep.subr.bf16.mxu0 0
      %986 = vmatpush1.bf16.msra.mxu0 0
      %987 = vmatprep.subr.bf16.mxu0 0
      %988 = vmatpush1.bf16.msra.mxu0 0
      %989 = vmatprep.subr.bf16.mxu0 0
      %990 = vmatpush1.bf16.msra.mxu0 0
      %991 = vmatprep.subr.bf16.mxu0 0
      %992 = vmatpush1.bf16.msra.mxu0 0
      %993 = vmatprep.subr.bf16.mxu0 0
      %994 = vmatpush1.bf16.msra.mxu0 0
      %995 = vmatprep.subr.bf16.mxu0 0
      %996 = vmatpush1.bf16.msra.mxu0 0
      %997 = vmatprep.subr.bf16.mxu0 0
      %998 = vmatpush1.bf16.msra.mxu0 0
      %999 = vmatprep.subr.bf16.mxu0 0
      %1000 = vmatpush1.bf16.msra.mxu0 0
      %1001 = vmatprep.subr.bf16.mxu0 0
      %1002 = vmatpush1.bf16.msra.mxu0 0
      %1003 = vmatprep.subr.bf16.mxu0 0
      %1004 = vmatpush1.bf16.msra.mxu0 0
      %1005 = vmatprep.subr.bf16.mxu0 0
      %1006 = vmatpush1.bf16.msra.mxu0 0
      %1007 = vmatprep.subr.bf16.mxu0 0
      %1008 = vmatpush1.bf16.msra.mxu0 0
      %1009 = vmatprep.subr.bf16.mxu0 0
      %1010 = vmatpush1.bf16.msra.mxu0 0
      %1011 = vmatprep.subr.bf16.mxu0 0
      %1012 = vmatpush1.bf16.msra.mxu0 0
      %1013 = vmatprep.mubr.bf16.mxu0 0
      %1014 = vmatmul.mubr.bf16.gmra.mrb[0].mxu0 %v975
      %v1015 = vpop.f32.mrb[0].mxu0
      %v1016 = vadd.f32 0.0, %v1015
      %v1017 = vpop.f32.mrb[0].mxu0
      %v1018 = vpop.f32.mrb[0].mxu0
      %v1019 = vadd.f32 0.0, %v1018
      %v1020 = vpop.f32.mrb[0].mxu0
      %1021 = vdwg.mxu0
      %v1022 = vmul.f32 %v1016, 0.35355338
      %v1023 = vmul.f32 %v1019, 0.35355338
      %v1024 = vadd.f32 %v1022, %v839
      %v1025 = vadd.f32 %v1023, %v840
      %vm1026 = vcmask 130048
      %v1027 = vsel %vm1026, %v1024, -inf
      %1028 = vmax.xlane.f32.xlu0 %v1027
      %v1029 = vpop.xlane.xlu0 %1028
      %v1030 = vsel %vm1026, %v1025, -inf
      %1031 = vmax.xlane.f32.xlu0 %v1030
      %v1032 = vpop.xlane.xlu0 %1031
      %v1033 = vsub.f32 %v1024, %v1029
      %v1034 = vsub.f32 %v1025, %v1032
      %v1035 = vmul.f32 %v1033, 1.442695
      %v1036 = vpow.pop %v1035
      %v1037 = vmul.f32 %v1034, 1.442695
      %v1038 = vpow.pop %v1037
      %v1039 = vsel %vm1026, %v1036, 0.0
      %1040 = vadd.xlane.f32.xlu0 %v1039
      %v1041 = vpop.xlane.xlu0 %1040
      %v1042 = vsel %vm1026, %v1038, 0.0
      %1043 = vadd.xlane.f32.xlu0 %v1042
      %v1044 = vpop.xlane.xlu0 %1043
      %v1045 = vrcp.pop %v1041
      %v1046 = vrcp.pop %v1044
      %v1047 = vmul.f32 %v1036, %v1045
      %v1048 = vmul.f32 %v1038, %v1046
      %v1049 = vpack.c.bf16 %v1048, %v1047
      %1051 = vrot.lane.b32.xlu0 %v971, 64
      %v1052 = vpop.permute.xlu0 %1051
      %v1055 = vsel %vm1026, %v1049, 0
      %1057 = vmatprep.subr.bf16.mxu0 0
      %1058 = vmatpush1.bf16.msra.mxu0 %v1052
      %1059 = vmatprep.subr.bf16.mxu0 0
      %1060 = vmatpush1.bf16.msra.mxu0 0
      %1061 = vmatprep.subr.bf16.mxu0 0
      %1062 = vmatpush1.bf16.msra.mxu0 0
      %1063 = vmatprep.subr.bf16.mxu0 0
      %1064 = vmatpush1.bf16.msra.mxu0 0
      %1065 = vmatprep.subr.bf16.mxu0 0
      %1066 = vmatpush1.bf16.msra.mxu0 0
      %1067 = vmatprep.subr.bf16.mxu0 0
      %1068 = vmatpush1.bf16.msra.mxu0 0
      %1069 = vmatprep.subr.bf16.mxu0 0
      %1070 = vmatpush1.bf16.msra.mxu0 0
      %1071 = vmatprep.subr.bf16.mxu0 0
      %1072 = vmatpush1.bf16.msra.mxu0 0
      %1073 = vmatprep.subr.bf16.mxu0 0
      %1074 = vmatpush1.bf16.msra.mxu0 0
      %1075 = vmatprep.subr.bf16.mxu0 0
      %1076 = vmatpush1.bf16.msra.mxu0 0
      %1077 = vmatprep.subr.bf16.mxu0 0
      %1078 = vmatpush1.bf16.msra.mxu0 0
      %1079 = vmatprep.subr.bf16.mxu0 0
      %1080 = vmatpush1.bf16.msra.mxu0 0
      %1081 = vmatprep.subr.bf16.mxu0 0
      %1082 = vmatpush1.bf16.msra.mxu0 0
      %1083 = vmatprep.subr.bf16.mxu0 0
      %1084 = vmatpush1.bf16.msra.mxu0 0
      %1085 = vmatprep.subr.bf16.mxu0 0
      %1086 = vmatpush1.bf16.msra.mxu0 0
      %1087 = vmatprep.subr.bf16.mxu0 0
      %1088 = vmatpush1.bf16.msra.mxu0 0
      %1089 = vmatprep.mubr.bf16.mxu0 0
      %1090 = vmatmul.mubr.bf16.gmra.mrb[0].mxu0 %v1055
      %v1091 = vpop.f32.mrb[0].mxu0
      %v1092 = vadd.f32 0.0, %v1091
      %v1093 = vpop.f32.mrb[0].mxu0
      %v1094 = vpop.f32.mrb[0].mxu0
      %v1095 = vadd.f32 0.0, %v1094
      %v1096 = vpop.f32.mrb[0].mxu0
      %1097 = vdwg.mxu0
      %1098 = vrot.lane.b32.xlu0 %v925, 88
      %v1099 = vpop.permute.xlu0 %1098
      %1100 = vrot.lane.b32.xlu0 %v928, 88
      %v1101 = vpop.permute.xlu0 %1100
      %1104 = vxpose.xlu0.b32.start [1/16] %v1099, 128
      %1105 = vxpose.xlu0.b32.cont [2/16] %v1101, 128
      %1106 = vxpose.xlu0.b32.cont [3/16] 0.0, 128
      %1107 = vxpose.xlu0.b32.cont [4/16] 0.0, 128
      %1108 = vxpose.xlu0.b32.cont [5/16] 0.0, 128
      %1109 = vxpose.xlu0.b32.cont [6/16] 0.0, 128
      %1110 = vxpose.xlu0.b32.cont [7/16] 0.0, 128
      %1111 = vxpose.xlu0.b32.cont [8/16] 0.0, 128
      %1112 = vxpose.xlu0.b32.cont [9/16] 0.0, 128
      %1113 = vxpose.xlu0.b32.cont [10/16] 0.0, 128
      %1114 = vxpose.xlu0.b32.cont [11/16] 0.0, 128
      %1115 = vxpose.xlu0.b32.cont [12/16] 0.0, 128
      %1116 = vxpose.xlu0.b32.cont [13/16] 0.0, 128
      %1117 = vxpose.xlu0.b32.cont [14/16] 0.0, 128
      %1118 = vxpose.xlu0.b32.cont [15/16] 0.0, 128
      %1119 = vxpose.xlu0.b32.end [16/16] 0.0, 128
      %v1120 = vpop.trf.xlu0
      %v1121 = vpop.trf.xlu0
      %v1122 = vpop.trf.xlu0
      %v1123 = vpop.trf.xlu0
      %v1124 = vpop.trf.xlu0
      %v1125 = vpop.trf.xlu0
      %v1126 = vpop.trf.xlu0
      %v1127 = vpop.trf.xlu0
      %v1128 = vpop.trf.xlu0
      %v1129 = vpop.trf.xlu0
      %v1130 = vpop.trf.xlu0
      %v1131 = vpop.trf.xlu0
      %v1132 = vpop.trf.xlu0
      %v1133 = vpop.trf.xlu0
      %v1134 = vpop.trf.xlu0
      %v1135 = vpop.trf.xlu0
      %v1136 = vpack.c.bf16 %v1120, %v1120
      %1137 = vrot.lane.b32.xlu0 %v971, 120
      %v1138 = vpop.permute.xlu0 %1137
      %v1140 = vsel %vm973, %v1138, 0
      %v1143 = vsel %vm977, %v1136, 0
      %1145 = vmatprep.subr.bf16.mxu0 0
      %1146 = vmatpush1.bf16.msra.mxu0 %v1143
      %1147 = vmatprep.subr.bf16.mxu0 0
      %1148 = vmatpush1.bf16.msra.mxu0 0
      %1149 = vmatprep.subr.bf16.mxu0 0
      %1150 = vmatpush1.bf16.msra.mxu0 0
      %1151 = vmatprep.subr.bf16.mxu0 0
      %1152 = vmatpush1.bf16.msra.mxu0 0
      %1153 = vmatprep.subr.bf16.mxu0 0
      %1154 = vmatpush1.bf16.msra.mxu0 0
      %1155 = vmatprep.subr.bf16.mxu0 0
      %1156 = vmatpush1.bf16.msra.mxu0 0
      %1157 = vmatprep.subr.bf16.mxu0 0
      %1158 = vmatpush1.bf16.msra.mxu0 0
      %1159 = vmatprep.subr.bf16.mxu0 0
      %1160 = vmatpush1.bf16.msra.mxu0 0
      %1161 = vmatprep.subr.bf16.mxu0 0
      %1162 = vmatpush1.bf16.msra.mxu0 0
      %1163 = vmatprep.subr.bf16.mxu0 0
      %1164 = vmatpush1.bf16.msra.mxu0 0
      %1165 = vmatprep.subr.bf16.mxu0 0
      %1166 = vmatpush1.bf16.msra.mxu0 0
      %1167 = vmatprep.subr.bf16.mxu0 0
      %1168 = vmatpush1.bf16.msra.mxu0 0
      %1169 = vmatprep.subr.bf16.mxu0 0
      %1170 = vmatpush1.bf16.msra.mxu0 0
      %1171 = vmatprep.subr.bf16.mxu0 0
      %1172 = vmatpush1.bf16.msra.mxu0 0
      %1173 = vmatprep.subr.bf16.mxu0 0
      %1174 = vmatpush1.bf16.msra.mxu0 0
      %1175 = vmatprep.subr.bf16.mxu0 0
      %1176 = vmatpush1.bf16.msra.mxu0 0
      %1177 = vmatprep.mubr.bf16.mxu0 0
      %1178 = vmatmul.mubr.bf16.gmra.mrb[0].mxu0 %v1140
      %v1179 = vpop.f32.mrb[0].mxu0
      %v1180 = vadd.f32 0.0, %v1179
      %v1181 = vpop.f32.mrb[0].mxu0
      %v1182 = vpop.f32.mrb[0].mxu0
      %v1183 = vadd.f32 0.0, %v1182
      %v1184 = vpop.f32.mrb[0].mxu0
      %1185 = vdwg.mxu0
      %v1186 = vmul.f32 %v1180, 0.35355338
      %v1187 = vmul.f32 %v1183, 0.35355338
      %v1188 = vadd.f32 %v1186, %v839
      %v1189 = vadd.f32 %v1187, %v840
      %v1190 = vsel %vm1026, %v1188, -inf
      %1191 = vmax.xlane.f32.xlu0 %v1190
      %v1192 = vpop.xlane.xlu0 %1191
      %v1193 = vsel %vm1026, %v1189, -inf
      %1194 = vmax.xlane.f32.xlu0 %v1193
      %v1195 = vpop.xlane.xlu0 %1194
      %v1196 = vsub.f32 %v1188, %v1192
      %v1197 = vsub.f32 %v1189, %v1195
      %v1198 = vmul.f32 %v1196, 1.442695
      %v1199 = vpow.pop %v1198
      %v1200 = vmul.f32 %v1197, 1.442695
      %v1201 = vpow.pop %v1200
      %v1202 = vsel %vm1026, %v1199, 0.0
      %1203 = vadd.xlane.f32.xlu0 %v1202
      %v1204 = vpop.xlane.xlu0 %1203
      %v1205 = vsel %vm1026, %v1201, 0.0
      %1206 = vadd.xlane.f32.xlu0 %v1205
      %v1207 = vpop.xlane.xlu0 %1206
      %v1208 = vrcp.pop %v1204
      %v1209 = vrcp.pop %v1207
      %v1210 = vmul.f32 %v1199, %v1208
      %v1211 = vmul.f32 %v1201, %v1209
      %v1212 = vpack.c.bf16 %v1211, %v1210
      %1213 = vrot.lane.b32.xlu0 %v971, 56
      %v1214 = vpop.permute.xlu0 %1213
      %v1217 = vsel %vm1026, %v1212, 0
      %1219 = vmatprep.subr.bf16.mxu0 0
      %1220 = vmatpush1.bf16.msra.mxu0 %v1214
      %1221 = vmatprep.subr.bf16.mxu0 0
      %1222 = vmatpush1.bf16.msra.mxu0 0
      %1223 = vmatprep.subr.bf16.mxu0 0
      %1224 = vmatpush1.bf16.msra.mxu0 0
      %1225 = vmatprep.subr.bf16.mxu0 0
      %1226 = vmatpush1.bf16.msra.mxu0 0
      %1227 = vmatprep.subr.bf16.mxu0 0
      %1228 = vmatpush1.bf16.msra.mxu0 0
      %1229 = vmatprep.subr.bf16.mxu0 0
      %1230 = vmatpush1.bf16.msra.mxu0 0
      %1231 = vmatprep.subr.bf16.mxu0 0
      %1232 = vmatpush1.bf16.msra.mxu0 0
      %1233 = vmatprep.subr.bf16.mxu0 0
      %1234 = vmatpush1.bf16.msra.mxu0 0
      %1235 = vmatprep.subr.bf16.mxu0 0
      %1236 = vmatpush1.bf16.msra.mxu0 0
      %1237 = vmatprep.subr.bf16.mxu0 0
      %1238 = vmatpush1.bf16.msra.mxu0 0
      %1239 = vmatprep.subr.bf16.mxu0 0
      %1240 = vmatpush1.bf16.msra.mxu0 0
      %1241 = vmatprep.subr.bf16.mxu0 0
      %1242 = vmatpush1.bf16.msra.mxu0 0
      %1243 = vmatprep.subr.bf16.mxu0 0
      %1244 = vmatpush1.bf16.msra.mxu0 0
      %1245 = vmatprep.subr.bf16.mxu0 0
      %1246 = vmatpush1.bf16.msra.mxu0 0
      %1247 = vmatprep.subr.bf16.mxu0 0
      %1248 = vmatpush1.bf16.msra.mxu0 0
      %1249 = vmatprep.subr.bf16.mxu0 0
      %1250 = vmatpush1.bf16.msra.mxu0 0
      %1251 = vmatprep.mubr.bf16.mxu0 0
      %1252 = vmatmul.mubr.bf16.gmra.mrb[0].mxu0 %v1217
      %v1253 = vpop.f32.mrb[0].mxu0
      %v1254 = vadd.f32 0.0, %v1253
      %v1255 = vpop.f32.mrb[0].mxu0
      %v1256 = vpop.f32.mrb[0].mxu0
      %v1257 = vadd.f32 0.0, %v1256
      %v1258 = vpop.f32.mrb[0].mxu0
      %1259 = vdwg.mxu0
      %1260 = vrot.lane.b32.xlu0 %v925, 80
      %v1261 = vpop.permute.xlu0 %1260
      %1262 = vrot.lane.b32.xlu0 %v928, 80
      %v1263 = vpop.permute.xlu0 %1262
      %1266 = vxpose.xlu0.b32.start [1/16] %v1261, 128
      %1267 = vxpose.xlu0.b32.cont [2/16] %v1263, 128
      %1268 = vxpose.xlu0.b32.cont [3/16] 0.0, 128
      %1269 = vxpose.xlu0.b32.cont [4/16] 0.0, 128
      %1270 = vxpose.xlu0.b32.cont [5/16] 0.0, 128
      %1271 = vxpose.xlu0.b32.cont [6/16] 0.0, 128
      %1272 = vxpose.xlu0.b32.cont [7/16] 0.0, 128
      %1273 = vxpose.xlu0.b32.cont [8/16] 0.0, 128
      %1274 = vxpose.xlu0.b32.cont [9/16] 0.0, 128
      %1275 = vxpose.xlu0.b32.cont [10/16] 0.0, 128
      %1276 = vxpose.xlu0.b32.cont [11/16] 0.0, 128
      %1277 = vxpose.xlu0.b32.cont [12/16] 0.0, 128
      %1278 = vxpose.xlu0.b32.cont [13/16] 0.0, 128
      %1279 = vxpose.xlu0.b32.cont [14/16] 0.0, 128
      %1280 = vxpose.xlu0.b32.cont [15/16] 0.0, 128
      %1281 = vxpose.xlu0.b32.end [16/16] 0.0, 128
      %v1282 = vpop.trf.xlu0
      %v1283 = vpop.trf.xlu0
      %v1284 = vpop.trf.xlu0
      %v1285 = vpop.trf.xlu0
      %v1286 = vpop.trf.xlu0
      %v1287 = vpop.trf.xlu0
      %v1288 = vpop.trf.xlu0
      %v1289 = vpop.trf.xlu0
      %v1290 = vpop.trf.xlu0
      %v1291 = vpop.trf.xlu0
      %v1292 = vpop.trf.xlu0
      %v1293 = vpop.trf.xlu0
      %v1294 = vpop.trf.xlu0
      %v1295 = vpop.trf.xlu0
      %v1296 = vpop.trf.xlu0
      %v1297 = vpop.trf.xlu0
      %v1298 = vpack.c.bf16 %v1282, %v1282
      %1299 = vrot.lane.b32.xlu0 %v971, 112
      %v1300 = vpop.permute.xlu0 %1299
      %v1302 = vsel %vm973, %v1300, 0
      %v1305 = vsel %vm977, %v1298, 0
      %1307 = vmatprep.subr.bf16.mxu0 0
      %1308 = vmatpush1.bf16.msra.mxu0 %v1305
      %1309 = vmatprep.subr.bf16.mxu0 0
      %1310 = vmatpush1.bf16.msra.mxu0 0
      %1311 = vmatprep.subr.bf16.mxu0 0
      %1312 = vmatpush1.bf16.msra.mxu0 0
      %1313 = vmatprep.subr.bf16.mxu0 0
      %1314 = vmatpush1.bf16.msra.mxu0 0
      %1315 = vmatprep.subr.bf16.mxu0 0
      %1316 = vmatpush1.bf16.msra.mxu0 0
      %1317 = vmatprep.subr.bf16.mxu0 0
      %1318 = vmatpush1.bf16.msra.mxu0 0
      %1319 = vmatprep.subr.bf16.mxu0 0
      %1320 = vmatpush1.bf16.msra.mxu0 0
      %1321 = vmatprep.subr.bf16.mxu0 0
      %1322 = vmatpush1.bf16.msra.mxu0 0
      %1323 = vmatprep.subr.bf16.mxu0 0
      %1324 = vmatpush1.bf16.msra.mxu0 0
      %1325 = vmatprep.subr.bf16.mxu0 0
      %1326 = vmatpush1.bf16.msra.mxu0 0
      %1327 = vmatprep.subr.bf16.mxu0 0
      %1328 = vmatpush1.bf16.msra.mxu0 0
      %1329 = vmatprep.subr.bf16.mxu0 0
      %1330 = vmatpush1.bf16.msra.mxu0 0
      %1331 = vmatprep.subr.bf16.mxu0 0
      %1332 = vmatpush1.bf16.msra.mxu0 0
      %1333 = vmatprep.subr.bf16.mxu0 0
      %1334 = vmatpush1.bf16.msra.mxu0 0
      %1335 = vmatprep.subr.bf16.mxu0 0
      %1336 = vmatpush1.bf16.msra.mxu0 0
      %1337 = vmatprep.subr.bf16.mxu0 0
      %1338 = vmatpush1.bf16.msra.mxu0 0
      %1339 = vmatprep.mubr.bf16.mxu0 0
      %1340 = vmatmul.mubr.bf16.gmra.mrb[0].mxu0 %v1302
      %v1341 = vpop.f32.mrb[0].mxu0
      %v1342 = vadd.f32 0.0, %v1341
      %v1343 = vpop.f32.mrb[0].mxu0
      %v1344 = vpop.f32.mrb[0].mxu0
      %v1345 = vadd.f32 0.0, %v1344
      %v1346 = vpop.f32.mrb[0].mxu0
      %1347 = vdwg.mxu0
      %v1348 = vmul.f32 %v1342, 0.35355338
      %v1349 = vmul.f32 %v1345, 0.35355338
      %v1350 = vadd.f32 %v1348, %v839
      %v1351 = vadd.f32 %v1349, %v840
      %v1352 = vsel %vm1026, %v1350, -inf
      %1353 = vmax.xlane.f32.xlu0 %v1352
      %v1354 = vpop.xlane.xlu0 %1353
      %v1355 = vsel %vm1026, %v1351, -inf
      %1356 = vmax.xlane.f32.xlu0 %v1355
      %v1357 = vpop.xlane.xlu0 %1356
      %v1358 = vsub.f32 %v1350, %v1354
      %v1359 = vsub.f32 %v1351, %v1357
      %v1360 = vmul.f32 %v1358, 1.442695
      %v1361 = vpow.pop %v1360
      %v1362 = vmul.f32 %v1359, 1.442695
      %v1363 = vpow.pop %v1362
      %v1364 = vsel %vm1026, %v1361, 0.0
      %1365 = vadd.xlane.f32.xlu0 %v1364
      %v1366 = vpop.xlane.xlu0 %1365
      %v1367 = vsel %vm1026, %v1363, 0.0
      %1368 = vadd.xlane.f32.xlu0 %v1367
      %v1369 = vpop.xlane.xlu0 %1368
      %v1370 = vrcp.pop %v1366
      %v1371 = vrcp.pop %v1369
      %v1372 = vmul.f32 %v1361, %v1370
      %v1373 = vmul.f32 %v1363, %v1371
      %v1374 = vpack.c.bf16 %v1373, %v1372
      %1375 = vrot.lane.b32.xlu0 %v971, 48
      %v1376 = vpop.permute.xlu0 %1375
      %v1379 = vsel %vm1026, %v1374, 0
      %1381 = vmatprep.subr.bf16.mxu0 0
      %1382 = vmatpush1.bf16.msra.mxu0 %v1376
      %1383 = vmatprep.subr.bf16.mxu0 0
      %1384 = vmatpush1.bf16.msra.mxu0 0
      %1385 = vmatprep.subr.bf16.mxu0 0
      %1386 = vmatpush1.bf16.msra.mxu0 0
      %1387 = vmatprep.subr.bf16.mxu0 0
      %1388 = vmatpush1.bf16.msra.mxu0 0
      %1389 = vmatprep.subr.bf16.mxu0 0
      %1390 = vmatpush1.bf16.msra.mxu0 0
      %1391 = vmatprep.subr.bf16.mxu0 0
      %1392 = vmatpush1.bf16.msra.mxu0 0
      %1393 = vmatprep.subr.bf16.mxu0 0
      %1394 = vmatpush1.bf16.msra.mxu0 0
      %1395 = vmatprep.subr.bf16.mxu0 0
      %1396 = vmatpush1.bf16.msra.mxu0 0
      %1397 = vmatprep.subr.bf16.mxu0 0
      %1398 = vmatpush1.bf16.msra.mxu0 0
      %1399 = vmatprep.subr.bf16.mxu0 0
      %1400 = vmatpush1.bf16.msra.mxu0 0
      %1401 = vmatprep.subr.bf16.mxu0 0
      %1402 = vmatpush1.bf16.msra.mxu0 0
      %1403 = vmatprep.subr.bf16.mxu0 0
      %1404 = vmatpush1.bf16.msra.mxu0 0
      %1405 = vmatprep.subr.bf16.mxu0 0
      %1406 = vmatpush1.bf16.msra.mxu0 0
      %1407 = vmatprep.subr.bf16.mxu0 0
      %1408 = vmatpush1.bf16.msra.mxu0 0
      %1409 = vmatprep.subr.bf16.mxu0 0
      %1410 = vmatpush1.bf16.msra.mxu0 0
      %1411 = vmatprep.subr.bf16.mxu0 0
      %1412 = vmatpush1.bf16.msra.mxu0 0
      %1413 = vmatprep.mubr.bf16.mxu0 0
      %1414 = vmatmul.mubr.bf16.gmra.mrb[0].mxu0 %v1379
      %v1415 = vpop.f32.mrb[0].mxu0
      %v1416 = vadd.f32 0.0, %v1415
      %v1417 = vpop.f32.mrb[0].mxu0
      %v1418 = vpop.f32.mrb[0].mxu0
      %v1419 = vadd.f32 0.0, %v1418
      %v1420 = vpop.f32.mrb[0].mxu0
      %1421 = vdwg.mxu0
      %1422 = vrot.lane.b32.xlu0 %v925, 72
      %v1423 = vpop.permute.xlu0 %1422
      %1424 = vrot.lane.b32.xlu0 %v928, 72
      %v1425 = vpop.permute.xlu0 %1424
      %1428 = vxpose.xlu0.b32.start [1/16] %v1423, 128
      %1429 = vxpose.xlu0.b32.cont [2/16] %v1425, 128
      %1430 = vxpose.xlu0.b32.cont [3/16] 0.0, 128
      %1431 = vxpose.xlu0.b32.cont [4/16] 0.0, 128
      %1432 = vxpose.xlu0.b32.cont [5/16] 0.0, 128
      %1433 = vxpose.xlu0.b32.cont [6/16] 0.0, 128
      %1434 = vxpose.xlu0.b32.cont [7/16] 0.0, 128
      %1435 = vxpose.xlu0.b32.cont [8/16] 0.0, 128
      %1436 = vxpose.xlu0.b32.cont [9/16] 0.0, 128
      %1437 = vxpose.xlu0.b32.cont [10/16] 0.0, 128
      %1438 = vxpose.xlu0.b32.cont [11/16] 0.0, 128
      %1439 = vxpose.xlu0.b32.cont [12/16] 0.0, 128
      %1440 = vxpose.xlu0.b32.cont [13/16] 0.0, 128
      %1441 = vxpose.xlu0.b32.cont [14/16] 0.0, 128
      %1442 = vxpose.xlu0.b32.cont [15/16] 0.0, 128
      %1443 = vxpose.xlu0.b32.end [16/16] 0.0, 128
      %v1444 = vpop.trf.xlu0
      %v1445 = vpop.trf.xlu0
      %v1446 = vpop.trf.xlu0
      %v1447 = vpop.trf.xlu0
      %v1448 = vpop.trf.xlu0
      %v1449 = vpop.trf.xlu0
      %v1450 = vpop.trf.xlu0
      %v1451 = vpop.trf.xlu0
      %v1452 = vpop.trf.xlu0
      %v1453 = vpop.trf.xlu0
      %v1454 = vpop.trf.xlu0
      %v1455 = vpop.trf.xlu0
      %v1456 = vpop.trf.xlu0
      %v1457 = vpop.trf.xlu0
      %v1458 = vpop.trf.xlu0
      %v1459 = vpop.trf.xlu0
      %v1460 = vpack.c.bf16 %v1444, %v1444
      %1461 = vrot.lane.b32.xlu0 %v971, 104
      %v1462 = vpop.permute.xlu0 %1461
      %v1464 = vsel %vm973, %v1462, 0
      %v1467 = vsel %vm977, %v1460, 0
      %1469 = vmatprep.subr.bf16.mxu0 0
      %1470 = vmatpush1.bf16.msra.mxu0 %v1467
      %1471 = vmatprep.subr.bf16.mxu0 0
      %1472 = vmatpush1.bf16.msra.mxu0 0
      %1473 = vmatprep.subr.bf16.mxu0 0
      %1474 = vmatpush1.bf16.msra.mxu0 0
      %1475 = vmatprep.subr.bf16.mxu0 0
      %1476 = vmatpush1.bf16.msra.mxu0 0
      %1477 = vmatprep.subr.bf16.mxu0 0
      %1478 = vmatpush1.bf16.msra.mxu0 0
      %1479 = vmatprep.subr.bf16.mxu0 0
      %1480 = vmatpush1.bf16.msra.mxu0 0
      %1481 = vmatprep.subr.bf16.mxu0 0
      %1482 = vmatpush1.bf16.msra.mxu0 0
      %1483 = vmatprep.subr.bf16.mxu0 0
      %1484 = vmatpush1.bf16.msra.mxu0 0
      %1485 = vmatprep.subr.bf16.mxu0 0
      %1486 = vmatpush1.bf16.msra.mxu0 0
      %1487 = vmatprep.subr.bf16.mxu0 0
      %1488 = vmatpush1.bf16.msra.mxu0 0
      %1489 = vmatprep.subr.bf16.mxu0 0
      %1490 = vmatpush1.bf16.msra.mxu0 0
      %1491 = vmatprep.subr.bf16.mxu0 0
      %1492 = vmatpush1.bf16.msra.mxu0 0
      %1493 = vmatprep.subr.bf16.mxu0 0
      %1494 = vmatpush1.bf16.msra.mxu0 0
      %1495 = vmatprep.subr.bf16.mxu0 0
      %1496 = vmatpush1.bf16.msra.mxu0 0
      %1497 = vmatprep.subr.bf16.mxu0 0
      %1498 = vmatpush1.bf16.msra.mxu0 0
      %1499 = vmatprep.subr.bf16.mxu0 0
      %1500 = vmatpush1.bf16.msra.mxu0 0
      %1501 = vmatprep.mubr.bf16.mxu0 0
      %1502 = vmatmul.mubr.bf16.gmra.mrb[0].mxu0 %v1464
      %v1503 = vpop.f32.mrb[0].mxu0
      %v1504 = vadd.f32 0.0, %v1503
      %v1505 = vpop.f32.mrb[0].mxu0
      %v1506 = vpop.f32.mrb[0].mxu0
      %v1507 = vadd.f32 0.0, %v1506
      %v1508 = vpop.f32.mrb[0].mxu0
      %1509 = vdwg.mxu0
      %v1510 = vmul.f32 %v1504, 0.35355338
      %v1511 = vmul.f32 %v1507, 0.35355338
      %v1512 = vadd.f32 %v1510, %v839
      %v1513 = vadd.f32 %v1511, %v840
      %v1514 = vsel %vm1026, %v1512, -inf
      %1515 = vmax.xlane.f32.xlu0 %v1514
      %v1516 = vpop.xlane.xlu0 %1515
      %v1517 = vsel %vm1026, %v1513, -inf
      %1518 = vmax.xlane.f32.xlu0 %v1517
      %v1519 = vpop.xlane.xlu0 %1518
      %v1520 = vsub.f32 %v1512, %v1516
      %v1521 = vsub.f32 %v1513, %v1519
      %v1522 = vmul.f32 %v1520, 1.442695
      %v1523 = vpow.pop %v1522
      %v1524 = vmul.f32 %v1521, 1.442695
      %v1525 = vpow.pop %v1524
      %v1526 = vsel %vm1026, %v1523, 0.0
      %1527 = vadd.xlane.f32.xlu0 %v1526
      %v1528 = vpop.xlane.xlu0 %1527
      %v1529 = vsel %vm1026, %v1525, 0.0
      %1530 = vadd.xlane.f32.xlu0 %v1529
      %v1531 = vpop.xlane.xlu0 %1530
      %v1532 = vrcp.pop %v1528
      %v1533 = vrcp.pop %v1531
      %v1534 = vmul.f32 %v1523, %v1532
      %v1535 = vmul.f32 %v1525, %v1533
      %v1536 = vpack.c.bf16 %v1535, %v1534
      %1537 = vrot.lane.b32.xlu0 %v971, 40
      %v1538 = vpop.permute.xlu0 %1537
      %v1541 = vsel %vm1026, %v1536, 0
      %1543 = vmatprep.subr.bf16.mxu0 0
      %1544 = vmatpush1.bf16.msra.mxu0 %v1538
      %1545 = vmatprep.subr.bf16.mxu0 0
      %1546 = vmatpush1.bf16.msra.mxu0 0
      %1547 = vmatprep.subr.bf16.mxu0 0
      %1548 = vmatpush1.bf16.msra.mxu0 0
      %1549 = vmatprep.subr.bf16.mxu0 0
      %1550 = vmatpush1.bf16.msra.mxu0 0
      %1551 = vmatprep.subr.bf16.mxu0 0
      %1552 = vmatpush1.bf16.msra.mxu0 0
      %1553 = vmatprep.subr.bf16.mxu0 0
      %1554 = vmatpush1.bf16.msra.mxu0 0
      %1555 = vmatprep.subr.bf16.mxu0 0
      %1556 = vmatpush1.bf16.msra.mxu0 0
      %1557 = vmatprep.subr.bf16.mxu0 0
      %1558 = vmatpush1.bf16.msra.mxu0 0
      %1559 = vmatprep.subr.bf16.mxu0 0
      %1560 = vmatpush1.bf16.msra.mxu0 0
      %1561 = vmatprep.subr.bf16.mxu0 0
      %1562 = vmatpush1.bf16.msra.mxu0 0
      %1563 = vmatprep.subr.bf16.mxu0 0
      %1564 = vmatpush1.bf16.msra.mxu0 0
      %1565 = vmatprep.subr.bf16.mxu0 0
      %1566 = vmatpush1.bf16.msra.mxu0 0
      %1567 = vmatprep.subr.bf16.mxu0 0
      %1568 = vmatpush1.bf16.msra.mxu0 0
      %1569 = vmatprep.subr.bf16.mxu0 0
      %1570 = vmatpush1.bf16.msra.mxu0 0
      %1571 = vmatprep.subr.bf16.mxu0 0
      %1572 = vmatpush1.bf16.msra.mxu0 0
      %1573 = vmatprep.subr.bf16.mxu0 0
      %1574 = vmatpush1.bf16.msra.mxu0 0
      %1575 = vmatprep.mubr.bf16.mxu0 0
      %1576 = vmatmul.mubr.bf16.gmra.mrb[0].mxu0 %v1541
      %v1577 = vpop.f32.mrb[0].mxu0
      %v1578 = vadd.f32 0.0, %v1577
      %v1579 = vpop.f32.mrb[0].mxu0
      %v1580 = vpop.f32.mrb[0].mxu0
      %v1581 = vadd.f32 0.0, %v1580
      %v1582 = vpop.f32.mrb[0].mxu0
      %1583 = vdwg.mxu0
      %1586 = vrot.lane.b32.xlu0 %v1254, 8
      %v1587 = vpop.permute.xlu0 %1586
      %1588 = vrot.lane.b32.xlu0 %v1257, 8
      %v1589 = vpop.permute.xlu0 %1588
      %1594 = vrot.lane.b32.xlu0 %v1416, 16
      %v1595 = vpop.permute.xlu0 %1594
      %1596 = vrot.lane.b32.xlu0 %v1419, 16
      %v1597 = vpop.permute.xlu0 %1596
      %1602 = vrot.lane.b32.xlu0 %v1578, 24
      %v1603 = vpop.permute.xlu0 %1602
      %1604 = vrot.lane.b32.xlu0 %v1581, 24
      %v1605 = vpop.permute.xlu0 %1604
      %v1608 = vsel %vm973, %v1092, %v1587
      %v1609 = vsel %vm973, %v1095, %v1589
      %v1610 = vsel %vm1026, %v1608, %v1595
      %v1611 = vsel %vm1026, %v1609, %v1597
      %vm1612 = vcmask 195584
      %v1613 = vsel %vm1612, %v1610, %v1603
      %v1614 = vsel %vm1612, %v1611, %v1605
      %v1615 = vpack.c.bf16 %v1614, %v1613
      %v1617 = vlaneseq
      %v1618 = vshrl.u32 %v1617, 7
      %v1619 = vsub.s32 0, %v1618
      %v1620 = vrot.slane %v850, %v1619
      %v1626 = vunpack.c.l.b16 %v846
      %v1627 = vunpack.c.l.b16 %v847
      %v1628 = vunpack.c.l.b16 %v848
      %v1629 = vunpack.c.l.b16 %v849
      %v1630 = vpack.c.b16 %v1627, %v1626
      %v1631 = vpack.c.b16 %v1629, %v1628
      %v1635 = vsel %vm886, %v1615, 0
      %1637 = vmatprep.subr.bf16.mxu0 0
      %1638 = vmatpush1.bf16.msra.mxu0 %v1630
      %1639 = vmatprep.subr.bf16.mxu0 0
      %1640 = vmatpush1.bf16.msra.mxu0 %v1631
      %1641 = vmatprep.subr.bf16.mxu0 0
      %1642 = vmatpush1.bf16.msra.mxu0 0
      %1643 = vmatprep.subr.bf16.mxu0 0
      %1644 = vmatpush1.bf16.msra.mxu0 0
      %1645 = vmatprep.subr.bf16.mxu0 0
      %1646 = vmatpush1.bf16.msra.mxu0 0
      %1647 = vmatprep.subr.bf16.mxu0 0
      %1648 = vmatpush1.bf16.msra.mxu0 0
      %1649 = vmatprep.subr.bf16.mxu0 0
      %1650 = vmatpush1.bf16.msra.mxu0 0
      %1651 = vmatprep.subr.bf16.mxu0 0
      %1652 = vmatpush1.bf16.msra.mxu0 0
      %1653 = vmatprep.subr.bf16.mxu0 0
      %1654 = vmatpush1.bf16.msra.mxu0 0
      %1655 = vmatprep.subr.bf16.mxu0 0
      %1656 = vmatpush1.bf16.msra.mxu0 0
      %1657 = vmatprep.subr.bf16.mxu0 0
      %1658 = vmatpush1.bf16.msra.mxu0 0
      %1659 = vmatprep.subr.bf16.mxu0 0
      %1660 = vmatpush1.bf16.msra.mxu0 0
      %1661 = vmatprep.subr.bf16.mxu0 0
      %1662 = vmatpush1.bf16.msra.mxu0 0
      %1663 = vmatprep.subr.bf16.mxu0 0
      %1664 = vmatpush1.bf16.msra.mxu0 0
      %1665 = vmatprep.subr.bf16.mxu0 0
      %1666 = vmatpush1.bf16.msra.mxu0 0
      %1667 = vmatprep.subr.bf16.mxu0 0
      %1668 = vmatpush1.bf16.msra.mxu0 0
      %1669 = vmatprep.mubr.bf16.mxu0 0
      %1670 = vmatmul.mubr.bf16.gmra.mrb[0].mxu0 %v1635
      %v1671 = vpop.f32.mrb[0].mxu0
      %v1672 = vadd.f32 %v1620, %v1671
      %v1673 = vpop.f32.mrb[0].mxu0
      %v1674 = vpop.f32.mrb[0].mxu0
      %v1675 = vadd.f32 %v1620, %v1674
      %v1676 = vpop.f32.mrb[0].mxu0
      %1677 = vdwg.mxu0
      %v1678 = vadd.f32 %v837, %v1672
      %v1679 = vadd.f32 %v838, %v1675
      %v1680 = vsel %vm886, %v1678, 0.0
      %1681 = vadd.xlane.f32.xlu0 %v1680
      %v1682 = vpop.xlane.xlu0 %1681
      %v1683 = vsel %vm886, %v1679, 0.0
      %1684 = vadd.xlane.f32.xlu0 %v1683
      %v1685 = vpop.xlane.xlu0 %1684
      %v1686 = vrcp.pop 32.0
      %v1687 = vmul.f32 %v1682, %v1686
      %v1688 = vmul.f32 %v1685, %v1686
      %v1689 = vsub.f32 %v1678, %v1687
      %v1690 = vsub.f32 %v1679, %v1688
      %v1691 = vmul.f32 %v1689, %v1689
      %v1692 = vmul.f32 %v1690, %v1690
      %v1693 = vsel %vm886, %v1691, 0.0
      %1694 = vadd.xlane.f32.xlu0 %v1693
      %v1695 = vpop.xlane.xlu0 %1694
      %v1696 = vsel %vm886, %v1692, 0.0
      %1697 = vadd.xlane.f32.xlu0 %v1696
      %v1698 = vpop.xlane.xlu0 %1697
      %v1699 = vmul.f32 %v1695, %v1686
      %v1700 = vmul.f32 %v1698, %v1686
      %v1701 = vadd.f32 %v1699, 1e-12
      %v1702 = vadd.f32 %v1700, 1e-12
      %v1703 = vrsqrt.pop %v1701
      %v1704 = vrsqrt.pop %v1702
      %v1705 = vmul.f32 %v1689, %v1703
      %v1706 = vmul.f32 %v1690, %v1704
      %v1707 = vlaneseq
      %v1708 = vshrl.u32 %v1707, 7
      %v1709 = vsub.s32 0, %v1708
      %v1710 = vrot.slane %v851, %v1709
      %v1711 = vmul.f32 %v1705, %v1710
      %v1712 = vmul.f32 %v1706, %v1710
      %v1713 = vlaneseq
      %v1714 = vshrl.u32 %v1713, 7
      %v1715 = vsub.s32 1, %v1714
      %v1716 = vrot.slane %v851, %v1715
      %v1717 = vadd.f32 %v1711, %v1716
      %v1718 = vadd.f32 %v1712, %v1716
      %v1719 = vpack.c.bf16 %v1718, %v1717
      %v1721 = vlaneseq
      %v1722 = vshrl.u32 %v1721, 7
      %v1723 = vsub.s32 0, %v1722
      %v1724 = vrot.slane %v856, %v1723
      %v1730 = vunpack.c.l.b16 %v852
      %v1731 = vunpack.c.l.b16 %v853
      %v1732 = vunpack.c.l.b16 %v854
      %v1733 = vunpack.c.l.b16 %v855
      %v1734 = vpack.c.b16 %v1731, %v1730
      %v1735 = vpack.c.b16 %v1733, %v1732
      %v1739 = vsel %vm886, %v1719, 0
      %1741 = vmatprep.subr.bf16.mxu0 0
      %1742 = vmatpush1.bf16.msra.mxu0 %v1734
      %1743 = vmatprep.subr.bf16.mxu0 0
      %1744 = vmatpush1.bf16.msra.mxu0 %v1735
      %1745 = vmatprep.subr.bf16.mxu0 0
      %1746 = vmatpush1.bf16.msra.mxu0 0
      %1747 = vmatprep.subr.bf16.mxu0 0
      %1748 = vmatpush1.bf16.msra.mxu0 0
      %1749 = vmatprep.subr.bf16.mxu0 0
      %1750 = vmatpush1.bf16.msra.mxu0 0
      %1751 = vmatprep.subr.bf16.mxu0 0
      %1752 = vmatpush1.bf16.msra.mxu0 0
      %1753 = vmatprep.subr.bf16.mxu0 0
      %1754 = vmatpush1.bf16.msra.mxu0 0
      %1755 = vmatprep.subr.bf16.mxu0 0
      %1756 = vmatpush1.bf16.msra.mxu0 0
      %1757 = vmatprep.subr.bf16.mxu0 0
      %1758 = vmatpush1.bf16.msra.mxu0 0
      %1759 = vmatprep.subr.bf16.mxu0 0
      %1760 = vmatpush1.bf16.msra.mxu0 0
      %1761 = vmatprep.subr.bf16.mxu0 0
      %1762 = vmatpush1.bf16.msra.mxu0 0
      %1763 = vmatprep.subr.bf16.mxu0 0
      %1764 = vmatpush1.bf16.msra.mxu0 0
      %1765 = vmatprep.subr.bf16.mxu0 0
      %1766 = vmatpush1.bf16.msra.mxu0 0
      %1767 = vmatprep.subr.bf16.mxu0 0
      %1768 = vmatpush1.bf16.msra.mxu0 0
      %1769 = vmatprep.subr.bf16.mxu0 0
      %1770 = vmatpush1.bf16.msra.mxu0 0
      %1771 = vmatprep.subr.bf16.mxu0 0
      %1772 = vmatpush1.bf16.msra.mxu0 0
      %1773 = vmatprep.mubr.bf16.mxu0 0
      %1774 = vmatmul.mubr.bf16.gmra.mrb[0].mxu0 %v1739
      %v1775 = vpop.f32.mrb[0].mxu0
      %v1776 = vadd.f32 %v1724, %v1775
      %v1777 = vpop.f32.mrb[0].mxu0
      %v1778 = vpop.f32.mrb[0].mxu0
      %v1779 = vadd.f32 %v1724, %v1778
      %v1780 = vpop.f32.mrb[0].mxu0
      %1781 = vdwg.mxu0
      %v1782 = vmul.f32 %v1776, 0.5
      %v1783 = vmul.f32 %v1779, 0.5
      %v1784 = vmul.f32 %v1776, 0.044715
      %v1785 = vmul.f32 %v1779, 0.044715
      %v1786 = vmul.f32 %v1784, %v1776
      %v1787 = vmul.f32 %v1785, %v1779
      %v1788 = vmul.f32 %v1786, %v1776
      %v1789 = vmul.f32 %v1787, %v1779
      %v1790 = vadd.f32 %v1776, %v1788
      %v1791 = vadd.f32 %v1779, %v1789
      %v1792 = vmul.f32 %v1790, 0.7978846
      %v1793 = vmul.f32 %v1791, 0.7978846
      %v1794 = vtanh.pop %v1792
      %v1795 = vtanh.pop %v1793
      %v1796 = vadd.f32 %v1794, 1.0
      %v1797 = vadd.f32 %v1795, 1.0
      %v1798 = vmul.f32 %v1782, %v1796
      %v1799 = vmul.f32 %v1783, %v1797
      %v1800 = vpack.c.bf16 %v1799, %v1798
      %v1809 = vunpack.c.l.b16 %v857
      %v1810 = vunpack.c.l.b16 %v858
      %v1811 = vunpack.c.l.b16 %v859
      %v1812 = vunpack.c.l.b16 %v860
      %v1813 = vunpack.c.l.b16 %v861
      %v1814 = vunpack.c.l.b16 %v862
      %v1815 = vunpack.c.l.b16 %v863
      %v1816 = vunpack.c.l.b16 %v864
      %v1817 = vpack.c.b16 %v1810, %v1809
      %v1818 = vpack.c.b16 %v1812, %v1811
      %v1819 = vpack.c.b16 %v1814, %v1813
      %v1820 = vpack.c.b16 %v1816, %v1815
      %vm1825 = vcmask 523264
      %v1827 = vsel %vm1825, %v1800, 0
      %1829 = vmatprep.subr.bf16.mxu0 0
      %1830 = vmatpush1.bf16.msra.mxu0 %v1817
      %1831 = vmatprep.subr.bf16.mxu0 0
      %1832 = vmatpush1.bf16.msra.mxu0 %v1818
      %1833 = vmatprep.subr.bf16.mxu0 0
      %1834 = vmatpush1.bf16.msra.mxu0 %v1819
      %1835 = vmatprep.subr.bf16.mxu0 0
      %1836 = vmatpush1.bf16.msra.mxu0 %v1820
      %1837 = vmatprep.subr.bf16.mxu0 0
      %1838 = vmatpush1.bf16.msra.mxu0 0
      %1839 = vmatprep.subr.bf16.mxu0 0
      %1840 = vmatpush1.bf16.msra.mxu0 0
      %1841 = vmatprep.subr.bf16.mxu0 0
      %1842 = vmatpush1.bf16.msra.mxu0 0
      %1843 = vmatprep.subr.bf16.mxu0 0
      %1844 = vmatpush1.bf16.msra.mxu0 0
      %1845 = vmatprep.subr.bf16.mxu0 0
      %1846 = vmatpush1.bf16.msra.mxu0 0
      %1847 = vmatprep.subr.bf16.mxu0 0
      %1848 = vmatpush1.bf16.msra.mxu0 0
      %1849 = vmatprep.subr.bf16.mxu0 0
      %1850 = vmatpush1.bf16.msra.mxu0 0
      %1851 = vmatprep.subr.bf16.mxu0 0
      %1852 = vmatpush1.bf16.msra.mxu0 0
      %1853 = vmatprep.subr.bf16.mxu0 0
      %1854 = vmatpush1.bf16.msra.mxu0 0
      %1855 = vmatprep.subr.bf16.mxu0 0
      %1856 = vmatpush1.bf16.msra.mxu0 0
      %1857 = vmatprep.subr.bf16.mxu0 0
      %1858 = vmatpush1.bf16.msra.mxu0 0
      %1859 = vmatprep.subr.bf16.mxu0 0
      %1860 = vmatpush1.bf16.msra.mxu0 0
      %1861 = vmatprep.mubr.bf16.mxu0 0
      %1862 = vmatmul.mubr.bf16.gmra.mrb[0].mxu0 %v1827
      %v1863 = vpop.f32.mrb[0].mxu0
      %v1864 = vadd.f32 0.0, %v1863
      %v1865 = vpop.f32.mrb[0].mxu0
      %v1866 = vpop.f32.mrb[0].mxu0
      %v1867 = vadd.f32 0.0, %v1866
      %v1868 = vpop.f32.mrb[0].mxu0
      %1869 = vdwg.mxu0
      %v1870 = vadd.f32 %v1717, %v1864
      %v1871 = vadd.f32 %v1718, %v1867
      %v1873 = vlaneseq
      %v1874 = vshrl.u32 %v1873, 7
      %v1875 = vsub.s32 0, %v1874
      %v1876 = vrot.slane %v865, %v1875
      %v1878 = vadd.f32 %v1870, %v1876
      %v1879 = vadd.f32 %v1871, %v1876
      %v1880 = vsel %vm886, %v1878, 0.0
      %1881 = vadd.xlane.f32.xlu0 %v1880
      %v1882 = vpop.xlane.xlu0 %1881
      %v1883 = vsel %vm886, %v1879, 0.0
      %1884 = vadd.xlane.f32.xlu0 %v1883
      %v1885 = vpop.xlane.xlu0 %1884
      %v1886 = vmul.f32 %v1882, %v1686
      %v1887 = vmul.f32 %v1885, %v1686
      %v1888 = vsub.f32 %v1878, %v1886
      %v1889 = vsub.f32 %v1879, %v1887
      %v1890 = vmul.f32 %v1888, %v1888
      %v1891 = vmul.f32 %v1889, %v1889
      %v1892 = vsel %vm886, %v1890, 0.0
      %1893 = vadd.xlane.f32.xlu0 %v1892
      %v1894 = vpop.xlane.xlu0 %1893
      %v1895 = vsel %vm886, %v1891, 0.0
      %1896 = vadd.xlane.f32.xlu0 %v1895
      %v1897 = vpop.xlane.xlu0 %1896
      %v1898 = vmul.f32 %v1894, %v1686
      %v1899 = vmul.f32 %v1897, %v1686
      %v1900 = vadd.f32 %v1898, 1e-12
      %v1901 = vadd.f32 %v1899, 1e-12
      %v1902 = vrsqrt.pop %v1900
      %v1903 = vrsqrt.pop %v1901
      %v1904 = vmul.f32 %v1888, %v1902
      %v1905 = vmul.f32 %v1889, %v1903
      %v1906 = vlaneseq
      %v1907 = vshrl.u32 %v1906, 7
      %v1908 = vsub.s32 0, %v1907
      %v1909 = vrot.slane %v866, %v1908
      %v1910 = vmul.f32 %v1904, %v1909
      %v1911 = vmul.f32 %v1905, %v1909
      %v1912 = vlaneseq
      %v1913 = vshrl.u32 %v1912, 7
      %v1914 = vsub.s32 1, %v1913
      %v1915 = vrot.slane %v866, %v1914
      %v1916 = vadd.f32 %v1910, %v1915
      %v1917 = vadd.f32 %v1911, %v1915
      %1918 = vst.msk [vmem:[#allocation2] sm:$0xff] %vm886, %v1916
      %1919 = vst.msk [vmem:[#allocation2 + $0x8] sm:$0xff] %vm886, %v1917
      %p1920 = scmp.eq.s32.totalorder %s29, 1
      // Predicated region
      $region89: #{mectec_forward.3} parent=83 // pred_check
        %p1921 = pneg %p1920
      $region90: #{mectec_forward.3} parent=83 // pred_check_branch
        %1923 = sbr.rel (%p1921) target = $region92
      $region91: #{mectec_forward.3} parent=83 // pred_region
        %1924 = vst.msk [vmem:[%s16] sm:$0xff] %vm886, %v1916
        %1925 = vst.msk [vmem:[%s16 + $0x8] sm:$0xff] %vm886, %v1917
      $region92: #{mectec_forward.3} parent=83 // pred_fallthru
        _
      // Predicated region
      $region93: #{mectec_forward.3} parent=83 // pred_check
        %p1926 = pneg %p428
      $region94: #{mectec_forward.3} parent=83 // pred_check_branch
        %1928 = sbr.rel (%p1926) target = $region96
      $region95: #{mectec_forward.3} parent=83 // pred_region
        _
      $region96: #{mectec_forward.3} parent=83 // pred_fallthru
        _
      // Predicated region
      $region97: #{mectec_forward.3} parent=83 // pred_check
        %p1929 = pneg %p449
      $region98: #{mectec_forward.3} parent=83 // pred_check_branch
        %1931 = sbr.rel (%p1929) target = $region100
      $region99: #{mectec_forward.3} parent=83 // pred_region
        _
      $region100: #{mectec_forward.3} parent=83 // pred_fallthru
        _
      // Predicated region
      $region101: #{mectec_forward.3} parent=83 // pred_check
        %p1932 = pneg %p428
      $region102: #{mectec_forward.3} parent=83 // pred_check_branch
        %1934 = sbr.rel (%p1932) target = $region104
      $region103: #{mectec_forward.3} parent=83 // pred_region
        _
      $region104: #{mectec_forward.3} parent=83 // pred_fallthru
        _
      // Predicated region
      $region105: #{mectec_forward.3} parent=83 // pred_check
        %p1935 = pneg %p449
      $region106: #{mectec_forward.3} parent=83 // pred_check_branch
        %1937 = sbr.rel (%p1935) target = $region108
      $region107: #{mectec_forward.3} parent=83 // pred_region
        _
      $region108: #{mectec_forward.3} parent=83 // pred_fallthru
        _
    $region84: #{mectec_forward.3} parent=5 // pred_fallthru
      _
    %p1938 = scmp.le.s32.totalorder 2, %s24
    // Predicated region
    $region109: #{mectec_forward.3} parent=5 // pred_check
      %p1939 = pneg %p1938
    $region110: #{mectec_forward.3} parent=5 // pred_check_branch
      %1941 = sbr.rel (%p1939) target = $region112
    $region111: #{mectec_forward.3} parent=5 // pred_region
      %s1942 = ssub.s32 %s24, 2
    $region112: #{mectec_forward.3} parent=5 // pred_fallthru
      _
  $region6: #{mectec_forward.3} parent=0 // loop_footer
    %s28 = sadd.s32 1, %s24
  $region7: #{mectec_forward.3} parent=0 // loop_footer_branch
    %23 = sbr.rel target = $region3
  $region8: #{mectec_forward.3} parent=0 // loop_exit
    _

// kernel: mectec_forward.4
$region0: #{mectec_forward.4}
  #allocation0 [shape = 'u32[]', space=smem, size = 0x4, offset = 0x4, fixed_abs, tag = 'smem constant byte address 0x4 - core index']
  #allocation1 [shape = 'u32[144,128]{1,0:T(1,128)}', space=vmem, size = 0x12000, scoped, tag = 'internal scratch']
  #allocation2 [shape = 'f32[16,32]{1,0:T(8,128)}', space=vmem, size = 0x2000, scoped, tag = 'scratch operand']
  %s0 = inlined_call_operand.vmem [shape: f32[16,32], index: 0, kind: input, shape index: {}]
  %s1 = inlined_call_operand.vmem [shape: f32[16,16], index: 1, kind: input, shape index: {}]
  %s2 = inlined_call_operand.vmem [shape: bf16[3,32,96], index: 2, kind: input, shape index: {}]
  %s3 = inlined_call_operand.vmem [shape: f32[3,1,96], index: 3, kind: input, shape index: {}]
  %s4 = inlined_call_operand.vmem [shape: bf16[3,32,32], index: 4, kind: input, shape index: {}]
  %s5 = inlined_call_operand.vmem [shape: f32[3,1,32], index: 5, kind: input, shape index: {}]
  %s6 = inlined_call_operand.vmem [shape: f32[3,2,32], index: 6, kind: input, shape index: {}]
  %s7 = inlined_call_operand.vmem [shape: bf16[3,32,64], index: 7, kind: input, shape index: {}]
  %s8 = inlined_call_operand.vmem [shape: f32[3,1,64], index: 8, kind: input, shape index: {}]
  %s9 = inlined_call_operand.vmem [shape: bf16[3,64,32], index: 9, kind: input, shape index: {}]
  %s10 = inlined_call_operand.vmem [shape: f32[3,1,32], index: 10, kind: input, shape index: {}]
  %s11 = inlined_call_operand.vmem [shape: f32[3,2,32], index: 11, kind: input, shape index: {}]
  %s12 = inlined_call_operand.vmem [shape: f32[16,32], index: 12, kind: output, shape index: {}]
  %s13 = sld [smem:[#allocation0]]
  $region89: #{mectec_forward.4} parent=0
    _
  %s15 = ssub.s32 1, %s13
  %s16 = scalar_select 0, %s15, %s13
  loop: start=0, step=1, limit=5
  $region2: #{mectec_forward.4} parent=0 // loop_pre_header
    _
  $region3: #{mectec_forward.4} parent=0 // loop_header
    %s18 = sphi 0, %s22
    %p19 = scmp.ge.s32.totalorder %s18, 5
    %s26 = sphi 0, %s26
    %s28 = sphi 0, %s26
    %s29 = sphi 0, %s28
    %s43 = sphi 0, %s29
    %s47 = sphi 0, %s47
    %s49 = sphi 0, %s47
    %s50 = sphi 0, %s49
    %s64 = sphi 0, %s50
    %s70 = sphi 0, %s72
    %s73 = sphi 0, %s70
    %s74 = sphi 0, %s73
    %s90 = sphi 0, %s74
    %s96 = sphi 0, %s98
    %s99 = sphi 0, %s96
    %s100 = sphi 0, %s99
    %s116 = sphi 0, %s100
    %s122 = sphi 0, %s124
    %s125 = sphi 0, %s122
    %s126 = sphi 0, %s125
    %s142 = sphi 0, %s126
    %s148 = sphi 0, %s150
    %s151 = sphi 0, %s148
    %s152 = sphi 0, %s151
    %s168 = sphi 0, %s152
    %s174 = sphi 0, %s176
    %s177 = sphi 0, %s174
    %s178 = sphi 0, %s177
    %s194 = sphi 0, %s178
    %s200 = sphi 0, %s202
    %s203 = sphi 0, %s200
    %s204 = sphi 0, %s203
    %s220 = sphi 0, %s204
    %s226 = sphi 0, %s228
    %s229 = sphi 0, %s226
    %s230 = sphi 0, %s229
    %s246 = sphi 0, %s230
    %s252 = sphi 0, %s254
    %s255 = sphi 0, %s252
    %s256 = sphi 0, %s255
    %s272 = sphi 0, %s256
    %s278 = sphi 0, %s280
    %s281 = sphi 0, %s278
    %s282 = sphi 0, %s281
    %s298 = sphi 0, %s282
    %s304 = sphi 0, %s306
    %s307 = sphi 0, %s304
    %s308 = sphi 0, %s307
    %s324 = sphi 0, %s308
    %s328 = sphi 0, %s328
    %s330 = sphi 0, %s328
    %s331 = sphi 0, %s330
    %s345 = sphi 0, %s331
  $region4: #{mectec_forward.4} parent=0 // loop_header_branch
    %21 = sbr.rel (%p19) target = $region8
  $region5: #{mectec_forward.4} parent=0 // loop_body
    %s23 = ssub.s32 %s18, 1
    %s24 = ssub.s32 %s18, 2
    %s25 = sadd.s32 %s18, 1
    %s27 = sadd.s32 %s26, 1
    %p30 = scmp.eq.s32.totalorder %s18, 2
    %p31 = scmp.ne.s32.totalorder %s26, %s28
    %p32 = scmp.eq.s32.totalorder %s18, 0
    %p33 = por %p31, %p32
    %p34 = scmp.ne.s32.totalorder %s26, %s28
    %p35 = scmp.eq.s32.totalorder %s23, 2
    %p36 = por %p34, %p35
    %p37 = scmp.ne.s32.totalorder %s28, %s29
    %p38 = scmp.eq.s32.totalorder %s23, 0
    %p39 = por %p37, %p38
    %p40 = scmp.ne.s32.totalorder %s28, %s29
    %p41 = scmp.eq.s32.totalorder %s24, 2
    %p42 = por %p40, %p41
    %p44 = scmp.ne.s32.totalorder %s29, %s43
    %p45 = scmp.eq.s32.totalorder %s24, 0
    %p46 = por %p44, %p45
    %s48 = sadd.s32 %s47, 1
    %p51 = scmp.eq.s32.totalorder %s18, 2
    %p52 = scmp.ne.s32.totalorder %s47, %s49
    %p53 = scmp.eq.s32.totalorder %s18, 0
    %p54 = por %p52, %p53
    %p55 = scmp.ne.s32.totalorder %s47, %s49
    %p56 = scmp.eq.s32.totalorder %s23, 2
    %p57 = por %p55, %p56
    %p58 = scmp.ne.s32.totalorder %s49, %s50
    %p59 = scmp.eq.s32.totalorder %s23, 0
    %p60 = por %p58, %p59
    %p61 = scmp.ne.s32.totalorder %s49, %s50
    %p62 = scmp.eq.s32.totalorder %s24, 2
    %p63 = por %p61, %p62
    %p65 = scmp.ne.s32.totalorder %s50, %s64
    %p66 = scmp.eq.s32.totalorder %s24, 0
    %p67 = por %p65, %p66
    %s68 = ssub.s32 %s18, %s25
    %p69 = scmp.eq.s32.totalorder %s68, 0
    %s71 = sadd.s32 %s70, 1
    %s72 = scalar_select %p69, %s70, %s71
    %p75 = pneg %p69
    %p76 = scmp.eq.s32.totalorder %s18, 2
    %p77 = por %p75, %p76
    %p78 = scmp.ne.s32.totalorder %s70, %s73
    %p79 = scmp.eq.s32.totalorder %s18, 0
    %p80 = por %p78, %p79
    %p81 = scmp.ne.s32.totalorder %s70, %s73
    %p82 = scmp.eq.s32.totalorder %s23, 2
    %p83 = por %p81, %p82
    %p84 = scmp.ne.s32.totalorder %s73, %s74
    %p85 = scmp.eq.s32.totalorder %s23, 0
    %p86 = por %p84, %p85
    %p87 = scmp.ne.s32.totalorder %s73, %s74
    %p88 = scmp.eq.s32.totalorder %s24, 2
    %p89 = por %p87, %p88
    %p91 = scmp.ne.s32.totalorder %s74, %s90
    %p92 = scmp.eq.s32.totalorder %s24, 0
    %p93 = por %p91, %p92
    %s94 = ssub.s32 %s18, %s25
    %p95 = scmp.eq.s32.totalorder %s94, 0
    %s97 = sadd.s32 %s96, 1
    %s98 = scalar_select %p95, %s96, %s97
    %p101 = pneg %p95
    %p102 = scmp.eq.s32.totalorder %s18, 2
    %p103 = por %p101, %p102
    %p104 = scmp.ne.s32.totalorder %s96, %s99
    %p105 = scmp.eq.s32.totalorder %s18, 0
    %p106 = por %p104, %p105
    %p107 = scmp.ne.s32.totalorder %s96, %s99
    %p108 = scmp.eq.s32.totalorder %s23, 2
    %p109 = por %p107, %p108
    %p110 = scmp.ne.s32.totalorder %s99, %s100
    %p111 = scmp.eq.s32.totalorder %s23, 0
    %p112 = por %p110, %p111
    %p113 = scmp.ne.s32.totalorder %s99, %s100
    %p114 = scmp.eq.s32.totalorder %s24, 2
    %p115 = por %p113, %p114
    %p117 = scmp.ne.s32.totalorder %s100, %s116
    %p118 = scmp.eq.s32.totalorder %s24, 0
    %p119 = por %p117, %p118
    %s120 = ssub.s32 %s18, %s25
    %p121 = scmp.eq.s32.totalorder %s120, 0
    %s123 = sadd.s32 %s122, 1
    %s124 = scalar_select %p121, %s122, %s123
    %p127 = pneg %p121
    %p128 = scmp.eq.s32.totalorder %s18, 2
    %p129 = por %p127, %p128
    %p130 = scmp.ne.s32.totalorder %s122, %s125
    %p131 = scmp.eq.s32.totalorder %s18, 0
    %p132 = por %p130, %p131
    %p133 = scmp.ne.s32.totalorder %s122, %s125
    %p134 = scmp.eq.s32.totalorder %s23, 2
    %p135 = por %p133, %p134
    %p136 = scmp.ne.s32.totalorder %s125, %s126
    %p137 = scmp.eq.s32.totalorder %s23, 0
    %p138 = por %p136, %p137
    %p139 = scmp.ne.s32.totalorder %s125, %s126
    %p140 = scmp.eq.s32.totalorder %s24, 2
    %p141 = por %p139, %p140
    %p143 = scmp.ne.s32.totalorder %s126, %s142
    %p144 = scmp.eq.s32.totalorder %s24, 0
    %p145 = por %p143, %p144
    %s146 = ssub.s32 %s18, %s25
    %p147 = scmp.eq.s32.totalorder %s146, 0
    %s149 = sadd.s32 %s148, 1
    %s150 = scalar_select %p147, %s148, %s149
    %p153 = pneg %p147
    %p154 = scmp.eq.s32.totalorder %s18, 2
    %p155 = por %p153, %p154
    %p156 = scmp.ne.s32.totalorder %s148, %s151
    %p157 = scmp.eq.s32.totalorder %s18, 0
    %p158 = por %p156, %p157
    %p159 = scmp.ne.s32.totalorder %s148, %s151
    %p160 = scmp.eq.s32.totalorder %s23, 2
    %p161 = por %p159, %p160
    %p162 = scmp.ne.s32.totalorder %s151, %s152
    %p163 = scmp.eq.s32.totalorder %s23, 0
    %p164 = por %p162, %p163
    %p165 = scmp.ne.s32.totalorder %s151, %s152
    %p166 = scmp.eq.s32.totalorder %s24, 2
    %p167 = por %p165, %p166
    %p169 = scmp.ne.s32.totalorder %s152, %s168
    %p170 = scmp.eq.s32.totalorder %s24, 0
    %p171 = por %p169, %p170
    %s172 = ssub.s32 %s18, %s25
    %p173 = scmp.eq.s32.totalorder %s172, 0
    %s175 = sadd.s32 %s174, 1
    %s176 = scalar_select %p173, %s174, %s175
    %p179 = pneg %p173
    %p180 = scmp.eq.s32.totalorder %s18, 2
    %p181 = por %p179, %p180
    %p182 = scmp.ne.s32.totalorder %s174, %s177
    %p183 = scmp.eq.s32.totalorder %s18, 0
    %p184 = por %p182, %p183
    %p185 = scmp.ne.s32.totalorder %s174, %s177
    %p186 = scmp.eq.s32.totalorder %s23, 2
    %p187 = por %p185, %p186
    %p188 = scmp.ne.s32.totalorder %s177, %s178
    %p189 = scmp.eq.s32.totalorder %s23, 0
    %p190 = por %p188, %p189
    %p191 = scmp.ne.s32.totalorder %s177, %s178
    %p192 = scmp.eq.s32.totalorder %s24, 2
    %p193 = por %p191, %p192
    %p195 = scmp.ne.s32.totalorder %s178, %s194
    %p196 = scmp.eq.s32.totalorder %s24, 0
    %p197 = por %p195, %p196
    %s198 = ssub.s32 %s18, %s25
    %p199 = scmp.eq.s32.totalorder %s198, 0
    %s201 = sadd.s32 %s200, 1
    %s202 = scalar_select %p199, %s200, %s201
    %p205 = pneg %p199
    %p206 = scmp.eq.s32.totalorder %s18, 2
    %p207 = por %p205, %p206
    %p208 = scmp.ne.s32.totalorder %s200, %s203
    %p209 = scmp.eq.s32.totalorder %s18, 0
    %p210 = por %p208, %p209
    %p211 = scmp.ne.s32.totalorder %s200, %s203
    %p212 = scmp.eq.s32.totalorder %s23, 2
    %p213 = por %p211, %p212
    %p214 = scmp.ne.s32.totalorder %s203, %s204
    %p215 = scmp.eq.s32.totalorder %s23, 0
    %p216 = por %p214, %p215
    %p217 = scmp.ne.s32.totalorder %s203, %s204
    %p218 = scmp.eq.s32.totalorder %s24, 2
    %p219 = por %p217, %p218
    %p221 = scmp.ne.s32.totalorder %s204, %s220
    %p222 = scmp.eq.s32.totalorder %s24, 0
    %p223 = por %p221, %p222
    %s224 = ssub.s32 %s18, %s25
    %p225 = scmp.eq.s32.totalorder %s224, 0
    %s227 = sadd.s32 %s226, 1
    %s228 = scalar_select %p225, %s226, %s227
    %p231 = pneg %p225
    %p232 = scmp.eq.s32.totalorder %s18, 2
    %p233 = por %p231, %p232
    %p234 = scmp.ne.s32.totalorder %s226, %s229
    %p235 = scmp.eq.s32.totalorder %s18, 0
    %p236 = por %p234, %p235
    %p237 = scmp.ne.s32.totalorder %s226, %s229
    %p238 = scmp.eq.s32.totalorder %s23, 2
    %p239 = por %p237, %p238
    %p240 = scmp.ne.s32.totalorder %s229, %s230
    %p241 = scmp.eq.s32.totalorder %s23, 0
    %p242 = por %p240, %p241
    %p243 = scmp.ne.s32.totalorder %s229, %s230
    %p244 = scmp.eq.s32.totalorder %s24, 2
    %p245 = por %p243, %p244
    %p247 = scmp.ne.s32.totalorder %s230, %s246
    %p248 = scmp.eq.s32.totalorder %s24, 0
    %p249 = por %p247, %p248
    %s250 = ssub.s32 %s18, %s25
    %p251 = scmp.eq.s32.totalorder %s250, 0
    %s253 = sadd.s32 %s252, 1
    %s254 = scalar_select %p251, %s252, %s253
    %p257 = pneg %p251
    %p258 = scmp.eq.s32.totalorder %s18, 2
    %p259 = por %p257, %p258
    %p260 = scmp.ne.s32.totalorder %s252, %s255
    %p261 = scmp.eq.s32.totalorder %s18, 0
    %p262 = por %p260, %p261
    %p263 = scmp.ne.s32.totalorder %s252, %s255
    %p264 = scmp.eq.s32.totalorder %s23, 2
    %p265 = por %p263, %p264
    %p266 = scmp.ne.s32.totalorder %s255, %s256
    %p267 = scmp.eq.s32.totalorder %s23, 0
    %p268 = por %p266, %p267
    %p269 = scmp.ne.s32.totalorder %s255, %s256
    %p270 = scmp.eq.s32.totalorder %s24, 2
    %p271 = por %p269, %p270
    %p273 = scmp.ne.s32.totalorder %s256, %s272
    %p274 = scmp.eq.s32.totalorder %s24, 0
    %p275 = por %p273, %p274
    %s276 = ssub.s32 %s18, %s25
    %p277 = scmp.eq.s32.totalorder %s276, 0
    %s279 = sadd.s32 %s278, 1
    %s280 = scalar_select %p277, %s278, %s279
    %p283 = pneg %p277
    %p284 = scmp.eq.s32.totalorder %s18, 2
    %p285 = por %p283, %p284
    %p286 = scmp.ne.s32.totalorder %s278, %s281
    %p287 = scmp.eq.s32.totalorder %s18, 0
    %p288 = por %p286, %p287
    %p289 = scmp.ne.s32.totalorder %s278, %s281
    %p290 = scmp.eq.s32.totalorder %s23, 2
    %p291 = por %p289, %p290
    %p292 = scmp.ne.s32.totalorder %s281, %s282
    %p293 = scmp.eq.s32.totalorder %s23, 0
    %p294 = por %p292, %p293
    %p295 = scmp.ne.s32.totalorder %s281, %s282
    %p296 = scmp.eq.s32.totalorder %s24, 2
    %p297 = por %p295, %p296
    %p299 = scmp.ne.s32.totalorder %s282, %s298
    %p300 = scmp.eq.s32.totalorder %s24, 0
    %p301 = por %p299, %p300
    %s302 = ssub.s32 %s18, %s25
    %p303 = scmp.eq.s32.totalorder %s302, 0
    %s305 = sadd.s32 %s304, 1
    %s306 = scalar_select %p303, %s304, %s305
    %p309 = pneg %p303
    %p310 = scmp.eq.s32.totalorder %s18, 2
    %p311 = por %p309, %p310
    %p312 = scmp.ne.s32.totalorder %s304, %s307
    %p313 = scmp.eq.s32.totalorder %s18, 0
    %p314 = por %p312, %p313
    %p315 = scmp.ne.s32.totalorder %s304, %s307
    %p316 = scmp.eq.s32.totalorder %s23, 2
    %p317 = por %p315, %p316
    %p318 = scmp.ne.s32.totalorder %s307, %s308
    %p319 = scmp.eq.s32.totalorder %s23, 0
    %p320 = por %p318, %p319
    %p321 = scmp.ne.s32.totalorder %s307, %s308
    %p322 = scmp.eq.s32.totalorder %s24, 2
    %p323 = por %p321, %p322
    %p325 = scmp.ne.s32.totalorder %s308, %s324
    %p326 = scmp.eq.s32.totalorder %s24, 0
    %p327 = por %p325, %p326
    %s329 = sadd.s32 %s328, 1
    %p332 = scmp.eq.s32.totalorder %s18, 2
    %p333 = scmp.ne.s32.totalorder %s328, %s330
    %p334 = scmp.eq.s32.totalorder %s18, 0
    %p335 = por %p333, %p334
    %p336 = scmp.ne.s32.totalorder %s328, %s330
    %p337 = scmp.eq.s32.totalorder %s23, 2
    %p338 = por %p336, %p337
    %p339 = scmp.ne.s32.totalorder %s330, %s331
    %p340 = scmp.eq.s32.totalorder %s23, 0
    %p341 = por %p339, %p340
    %p342 = scmp.ne.s32.totalorder %s330, %s331
    %p343 = scmp.eq.s32.totalorder %s24, 2
    %p344 = por %p342, %p343
    %p346 = scmp.ne.s32.totalorder %s331, %s345
    %p347 = scmp.eq.s32.totalorder %s24, 0
    %p348 = por %p346, %p347
    %p349 = scmp.le.s32.totalorder 1, %s18
    %p350 = scmp.lt.s32.totalorder %s18, 4
    %p351 = pnand %p349, %p350
    %p352 = pneg %p351
    // Predicated region
    $region9: #{mectec_forward.4} parent=5 // pred_check
      _
    $region10: #{mectec_forward.4} parent=5 // pred_check_branch
      %354 = sbr.rel (%p351) target = $region12
    $region11: #{mectec_forward.4} parent=5 // pred_region
      %s355 = ssub.s32 %s18, 1
      // Predicated region
      $region13: #{mectec_forward.4} parent=11 // pred_check
        %p356 = pneg %p39
      $region14: #{mectec_forward.4} parent=11 // pred_check_branch
        %358 = sbr.rel (%p356) target = $region16
      $region15: #{mectec_forward.4} parent=11 // pred_region
        _
      $region16: #{mectec_forward.4} parent=11 // pred_fallthru
        _
      // Predicated region
      $region17: #{mectec_forward.4} parent=11 // pred_check
        %p359 = pneg %p60
      $region18: #{mectec_forward.4} parent=11 // pred_check_branch
        %361 = sbr.rel (%p359) target = $region20
      $region19: #{mectec_forward.4} parent=11 // pred_region
        _
      $region20: #{mectec_forward.4} parent=11 // pred_fallthru
        _
    $region12: #{mectec_forward.4} parent=5 // pred_fallthru
      _
    %p362 = scmp.lt.s32.totalorder %s18, 3
    // Predicated region
    $region21: #{mectec_forward.4} parent=5 // pred_check
      %p363 = pneg %p362
    $region22: #{mectec_forward.4} parent=5 // pred_check_branch
      %365 = sbr.rel (%p363) target = $region24
    $region23: #{mectec_forward.4} parent=5 // pred_region
      // Predicated region
      $region25: #{mectec_forward.4} parent=23 // pred_check
        %p366 = pneg %p80
      $region26: #{mectec_forward.4} parent=23 // pred_check_branch
        %368 = sbr.rel (%p366) target = $region28
      $region27: #{mectec_forward.4} parent=23 // pred_region
        %p369 = scmp.lt.s32.totalorder %s18, 2
        %s370 = scalar_select %p369, %s18, 2
        %s371 = smul.addr %s370, 4
        %s372 = smul.addr %s371, 4
        %s373 = scalar_lea.vmem %s2, %s372
      $region28: #{mectec_forward.4} parent=23 // pred_fallthru
        _
      // Predicated region
      $region29: #{mectec_forward.4} parent=23 // pred_check
        %p374 = pneg %p106
      $region30: #{mectec_forward.4} parent=23 // pred_check_branch
        %376 = sbr.rel (%p374) target = $region32
      $region31: #{mectec_forward.4} parent=23 // pred_region
        %p377 = scmp.lt.s32.totalorder %s18, 2
        %s378 = scalar_select %p377, %s18, 2
        %s379 = scalar_lea.vmem %s3, %s378
      $region32: #{mectec_forward.4} parent=23 // pred_fallthru
        _
      // Predicated region
      $region33: #{mectec_forward.4} parent=23 // pred_check
        %p380 = pneg %p132
      $region34: #{mectec_forward.4} parent=23 // pred_check_branch
        %382 = sbr.rel (%p380) target = $region36
      $region35: #{mectec_forward.4} parent=23 // pred_region
        %p383 = scmp.lt.s32.totalorder %s18, 2
        %s384 = scalar_select %p383, %s18, 2
        %s385 = smul.addr %s384, 4
        %s386 = smul.addr %s385, 4
        %s387 = scalar_lea.vmem %s4, %s386
      $region36: #{mectec_forward.4} parent=23 // pred_fallthru
        _
      // Predicated region
      $region37: #{mectec_forward.4} parent=23 // pred_check
        %p388 = pneg %p158
      $region38: #{mectec_forward.4} parent=23 // pred_check_branch
        %390 = sbr.rel (%p388) target = $region40
      $region39: #{mectec_forward.4} parent=23 // pred_region
        %p391 = scmp.lt.s32.totalorder %s18, 2
        %s392 = scalar_select %p391, %s18, 2
        %s393 = scalar_lea.vmem %s5, %s392
      $region40: #{mectec_forward.4} parent=23 // pred_fallthru
        _
      // Predicated region
      $region41: #{mectec_forward.4} parent=23 // pred_check
        %p394 = pneg %p184
      $region42: #{mectec_forward.4} parent=23 // pred_check_branch
        %396 = sbr.rel (%p394) target = $region44
      $region43: #{mectec_forward.4} parent=23 // pred_region
        %p397 = scmp.lt.s32.totalorder %s18, 2
        %s398 = scalar_select %p397, %s18, 2
        %s399 = smul.addr %s398, 2
        %s400 = scalar_lea.vmem %s6, %s399
      $region44: #{mectec_forward.4} parent=23 // pred_fallthru
        _
      // Predicated region
      $region45: #{mectec_forward.4} parent=23 // pred_check
        %p401 = pneg %p210
      $region46: #{mectec_forward.4} parent=23 // pred_check_branch
        %403 = sbr.rel (%p401) target = $region48
      $region47: #{mectec_forward.4} parent=23 // pred_region
        %p404 = scmp.lt.s32.totalorder %s18, 2
        %s405 = scalar_select %p404, %s18, 2
        %s406 = smul.addr %s405, 4
        %s407 = smul.addr %s406, 4
        %s408 = scalar_lea.vmem %s7, %s407
      $region48: #{mectec_forward.4} parent=23 // pred_fallthru
        _
      // Predicated region
      $region49: #{mectec_forward.4} parent=23 // pred_check
        %p409 = pneg %p236
      $region50: #{mectec_forward.4} parent=23 // pred_check_branch
        %411 = sbr.rel (%p409) target = $region52
      $region51: #{mectec_forward.4} parent=23 // pred_region
        %p412 = scmp.lt.s32.totalorder %s18, 2
        %s413 = scalar_select %p412, %s18, 2
        %s414 = scalar_lea.vmem %s8, %s413
      $region52: #{mectec_forward.4} parent=23 // pred_fallthru
        _
      // Predicated region
      $region53: #{mectec_forward.4} parent=23 // pred_check
        %p415 = pneg %p262
      $region54: #{mectec_forward.4} parent=23 // pred_check_branch
        %417 = sbr.rel (%p415) target = $region56
      $region55: #{mectec_forward.4} parent=23 // pred_region
        %p418 = scmp.lt.s32.totalorder %s18, 2
        %s419 = scalar_select %p418, %s18, 2
        %s420 = smul.addr %s419, 8
        %s421 = smul.addr %s420, 4
        %s422 = scalar_lea.vmem %s9, %s421
      $region56: #{mectec_forward.4} parent=23 // pred_fallthru
        _
      // Predicated region
      $region57: #{mectec_forward.4} parent=23 // pred_check
        %p423 = pneg %p288
      $region58: #{mectec_forward.4} parent=23 // pred_check_branch
        %425 = sbr.rel (%p423) target = $region60
      $region59: #{mectec_forward.4} parent=23 // pred_region
        %p426 = scmp.lt.s32.totalorder %s18, 2
        %s427 = scalar_select %p426, %s18, 2
        %s428 = scalar_lea.vmem %s10, %s427
      $region60: #{mectec_forward.4} parent=23 // pred_fallthru
        _
      // Predicated region
      $region61: #{mectec_forward.4} parent=23 // pred_check
        %p429 = pneg %p314
      $region62: #{mectec_forward.4} parent=23 // pred_check_branch
        %431 = sbr.rel (%p429) target = $region64
      $region63: #{mectec_forward.4} parent=23 // pred_region
        %p432 = scmp.lt.s32.totalorder %s18, 2
        %s433 = scalar_select %p432, %s18, 2
        %s434 = smul.addr %s433, 2
        %s435 = scalar_lea.vmem %s11, %s434
      $region64: #{mectec_forward.4} parent=23 // pred_fallthru
        _
    $region24: #{mectec_forward.4} parent=5 // pred_fallthru
      _
    %p436 = scmp.le.s32.totalorder 1, %s18
    %p437 = scmp.lt.s32.totalorder %s18, 4
    %p438 = pnand %p436, %p437
    %p439 = pneg %p438
    // Predicated region
    $region65: #{mectec_forward.4} parent=5 // pred_check
      _
    $region66: #{mectec_forward.4} parent=5 // pred_check_branch
      %441 = sbr.rel (%p438) target = $region68
    $region67: #{mectec_forward.4} parent=5 // pred_region
      %s442 = ssub.s32 %s18, 1
      %p443 = pneg %p39
      %p444 = pneg %p36
      %p445 = pneg %p60
      %p446 = pneg %p57
      %p447 = scmp.lt.s32.totalorder %s23, 2
      %s448 = scalar_select %p447, %s23, 2
      %s449 = smul.addr %s448, 4
      %s450 = smul.addr %s449, 4
      %s451 = scalar_lea.vmem %s2, %s450
      %p452 = pneg %p86
      %p453 = pneg %p83
      %p454 = scmp.lt.s32.totalorder %s23, 2
      %s455 = scalar_select %p454, %s23, 2
      %s456 = scalar_lea.vmem %s3, %s455
      %p457 = pneg %p112
      %p458 = pneg %p109
      %p459 = scmp.lt.s32.totalorder %s23, 2
      %s460 = scalar_select %p459, %s23, 2
      %s461 = smul.addr %s460, 4
      %s462 = smul.addr %s461, 4
      %s463 = scalar_lea.vmem %s4, %s462
      %p464 = pneg %p138
      %p465 = pneg %p135
      %p466 = scmp.lt.s32.totalorder %s23, 2
      %s467 = scalar_select %p466, %s23, 2
      %s468 = scalar_lea.vmem %s5, %s467
      %p469 = pneg %p164
      %p470 = pneg %p161
      %p471 = scmp.lt.s32.totalorder %s23, 2
      %s472 = scalar_select %p471, %s23, 2
      %s473 = smul.addr %s472, 2
      %s474 = scalar_lea.vmem %s6, %s473
      %p475 = pneg %p190
      %p476 = pneg %p187
      %p477 = scmp.lt.s32.totalorder %s23, 2
      %s478 = scalar_select %p477, %s23, 2
      %s479 = smul.addr %s478, 4
      %s480 = smul.addr %s479, 4
      %s481 = scalar_lea.vmem %s7, %s480
      %p482 = pneg %p216
      %p483 = pneg %p213
      %p484 = scmp.lt.s32.totalorder %s23, 2
      %s485 = scalar_select %p484, %s23, 2
      %s486 = scalar_lea.vmem %s8, %s485
      %p487 = pneg %p242
      %p488 = pneg %p239
      %p489 = scmp.lt.s32.totalorder %s23, 2
      %s490 = scalar_select %p489, %s23, 2
      %s491 = smul.addr %s490, 8
      %s492 = smul.addr %s491, 4
      %s493 = scalar_lea.vmem %s9, %s492
      %p494 = pneg %p268
      %p495 = pneg %p265
      %p496 = scmp.lt.s32.totalorder %s23, 2
      %s497 = scalar_select %p496, %s23, 2
      %s498 = scalar_lea.vmem %s10, %s497
      %p499 = pneg %p294
      %p500 = pneg %p291
      %p501 = scmp.lt.s32.totalorder %s23, 2
      %s502 = scalar_select %p501, %s23, 2
      %s503 = smul.addr %s502, 2
      %s504 = scalar_lea.vmem %s11, %s503
      %p505 = pneg %p320
      %p506 = pneg %p317
      %p507 = pneg %p341
      %p508 = pneg %p338
      %p509 = scmp.lt.s32.totalorder %s23, 2
      %s510 = scalar_select %p509, %s23, 2
      %s511 = smul.addr %s510, 4
      %s512 = smul.addr %s511, 4
      %s513 = scalar_lea.vmem %s2, %s512
      %p514 = scmp.lt.s32.totalorder %s23, 2
      %s515 = scalar_select %p514, %s23, 2
      %s516 = scalar_lea.vmem %s3, %s515
      %p517 = scmp.lt.s32.totalorder %s23, 2
      %s518 = scalar_select %p517, %s23, 2
      %s519 = smul.addr %s518, 4
      %s520 = smul.addr %s519, 4
      %s521 = scalar_lea.vmem %s4, %s520
      %p522 = scmp.lt.s32.totalorder %s23, 2
      %s523 = scalar_select %p522, %s23, 2
      %s524 = scalar_lea.vmem %s5, %s523
      %p525 = scmp.lt.s32.totalorder %s23, 2
      %s526 = scalar_select %p525, %s23, 2
      %s527 = smul.addr %s526, 2
      %s528 = scalar_lea.vmem %s6, %s527
      %p529 = scmp.lt.s32.totalorder %s23, 2
      %s530 = scalar_select %p529, %s23, 2
      %s531 = smul.addr %s530, 4
      %s532 = smul.addr %s531, 4
      %s533 = scalar_lea.vmem %s7, %s532
      %p534 = scmp.lt.s32.totalorder %s23, 2
      %s535 = scalar_select %p534, %s23, 2
      %s536 = scalar_lea.vmem %s8, %s535
      %p537 = scmp.lt.s32.totalorder %s23, 2
      %s538 = scalar_select %p537, %s23, 2
      %s539 = smul.addr %s538, 8
      %s540 = smul.addr %s539, 4
      %s541 = scalar_lea.vmem %s9, %s540
      %p542 = scmp.lt.s32.totalorder %s23, 2
      %s543 = scalar_select %p542, %s23, 2
      %s544 = scalar_lea.vmem %s10, %s543
      %p545 = scmp.lt.s32.totalorder %s23, 2
      %s546 = scalar_select %p545, %s23, 2
      %s547 = smul.addr %s546, 2
      %s548 = scalar_lea.vmem %s11, %s547
      %p550 = scmp.eq.s32.totalorder %s23, 0
      // Predicated region
      $region69: #{mectec_forward.4} parent=67 // pred_check
        %p551 = pneg %p550
      $region70: #{mectec_forward.4} parent=67 // pred_check_branch
        %553 = sbr.rel (%p551) target = $region72
      $region71: #{mectec_forward.4} parent=67 // pred_region
        %v554 = vld [vmem:[%s0] sm:$0xff]
        %v555 = vld [vmem:[%s0 + $0x8] sm:$0xff]
        %vm556 = vcmask 261120
        %557 = vst.msk [vmem:[#allocation2] sm:$0xff] %vm556, %v554
        %558 = vst.msk [vmem:[#allocation2 + $0x8] sm:$0xff] %vm556, %v555
      $region72: #{mectec_forward.4} parent=67 // pred_fallthru
        _
      %v559 = vld [vmem:[#allocation2] sm:$0xff]
      %v560 = vld [vmem:[#allocation2 + $0x8] sm:$0xff]
      %v561 = vld [vmem:[%s1] sm:$0xff]
      %v562 = vld [vmem:[%s1 + $0x8] sm:$0xff]
      %v563 = vld [vmem:[%s513] sm:$0xf]
      %v564 = vld [vmem:[%s513 + $0x4] sm:$0xf]
      %v565 = vld [vmem:[%s513 + $0x8] sm:$0xf]
      %v566 = vld [vmem:[%s513 + $0xc] sm:$0xf]
      %v567 = vld [vmem:[%s516] sm:$0x1]
      %v568 = vld [vmem:[%s521] sm:$0xf]
      %v569 = vld [vmem:[%s521 + $0x4] sm:$0xf]
      %v570 = vld [vmem:[%s521 + $0x8] sm:$0xf]
      %v571 = vld [vmem:[%s521 + $0xc] sm:$0xf]
      %v572 = vld [vmem:[%s524] sm:$0x1]
      %v573 = vld [vmem:[%s528] sm:$0x3]
      %v574 = vld [vmem:[%s533] sm:$0xf]
      %v575 = vld [vmem:[%s533 + $0x4] sm:$0xf]
      %v576 = vld [vmem:[%s533 + $0x8] sm:$0xf]
      %v577 = vld [vmem:[%s533 + $0xc] sm:$0xf]
      %v578 = vld [vmem:[%s536] sm:$0x1]
      %v579 = vld [vmem:[%s541] sm:$0xf]
      %v580 = vld [vmem:[%s541 + $0x4] sm:$0xf]
      %v581 = vld [vmem:[%s541 + $0x8] sm:$0xf]
      %v582 = vld [vmem:[%s541 + $0xc] sm:$0xf]
      %v583 = vld [vmem:[%s541 + $0x10] sm:$0xf]
      %v584 = vld [vmem:[%s541 + $0x14] sm:$0xf]
      %v585 = vld [vmem:[%s541 + $0x18] sm:$0xf]
      %v586 = vld [vmem:[%s541 + $0x1c] sm:$0xf]
      %v587 = vld [vmem:[%s544] sm:$0x1]
      %v588 = vld [vmem:[%s548] sm:$0x3]
      %vm589 = vcmask 261120
      %v590 = vsel %vm589, %v559, 0.0
      %591 = vadd.xlane.f32.xlu0 %v590
      %v592 = vpop.xlane.xlu0 %591
      %v593 = vsel %vm589, %v560, 0.0
      %594 = vadd.xlane.f32.xlu0 %v593
      %v595 = vpop.xlane.xlu0 %594
      %v596 = vrcp.pop 32.0
      %v597 = vmul.f32 %v592, %v596
      %v598 = vmul.f32 %v595, %v596
      %v599 = vsub.f32 %v559, %v597
      %v600 = vsub.f32 %v560, %v598
      %v601 = vmul.f32 %v599, %v599
      %v602 = vmul.f32 %v600, %v600
      %v603 = vsel %vm589, %v601, 0.0
      %604 = vadd.xlane.f32.xlu0 %v603
      %v605 = vpop.xlane.xlu0 %604
      %v606 = vsel %vm589, %v602, 0.0
      %607 = vadd.xlane.f32.xlu0 %v606
      %v608 = vpop.xlane.xlu0 %607
      %v609 = vmul.f32 %v605, %v596
      %v610 = vmul.f32 %v608, %v596
      %v611 = vadd.f32 %v609, 1e-05
      %v612 = vadd.f32 %v610, 1e-05
      %v613 = vrsqrt.pop %v611
      %v614 = vrsqrt.pop %v612
      %v615 = vmul.f32 %v599, %v613
      %v616 = vmul.f32 %v600, %v614
      %v617 = vlaneseq
      %v618 = vshrl.u32 %v617, 7
      %v619 = vsub.s32 0, %v618
      %v620 = vrot.slane %v573, %v619
      %v621 = vmul.f32 %v615, %v620
      %v622 = vmul.f32 %v616, %v620
      %v623 = vlaneseq
      %v624 = vshrl.u32 %v623, 7
      %v625 = vsub.s32 1, %v624
      %v626 = vrot.slane %v573, %v625
      %v627 = vadd.f32 %v621, %v626
      %v628 = vadd.f32 %v622, %v626
      %v629 = vpack.c.bf16 %v628, %v627
      %v631 = vlaneseq
      %v632 = vshrl.u32 %v631, 7
      %v633 = vsub.s32 0, %v632
      %v634 = vrot.slane %v567, %v633
      %v640 = vunpack.c.l.b16 %v563
      %v641 = vunpack.c.l.b16 %v564
      %v642 = vunpack.c.l.b16 %v565
      %v643 = vunpack.c.l.b16 %v566
      %v644 = vpack.c.b16 %v641, %v640
      %v645 = vpack.c.b16 %v643, %v642
      %v649 = vsel %vm589, %v629, 0
      %651 = vmatprep.subr.bf16.mxu0 0
      %652 = vmatpush1.bf16.msra.mxu0 %v644
      %653 = vmatprep.subr.bf16.mxu0 0
      %654 = vmatpush1.bf16.msra.mxu0 %v645
      %655 = vmatprep.subr.bf16.mxu0 0
      %656 = vmatpush1.bf16.msra.mxu0 0
      %657 = vmatprep.subr.bf16.mxu0 0
      %658 = vmatpush1.bf16.msra.mxu0 0
      %659 = vmatprep.subr.bf16.mxu0 0
      %660 = vmatpush1.bf16.msra.mxu0 0
      %661 = vmatprep.subr.bf16.mxu0 0
      %662 = vmatpush1.bf16.msra.mxu0 0
      %663 = vmatprep.subr.bf16.mxu0 0
      %664 = vmatpush1.bf16.msra.mxu0 0
      %665 = vmatprep.subr.bf16.mxu0 0
      %666 = vmatpush1.bf16.msra.mxu0 0
      %667 = vmatprep.subr.bf16.mxu0 0
      %668 = vmatpush1.bf16.msra.mxu0 0
      %669 = vmatprep.subr.bf16.mxu0 0
      %670 = vmatpush1.bf16.msra.mxu0 0
      %671 = vmatprep.subr.bf16.mxu0 0
      %672 = vmatpush1.bf16.msra.mxu0 0
      %673 = vmatprep.subr.bf16.mxu0 0
      %674 = vmatpush1.bf16.msra.mxu0 0
      %675 = vmatprep.subr.bf16.mxu0 0
      %676 = vmatpush1.bf16.msra.mxu0 0
      %677 = vmatprep.subr.bf16.mxu0 0
      %678 = vmatpush1.bf16.msra.mxu0 0
      %679 = vmatprep.subr.bf16.mxu0 0
      %680 = vmatpush1.bf16.msra.mxu0 0
      %681 = vmatprep.subr.bf16.mxu0 0
      %682 = vmatpush1.bf16.msra.mxu0 0
      %683 = vmatprep.mubr.bf16.mxu0 0
      %684 = vmatmul.mubr.bf16.gmra.mrb[0].mxu0 %v649
      %v685 = vpop.f32.mrb[0].mxu0
      %v686 = vadd.f32 %v634, %v685
      %v687 = vpop.f32.mrb[0].mxu0
      %v688 = vpop.f32.mrb[0].mxu0
      %v689 = vadd.f32 %v634, %v688
      %v690 = vpop.f32.mrb[0].mxu0
      %691 = vdwg.mxu0
      %694 = vrot.lane.b32.xlu0 %v686, 96
      %v695 = vpop.permute.xlu0 %694
      %696 = vrot.lane.b32.xlu0 %v689, 96
      %v697 = vpop.permute.xlu0 %696
      %700 = vxpose.xlu0.b32.start [1/16] %v695, 128
      %701 = vxpose.xlu0.b32.cont [2/16] %v697, 128
      %702 = vxpose.xlu0.b32.cont [3/16] 0.0, 128
      %703 = vxpose.xlu0.b32.cont [4/16] 0.0, 128
      %704 = vxpose.xlu0.b32.cont [5/16] 0.0, 128
      %705 = vxpose.xlu0.b32.cont [6/16] 0.0, 128
      %706 = vxpose.xlu0.b32.cont [7/16] 0.0, 128
      %707 = vxpose.xlu0.b32.cont [8/16] 0.0, 128
      %708 = vxpose.xlu0.b32.cont [9/16] 0.0, 128
      %709 = vxpose.xlu0.b32.cont [10/16] 0.0, 128
      %710 = vxpose.xlu0.b32.cont [11/16] 0.0, 128
      %711 = vxpose.xlu0.b32.cont [12/16] 0.0, 128
      %712 = vxpose.xlu0.b32.cont [13/16] 0.0, 128
      %713 = vxpose.xlu0.b32.cont [14/16] 0.0, 128
      %714 = vxpose.xlu0.b32.cont [15/16] 0.0, 128
      %715 = vxpose.xlu0.b32.end [16/16] 0.0, 128
      %v716 = vpop.trf.xlu0
      %v717 = vpop.trf.xlu0
      %v718 = vpop.trf.xlu0
      %v719 = vpop.trf.xlu0
      %v720 = vpop.trf.xlu0
      %v721 = vpop.trf.xlu0
      %v722 = vpop.trf.xlu0
      %v723 = vpop.trf.xlu0
      %v724 = vpop.trf.xlu0
      %v725 = vpop.trf.xlu0
      %v726 = vpop.trf.xlu0
      %v727 = vpop.trf.xlu0
      %v728 = vpop.trf.xlu0
      %v729 = vpop.trf.xlu0
      %v730 = vpop.trf.xlu0
      %v731 = vpop.trf.xlu0
      %v732 = vpack.c.bf16 %v689, %v686
      %v733 = vpack.c.bf16 %v716, %v716
      %vm734 = vcmask 64512
      %v736 = vsel %vm734, %v732, 0
      %vm738 = vcmask 1043456
      %v740 = vsel %vm738, %v733, 0
      %742 = vmatprep.subr.bf16.mxu0 0
      %743 = vmatpush1.bf16.msra.mxu0 %v740
      %744 = vmatprep.subr.bf16.mxu0 0
      %745 = vmatpush1.bf16.msra.mxu0 0
      %746 = vmatprep.subr.bf16.mxu0 0
      %747 = vmatpush1.bf16.msra.mxu0 0
      %748 = vmatprep.subr.bf16.mxu0 0
      %749 = vmatpush1.bf16.msra.mxu0 0
      %750 = vmatprep.subr.bf16.mxu0 0
      %751 = vmatpush1.bf16.msra.mxu0 0
      %752 = vmatprep.subr.bf16.mxu0 0
      %753 = vmatpush1.bf16.msra.mxu0 0
      %754 = vmatprep.subr.bf16.mxu0 0
      %755 = vmatpush1.bf16.msra.mxu0 0
      %756 = vmatprep.subr.bf16.mxu0 0
      %757 = vmatpush1.bf16.msra.mxu0 0
      %758 = vmatprep.subr.bf16.mxu0 0
      %759 = vmatpush1.bf16.msra.mxu0 0
      %760 = vmatprep.subr.bf16.mxu0 0
      %761 = vmatpush1.bf16.msra.mxu0 0
      %762 = vmatprep.subr.bf16.mxu0 0
      %763 = vmatpush1.bf16.msra.mxu0 0
      %764 = vmatprep.subr.bf16.mxu0 0
      %765 = vmatpush1.bf16.msra.mxu0 0
      %766 = vmatprep.subr.bf16.mxu0 0
      %767 = vmatpush1.bf16.msra.mxu0 0
      %768 = vmatprep.subr.bf16.mxu0 0
      %769 = vmatpush1.bf16.msra.mxu0 0
      %770 = vmatprep.subr.bf16.mxu0 0
      %771 = vmatpush1.bf16.msra.mxu0 0
      %772 = vmatprep.subr.bf16.mxu0 0
      %773 = vmatpush1.bf16.msra.mxu0 0
      %774 = vmatprep.mubr.bf16.mxu0 0
      %775 = vmatmul.mubr.bf16.gmra.mrb[0].mxu0 %v736
      %v776 = vpop.f32.mrb[0].mxu0
      %v777 = vadd.f32 0.0, %v776
      %v778 = vpop.f32.mrb[0].mxu0
      %v779 = vpop.f32.mrb[0].mxu0
      %v780 = vadd.f32 0.0, %v779
      %v781 = vpop.f32.mrb[0].mxu0
      %782 = vdwg.mxu0
      %v783 = vmul.f32 %v777, 0.35355338
      %v784 = vmul.f32 %v780, 0.35355338
      %v785 = vadd.f32 %v783, %v561
      %v786 = vadd.f32 %v784, %v562
      %vm787 = vcmask 130048
      %v788 = vsel %vm787, %v785, -inf
      %789 = vmax.xlane.f32.xlu0 %v788
      %v790 = vpop.xlane.xlu0 %789
      %v791 = vsel %vm787, %v786, -inf
      %792 = vmax.xlane.f32.xlu0 %v791
      %v793 = vpop.xlane.xlu0 %792
      %v794 = vsub.f32 %v785, %v790
      %v795 = vsub.f32 %v786, %v793
      %v796 = vmul.f32 %v794, 1.442695
      %v797 = vpow.pop %v796
      %v798 = vmul.f32 %v795, 1.442695
      %v799 = vpow.pop %v798
      %v800 = vsel %vm787, %v797, 0.0
      %801 = vadd.xlane.f32.xlu0 %v800
      %v802 = vpop.xlane.xlu0 %801
      %v803 = vsel %vm787, %v799, 0.0
      %804 = vadd.xlane.f32.xlu0 %v803
      %v805 = vpop.xlane.xlu0 %804
      %v806 = vrcp.pop %v802
      %v807 = vrcp.pop %v805
      %v808 = vmul.f32 %v797, %v806
      %v809 = vmul.f32 %v799, %v807
      %v810 = vpack.c.bf16 %v809, %v808
      %812 = vrot.lane.b32.xlu0 %v732, 64
      %v813 = vpop.permute.xlu0 %812
      %v816 = vsel %vm787, %v810, 0
      %818 = vmatprep.subr.bf16.mxu0 0
      %819 = vmatpush1.bf16.msra.mxu0 %v813
      %820 = vmatprep.subr.bf16.mxu0 0
      %821 = vmatpush1.bf16.msra.mxu0 0
      %822 = vmatprep.subr.bf16.mxu0 0
      %823 = vmatpush1.bf16.msra.mxu0 0
      %824 = vmatprep.subr.bf16.mxu0 0
      %825 = vmatpush1.bf16.msra.mxu0 0
      %826 = vmatprep.subr.bf16.mxu0 0
      %827 = vmatpush1.bf16.msra.mxu0 0
      %828 = vmatprep.subr.bf16.mxu0 0
      %829 = vmatpush1.bf16.msra.mxu0 0
      %830 = vmatprep.subr.bf16.mxu0 0
      %831 = vmatpush1.bf16.msra.mxu0 0
      %832 = vmatprep.subr.bf16.mxu0 0
      %833 = vmatpush1.bf16.msra.mxu0 0
      %834 = vmatprep.subr.bf16.mxu0 0
      %835 = vmatpush1.bf16.msra.mxu0 0
      %836 = vmatprep.subr.bf16.mxu0 0
      %837 = vmatpush1.bf16.msra.mxu0 0
      %838 = vmatprep.subr.bf16.mxu0 0
      %839 = vmatpush1.bf16.msra.mxu0 0
      %840 = vmatprep.subr.bf16.mxu0 0
      %841 = vmatpush1.bf16.msra.mxu0 0
      %842 = vmatprep.subr.bf16.mxu0 0
      %843 = vmatpush1.bf16.msra.mxu0 0
      %844 = vmatprep.subr.bf16.mxu0 0
      %845 = vmatpush1.bf16.msra.mxu0 0
      %846 = vmatprep.subr.bf16.mxu0 0
      %847 = vmatpush1.bf16.msra.mxu0 0
      %848 = vmatprep.subr.bf16.mxu0 0
      %849 = vmatpush1.bf16.msra.mxu0 0
      %850 = vmatprep.mubr.bf16.mxu0 0
      %851 = vmatmul.mubr.bf16.gmra.mrb[0].mxu0 %v816
      %v852 = vpop.f32.mrb[0].mxu0
      %v853 = vadd.f32 0.0, %v852
      %v854 = vpop.f32.mrb[0].mxu0
      %v855 = vpop.f32.mrb[0].mxu0
      %v856 = vadd.f32 0.0, %v855
      %v857 = vpop.f32.mrb[0].mxu0
      %858 = vdwg.mxu0
      %859 = vrot.lane.b32.xlu0 %v686, 88
      %v860 = vpop.permute.xlu0 %859
      %861 = vrot.lane.b32.xlu0 %v689, 88
      %v862 = vpop.permute.xlu0 %861
      %865 = vxpose.xlu0.b32.start [1/16] %v860, 128
      %866 = vxpose.xlu0.b32.cont [2/16] %v862, 128
      %867 = vxpose.xlu0.b32.cont [3/16] 0.0, 128
      %868 = vxpose.xlu0.b32.cont [4/16] 0.0, 128
      %869 = vxpose.xlu0.b32.cont [5/16] 0.0, 128
      %870 = vxpose.xlu0.b32.cont [6/16] 0.0, 128
      %871 = vxpose.xlu0.b32.cont [7/16] 0.0, 128
      %872 = vxpose.xlu0.b32.cont [8/16] 0.0, 128
      %873 = vxpose.xlu0.b32.cont [9/16] 0.0, 128
      %874 = vxpose.xlu0.b32.cont [10/16] 0.0, 128
      %875 = vxpose.xlu0.b32.cont [11/16] 0.0, 128
      %876 = vxpose.xlu0.b32.cont [12/16] 0.0, 128
      %877 = vxpose.xlu0.b32.cont [13/16] 0.0, 128
      %878 = vxpose.xlu0.b32.cont [14/16] 0.0, 128
      %879 = vxpose.xlu0.b32.cont [15/16] 0.0, 128
      %880 = vxpose.xlu0.b32.end [16/16] 0.0, 128
      %v881 = vpop.trf.xlu0
      %v882 = vpop.trf.xlu0
      %v883 = vpop.trf.xlu0
      %v884 = vpop.trf.xlu0
      %v885 = vpop.trf.xlu0
      %v886 = vpop.trf.xlu0
      %v887 = vpop.trf.xlu0
      %v888 = vpop.trf.xlu0
      %v889 = vpop.trf.xlu0
      %v890 = vpop.trf.xlu0
      %v891 = vpop.trf.xlu0
      %v892 = vpop.trf.xlu0
      %v893 = vpop.trf.xlu0
      %v894 = vpop.trf.xlu0
      %v895 = vpop.trf.xlu0
      %v896 = vpop.trf.xlu0
      %v897 = vpack.c.bf16 %v881, %v881
      %898 = vrot.lane.b32.xlu0 %v732, 120
      %v899 = vpop.permute.xlu0 %898
      %v901 = vsel %vm734, %v899, 0
      %v904 = vsel %vm738, %v897, 0
      %906 = vmatprep.subr.bf16.mxu0 0
      %907 = vmatpush1.bf16.msra.mxu0 %v904
      %908 = vmatprep.subr.bf16.mxu0 0
      %909 = vmatpush1.bf16.msra.mxu0 0
      %910 = vmatprep.subr.bf16.mxu0 0
      %911 = vmatpush1.bf16.msra.mxu0 0
      %912 = vmatprep.subr.bf16.mxu0 0
      %913 = vmatpush1.bf16.msra.mxu0 0
      %914 = vmatprep.subr.bf16.mxu0 0
      %915 = vmatpush1.bf16.msra.mxu0 0
      %916 = vmatprep.subr.bf16.mxu0 0
      %917 = vmatpush1.bf16.msra.mxu0 0
      %918 = vmatprep.subr.bf16.mxu0 0
      %919 = vmatpush1.bf16.msra.mxu0 0
      %920 = vmatprep.subr.bf16.mxu0 0
      %921 = vmatpush1.bf16.msra.mxu0 0
      %922 = vmatprep.subr.bf16.mxu0 0
      %923 = vmatpush1.bf16.msra.mxu0 0
      %924 = vmatprep.subr.bf16.mxu0 0
      %925 = vmatpush1.bf16.msra.mxu0 0
      %926 = vmatprep.subr.bf16.mxu0 0
      %927 = vmatpush1.bf16.msra.mxu0 0
      %928 = vmatprep.subr.bf16.mxu0 0
      %929 = vmatpush1.bf16.msra.mxu0 0
      %930 = vmatprep.subr.bf16.mxu0 0
      %931 = vmatpush1.bf16.msra.mxu0 0
      %932 = vmatprep.subr.bf16.mxu0 0
      %933 = vmatpush1.bf16.msra.mxu0 0
      %934 = vmatprep.subr.bf16.mxu0 0
      %935 = vmatpush1.bf16.msra.mxu0 0
      %936 = vmatprep.subr.bf16.mxu0 0
      %937 = vmatpush1.bf16.msra.mxu0 0
      %938 = vmatprep.mubr.bf16.mxu0 0
      %939 = vmatmul.mubr.bf16.gmra.mrb[0].mxu0 %v901
      %v940 = vpop.f32.mrb[0].mxu0
      %v941 = vadd.f32 0.0, %v940
      %v942 = vpop.f32.mrb[0].mxu0
      %v943 = vpop.f32.mrb[0].mxu0
      %v944 = vadd.f32 0.0, %v943
      %v945 = vpop.f32.mrb[0].mxu0
      %946 = vdwg.mxu0
      %v947 = vmul.f32 %v941, 0.35355338
      %v948 = vmul.f32 %v944, 0.35355338
      %v949 = vadd.f32 %v947, %v561
      %v950 = vadd.f32 %v948, %v562
      %v951 = vsel %vm787, %v949, -inf
      %952 = vmax.xlane.f32.xlu0 %v951
      %v953 = vpop.xlane.xlu0 %952
      %v954 = vsel %vm787, %v950, -inf
      %955 = vmax.xlane.f32.xlu0 %v954
      %v956 = vpop.xlane.xlu0 %955
      %v957 = vsub.f32 %v949, %v953
      %v958 = vsub.f32 %v950, %v956
      %v959 = vmul.f32 %v957, 1.442695
      %v960 = vpow.pop %v959
      %v961 = vmul.f32 %v958, 1.442695
      %v962 = vpow.pop %v961
      %v963 = vsel %vm787, %v960, 0.0
      %964 = vadd.xlane.f32.xlu0 %v963
      %v965 = vpop.xlane.xlu0 %964
      %v966 = vsel %vm787, %v962, 0.0
      %967 = vadd.xlane.f32.xlu0 %v966
      %v968 = vpop.xlane.xlu0 %967
      %v969 = vrcp.pop %v965
      %v970 = vrcp.pop %v968
      %v971 = vmul.f32 %v960, %v969
      %v972 = vmul.f32 %v962, %v970
      %v973 = vpack.c.bf16 %v972, %v971
      %974 = vrot.lane.b32.xlu0 %v732, 56
      %v975 = vpop.permute.xlu0 %974
      %v978 = vsel %vm787, %v973, 0
      %980 = vmatprep.subr.bf16.mxu0 0
      %981 = vmatpush1.bf16.msra.mxu0 %v975
      %982 = vmatprep.subr.bf16.mxu0 0
      %983 = vmatpush1.bf16.msra.mxu0 0
      %984 = vmatprep.subr.bf16.mxu0 0
      %985 = vmatpush1.bf16.msra.mxu0 0
      %986 = vmatprep.subr.bf16.mxu0 0
      %987 = vmatpush1.bf16.msra.mxu0 0
      %988 = vmatprep.subr.bf16.mxu0 0
      %989 = vmatpush1.bf16.msra.mxu0 0
      %990 = vmatprep.subr.bf16.mxu0 0
      %991 = vmatpush1.bf16.msra.mxu0 0
      %992 = vmatprep.subr.bf16.mxu0 0
      %993 = vmatpush1.bf16.msra.mxu0 0
      %994 = vmatprep.subr.bf16.mxu0 0
      %995 = vmatpush1.bf16.msra.mxu0 0
      %996 = vmatprep.subr.bf16.mxu0 0
      %997 = vmatpush1.bf16.msra.mxu0 0
      %998 = vmatprep.subr.bf16.mxu0 0
      %999 = vmatpush1.bf16.msra.mxu0 0
      %1000 = vmatprep.subr.bf16.mxu0 0
      %1001 = vmatpush1.bf16.msra.mxu0 0
      %1002 = vmatprep.subr.bf16.mxu0 0
      %1003 = vmatpush1.bf16.msra.mxu0 0
      %1004 = vmatprep.subr.bf16.mxu0 0
      %1005 = vmatpush1.bf16.msra.mxu0 0
      %1006 = vmatprep.subr.bf16.mxu0 0
      %1007 = vmatpush1.bf16.msra.mxu0 0
      %1008 = vmatprep.subr.bf16.mxu0 0
      %1009 = vmatpush1.bf16.msra.mxu0 0
      %1010 = vmatprep.subr.bf16.mxu0 0
      %1011 = vmatpush1.bf16.msra.mxu0 0
      %1012 = vmatprep.mubr.bf16.mxu0 0
      %1013 = vmatmul.mubr.bf16.gmra.mrb[0].mxu0 %v978
      %v1014 = vpop.f32.mrb[0].mxu0
      %v1015 = vadd.f32 0.0, %v1014
      %v1016 = vpop.f32.mrb[0].mxu0
      %v1017 = vpop.f32.mrb[0].mxu0
      %v1018 = vadd.f32 0.0, %v1017
      %v1019 = vpop.f32.mrb[0].mxu0
      %1020 = vdwg.mxu0
      %1021 = vrot.lane.b32.xlu0 %v686, 80
      %v1022 = vpop.permute.xlu0 %1021
      %1023 = vrot.lane.b32.xlu0 %v689, 80
      %v1024 = vpop.permute.xlu0 %1023
      %1027 = vxpose.xlu0.b32.start [1/16] %v1022, 128
      %1028 = vxpose.xlu0.b32.cont [2/16] %v1024, 128
      %1029 = vxpose.xlu0.b32.cont [3/16] 0.0, 128
      %1030 = vxpose.xlu0.b32.cont [4/16] 0.0, 128
      %1031 = vxpose.xlu0.b32.cont [5/16] 0.0, 128
      %1032 = vxpose.xlu0.b32.cont [6/16] 0.0, 128
      %1033 = vxpose.xlu0.b32.cont [7/16] 0.0, 128
      %1034 = vxpose.xlu0.b32.cont [8/16] 0.0, 128
      %1035 = vxpose.xlu0.b32.cont [9/16] 0.0, 128
      %1036 = vxpose.xlu0.b32.cont [10/16] 0.0, 128
      %1037 = vxpose.xlu0.b32.cont [11/16] 0.0, 128
      %1038 = vxpose.xlu0.b32.cont [12/16] 0.0, 128
      %1039 = vxpose.xlu0.b32.cont [13/16] 0.0, 128
      %1040 = vxpose.xlu0.b32.cont [14/16] 0.0, 128
      %1041 = vxpose.xlu0.b32.cont [15/16] 0.0, 128
      %1042 = vxpose.xlu0.b32.end [16/16] 0.0, 128
      %v1043 = vpop.trf.xlu0
      %v1044 = vpop.trf.xlu0
      %v1045 = vpop.trf.xlu0
      %v1046 = vpop.trf.xlu0
      %v1047 = vpop.trf.xlu0
      %v1048 = vpop.trf.xlu0
      %v1049 = vpop.trf.xlu0
      %v1050 = vpop.trf.xlu0
      %v1051 = vpop.trf.xlu0
      %v1052 = vpop.trf.xlu0
      %v1053 = vpop.trf.xlu0
      %v1054 = vpop.trf.xlu0
      %v1055 = vpop.trf.xlu0
      %v1056 = vpop.trf.xlu0
      %v1057 = vpop.trf.xlu0
      %v1058 = vpop.trf.xlu0
      %v1059 = vpack.c.bf16 %v1043, %v1043
      %1060 = vrot.lane.b32.xlu0 %v732, 112
      %v1061 = vpop.permute.xlu0 %1060
      %v1063 = vsel %vm734, %v1061, 0
      %v1066 = vsel %vm738, %v1059, 0
      %1068 = vmatprep.subr.bf16.mxu0 0
      %1069 = vmatpush1.bf16.msra.mxu0 %v1066
      %1070 = vmatprep.subr.bf16.mxu0 0
      %1071 = vmatpush1.bf16.msra.mxu0 0
      %1072 = vmatprep.subr.bf16.mxu0 0
      %1073 = vmatpush1.bf16.msra.mxu0 0
      %1074 = vmatprep.subr.bf16.mxu0 0
      %1075 = vmatpush1.bf16.msra.mxu0 0
      %1076 = vmatprep.subr.bf16.mxu0 0
      %1077 = vmatpush1.bf16.msra.mxu0 0
      %1078 = vmatprep.subr.bf16.mxu0 0
      %1079 = vmatpush1.bf16.msra.mxu0 0
      %1080 = vmatprep.subr.bf16.mxu0 0
      %1081 = vmatpush1.bf16.msra.mxu0 0
      %1082 = vmatprep.subr.bf16.mxu0 0
      %1083 = vmatpush1.bf16.msra.mxu0 0
      %1084 = vmatprep.subr.bf16.mxu0 0
      %1085 = vmatpush1.bf16.msra.mxu0 0
      %1086 = vmatprep.subr.bf16.mxu0 0
      %1087 = vmatpush1.bf16.msra.mxu0 0
      %1088 = vmatprep.subr.bf16.mxu0 0
      %1089 = vmatpush1.bf16.msra.mxu0 0
      %1090 = vmatprep.subr.bf16.mxu0 0
      %1091 = vmatpush1.bf16.msra.mxu0 0
      %1092 = vmatprep.subr.bf16.mxu0 0
      %1093 = vmatpush1.bf16.msra.mxu0 0
      %1094 = vmatprep.subr.bf16.mxu0 0
      %1095 = vmatpush1.bf16.msra.mxu0 0
      %1096 = vmatprep.subr.bf16.mxu0 0
      %1097 = vmatpush1.bf16.msra.mxu0 0
      %1098 = vmatprep.subr.bf16.mxu0 0
      %1099 = vmatpush1.bf16.msra.mxu0 0
      %1100 = vmatprep.mubr.bf16.mxu0 0
      %1101 = vmatmul.mubr.bf16.gmra.mrb[0].mxu0 %v1063
      %v1102 = vpop.f32.mrb[0].mxu0
      %v1103 = vadd.f32 0.0, %v1102
      %v1104 = vpop.f32.mrb[0].mxu0
      %v1105 = vpop.f32.mrb[0].mxu0
      %v1106 = vadd.f32 0.0, %v1105
      %v1107 = vpop.f32.mrb[0].mxu0
      %1108 = vdwg.mxu0
      %v1109 = vmul.f32 %v1103, 0.35355338
      %v1110 = vmul.f32 %v1106, 0.35355338
      %v1111 = vadd.f32 %v1109, %v561
      %v1112 = vadd.f32 %v1110, %v562
      %v1113 = vsel %vm787, %v1111, -inf
      %1114 = vmax.xlane.f32.xlu0 %v1113
      %v1115 = vpop.xlane.xlu0 %1114
      %v1116 = vsel %vm787, %v1112, -inf
      %1117 = vmax.xlane.f32.xlu0 %v1116
      %v1118 = vpop.xlane.xlu0 %1117
      %v1119 = vsub.f32 %v1111, %v1115
      %v1120 = vsub.f32 %v1112, %v1118
      %v1121 = vmul.f32 %v1119, 1.442695
      %v1122 = vpow.pop %v1121
      %v1123 = vmul.f32 %v1120, 1.442695
      %v1124 = vpow.pop %v1123
      %v1125 = vsel %vm787, %v1122, 0.0
      %1126 = vadd.xlane.f32.xlu0 %v1125
      %v1127 = vpop.xlane.xlu0 %1126
      %v1128 = vsel %vm787, %v1124, 0.0
      %1129 = vadd.xlane.f32.xlu0 %v1128
      %v1130 = vpop.xlane.xlu0 %1129
      %v1131 = vrcp.pop %v1127
      %v1132 = vrcp.pop %v1130
      %v1133 = vmul.f32 %v1122, %v1131
      %v1134 = vmul.f32 %v1124, %v1132
      %v1135 = vpack.c.bf16 %v1134, %v1133
      %1136 = vrot.lane.b32.xlu0 %v732, 48
      %v1137 = vpop.permute.xlu0 %1136
      %v1140 = vsel %vm787, %v1135, 0
      %1142 = vmatprep.subr.bf16.mxu0 0
      %1143 = vmatpush1.bf16.msra.mxu0 %v1137
      %1144 = vmatprep.subr.bf16.mxu0 0
      %1145 = vmatpush1.bf16.msra.mxu0 0
      %1146 = vmatprep.subr.bf16.mxu0 0
      %1147 = vmatpush1.bf16.msra.mxu0 0
      %1148 = vmatprep.subr.bf16.mxu0 0
      %1149 = vmatpush1.bf16.msra.mxu0 0
      %1150 = vmatprep.subr.bf16.mxu0 0
      %1151 = vmatpush1.bf16.msra.mxu0 0
      %1152 = vmatprep.subr.bf16.mxu0 0
      %1153 = vmatpush1.bf16.msra.mxu0 0
      %1154 = vmatprep.subr.bf16.mxu0 0
      %1155 = vmatpush1.bf16.msra.mxu0 0
      %1156 = vmatprep.subr.bf16.mxu0 0
      %1157 = vmatpush1.bf16.msra.mxu0 0
      %1158 = vmatprep.subr.bf16.mxu0 0
      %1159 = vmatpush1.bf16.msra.mxu0 0
      %1160 = vmatprep.subr.bf16.mxu0 0
      %1161 = vmatpush1.bf16.msra.mxu0 0
      %1162 = vmatprep.subr.bf16.mxu0 0
      %1163 = vmatpush1.bf16.msra.mxu0 0
      %1164 = vmatprep.subr.bf16.mxu0 0
      %1165 = vmatpush1.bf16.msra.mxu0 0
      %1166 = vmatprep.subr.bf16.mxu0 0
      %1167 = vmatpush1.bf16.msra.mxu0 0
      %1168 = vmatprep.subr.bf16.mxu0 0
      %1169 = vmatpush1.bf16.msra.mxu0 0
      %1170 = vmatprep.subr.bf16.mxu0 0
      %1171 = vmatpush1.bf16.msra.mxu0 0
      %1172 = vmatprep.subr.bf16.mxu0 0
      %1173 = vmatpush1.bf16.msra.mxu0 0
      %1174 = vmatprep.mubr.bf16.mxu0 0
      %1175 = vmatmul.mubr.bf16.gmra.mrb[0].mxu0 %v1140
      %v1176 = vpop.f32.mrb[0].mxu0
      %v1177 = vadd.f32 0.0, %v1176
      %v1178 = vpop.f32.mrb[0].mxu0
      %v1179 = vpop.f32.mrb[0].mxu0
      %v1180 = vadd.f32 0.0, %v1179
      %v1181 = vpop.f32.mrb[0].mxu0
      %1182 = vdwg.mxu0
      %1183 = vrot.lane.b32.xlu0 %v686, 72
      %v1184 = vpop.permute.xlu0 %1183
      %1185 = vrot.lane.b32.xlu0 %v689, 72
      %v1186 = vpop.permute.xlu0 %1185
      %1189 = vxpose.xlu0.b32.start [1/16] %v1184, 128
      %1190 = vxpose.xlu0.b32.cont [2/16] %v1186, 128
      %1191 = vxpose.xlu0.b32.cont [3/16] 0.0, 128
      %1192 = vxpose.xlu0.b32.cont [4/16] 0.0, 128
      %1193 = vxpose.xlu0.b32.cont [5/16] 0.0, 128
      %1194 = vxpose.xlu0.b32.cont [6/16] 0.0, 128
      %1195 = vxpose.xlu0.b32.cont [7/16] 0.0, 128
      %1196 = vxpose.xlu0.b32.cont [8/16] 0.0, 128
      %1197 = vxpose.xlu0.b32.cont [9/16] 0.0, 128
      %1198 = vxpose.xlu0.b32.cont [10/16] 0.0, 128
      %1199 = vxpose.xlu0.b32.cont [11/16] 0.0, 128
      %1200 = vxpose.xlu0.b32.cont [12/16] 0.0, 128
      %1201 = vxpose.xlu0.b32.cont [13/16] 0.0, 128
      %1202 = vxpose.xlu0.b32.cont [14/16] 0.0, 128
      %1203 = vxpose.xlu0.b32.cont [15/16] 0.0, 128
      %1204 = vxpose.xlu0.b32.end [16/16] 0.0, 128
      %v1205 = vpop.trf.xlu0
      %v1206 = vpop.trf.xlu0
      %v1207 = vpop.trf.xlu0
      %v1208 = vpop.trf.xlu0
      %v1209 = vpop.trf.xlu0
      %v1210 = vpop.trf.xlu0
      %v1211 = vpop.trf.xlu0
      %v1212 = vpop.trf.xlu0
      %v1213 = vpop.trf.xlu0
      %v1214 = vpop.trf.xlu0
      %v1215 = vpop.trf.xlu0
      %v1216 = vpop.trf.xlu0
      %v1217 = vpop.trf.xlu0
      %v1218 = vpop.trf.xlu0
      %v1219 = vpop.trf.xlu0
      %v1220 = vpop.trf.xlu0
      %v1221 = vpack.c.bf16 %v1205, %v1205
      %1222 = vrot.lane.b32.xlu0 %v732, 104
      %v1223 = vpop.permute.xlu0 %1222
      %v1225 = vsel %vm734, %v1223, 0
      %v1228 = vsel %vm738, %v1221, 0
      %1230 = vmatprep.subr.bf16.mxu0 0
      %1231 = vmatpush1.bf16.msra.mxu0 %v1228
      %1232 = vmatprep.subr.bf16.mxu0 0
      %1233 = vmatpush1.bf16.msra.mxu0 0
      %1234 = vmatprep.subr.bf16.mxu0 0
      %1235 = vmatpush1.bf16.msra.mxu0 0
      %1236 = vmatprep.subr.bf16.mxu0 0
      %1237 = vmatpush1.bf16.msra.mxu0 0
      %1238 = vmatprep.subr.bf16.mxu0 0
      %1239 = vmatpush1.bf16.msra.mxu0 0
      %1240 = vmatprep.subr.bf16.mxu0 0
      %1241 = vmatpush1.bf16.msra.mxu0 0
      %1242 = vmatprep.subr.bf16.mxu0 0
      %1243 = vmatpush1.bf16.msra.mxu0 0
      %1244 = vmatprep.subr.bf16.mxu0 0
      %1245 = vmatpush1.bf16.msra.mxu0 0
      %1246 = vmatprep.subr.bf16.mxu0 0
      %1247 = vmatpush1.bf16.msra.mxu0 0
      %1248 = vmatprep.subr.bf16.mxu0 0
      %1249 = vmatpush1.bf16.msra.mxu0 0
      %1250 = vmatprep.subr.bf16.mxu0 0
      %1251 = vmatpush1.bf16.msra.mxu0 0
      %1252 = vmatprep.subr.bf16.mxu0 0
      %1253 = vmatpush1.bf16.msra.mxu0 0
      %1254 = vmatprep.subr.bf16.mxu0 0
      %1255 = vmatpush1.bf16.msra.mxu0 0
      %1256 = vmatprep.subr.bf16.mxu0 0
      %1257 = vmatpush1.bf16.msra.mxu0 0
      %1258 = vmatprep.subr.bf16.mxu0 0
      %1259 = vmatpush1.bf16.msra.mxu0 0
      %1260 = vmatprep.subr.bf16.mxu0 0
      %1261 = vmatpush1.bf16.msra.mxu0 0
      %1262 = vmatprep.mubr.bf16.mxu0 0
      %1263 = vmatmul.mubr.bf16.gmra.mrb[0].mxu0 %v1225
      %v1264 = vpop.f32.mrb[0].mxu0
      %v1265 = vadd.f32 0.0, %v1264
      %v1266 = vpop.f32.mrb[0].mxu0
      %v1267 = vpop.f32.mrb[0].mxu0
      %v1268 = vadd.f32 0.0, %v1267
      %v1269 = vpop.f32.mrb[0].mxu0
      %1270 = vdwg.mxu0
      %v1271 = vmul.f32 %v1265, 0.35355338
      %v1272 = vmul.f32 %v1268, 0.35355338
      %v1273 = vadd.f32 %v1271, %v561
      %v1274 = vadd.f32 %v1272, %v562
      %v1275 = vsel %vm787, %v1273, -inf
      %1276 = vmax.xlane.f32.xlu0 %v1275
      %v1277 = vpop.xlane.xlu0 %1276
      %v1278 = vsel %vm787, %v1274, -inf
      %1279 = vmax.xlane.f32.xlu0 %v1278
      %v1280 = vpop.xlane.xlu0 %1279
      %v1281 = vsub.f32 %v1273, %v1277
      %v1282 = vsub.f32 %v1274, %v1280
      %v1283 = vmul.f32 %v1281, 1.442695
      %v1284 = vpow.pop %v1283
      %v1285 = vmul.f32 %v1282, 1.442695
      %v1286 = vpow.pop %v1285
      %v1287 = vsel %vm787, %v1284, 0.0
      %1288 = vadd.xlane.f32.xlu0 %v1287
      %v1289 = vpop.xlane.xlu0 %1288
      %v1290 = vsel %vm787, %v1286, 0.0
      %1291 = vadd.xlane.f32.xlu0 %v1290
      %v1292 = vpop.xlane.xlu0 %1291
      %v1293 = vrcp.pop %v1289
      %v1294 = vrcp.pop %v1292
      %v1295 = vmul.f32 %v1284, %v1293
      %v1296 = vmul.f32 %v1286, %v1294
      %v1297 = vpack.c.bf16 %v1296, %v1295
      %1298 = vrot.lane.b32.xlu0 %v732, 40
      %v1299 = vpop.permute.xlu0 %1298
      %v1302 = vsel %vm787, %v1297, 0
      %1304 = vmatprep.subr.bf16.mxu0 0
      %1305 = vmatpush1.bf16.msra.mxu0 %v1299
      %1306 = vmatprep.subr.bf16.mxu0 0
      %1307 = vmatpush1.bf16.msra.mxu0 0
      %1308 = vmatprep.subr.bf16.mxu0 0
      %1309 = vmatpush1.bf16.msra.mxu0 0
      %1310 = vmatprep.subr.bf16.mxu0 0
      %1311 = vmatpush1.bf16.msra.mxu0 0
      %1312 = vmatprep.subr.bf16.mxu0 0
      %1313 = vmatpush1.bf16.msra.mxu0 0
      %1314 = vmatprep.subr.bf16.mxu0 0
      %1315 = vmatpush1.bf16.msra.mxu0 0
      %1316 = vmatprep.subr.bf16.mxu0 0
      %1317 = vmatpush1.bf16.msra.mxu0 0
      %1318 = vmatprep.subr.bf16.mxu0 0
      %1319 = vmatpush1.bf16.msra.mxu0 0
      %1320 = vmatprep.subr.bf16.mxu0 0
      %1321 = vmatpush1.bf16.msra.mxu0 0
      %1322 = vmatprep.subr.bf16.mxu0 0
      %1323 = vmatpush1.bf16.msra.mxu0 0
      %1324 = vmatprep.subr.bf16.mxu0 0
      %1325 = vmatpush1.bf16.msra.mxu0 0
      %1326 = vmatprep.subr.bf16.mxu0 0
      %1327 = vmatpush1.bf16.msra.mxu0 0
      %1328 = vmatprep.subr.bf16.mxu0 0
      %1329 = vmatpush1.bf16.msra.mxu0 0
      %1330 = vmatprep.subr.bf16.mxu0 0
      %1331 = vmatpush1.bf16.msra.mxu0 0
      %1332 = vmatprep.subr.bf16.mxu0 0
      %1333 = vmatpush1.bf16.msra.mxu0 0
      %1334 = vmatprep.subr.bf16.mxu0 0
      %1335 = vmatpush1.bf16.msra.mxu0 0
      %1336 = vmatprep.mubr.bf16.mxu0 0
      %1337 = vmatmul.mubr.bf16.gmra.mrb[0].mxu0 %v1302
      %v1338 = vpop.f32.mrb[0].mxu0
      %v1339 = vadd.f32 0.0, %v1338
      %v1340 = vpop.f32.mrb[0].mxu0
      %v1341 = vpop.f32.mrb[0].mxu0
      %v1342 = vadd.f32 0.0, %v1341
      %v1343 = vpop.f32.mrb[0].mxu0
      %1344 = vdwg.mxu0
      %1347 = vrot.lane.b32.xlu0 %v1015, 8
      %v1348 = vpop.permute.xlu0 %1347
      %1349 = vrot.lane.b32.xlu0 %v1018, 8
      %v1350 = vpop.permute.xlu0 %1349
      %1355 = vrot.lane.b32.xlu0 %v1177, 16
      %v1356 = vpop.permute.xlu0 %1355
      %1357 = vrot.lane.b32.xlu0 %v1180, 16
      %v1358 = vpop.permute.xlu0 %1357
      %1363 = vrot.lane.b32.xlu0 %v1339, 24
      %v1364 = vpop.permute.xlu0 %1363
      %1365 = vrot.lane.b32.xlu0 %v1342, 24
      %v1366 = vpop.permute.xlu0 %1365
      %v1369 = vsel %vm734, %v853, %v1348
      %v1370 = vsel %vm734, %v856, %v1350
      %v1371 = vsel %vm787, %v1369, %v1356
      %v1372 = vsel %vm787, %v1370, %v1358
      %vm1373 = vcmask 195584
      %v1374 = vsel %vm1373, %v1371, %v1364
      %v1375 = vsel %vm1373, %v1372, %v1366
      %v1376 = vpack.c.bf16 %v1375, %v1374
      %v1378 = vlaneseq
      %v1379 = vshrl.u32 %v1378, 7
      %v1380 = vsub.s32 0, %v1379
      %v1381 = vrot.slane %v572, %v1380
      %v1387 = vunpack.c.l.b16 %v568
      %v1388 = vunpack.c.l.b16 %v569
      %v1389 = vunpack.c.l.b16 %v570
      %v1390 = vunpack.c.l.b16 %v571
      %v1391 = vpack.c.b16 %v1388, %v1387
      %v1392 = vpack.c.b16 %v1390, %v1389
      %v1396 = vsel %vm589, %v1376, 0
      %1398 = vmatprep.subr.bf16.mxu0 0
      %1399 = vmatpush1.bf16.msra.mxu0 %v1391
      %1400 = vmatprep.subr.bf16.mxu0 0
      %1401 = vmatpush1.bf16.msra.mxu0 %v1392
      %1402 = vmatprep.subr.bf16.mxu0 0
      %1403 = vmatpush1.bf16.msra.mxu0 0
      %1404 = vmatprep.subr.bf16.mxu0 0
      %1405 = vmatpush1.bf16.msra.mxu0 0
      %1406 = vmatprep.subr.bf16.mxu0 0
      %1407 = vmatpush1.bf16.msra.mxu0 0
      %1408 = vmatprep.subr.bf16.mxu0 0
      %1409 = vmatpush1.bf16.msra.mxu0 0
      %1410 = vmatprep.subr.bf16.mxu0 0
      %1411 = vmatpush1.bf16.msra.mxu0 0
      %1412 = vmatprep.subr.bf16.mxu0 0
      %1413 = vmatpush1.bf16.msra.mxu0 0
      %1414 = vmatprep.subr.bf16.mxu0 0
      %1415 = vmatpush1.bf16.msra.mxu0 0
      %1416 = vmatprep.subr.bf16.mxu0 0
      %1417 = vmatpush1.bf16.msra.mxu0 0
      %1418 = vmatprep.subr.bf16.mxu0 0
      %1419 = vmatpush1.bf16.msra.mxu0 0
      %1420 = vmatprep.subr.bf16.mxu0 0
      %1421 = vmatpush1.bf16.msra.mxu0 0
      %1422 = vmatprep.subr.bf16.mxu0 0
      %1423 = vmatpush1.bf16.msra.mxu0 0
      %1424 = vmatprep.subr.bf16.mxu0 0
      %1425 = vmatpush1.bf16.msra.mxu0 0
      %1426 = vmatprep.subr.bf16.mxu0 0
      %1427 = vmatpush1.bf16.msra.mxu0 0
      %1428 = vmatprep.subr.bf16.mxu0 0
      %1429 = vmatpush1.bf16.msra.mxu0 0
      %1430 = vmatprep.mubr.bf16.mxu0 0
      %1431 = vmatmul.mubr.bf16.gmra.mrb[0].mxu0 %v1396
      %v1432 = vpop.f32.mrb[0].mxu0
      %v1433 = vadd.f32 %v1381, %v1432
      %v1434 = vpop.f32.mrb[0].mxu0
      %v1435 = vpop.f32.mrb[0].mxu0
      %v1436 = vadd.f32 %v1381, %v1435
      %v1437 = vpop.f32.mrb[0].mxu0
      %1438 = vdwg.mxu0
      %v1439 = vadd.f32 %v559, %v1433
      %v1440 = vadd.f32 %v560, %v1436
      %v1441 = vsel %vm589, %v1439, 0.0
      %1442 = vadd.xlane.f32.xlu0 %v1441
      %v1443 = vpop.xlane.xlu0 %1442
      %v1444 = vsel %vm589, %v1440, 0.0
      %1445 = vadd.xlane.f32.xlu0 %v1444
      %v1446 = vpop.xlane.xlu0 %1445
      %v1447 = vmul.f32 %v1443, %v596
      %v1448 = vmul.f32 %v1446, %v596
      %v1449 = vsub.f32 %v1439, %v1447
      %v1450 = vsub.f32 %v1440, %v1448
      %v1451 = vmul.f32 %v1449, %v1449
      %v1452 = vmul.f32 %v1450, %v1450
      %v1453 = vsel %vm589, %v1451, 0.0
      %1454 = vadd.xlane.f32.xlu0 %v1453
      %v1455 = vpop.xlane.xlu0 %1454
      %v1456 = vsel %vm589, %v1452, 0.0
      %1457 = vadd.xlane.f32.xlu0 %v1456
      %v1458 = vpop.xlane.xlu0 %1457
      %v1459 = vmul.f32 %v1455, %v596
      %v1460 = vmul.f32 %v1458, %v596
      %v1461 = vadd.f32 %v1459, 1e-05
      %v1462 = vadd.f32 %v1460, 1e-05
      %v1463 = vrsqrt.pop %v1461
      %v1464 = vrsqrt.pop %v1462
      %v1465 = vmul.f32 %v1449, %v1463
      %v1466 = vmul.f32 %v1450, %v1464
      %v1467 = vlaneseq
      %v1468 = vshrl.u32 %v1467, 7
      %v1469 = vsub.s32 0, %v1468
      %v1470 = vrot.slane %v588, %v1469
      %v1471 = vmul.f32 %v1465, %v1470
      %v1472 = vmul.f32 %v1466, %v1470
      %v1473 = vlaneseq
      %v1474 = vshrl.u32 %v1473, 7
      %v1475 = vsub.s32 1, %v1474
      %v1476 = vrot.slane %v588, %v1475
      %v1477 = vadd.f32 %v1471, %v1476
      %v1478 = vadd.f32 %v1472, %v1476
      %v1479 = vpack.c.bf16 %v1478, %v1477
      %v1481 = vlaneseq
      %v1482 = vshrl.u32 %v1481, 7
      %v1483 = vsub.s32 0, %v1482
      %v1484 = vrot.slane %v578, %v1483
      %v1490 = vunpack.c.l.b16 %v574
      %v1491 = vunpack.c.l.b16 %v575
      %v1492 = vunpack.c.l.b16 %v576
      %v1493 = vunpack.c.l.b16 %v577
      %v1494 = vpack.c.b16 %v1491, %v1490
      %v1495 = vpack.c.b16 %v1493, %v1492
      %v1499 = vsel %vm589, %v1479, 0
      %1501 = vmatprep.subr.bf16.mxu0 0
      %1502 = vmatpush1.bf16.msra.mxu0 %v1494
      %1503 = vmatprep.subr.bf16.mxu0 0
      %1504 = vmatpush1.bf16.msra.mxu0 %v1495
      %1505 = vmatprep.subr.bf16.mxu0 0
      %1506 = vmatpush1.bf16.msra.mxu0 0
      %1507 = vmatprep.subr.bf16.mxu0 0
      %1508 = vmatpush1.bf16.msra.mxu0 0
      %1509 = vmatprep.subr.bf16.mxu0 0
      %1510 = vmatpush1.bf16.msra.mxu0 0
      %1511 = vmatprep.subr.bf16.mxu0 0
      %1512 = vmatpush1.bf16.msra.mxu0 0
      %1513 = vmatprep.subr.bf16.mxu0 0
      %1514 = vmatpush1.bf16.msra.mxu0 0
      %1515 = vmatprep.subr.bf16.mxu0 0
      %1516 = vmatpush1.bf16.msra.mxu0 0
      %1517 = vmatprep.subr.bf16.mxu0 0
      %1518 = vmatpush1.bf16.msra.mxu0 0
      %1519 = vmatprep.subr.bf16.mxu0 0
      %1520 = vmatpush1.bf16.msra.mxu0 0
      %1521 = vmatprep.subr.bf16.mxu0 0
      %1522 = vmatpush1.bf16.msra.mxu0 0
      %1523 = vmatprep.subr.bf16.mxu0 0
      %1524 = vmatpush1.bf16.msra.mxu0 0
      %1525 = vmatprep.subr.bf16.mxu0 0
      %1526 = vmatpush1.bf16.msra.mxu0 0
      %1527 = vmatprep.subr.bf16.mxu0 0
      %1528 = vmatpush1.bf16.msra.mxu0 0
      %1529 = vmatprep.subr.bf16.mxu0 0
      %1530 = vmatpush1.bf16.msra.mxu0 0
      %1531 = vmatprep.subr.bf16.mxu0 0
      %1532 = vmatpush1.bf16.msra.mxu0 0
      %1533 = vmatprep.mubr.bf16.mxu0 0
      %1534 = vmatmul.mubr.bf16.gmra.mrb[0].mxu0 %v1499
      %v1535 = vpop.f32.mrb[0].mxu0
      %v1536 = vadd.f32 %v1484, %v1535
      %v1537 = vpop.f32.mrb[0].mxu0
      %v1538 = vpop.f32.mrb[0].mxu0
      %v1539 = vadd.f32 %v1484, %v1538
      %v1540 = vpop.f32.mrb[0].mxu0
      %1541 = vdwg.mxu0
      %v1542 = vmul.f32 %v1536, 0.5
      %v1543 = vmul.f32 %v1539, 0.5
      %v1544 = vmul.f32 %v1536, 0.044715
      %v1545 = vmul.f32 %v1539, 0.044715
      %v1546 = vmul.f32 %v1544, %v1536
      %v1547 = vmul.f32 %v1545, %v1539
      %v1548 = vmul.f32 %v1546, %v1536
      %v1549 = vmul.f32 %v1547, %v1539
      %v1550 = vadd.f32 %v1536, %v1548
      %v1551 = vadd.f32 %v1539, %v1549
      %v1552 = vmul.f32 %v1550, 0.7978846
      %v1553 = vmul.f32 %v1551, 0.7978846
      %v1554 = vtanh.pop %v1552
      %v1555 = vtanh.pop %v1553
      %v1556 = vadd.f32 %v1554, 1.0
      %v1557 = vadd.f32 %v1555, 1.0
      %v1558 = vmul.f32 %v1542, %v1556
      %v1559 = vmul.f32 %v1543, %v1557
      %v1560 = vpack.c.bf16 %v1559, %v1558
      %v1569 = vunpack.c.l.b16 %v579
      %v1570 = vunpack.c.l.b16 %v580
      %v1571 = vunpack.c.l.b16 %v581
      %v1572 = vunpack.c.l.b16 %v582
      %v1573 = vunpack.c.l.b16 %v583
      %v1574 = vunpack.c.l.b16 %v584
      %v1575 = vunpack.c.l.b16 %v585
      %v1576 = vunpack.c.l.b16 %v586
      %v1577 = vpack.c.b16 %v1570, %v1569
      %v1578 = vpack.c.b16 %v1572, %v1571
      %v1579 = vpack.c.b16 %v1574, %v1573
      %v1580 = vpack.c.b16 %v1576, %v1575
      %vm1585 = vcmask 523264
      %v1587 = vsel %vm1585, %v1560, 0
      %1589 = vmatprep.subr.bf16.mxu0 0
      %1590 = vmatpush1.bf16.msra.mxu0 %v1577
      %1591 = vmatprep.subr.bf16.mxu0 0
      %1592 = vmatpush1.bf16.msra.mxu0 %v1578
      %1593 = vmatprep.subr.bf16.mxu0 0
      %1594 = vmatpush1.bf16.msra.mxu0 %v1579
      %1595 = vmatprep.subr.bf16.mxu0 0
      %1596 = vmatpush1.bf16.msra.mxu0 %v1580
      %1597 = vmatprep.subr.bf16.mxu0 0
      %1598 = vmatpush1.bf16.msra.mxu0 0
      %1599 = vmatprep.subr.bf16.mxu0 0
      %1600 = vmatpush1.bf16.msra.mxu0 0
      %1601 = vmatprep.subr.bf16.mxu0 0
      %1602 = vmatpush1.bf16.msra.mxu0 0
      %1603 = vmatprep.subr.bf16.mxu0 0
      %1604 = vmatpush1.bf16.msra.mxu0 0
      %1605 = vmatprep.subr.bf16.mxu0 0
      %1606 = vmatpush1.bf16.msra.mxu0 0
      %1607 = vmatprep.subr.bf16.mxu0 0
      %1608 = vmatpush1.bf16.msra.mxu0 0
      %1609 = vmatprep.subr.bf16.mxu0 0
      %1610 = vmatpush1.bf16.msra.mxu0 0
      %1611 = vmatprep.subr.bf16.mxu0 0
      %1612 = vmatpush1.bf16.msra.mxu0 0
      %1613 = vmatprep.subr.bf16.mxu0 0
      %1614 = vmatpush1.bf16.msra.mxu0 0
      %1615 = vmatprep.subr.bf16.mxu0 0
      %1616 = vmatpush1.bf16.msra.mxu0 0
      %1617 = vmatprep.subr.bf16.mxu0 0
      %1618 = vmatpush1.bf16.msra.mxu0 0
      %1619 = vmatprep.subr.bf16.mxu0 0
      %1620 = vmatpush1.bf16.msra.mxu0 0
      %1621 = vmatprep.mubr.bf16.mxu0 0
      %1622 = vmatmul.mubr.bf16.gmra.mrb[0].mxu0 %v1587
      %v1623 = vpop.f32.mrb[0].mxu0
      %v1624 = vadd.f32 0.0, %v1623
      %v1625 = vpop.f32.mrb[0].mxu0
      %v1626 = vpop.f32.mrb[0].mxu0
      %v1627 = vadd.f32 0.0, %v1626
      %v1628 = vpop.f32.mrb[0].mxu0
      %1629 = vdwg.mxu0
      %v1630 = vadd.f32 %v1439, %v1624
      %v1631 = vadd.f32 %v1440, %v1627
      %v1633 = vlaneseq
      %v1634 = vshrl.u32 %v1633, 7
      %v1635 = vsub.s32 0, %v1634
      %v1636 = vrot.slane %v587, %v1635
      %v1638 = vadd.f32 %v1630, %v1636
      %v1639 = vadd.f32 %v1631, %v1636
      %1640 = vst.msk [vmem:[#allocation2] sm:$0xff] %vm589, %v1638
      %1641 = vst.msk [vmem:[#allocation2 + $0x8] sm:$0xff] %vm589, %v1639
      %p1642 = scmp.eq.s32.totalorder %s23, 2
      // Predicated region
      $region73: #{mectec_forward.4} parent=67 // pred_check
        %p1643 = pneg %p1642
      $region74: #{mectec_forward.4} parent=67 // pred_check_branch
        %1645 = sbr.rel (%p1643) target = $region76
      $region75: #{mectec_forward.4} parent=67 // pred_region
        %1646 = vst.msk [vmem:[%s12] sm:$0xff] %vm589, %v1638
        %1647 = vst.msk [vmem:[%s12 + $0x8] sm:$0xff] %vm589, %v1639
      $region76: #{mectec_forward.4} parent=67 // pred_fallthru
        _
      // Predicated region
      $region77: #{mectec_forward.4} parent=67 // pred_check
        %p1648 = pneg %p338
      $region78: #{mectec_forward.4} parent=67 // pred_check_branch
        %1650 = sbr.rel (%p1648) target = $region80
      $region79: #{mectec_forward.4} parent=67 // pred_region
        _
      $region80: #{mectec_forward.4} parent=67 // pred_fallthru
        _
      // Predicated region
      $region81: #{mectec_forward.4} parent=67 // pred_check
        %p1651 = pneg %p338
      $region82: #{mectec_forward.4} parent=67 // pred_check_branch
        %1653 = sbr.rel (%p1651) target = $region84
      $region83: #{mectec_forward.4} parent=67 // pred_region
        _
      $region84: #{mectec_forward.4} parent=67 // pred_fallthru
        _
    $region68: #{mectec_forward.4} parent=5 // pred_fallthru
      _
    %p1654 = scmp.le.s32.totalorder 2, %s18
    // Predicated region
    $region85: #{mectec_forward.4} parent=5 // pred_check
      %p1655 = pneg %p1654
    $region86: #{mectec_forward.4} parent=5 // pred_check_branch
      %1657 = sbr.rel (%p1655) target = $region88
    $region87: #{mectec_forward.4} parent=5 // pred_region
      %s1658 = ssub.s32 %s18, 2
    $region88: #{mectec_forward.4} parent=5 // pred_fallthru
      _
  $region6: #{mectec_forward.4} parent=0 // loop_footer
    %s22 = sadd.s32 1, %s18
  $region7: #{mectec_forward.4} parent=0 // loop_footer_branch
    %17 = sbr.rel target = $region3
  $region8: #{mectec_forward.4} parent=0 // loop_exit
    _

// kernel: mectec_forward.5
$region0: #{mectec_forward.5}
  #allocation0 [shape = 'u32[]', space=smem, size = 0x4, offset = 0x4, fixed_abs, tag = 'smem constant byte address 0x4 - core index']
  #allocation1 [shape = 'u32[144,128]{1,0:T(1,128)}', space=vmem, size = 0x12000, scoped, tag = 'internal scratch']
  %s0 = inlined_call_operand.vmem [shape: f32[16,32], index: 0, kind: input, shape index: {}]
  %s1 = inlined_call_operand.vmem [shape: f32[16,32], index: 1, kind: input, shape index: {}]
  %s2 = inlined_call_operand.vmem [shape: f32[16,32], index: 2, kind: input, shape index: {}]
  %s3 = inlined_call_operand.vmem [shape: f32[16,768], index: 3, kind: input, shape index: {}]
  %s4 = inlined_call_operand.vmem [shape: bf16[768,128], index: 4, kind: input, shape index: {}]
  %s5 = inlined_call_operand.vmem [shape: f32[1,128], index: 5, kind: input, shape index: {}]
  %s6 = inlined_call_operand.vmem [shape: bf16[128,64], index: 6, kind: input, shape index: {}]
  %s7 = inlined_call_operand.vmem [shape: f32[1,64], index: 7, kind: input, shape index: {}]
  %s8 = inlined_call_operand.vmem [shape: bf16[64,32], index: 8, kind: input, shape index: {}]
  %s9 = inlined_call_operand.vmem [shape: f32[1,32], index: 9, kind: input, shape index: {}]
  %s10 = inlined_call_operand.vmem [shape: f32[2,32], index: 10, kind: input, shape index: {}]
  %s11 = inlined_call_operand.vmem [shape: bf16[32,16], index: 11, kind: input, shape index: {}]
  %s12 = inlined_call_operand.vmem [shape: f32[1,16], index: 12, kind: input, shape index: {}]
  %s13 = inlined_call_operand.vmem [shape: bf16[32,4], index: 13, kind: input, shape index: {}]
  %s14 = inlined_call_operand.vmem [shape: f32[1,4], index: 14, kind: input, shape index: {}]
  %s15 = inlined_call_operand.vmem [shape: f32[16,1], index: 15, kind: input, shape index: {}]
  %s16 = inlined_call_operand.vmem [shape: s32[16,1], index: 16, kind: input, shape index: {}]
  %s17 = inlined_call_operand.vmem [shape: s32[16,1], index: 17, kind: input, shape index: {}]
  %s18 = inlined_call_operand.vmem [shape: f32[16,128], index: 18, kind: output, shape index: {}]
  %s19 = sld [smem:[#allocation0]]
  $region82: #{mectec_forward.5} parent=0
    _
  %s21 = ssub.s32 1, %s19
  %s22 = scalar_select 0, %s21, %s19
  // Predicated region
  $region2: #{mectec_forward.5} parent=0 // pred_check
    _
  $region3: #{mectec_forward.5} parent=0 // pred_check_branch
    %24 = sbr.rel (0) target = $region5
  $region4: #{mectec_forward.5} parent=0 // pred_region
    _
  $region5: #{mectec_forward.5} parent=0 // pred_fallthru
    _
  // Predicated region
  $region6: #{mectec_forward.5} parent=0 // pred_check
    _
  $region7: #{mectec_forward.5} parent=0 // pred_check_branch
    %26 = sbr.rel (0) target = $region9
  $region8: #{mectec_forward.5} parent=0 // pred_region
    _
  $region9: #{mectec_forward.5} parent=0 // pred_fallthru
    _
  // Predicated region
  $region10: #{mectec_forward.5} parent=0 // pred_check
    _
  $region11: #{mectec_forward.5} parent=0 // pred_check_branch
    %28 = sbr.rel (0) target = $region13
  $region12: #{mectec_forward.5} parent=0 // pred_region
    _
  $region13: #{mectec_forward.5} parent=0 // pred_fallthru
    _
  // Predicated region
  $region14: #{mectec_forward.5} parent=0 // pred_check
    _
  $region15: #{mectec_forward.5} parent=0 // pred_check_branch
    %30 = sbr.rel (0) target = $region17
  $region16: #{mectec_forward.5} parent=0 // pred_region
    _
  $region17: #{mectec_forward.5} parent=0 // pred_fallthru
    _
  // Predicated region
  $region18: #{mectec_forward.5} parent=0 // pred_check
    _
  $region19: #{mectec_forward.5} parent=0 // pred_check_branch
    %32 = sbr.rel (0) target = $region21
  $region20: #{mectec_forward.5} parent=0 // pred_region
    _
  $region21: #{mectec_forward.5} parent=0 // pred_fallthru
    _
  // Predicated region
  $region22: #{mectec_forward.5} parent=0 // pred_check
    _
  $region23: #{mectec_forward.5} parent=0 // pred_check_branch
    %34 = sbr.rel (0) target = $region25
  $region24: #{mectec_forward.5} parent=0 // pred_region
    _
  $region25: #{mectec_forward.5} parent=0 // pred_fallthru
    _
  // Predicated region
  $region26: #{mectec_forward.5} parent=0 // pred_check
    _
  $region27: #{mectec_forward.5} parent=0 // pred_check_branch
    %36 = sbr.rel (0) target = $region29
  $region28: #{mectec_forward.5} parent=0 // pred_region
    _
  $region29: #{mectec_forward.5} parent=0 // pred_fallthru
    _
  // Predicated region
  $region30: #{mectec_forward.5} parent=0 // pred_check
    _
  $region31: #{mectec_forward.5} parent=0 // pred_check_branch
    %38 = sbr.rel (0) target = $region33
  $region32: #{mectec_forward.5} parent=0 // pred_region
    _
  $region33: #{mectec_forward.5} parent=0 // pred_fallthru
    _
  // Predicated region
  $region34: #{mectec_forward.5} parent=0 // pred_check
    _
  $region35: #{mectec_forward.5} parent=0 // pred_check_branch
    %40 = sbr.rel (0) target = $region37
  $region36: #{mectec_forward.5} parent=0 // pred_region
    _
  $region37: #{mectec_forward.5} parent=0 // pred_fallthru
    _
  // Predicated region
  $region38: #{mectec_forward.5} parent=0 // pred_check
    _
  $region39: #{mectec_forward.5} parent=0 // pred_check_branch
    %42 = sbr.rel (0) target = $region41
  $region40: #{mectec_forward.5} parent=0 // pred_region
    _
  $region41: #{mectec_forward.5} parent=0 // pred_fallthru
    _
  // Predicated region
  $region42: #{mectec_forward.5} parent=0 // pred_check
    _
  $region43: #{mectec_forward.5} parent=0 // pred_check_branch
    %44 = sbr.rel (0) target = $region45
  $region44: #{mectec_forward.5} parent=0 // pred_region
    _
  $region45: #{mectec_forward.5} parent=0 // pred_fallthru
    _
  // Predicated region
  $region46: #{mectec_forward.5} parent=0 // pred_check
    _
  $region47: #{mectec_forward.5} parent=0 // pred_check_branch
    %46 = sbr.rel (0) target = $region49
  $region48: #{mectec_forward.5} parent=0 // pred_region
    _
  $region49: #{mectec_forward.5} parent=0 // pred_fallthru
    _
  // Predicated region
  $region50: #{mectec_forward.5} parent=0 // pred_check
    _
  $region51: #{mectec_forward.5} parent=0 // pred_check_branch
    %48 = sbr.rel (0) target = $region53
  $region52: #{mectec_forward.5} parent=0 // pred_region
    _
  $region53: #{mectec_forward.5} parent=0 // pred_fallthru
    _
  // Predicated region
  $region54: #{mectec_forward.5} parent=0 // pred_check
    _
  $region55: #{mectec_forward.5} parent=0 // pred_check_branch
    %50 = sbr.rel (0) target = $region57
  $region56: #{mectec_forward.5} parent=0 // pred_region
    _
  $region57: #{mectec_forward.5} parent=0 // pred_fallthru
    _
  // Predicated region
  $region58: #{mectec_forward.5} parent=0 // pred_check
    _
  $region59: #{mectec_forward.5} parent=0 // pred_check_branch
    %52 = sbr.rel (0) target = $region61
  $region60: #{mectec_forward.5} parent=0 // pred_region
    _
  $region61: #{mectec_forward.5} parent=0 // pred_fallthru
    _
  // Predicated region
  $region62: #{mectec_forward.5} parent=0 // pred_check
    _
  $region63: #{mectec_forward.5} parent=0 // pred_check_branch
    %54 = sbr.rel (0) target = $region65
  $region64: #{mectec_forward.5} parent=0 // pred_region
    _
  $region65: #{mectec_forward.5} parent=0 // pred_fallthru
    _
  // Predicated region
  $region66: #{mectec_forward.5} parent=0 // pred_check
    _
  $region67: #{mectec_forward.5} parent=0 // pred_check_branch
    %56 = sbr.rel (0) target = $region69
  $region68: #{mectec_forward.5} parent=0 // pred_region
    _
  $region69: #{mectec_forward.5} parent=0 // pred_fallthru
    _
  // Predicated region
  $region70: #{mectec_forward.5} parent=0 // pred_check
    _
  $region71: #{mectec_forward.5} parent=0 // pred_check_branch
    %58 = sbr.rel (0) target = $region73
  $region72: #{mectec_forward.5} parent=0 // pred_region
    _
  $region73: #{mectec_forward.5} parent=0 // pred_fallthru
    _
  %v60 = vld [vmem:[%s3] sm:$0xff]
  %v61 = vld [vmem:[%s3 + $0x8] sm:$0xff]
  %v62 = vld [vmem:[%s3 + $0x10] sm:$0xff]
  %v63 = vld [vmem:[%s3 + $0x18] sm:$0xff]
  %v64 = vld [vmem:[%s3 + $0x20] sm:$0xff]
  %v65 = vld [vmem:[%s3 + $0x28] sm:$0xff]
  %v66 = vld [vmem:[%s3 + $0x30] sm:$0xff]
  %v67 = vld [vmem:[%s3 + $0x38] sm:$0xff]
  %v68 = vld [vmem:[%s3 + $0x40] sm:$0xff]
  %v69 = vld [vmem:[%s3 + $0x48] sm:$0xff]
  %v70 = vld [vmem:[%s3 + $0x50] sm:$0xff]
  %v71 = vld [vmem:[%s3 + $0x58] sm:$0xff]
  %v72 = vld [vmem:[%s4] sm:$0xf]
  %v73 = vld [vmem:[%s4 + $0x4] sm:$0xf]
  %v74 = vld [vmem:[%s4 + $0x8] sm:$0xf]
  %v75 = vld [vmem:[%s4 + $0xc] sm:$0xf]
  %v76 = vld [vmem:[%s4 + $0x10] sm:$0xf]
  %v77 = vld [vmem:[%s4 + $0x14] sm:$0xf]
  %v78 = vld [vmem:[%s4 + $0x18] sm:$0xf]
  %v79 = vld [vmem:[%s4 + $0x1c] sm:$0xf]
  %v80 = vld [vmem:[%s4 + $0x20] sm:$0xf]
  %v81 = vld [vmem:[%s4 + $0x24] sm:$0xf]
  %v82 = vld [vmem:[%s4 + $0x28] sm:$0xf]
  %v83 = vld [vmem:[%s4 + $0x2c] sm:$0xf]
  %v84 = vld [vmem:[%s4 + $0x30] sm:$0xf]
  %v85 = vld [vmem:[%s4 + $0x34] sm:$0xf]
  %v86 = vld [vmem:[%s4 + $0x38] sm:$0xf]
  %v87 = vld [vmem:[%s4 + $0x3c] sm:$0xf]
  %v88 = vld [vmem:[%s4 + $0x40] sm:$0xf]
  %v89 = vld [vmem:[%s4 + $0x44] sm:$0xf]
  %v90 = vld [vmem:[%s4 + $0x48] sm:$0xf]
  %v91 = vld [vmem:[%s4 + $0x4c] sm:$0xf]
  %v92 = vld [vmem:[%s4 + $0x50] sm:$0xf]
  %v93 = vld [vmem:[%s4 + $0x54] sm:$0xf]
  %v94 = vld [vmem:[%s4 + $0x58] sm:$0xf]
  %v95 = vld [vmem:[%s4 + $0x5c] sm:$0xf]
  %v96 = vld [vmem:[%s4 + $0x60] sm:$0xf]
  %v97 = vld [vmem:[%s4 + $0x64] sm:$0xf]
  %v98 = vld [vmem:[%s4 + $0x68] sm:$0xf]
  %v99 = vld [vmem:[%s4 + $0x6c] sm:$0xf]
  %v100 = vld [vmem:[%s4 + $0x70] sm:$0xf]
  %v101 = vld [vmem:[%s4 + $0x74] sm:$0xf]
  %v102 = vld [vmem:[%s4 + $0x78] sm:$0xf]
  %v103 = vld [vmem:[%s4 + $0x7c] sm:$0xf]
  %v104 = vld [vmem:[%s4 + $0x80] sm:$0xf]
  %v105 = vld [vmem:[%s4 + $0x84] sm:$0xf]
  %v106 = vld [vmem:[%s4 + $0x88] sm:$0xf]
  %v107 = vld [vmem:[%s4 + $0x8c] sm:$0xf]
  %v108 = vld [vmem:[%s4 + $0x90] sm:$0xf]
  %v109 = vld [vmem:[%s4 + $0x94] sm:$0xf]
  %v110 = vld [vmem:[%s4 + $0x98] sm:$0xf]
  %v111 = vld [vmem:[%s4 + $0x9c] sm:$0xf]
  %v112 = vld [vmem:[%s4 + $0xa0] sm:$0xf]
  %v113 = vld [vmem:[%s4 + $0xa4] sm:$0xf]
  %v114 = vld [vmem:[%s4 + $0xa8] sm:$0xf]
  %v115 = vld [vmem:[%s4 + $0xac] sm:$0xf]
  %v116 = vld [vmem:[%s4 + $0xb0] sm:$0xf]
  %v117 = vld [vmem:[%s4 + $0xb4] sm:$0xf]
  %v118 = vld [vmem:[%s4 + $0xb8] sm:$0xf]
  %v119 = vld [vmem:[%s4 + $0xbc] sm:$0xf]
  %v120 = vld [vmem:[%s4 + $0xc0] sm:$0xf]
  %v121 = vld [vmem:[%s4 + $0xc4] sm:$0xf]
  %v122 = vld [vmem:[%s4 + $0xc8] sm:$0xf]
  %v123 = vld [vmem:[%s4 + $0xcc] sm:$0xf]
  %v124 = vld [vmem:[%s4 + $0xd0] sm:$0xf]
  %v125 = vld [vmem:[%s4 + $0xd4] sm:$0xf]
  %v126 = vld [vmem:[%s4 + $0xd8] sm:$0xf]
  %v127 = vld [vmem:[%s4 + $0xdc] sm:$0xf]
  %v128 = vld [vmem:[%s4 + $0xe0] sm:$0xf]
  %v129 = vld [vmem:[%s4 + $0xe4] sm:$0xf]
  %v130 = vld [vmem:[%s4 + $0xe8] sm:$0xf]
  %v131 = vld [vmem:[%s4 + $0xec] sm:$0xf]
  %v132 = vld [vmem:[%s4 + $0xf0] sm:$0xf]
  %v133 = vld [vmem:[%s4 + $0xf4] sm:$0xf]
  %v134 = vld [vmem:[%s4 + $0xf8] sm:$0xf]
  %v135 = vld [vmem:[%s4 + $0xfc] sm:$0xf]
  %v136 = vld [vmem:[%s4 + $0x100] sm:$0xf]
  %v137 = vld [vmem:[%s4 + $0x104] sm:$0xf]
  %v138 = vld [vmem:[%s4 + $0x108] sm:$0xf]
  %v139 = vld [vmem:[%s4 + $0x10c] sm:$0xf]
  %v140 = vld [vmem:[%s4 + $0x110] sm:$0xf]
  %v141 = vld [vmem:[%s4 + $0x114] sm:$0xf]
  %v142 = vld [vmem:[%s4 + $0x118] sm:$0xf]
  %v143 = vld [vmem:[%s4 + $0x11c] sm:$0xf]
  %v144 = vld [vmem:[%s4 + $0x120] sm:$0xf]
  %v145 = vld [vmem:[%s4 + $0x124] sm:$0xf]
  %v146 = vld [vmem:[%s4 + $0x128] sm:$0xf]
  %v147 = vld [vmem:[%s4 + $0x12c] sm:$0xf]
  %v148 = vld [vmem:[%s4 + $0x130] sm:$0xf]
  %v149 = vld [vmem:[%s4 + $0x134] sm:$0xf]
  %v150 = vld [vmem:[%s4 + $0x138] sm:$0xf]
  %v151 = vld [vmem:[%s4 + $0x13c] sm:$0xf]
  %v152 = vld [vmem:[%s4 + $0x140] sm:$0xf]
  %v153 = vld [vmem:[%s4 + $0x144] sm:$0xf]
  %v154 = vld [vmem:[%s4 + $0x148] sm:$0xf]
  %v155 = vld [vmem:[%s4 + $0x14c] sm:$0xf]
  %v156 = vld [vmem:[%s4 + $0x150] sm:$0xf]
  %v157 = vld [vmem:[%s4 + $0x154] sm:$0xf]
  %v158 = vld [vmem:[%s4 + $0x158] sm:$0xf]
  %v159 = vld [vmem:[%s4 + $0x15c] sm:$0xf]
  %v160 = vld [vmem:[%s4 + $0x160] sm:$0xf]
  %v161 = vld [vmem:[%s4 + $0x164] sm:$0xf]
  %v162 = vld [vmem:[%s4 + $0x168] sm:$0xf]
  %v163 = vld [vmem:[%s4 + $0x16c] sm:$0xf]
  %v164 = vld [vmem:[%s4 + $0x170] sm:$0xf]
  %v165 = vld [vmem:[%s4 + $0x174] sm:$0xf]
  %v166 = vld [vmem:[%s4 + $0x178] sm:$0xf]
  %v167 = vld [vmem:[%s4 + $0x17c] sm:$0xf]
  %v168 = vpack.c.bf16 %v66, %v60
  %v169 = vpack.c.bf16 %v67, %v61
  %v170 = vpack.c.bf16 %v68, %v62
  %v171 = vpack.c.bf16 %v69, %v63
  %v172 = vpack.c.bf16 %v70, %v64
  %v173 = vpack.c.bf16 %v71, %v65
  %v174 = vld [vmem:[%s5] sm:$0x1]
  %v176 = vlaneseq
  %v177 = vshrl.u32 %v176, 7
  %v178 = vsub.s32 0, %v177
  %v179 = vrot.slane %v174, %v178
  %v277 = vunpack.c.l.b16 %v72
  %v278 = vunpack.c.l.b16 %v73
  %v279 = vunpack.c.l.b16 %v74
  %v280 = vunpack.c.l.b16 %v75
  %v281 = vunpack.c.l.b16 %v76
  %v282 = vunpack.c.l.b16 %v77
  %v283 = vunpack.c.l.b16 %v78
  %v284 = vunpack.c.l.b16 %v79
  %v285 = vunpack.c.l.b16 %v80
  %v286 = vunpack.c.l.b16 %v81
  %v287 = vunpack.c.l.b16 %v82
  %v288 = vunpack.c.l.b16 %v83
  %v289 = vunpack.c.l.b16 %v84
  %v290 = vunpack.c.l.b16 %v85
  %v291 = vunpack.c.l.b16 %v86
  %v292 = vunpack.c.l.b16 %v87
  %v293 = vunpack.c.l.b16 %v88
  %v294 = vunpack.c.l.b16 %v89
  %v295 = vunpack.c.l.b16 %v90
  %v296 = vunpack.c.l.b16 %v91
  %v297 = vunpack.c.l.b16 %v92
  %v298 = vunpack.c.l.b16 %v93
  %v299 = vunpack.c.l.b16 %v94
  %v300 = vunpack.c.l.b16 %v95
  %v301 = vunpack.c.l.b16 %v96
  %v302 = vunpack.c.l.b16 %v97
  %v303 = vunpack.c.l.b16 %v98
  %v304 = vunpack.c.l.b16 %v99
  %v305 = vunpack.c.l.b16 %v100
  %v306 = vunpack.c.l.b16 %v101
  %v307 = vunpack.c.l.b16 %v102
  %v308 = vunpack.c.l.b16 %v103
  %v309 = vunpack.c.l.b16 %v104
  %v310 = vunpack.c.l.b16 %v105
  %v311 = vunpack.c.l.b16 %v106
  %v312 = vunpack.c.l.b16 %v107
  %v313 = vunpack.c.l.b16 %v108
  %v314 = vunpack.c.l.b16 %v109
  %v315 = vunpack.c.l.b16 %v110
  %v316 = vunpack.c.l.b16 %v111
  %v317 = vunpack.c.l.b16 %v112
  %v318 = vunpack.c.l.b16 %v113
  %v319 = vunpack.c.l.b16 %v114
  %v320 = vunpack.c.l.b16 %v115
  %v321 = vunpack.c.l.b16 %v116
  %v322 = vunpack.c.l.b16 %v117
  %v323 = vunpack.c.l.b16 %v118
  %v324 = vunpack.c.l.b16 %v119
  %v325 = vunpack.c.l.b16 %v120
  %v326 = vunpack.c.l.b16 %v121
  %v327 = vunpack.c.l.b16 %v122
  %v328 = vunpack.c.l.b16 %v123
  %v329 = vunpack.c.l.b16 %v124
  %v330 = vunpack.c.l.b16 %v125
  %v331 = vunpack.c.l.b16 %v126
  %v332 = vunpack.c.l.b16 %v127
  %v333 = vunpack.c.l.b16 %v128
  %v334 = vunpack.c.l.b16 %v129
  %v335 = vunpack.c.l.b16 %v130
  %v336 = vunpack.c.l.b16 %v131
  %v337 = vunpack.c.l.b16 %v132
  %v338 = vunpack.c.l.b16 %v133
  %v339 = vunpack.c.l.b16 %v134
  %v340 = vunpack.c.l.b16 %v135
  %v341 = vunpack.c.l.b16 %v136
  %v342 = vunpack.c.l.b16 %v137
  %v343 = vunpack.c.l.b16 %v138
  %v344 = vunpack.c.l.b16 %v139
  %v345 = vunpack.c.l.b16 %v140
  %v346 = vunpack.c.l.b16 %v141
  %v347 = vunpack.c.l.b16 %v142
  %v348 = vunpack.c.l.b16 %v143
  %v349 = vunpack.c.l.b16 %v144
  %v350 = vunpack.c.l.b16 %v145
  %v351 = vunpack.c.l.b16 %v146
  %v352 = vunpack.c.l.b16 %v147
  %v353 = vunpack.c.l.b16 %v148
  %v354 = vunpack.c.l.b16 %v149
  %v355 = vunpack.c.l.b16 %v150
  %v356 = vunpack.c.l.b16 %v151
  %v357 = vunpack.c.l.b16 %v152
  %v358 = vunpack.c.l.b16 %v153
  %v359 = vunpack.c.l.b16 %v154
  %v360 = vunpack.c.l.b16 %v155
  %v361 = vunpack.c.l.b16 %v156
  %v362 = vunpack.c.l.b16 %v157
  %v363 = vunpack.c.l.b16 %v158
  %v364 = vunpack.c.l.b16 %v159
  %v365 = vunpack.c.l.b16 %v160
  %v366 = vunpack.c.l.b16 %v161
  %v367 = vunpack.c.l.b16 %v162
  %v368 = vunpack.c.l.b16 %v163
  %v369 = vunpack.c.l.b16 %v164
  %v370 = vunpack.c.l.b16 %v165
  %v371 = vunpack.c.l.b16 %v166
  %v372 = vunpack.c.l.b16 %v167
  %v373 = vpack.c.b16 %v278, %v277
  %v374 = vpack.c.b16 %v280, %v279
  %v375 = vpack.c.b16 %v282, %v281
  %v376 = vpack.c.b16 %v284, %v283
  %v377 = vpack.c.b16 %v286, %v285
  %v378 = vpack.c.b16 %v288, %v287
  %v379 = vpack.c.b16 %v290, %v289
  %v380 = vpack.c.b16 %v292, %v291
  %v381 = vpack.c.b16 %v294, %v293
  %v382 = vpack.c.b16 %v296, %v295
  %v383 = vpack.c.b16 %v298, %v297
  %v384 = vpack.c.b16 %v300, %v299
  %v385 = vpack.c.b16 %v302, %v301
  %v386 = vpack.c.b16 %v304, %v303
  %v387 = vpack.c.b16 %v306, %v305
  %v388 = vpack.c.b16 %v308, %v307
  %v389 = vpack.c.b16 %v310, %v309
  %v390 = vpack.c.b16 %v312, %v311
  %v391 = vpack.c.b16 %v314, %v313
  %v392 = vpack.c.b16 %v316, %v315
  %v393 = vpack.c.b16 %v318, %v317
  %v394 = vpack.c.b16 %v320, %v319
  %v395 = vpack.c.b16 %v322, %v321
  %v396 = vpack.c.b16 %v324, %v323
  %v397 = vpack.c.b16 %v326, %v325
  %v398 = vpack.c.b16 %v328, %v327
  %v399 = vpack.c.b16 %v330, %v329
  %v400 = vpack.c.b16 %v332, %v331
  %v401 = vpack.c.b16 %v334, %v333
  %v402 = vpack.c.b16 %v336, %v335
  %v403 = vpack.c.b16 %v338, %v337
  %v404 = vpack.c.b16 %v340, %v339
  %v405 = vpack.c.b16 %v342, %v341
  %v406 = vpack.c.b16 %v344, %v343
  %v407 = vpack.c.b16 %v346, %v345
  %v408 = vpack.c.b16 %v348, %v347
  %v409 = vpack.c.b16 %v350, %v349
  %v410 = vpack.c.b16 %v352, %v351
  %v411 = vpack.c.b16 %v354, %v353
  %v412 = vpack.c.b16 %v356, %v355
  %v413 = vpack.c.b16 %v358, %v357
  %v414 = vpack.c.b16 %v360, %v359
  %v415 = vpack.c.b16 %v362, %v361
  %v416 = vpack.c.b16 %v364, %v363
  %v417 = vpack.c.b16 %v366, %v365
  %v418 = vpack.c.b16 %v368, %v367
  %v419 = vpack.c.b16 %v370, %v369
  %v420 = vpack.c.b16 %v372, %v371
  %469 = vmatprep.subr.bf16.mxu0 0
  %470 = vmatpush1.bf16.msra.mxu0 %v373
  %471 = vmatprep.subr.bf16.mxu0 0
  %472 = vmatpush1.bf16.msra.mxu0 %v374
  %473 = vmatprep.subr.bf16.mxu0 0
  %474 = vmatpush1.bf16.msra.mxu0 %v375
  %475 = vmatprep.subr.bf16.mxu0 0
  %476 = vmatpush1.bf16.msra.mxu0 %v376
  %477 = vmatprep.subr.bf16.mxu0 0
  %478 = vmatpush1.bf16.msra.mxu0 %v377
  %479 = vmatprep.subr.bf16.mxu0 0
  %480 = vmatpush1.bf16.msra.mxu0 %v378
  %481 = vmatprep.subr.bf16.mxu0 0
  %482 = vmatpush1.bf16.msra.mxu0 %v379
  %483 = vmatprep.subr.bf16.mxu0 0
  %484 = vmatpush1.bf16.msra.mxu0 %v380
  %485 = vmatprep.subr.bf16.mxu0 0
  %486 = vmatpush1.bf16.msra.mxu0 %v381
  %487 = vmatprep.subr.bf16.mxu0 0
  %488 = vmatpush1.bf16.msra.mxu0 %v382
  %489 = vmatprep.subr.bf16.mxu0 0
  %490 = vmatpush1.bf16.msra.mxu0 %v383
  %491 = vmatprep.subr.bf16.mxu0 0
  %492 = vmatpush1.bf16.msra.mxu0 %v384
  %493 = vmatprep.subr.bf16.mxu0 0
  %494 = vmatpush1.bf16.msra.mxu0 %v385
  %495 = vmatprep.subr.bf16.mxu0 0
  %496 = vmatpush1.bf16.msra.mxu0 %v386
  %497 = vmatprep.subr.bf16.mxu0 0
  %498 = vmatpush1.bf16.msra.mxu0 %v387
  %499 = vmatprep.subr.bf16.mxu0 0
  %500 = vmatpush1.bf16.msra.mxu0 %v388
  %501 = vmatprep.mubr.bf16.mxu0 %v169
  %502 = vmatmul.mubr.bf16.gmra.mrb[0].mxu0 %v168
  %v503 = vpop.f32.mrb[0].mxu0
  %v504 = vadd.f32 %v179, %v503
  %v505 = vpop.f32.mrb[0].mxu0
  %v506 = vpop.f32.mrb[0].mxu0
  %v507 = vadd.f32 %v179, %v506
  %v508 = vpop.f32.mrb[0].mxu0
  %509 = vdwg.mxu0
  %510 = vmatprep.subr.bf16.mxu0 0
  %511 = vmatpush1.bf16.msra.mxu0 %v389
  %512 = vmatprep.subr.bf16.mxu0 0
  %513 = vmatpush1.bf16.msra.mxu0 %v390
  %514 = vmatprep.subr.bf16.mxu0 0
  %515 = vmatpush1.bf16.msra.mxu0 %v391
  %516 = vmatprep.subr.bf16.mxu0 0
  %517 = vmatpush1.bf16.msra.mxu0 %v392
  %518 = vmatprep.subr.bf16.mxu0 0
  %519 = vmatpush1.bf16.msra.mxu0 %v393
  %520 = vmatprep.subr.bf16.mxu0 0
  %521 = vmatpush1.bf16.msra.mxu0 %v394
  %522 = vmatprep.subr.bf16.mxu0 0
  %523 = vmatpush1.bf16.msra.mxu0 %v395
  %524 = vmatprep.subr.bf16.mxu0 0
  %525 = vmatpush1.bf16.msra.mxu0 %v396
  %526 = vmatprep.subr.bf16.mxu0 0
  %527 = vmatpush1.bf16.msra.mxu0 %v397
  %528 = vmatprep.subr.bf16.mxu0 0
  %529 = vmatpush1.bf16.msra.mxu0 %v398
  %530 = vmatprep.subr.bf16.mxu0 0
  %531 = vmatpush1.bf16.msra.mxu0 %v399
  %532 = vmatprep.subr.bf16.mxu0 0
  %533 = vmatpush1.bf16.msra.mxu0 %v400
  %534 = vmatprep.subr.bf16.mxu0 0
  %535 = vmatpush1.bf16.msra.mxu0 %v401
  %536 = vmatprep.subr.bf16.mxu0 0
  %537 = vmatpush1.bf16.msra.mxu0 %v402
  %538 = vmatprep.subr.bf16.mxu0 0
  %539 = vmatpush1.bf16.msra.mxu0 %v403
  %540 = vmatprep.subr.bf16.mxu0 0
  %541 = vmatpush1.bf16.msra.mxu0 %v404
  %542 = vmatprep.mubr.bf16.mxu0 %v171
  %543 = vmatmul.mubr.bf16.gmra.mrb[0].mxu0 %v170
  %v544 = vpop.f32.mrb[0].mxu0
  %v545 = vadd.f32 %v504, %v544
  %v546 = vpop.f32.mrb[0].mxu0
  %v547 = vpop.f32.mrb[0].mxu0
  %v548 = vadd.f32 %v507, %v547
  %v549 = vpop.f32.mrb[0].mxu0
  %550 = vdwg.mxu0
  %551 = vmatprep.subr.bf16.mxu0 0
  %552 = vmatpush1.bf16.msra.mxu0 %v405
  %553 = vmatprep.subr.bf16.mxu0 0
  %554 = vmatpush1.bf16.msra.mxu0 %v406
  %555 = vmatprep.subr.bf16.mxu0 0
  %556 = vmatpush1.bf16.msra.mxu0 %v407
  %557 = vmatprep.subr.bf16.mxu0 0
  %558 = vmatpush1.bf16.msra.mxu0 %v408
  %559 = vmatprep.subr.bf16.mxu0 0
  %560 = vmatpush1.bf16.msra.mxu0 %v409
  %561 = vmatprep.subr.bf16.mxu0 0
  %562 = vmatpush1.bf16.msra.mxu0 %v410
  %563 = vmatprep.subr.bf16.mxu0 0
  %564 = vmatpush1.bf16.msra.mxu0 %v411
  %565 = vmatprep.subr.bf16.mxu0 0
  %566 = vmatpush1.bf16.msra.mxu0 %v412
  %567 = vmatprep.subr.bf16.mxu0 0
  %568 = vmatpush1.bf16.msra.mxu0 %v413
  %569 = vmatprep.subr.bf16.mxu0 0
  %570 = vmatpush1.bf16.msra.mxu0 %v414
  %571 = vmatprep.subr.bf16.mxu0 0
  %572 = vmatpush1.bf16.msra.mxu0 %v415
  %573 = vmatprep.subr.bf16.mxu0 0
  %574 = vmatpush1.bf16.msra.mxu0 %v416
  %575 = vmatprep.subr.bf16.mxu0 0
  %576 = vmatpush1.bf16.msra.mxu0 %v417
  %577 = vmatprep.subr.bf16.mxu0 0
  %578 = vmatpush1.bf16.msra.mxu0 %v418
  %579 = vmatprep.subr.bf16.mxu0 0
  %580 = vmatpush1.bf16.msra.mxu0 %v419
  %581 = vmatprep.subr.bf16.mxu0 0
  %582 = vmatpush1.bf16.msra.mxu0 %v420
  %583 = vmatprep.mubr.bf16.mxu0 %v173
  %584 = vmatmul.mubr.bf16.gmra.mrb[0].mxu0 %v172
  %v585 = vpop.f32.mrb[0].mxu0
  %v586 = vadd.f32 %v545, %v585
  %v587 = vpop.f32.mrb[0].mxu0
  %v588 = vpop.f32.mrb[0].mxu0
  %v589 = vadd.f32 %v548, %v588
  %v590 = vpop.f32.mrb[0].mxu0
  %591 = vdwg.mxu0
  %v592 = vmul.f32 %v586, 0.5
  %v593 = vmul.f32 %v589, 0.5
  %v594 = vmul.f32 %v586, 0.044715
  %v595 = vmul.f32 %v589, 0.044715
  %v596 = vmul.f32 %v594, %v586
  %v597 = vmul.f32 %v595, %v589
  %v598 = vmul.f32 %v596, %v586
  %v599 = vmul.f32 %v597, %v589
  %v600 = vadd.f32 %v586, %v598
  %v601 = vadd.f32 %v589, %v599
  %v602 = vmul.f32 %v600, 0.7978846
  %v603 = vmul.f32 %v601, 0.7978846
  %v604 = vtanh.pop %v602
  %v605 = vtanh.pop %v603
  %v606 = vadd.f32 %v604, 1.0
  %v607 = vadd.f32 %v605, 1.0
  %v608 = vmul.f32 %v592, %v606
  %v609 = vmul.f32 %v593, %v607
  %v610 = vld [vmem:[%s6] sm:$0xf]
  %v611 = vld [vmem:[%s6 + $0x4] sm:$0xf]
  %v612 = vld [vmem:[%s6 + $0x8] sm:$0xf]
  %v613 = vld [vmem:[%s6 + $0xc] sm:$0xf]
  %v614 = vld [vmem:[%s6 + $0x10] sm:$0xf]
  %v615 = vld [vmem:[%s6 + $0x14] sm:$0xf]
  %v616 = vld [vmem:[%s6 + $0x18] sm:$0xf]
  %v617 = vld [vmem:[%s6 + $0x1c] sm:$0xf]
  %v618 = vld [vmem:[%s6 + $0x20] sm:$0xf]
  %v619 = vld [vmem:[%s6 + $0x24] sm:$0xf]
  %v620 = vld [vmem:[%s6 + $0x28] sm:$0xf]
  %v621 = vld [vmem:[%s6 + $0x2c] sm:$0xf]
  %v622 = vld [vmem:[%s6 + $0x30] sm:$0xf]
  %v623 = vld [vmem:[%s6 + $0x34] sm:$0xf]
  %v624 = vld [vmem:[%s6 + $0x38] sm:$0xf]
  %v625 = vld [vmem:[%s6 + $0x3c] sm:$0xf]
  %v626 = vpack.c.bf16 %v609, %v608
  %v627 = vld [vmem:[%s7] sm:$0x1]
  %v629 = vlaneseq
  %v630 = vshrl.u32 %v629, 7
  %v631 = vsub.s32 0, %v630
  %v632 = vrot.slane %v627, %v631
  %v650 = vunpack.c.l.b16 %v610
  %v651 = vunpack.c.l.b16 %v611
  %v652 = vunpack.c.l.b16 %v612
  %v653 = vunpack.c.l.b16 %v613
  %v654 = vunpack.c.l.b16 %v614
  %v655 = vunpack.c.l.b16 %v615
  %v656 = vunpack.c.l.b16 %v616
  %v657 = vunpack.c.l.b16 %v617
  %v658 = vunpack.c.l.b16 %v618
  %v659 = vunpack.c.l.b16 %v619
  %v660 = vunpack.c.l.b16 %v620
  %v661 = vunpack.c.l.b16 %v621
  %v662 = vunpack.c.l.b16 %v622
  %v663 = vunpack.c.l.b16 %v623
  %v664 = vunpack.c.l.b16 %v624
  %v665 = vunpack.c.l.b16 %v625
  %v666 = vpack.c.b16 %v651, %v650
  %v667 = vpack.c.b16 %v653, %v652
  %v668 = vpack.c.b16 %v655, %v654
  %v669 = vpack.c.b16 %v657, %v656
  %v670 = vpack.c.b16 %v659, %v658
  %v671 = vpack.c.b16 %v661, %v660
  %v672 = vpack.c.b16 %v663, %v662
  %v673 = vpack.c.b16 %v665, %v664
  %682 = vmatprep.subr.bf16.mxu0 0
  %683 = vmatpush1.bf16.msra.mxu0 %v666
  %684 = vmatprep.subr.bf16.mxu0 0
  %685 = vmatpush1.bf16.msra.mxu0 %v667
  %686 = vmatprep.subr.bf16.mxu0 0
  %687 = vmatpush1.bf16.msra.mxu0 %v668
  %688 = vmatprep.subr.bf16.mxu0 0
  %689 = vmatpush1.bf16.msra.mxu0 %v669
  %690 = vmatprep.subr.bf16.mxu0 0
  %691 = vmatpush1.bf16.msra.mxu0 %v670
  %692 = vmatprep.subr.bf16.mxu0 0
  %693 = vmatpush1.bf16.msra.mxu0 %v671
  %694 = vmatprep.subr.bf16.mxu0 0
  %695 = vmatpush1.bf16.msra.mxu0 %v672
  %696 = vmatprep.subr.bf16.mxu0 0
  %697 = vmatpush1.bf16.msra.mxu0 %v673
  %698 = vmatprep.subr.bf16.mxu0 0
  %699 = vmatpush1.bf16.msra.mxu0 0
  %700 = vmatprep.subr.bf16.mxu0 0
  %701 = vmatpush1.bf16.msra.mxu0 0
  %702 = vmatprep.subr.bf16.mxu0 0
  %703 = vmatpush1.bf16.msra.mxu0 0
  %704 = vmatprep.subr.bf16.mxu0 0
  %705 = vmatpush1.bf16.msra.mxu0 0
  %706 = vmatprep.subr.bf16.mxu0 0
  %707 = vmatpush1.bf16.msra.mxu0 0
  %708 = vmatprep.subr.bf16.mxu0 0
  %709 = vmatpush1.bf16.msra.mxu0 0
  %710 = vmatprep.subr.bf16.mxu0 0
  %711 = vmatpush1.bf16.msra.mxu0 0
  %712 = vmatprep.subr.bf16.mxu0 0
  %713 = vmatpush1.bf16.msra.mxu0 0
  %714 = vmatprep.mubr.bf16.mxu0 0
  %715 = vmatmul.mubr.bf16.gmra.mrb[0].mxu0 %v626
  %v716 = vpop.f32.mrb[0].mxu0
  %v717 = vadd.f32 %v632, %v716
  %v718 = vpop.f32.mrb[0].mxu0
  %v719 = vpop.f32.mrb[0].mxu0
  %v720 = vadd.f32 %v632, %v719
  %v721 = vpop.f32.mrb[0].mxu0
  %722 = vdwg.mxu0
  %v723 = vmul.f32 %v717, 0.5
  %v724 = vmul.f32 %v720, 0.5
  %v725 = vmul.f32 %v717, 0.044715
  %v726 = vmul.f32 %v720, 0.044715
  %v727 = vmul.f32 %v725, %v717
  %v728 = vmul.f32 %v726, %v720
  %v729 = vmul.f32 %v727, %v717
  %v730 = vmul.f32 %v728, %v720
  %v731 = vadd.f32 %v717, %v729
  %v732 = vadd.f32 %v720, %v730
  %v733 = vmul.f32 %v731, 0.7978846
  %v734 = vmul.f32 %v732, 0.7978846
  %v735 = vtanh.pop %v733
  %v736 = vtanh.pop %v734
  %v737 = vadd.f32 %v735, 1.0
  %v738 = vadd.f32 %v736, 1.0
  %v739 = vmul.f32 %v723, %v737
  %v740 = vmul.f32 %v724, %v738
  %v741 = vld [vmem:[%s8] sm:$0xf]
  %v742 = vld [vmem:[%s8 + $0x4] sm:$0xf]
  %v743 = vld [vmem:[%s8 + $0x8] sm:$0xf]
  %v744 = vld [vmem:[%s8 + $0xc] sm:$0xf]
  %v745 = vld [vmem:[%s8 + $0x10] sm:$0xf]
  %v746 = vld [vmem:[%s8 + $0x14] sm:$0xf]
  %v747 = vld [vmem:[%s8 + $0x18] sm:$0xf]
  %v748 = vld [vmem:[%s8 + $0x1c] sm:$0xf]
  %v749 = vpack.c.bf16 %v740, %v739
  %v750 = vld [vmem:[%s9] sm:$0x1]
  %v752 = vlaneseq
  %v753 = vshrl.u32 %v752, 7
  %v754 = vsub.s32 0, %v753
  %v755 = vrot.slane %v750, %v754
  %v765 = vunpack.c.l.b16 %v741
  %v766 = vunpack.c.l.b16 %v742
  %v767 = vunpack.c.l.b16 %v743
  %v768 = vunpack.c.l.b16 %v744
  %v769 = vunpack.c.l.b16 %v745
  %v770 = vunpack.c.l.b16 %v746
  %v771 = vunpack.c.l.b16 %v747
  %v772 = vunpack.c.l.b16 %v748
  %v773 = vpack.c.b16 %v766, %v765
  %v774 = vpack.c.b16 %v768, %v767
  %v775 = vpack.c.b16 %v770, %v769
  %v776 = vpack.c.b16 %v772, %v771
  %vm781 = vcmask 523264
  %v783 = vsel %vm781, %v749, 0
  %785 = vmatprep.subr.bf16.mxu0 0
  %786 = vmatpush1.bf16.msra.mxu0 %v773
  %787 = vmatprep.subr.bf16.mxu0 0
  %788 = vmatpush1.bf16.msra.mxu0 %v774
  %789 = vmatprep.subr.bf16.mxu0 0
  %790 = vmatpush1.bf16.msra.mxu0 %v775
  %791 = vmatprep.subr.bf16.mxu0 0
  %792 = vmatpush1.bf16.msra.mxu0 %v776
  %793 = vmatprep.subr.bf16.mxu0 0
  %794 = vmatpush1.bf16.msra.mxu0 0
  %795 = vmatprep.subr.bf16.mxu0 0
  %796 = vmatpush1.bf16.msra.mxu0 0
  %797 = vmatprep.subr.bf16.mxu0 0
  %798 = vmatpush1.bf16.msra.mxu0 0
  %799 = vmatprep.subr.bf16.mxu0 0
  %800 = vmatpush1.bf16.msra.mxu0 0
  %801 = vmatprep.subr.bf16.mxu0 0
  %802 = vmatpush1.bf16.msra.mxu0 0
  %803 = vmatprep.subr.bf16.mxu0 0
  %804 = vmatpush1.bf16.msra.mxu0 0
  %805 = vmatprep.subr.bf16.mxu0 0
  %806 = vmatpush1.bf16.msra.mxu0 0
  %807 = vmatprep.subr.bf16.mxu0 0
  %808 = vmatpush1.bf16.msra.mxu0 0
  %809 = vmatprep.subr.bf16.mxu0 0
  %810 = vmatpush1.bf16.msra.mxu0 0
  %811 = vmatprep.subr.bf16.mxu0 0
  %812 = vmatpush1.bf16.msra.mxu0 0
  %813 = vmatprep.subr.bf16.mxu0 0
  %814 = vmatpush1.bf16.msra.mxu0 0
  %815 = vmatprep.subr.bf16.mxu0 0
  %816 = vmatpush1.bf16.msra.mxu0 0
  %817 = vmatprep.mubr.bf16.mxu0 0
  %818 = vmatmul.mubr.bf16.gmra.mrb[0].mxu0 %v783
  %v819 = vpop.f32.mrb[0].mxu0
  %v820 = vadd.f32 %v755, %v819
  %v821 = vpop.f32.mrb[0].mxu0
  %v822 = vpop.f32.mrb[0].mxu0
  %v823 = vadd.f32 %v755, %v822
  %v824 = vpop.f32.mrb[0].mxu0
  %825 = vdwg.mxu0
  %v826 = vld [vmem:[%s0] sm:$0xff]
  %v827 = vld [vmem:[%s0 + $0x8] sm:$0xff]
  %v828 = vld [vmem:[%s2] sm:$0xff]
  %v829 = vld [vmem:[%s2 + $0x8] sm:$0xff]
  %v830 = vld [vmem:[%s10] sm:$0x1]
  %v831 = vld [vmem:[%s10 + $0x1] sm:$0x1]
  %vm832 = vcmask 261120
  %v833 = vsel %vm832, %v828, 0.0
  %834 = vadd.xlane.f32.xlu0 %v833
  %v835 = vpop.xlane.xlu0 %834
  %v836 = vsel %vm832, %v829, 0.0
  %837 = vadd.xlane.f32.xlu0 %v836
  %v838 = vpop.xlane.xlu0 %837
  %v839 = vrcp.pop 32.0
  %v840 = vmul.f32 %v835, %v839
  %v841 = vmul.f32 %v838, %v839
  %v842 = vsub.f32 %v828, %v840
  %v843 = vsub.f32 %v829, %v841
  %v844 = vmul.f32 %v842, %v842
  %v845 = vmul.f32 %v843, %v843
  %v846 = vsel %vm832, %v844, 0.0
  %847 = vadd.xlane.f32.xlu0 %v846
  %v848 = vpop.xlane.xlu0 %847
  %v849 = vsel %vm832, %v845, 0.0
  %850 = vadd.xlane.f32.xlu0 %v849
  %v851 = vpop.xlane.xlu0 %850
  %v852 = vmul.f32 %v848, %v839
  %v853 = vmul.f32 %v851, %v839
  %v854 = vadd.f32 %v852, 1e-05
  %v855 = vadd.f32 %v853, 1e-05
  %v856 = vrsqrt.pop %v854
  %v857 = vrsqrt.pop %v855
  %v858 = vmul.f32 %v842, %v856
  %v859 = vmul.f32 %v843, %v857
  %v860 = vlaneseq
  %v861 = vshrl.u32 %v860, 7
  %v862 = vsub.s32 0, %v861
  %v863 = vrot.slane %v830, %v862
  %v864 = vmul.f32 %v858, %v863
  %v865 = vmul.f32 %v859, %v863
  %v866 = vlaneseq
  %v867 = vshrl.u32 %v866, 7
  %v868 = vsub.s32 0, %v867
  %v869 = vrot.slane %v831, %v868
  %v870 = vadd.f32 %v864, %v869
  %v871 = vadd.f32 %v865, %v869
  %v872 = vld [vmem:[%s1] sm:$0xff]
  %v873 = vld [vmem:[%s1 + $0x8] sm:$0xff]
  %v874 = vadd.f32 %v872, %v826
  %v875 = vadd.f32 %v873, %v827
  %v876 = vadd.f32 %v874, %v870
  %v877 = vadd.f32 %v875, %v871
  %v878 = vadd.f32 %v876, %v820
  %v879 = vadd.f32 %v877, %v823
  %v880 = vld [vmem:[%s11] sm:$0xf]
  %v881 = vld [vmem:[%s11 + $0x4] sm:$0xf]
  %v882 = vld [vmem:[%s11 + $0x8] sm:$0xf]
  %v883 = vld [vmem:[%s11 + $0xc] sm:$0xf]
  %v884 = vpack.c.bf16 %v879, %v878
  %v885 = vld [vmem:[%s12] sm:$0x1]
  %v887 = vlaneseq
  %v888 = vshrl.u32 %v887, 7
  %v889 = vsub.s32 0, %v888
  %v890 = vrot.slane %v885, %v889
  %v896 = vunpack.c.l.b16 %v880
  %v897 = vunpack.c.l.b16 %v881
  %v898 = vunpack.c.l.b16 %v882
  %v899 = vunpack.c.l.b16 %v883
  %v900 = vpack.c.b16 %v897, %v896
  %v901 = vpack.c.b16 %v899, %v898
  %v905 = vsel %vm832, %v884, 0
  %907 = vmatprep.subr.bf16.mxu0 0
  %908 = vmatpush1.bf16.msra.mxu0 %v900
  %909 = vmatprep.subr.bf16.mxu0 0
  %910 = vmatpush1.bf16.msra.mxu0 %v901
  %911 = vmatprep.subr.bf16.mxu0 0
  %912 = vmatpush1.bf16.msra.mxu0 0
  %913 = vmatprep.subr.bf16.mxu0 0
  %914 = vmatpush1.bf16.msra.mxu0 0
  %915 = vmatprep.subr.bf16.mxu0 0
  %916 = vmatpush1.bf16.msra.mxu0 0
  %917 = vmatprep.subr.bf16.mxu0 0
  %918 = vmatpush1.bf16.msra.mxu0 0
  %919 = vmatprep.subr.bf16.mxu0 0
  %920 = vmatpush1.bf16.msra.mxu0 0
  %921 = vmatprep.subr.bf16.mxu0 0
  %922 = vmatpush1.bf16.msra.mxu0 0
  %923 = vmatprep.subr.bf16.mxu0 0
  %924 = vmatpush1.bf16.msra.mxu0 0
  %925 = vmatprep.subr.bf16.mxu0 0
  %926 = vmatpush1.bf16.msra.mxu0 0
  %927 = vmatprep.subr.bf16.mxu0 0
  %928 = vmatpush1.bf16.msra.mxu0 0
  %929 = vmatprep.subr.bf16.mxu0 0
  %930 = vmatpush1.bf16.msra.mxu0 0
  %931 = vmatprep.subr.bf16.mxu0 0
  %932 = vmatpush1.bf16.msra.mxu0 0
  %933 = vmatprep.subr.bf16.mxu0 0
  %934 = vmatpush1.bf16.msra.mxu0 0
  %935 = vmatprep.subr.bf16.mxu0 0
  %936 = vmatpush1.bf16.msra.mxu0 0
  %937 = vmatprep.subr.bf16.mxu0 0
  %938 = vmatpush1.bf16.msra.mxu0 0
  %939 = vmatprep.mubr.bf16.mxu0 0
  %940 = vmatmul.mubr.bf16.gmra.mrb[0].mxu0 %v905
  %v941 = vpop.f32.mrb[0].mxu0
  %v942 = vadd.f32 %v890, %v941
  %v943 = vpop.f32.mrb[0].mxu0
  %v944 = vpop.f32.mrb[0].mxu0
  %v945 = vadd.f32 %v890, %v944
  %v946 = vpop.f32.mrb[0].mxu0
  %947 = vdwg.mxu0
  %v948 = vld [vmem:[%s13] sm:$0xf]
  %v949 = vld [vmem:[%s13 + $0x4] sm:$0xf]
  %v950 = vld [vmem:[%s13 + $0x8] sm:$0xf]
  %v951 = vld [vmem:[%s13 + $0xc] sm:$0xf]
  %v952 = vpack.c.bf16 %v827, %v826
  %v953 = vld [vmem:[%s14] sm:$0x1]
  %v955 = vlaneseq
  %v956 = vshrl.u32 %v955, 7
  %v957 = vsub.s32 0, %v956
  %v958 = vrot.slane %v953, %v957
  %v964 = vunpack.c.l.b16 %v948
  %v965 = vunpack.c.l.b16 %v949
  %v966 = vunpack.c.l.b16 %v950
  %v967 = vunpack.c.l.b16 %v951
  %v968 = vpack.c.b16 %v965, %v964
  %v969 = vpack.c.b16 %v967, %v966
  %v973 = vsel %vm832, %v952, 0
  %975 = vmatprep.subr.bf16.mxu0 0
  %976 = vmatpush1.bf16.msra.mxu0 %v968
  %977 = vmatprep.subr.bf16.mxu0 0
  %978 = vmatpush1.bf16.msra.mxu0 %v969
  %979 = vmatprep.subr.bf16.mxu0 0
  %980 = vmatpush1.bf16.msra.mxu0 0
  %981 = vmatprep.subr.bf16.mxu0 0
  %982 = vmatpush1.bf16.msra.mxu0 0
  %983 = vmatprep.subr.bf16.mxu0 0
  %984 = vmatpush1.bf16.msra.mxu0 0
  %985 = vmatprep.subr.bf16.mxu0 0
  %986 = vmatpush1.bf16.msra.mxu0 0
  %987 = vmatprep.subr.bf16.mxu0 0
  %988 = vmatpush1.bf16.msra.mxu0 0
  %989 = vmatprep.subr.bf16.mxu0 0
  %990 = vmatpush1.bf16.msra.mxu0 0
  %991 = vmatprep.subr.bf16.mxu0 0
  %992 = vmatpush1.bf16.msra.mxu0 0
  %993 = vmatprep.subr.bf16.mxu0 0
  %994 = vmatpush1.bf16.msra.mxu0 0
  %995 = vmatprep.subr.bf16.mxu0 0
  %996 = vmatpush1.bf16.msra.mxu0 0
  %997 = vmatprep.subr.bf16.mxu0 0
  %998 = vmatpush1.bf16.msra.mxu0 0
  %999 = vmatprep.subr.bf16.mxu0 0
  %1000 = vmatpush1.bf16.msra.mxu0 0
  %1001 = vmatprep.subr.bf16.mxu0 0
  %1002 = vmatpush1.bf16.msra.mxu0 0
  %1003 = vmatprep.subr.bf16.mxu0 0
  %1004 = vmatpush1.bf16.msra.mxu0 0
  %1005 = vmatprep.subr.bf16.mxu0 0
  %1006 = vmatpush1.bf16.msra.mxu0 0
  %1007 = vmatprep.mubr.bf16.mxu0 0
  %1008 = vmatmul.mubr.bf16.gmra.mrb[0].mxu0 %v973
  %v1009 = vpop.f32.mrb[0].mxu0
  %v1010 = vadd.f32 %v958, %v1009
  %v1011 = vpop.f32.mrb[0].mxu0
  %v1012 = vpop.f32.mrb[0].mxu0
  %v1013 = vadd.f32 %v958, %v1012
  %v1014 = vpop.f32.mrb[0].mxu0
  %1015 = vdwg.mxu0
  %vm1016 = vcmask 130048
  %v1017 = vsel %vm1016, %v942, -inf
  %1018 = vmax.xlane.f32.xlu0 %v1017
  %v1019 = vpop.xlane.xlu0 %1018
  %v1020 = vsel %vm1016, %v945, -inf
  %1021 = vmax.xlane.f32.xlu0 %v1020
  %v1022 = vpop.xlane.xlu0 %1021
  %v1023 = vsub.f32 %v942, %v1019
  %v1024 = vsub.f32 %v945, %v1022
  %v1025 = vmul.f32 %v1023, 1.442695
  %v1026 = vpow.pop %v1025
  %v1027 = vmul.f32 %v1024, 1.442695
  %v1028 = vpow.pop %v1027
  %v1029 = vsel %vm1016, %v1026, 0.0
  %1030 = vadd.xlane.f32.xlu0 %v1029
  %v1031 = vpop.xlane.xlu0 %1030
  %v1032 = vsel %vm1016, %v1028, 0.0
  %1033 = vadd.xlane.f32.xlu0 %v1032
  %v1034 = vpop.xlane.xlu0 %1033
  %v1035 = vrcp.pop %v1031
  %v1036 = vmul.f32 %v1026, %v1035
  %v1037 = vrcp.pop %v1034
  %v1038 = vmul.f32 %v1028, %v1037
  %vm1039 = vcmask 31744
  %v1040 = vsel %vm1039, %v1010, -inf
  %1041 = vmax.xlane.f32.xlu0 %v1040
  %v1042 = vpop.xlane.xlu0 %1041
  %v1043 = vsel %vm1039, %v1013, -inf
  %1044 = vmax.xlane.f32.xlu0 %v1043
  %v1045 = vpop.xlane.xlu0 %1044
  %v1046 = vsub.f32 %v1010, %v1042
  %v1047 = vsub.f32 %v1013, %v1045
  %v1048 = vmul.f32 %v1046, 1.442695
  %v1049 = vpow.pop %v1048
  %v1050 = vmul.f32 %v1047, 1.442695
  %v1051 = vpow.pop %v1050
  %v1052 = vsel %vm1039, %v1049, 0.0
  %1053 = vadd.xlane.f32.xlu0 %v1052
  %v1054 = vpop.xlane.xlu0 %1053
  %v1055 = vsel %vm1039, %v1051, 0.0
  %1056 = vadd.xlane.f32.xlu0 %v1055
  %v1057 = vpop.xlane.xlu0 %1056
  %v1058 = vrcp.pop %v1054
  %v1059 = vmul.f32 %v1049, %v1058
  %v1060 = vrcp.pop %v1057
  %v1061 = vmul.f32 %v1051, %v1060
  %v1062 = vlaneseq
  %v1063 = vand.u32 %v1062, 127
  %vm1064 = vcmp.eq.s32.totalorder %v1063, 1
  %v1065 = vsel %vm1064, %v1059, 0.0
  %v1066 = vsel %vm1064, %v1061, 0.0
  %v1067 = vsel %vm1039, %v1065, 0.0
  %1068 = vadd.xlane.f32.xlu0 %v1067
  %v1069 = vpop.xlane.xlu0 %1068
  %v1070 = vsel %vm1039, %v1066, 0.0
  %1071 = vadd.xlane.f32.xlu0 %v1070
  %v1072 = vpop.xlane.xlu0 %1071
  %v1073 = vld [vmem:[%s15] sm:$0xff]
  %v1074 = vld [vmem:[%s15 + $0x8] sm:$0xff]
  %v1075 = vmul.f32 %v1069, %v1073
  %v1076 = vmul.f32 %v1072, %v1074
  %v1077 = vlaneseq
  %v1078 = vshrl.u32 %v1077, 7
  %v1079 = vcvt.s32.f32 %v1078
  %vm1080 = vcmask 7168
  %v1081 = vsel %vm1080, %v1075, -inf
  %v1082 = vrot.slane %v1081, 4
  %v1083 = vmax.f32 %v1081, %v1082
  %v1084 = vrot.slane %v1083, 2
  %v1085 = vmax.f32 %v1083, %v1084
  %v1086 = vrot.slane %v1085, 1
  %v1087 = vmax.f32 %v1085, %v1086
  %vm1088 = vcmp.eq.f32.partialorder %v1075, %v1087
  %v1089 = vsel %vm1088, %v1079, 8.0
  %v1090 = vsel %vm1080, %v1089, inf
  %v1091 = vrot.slane %v1090, 4
  %v1092 = vmin.f32 %v1090, %v1091
  %v1093 = vrot.slane %v1092, 2
  %v1094 = vmin.f32 %v1092, %v1093
  %v1095 = vrot.slane %v1094, 1
  %v1096 = vmin.f32 %v1094, %v1095
  %v1097 = vsel %vm1080, %v1076, -inf
  %v1098 = vrot.slane %v1097, 4
  %v1099 = vmax.f32 %v1097, %v1098
  %v1100 = vrot.slane %v1099, 2
  %v1101 = vmax.f32 %v1099, %v1100
  %v1102 = vrot.slane %v1101, 1
  %v1103 = vmax.f32 %v1101, %v1102
  %vm1104 = vcmp.eq.f32.partialorder %v1076, %v1103
  %v1105 = vsel %vm1104, %v1079, 8.0
  %v1106 = vsel %vm1080, %v1105, inf
  %v1107 = vrot.slane %v1106, 4
  %v1108 = vmin.f32 %v1106, %v1107
  %v1109 = vrot.slane %v1108, 2
  %v1110 = vmin.f32 %v1108, %v1109
  %v1111 = vrot.slane %v1110, 1
  %v1112 = vmin.f32 %v1110, %v1111
  %vm1113 = vcmask 1040384
  %v1114 = vsel %vm1113, %v1087, %v1103
  %v1115 = vsel %vm1113, %v1096, %v1112
  %v1116 = vld [vmem:[%s16] sm:$0xff]
  %v1117 = vld [vmem:[%s16 + $0x8] sm:$0xff]
  %v1118 = vlog2.pop %v1031
  %v1119 = vmul.f32 %v1118, 0.6931472
  %v1120 = vlog2.pop %v1034
  %v1121 = vmul.f32 %v1120, 0.6931472
  %v1122 = vadd.f32 %v1119, %v1019
  %v1123 = vadd.f32 %v1121, %v1022
  %1124 = vset.pattern.permute.xlu0 0
  %1125 = vperm.xlu0 %1124, %v1116
  %v1126 = vpop.permute.xlu0 %1125
  %1127 = vset.pattern.permute.xlu0 0
  %1128 = vperm.xlu0 %1127, %v1117
  %v1129 = vpop.permute.xlu0 %1128
  %vm1130 = vcmp.eq.s32.totalorder %v1063, %v1126
  %vm1131 = vcmp.eq.s32.totalorder %v1063, %v1129
  %v1132 = vsel %vm1130, %v942, 0.0
  %v1133 = vsel %vm1131, %v945, 0.0
  %v1134 = vsel %vm1016, %v1132, 0.0
  %1135 = vadd.xlane.f32.xlu0 %v1134
  %v1136 = vpop.xlane.xlu0 %1135
  %v1137 = vsel %vm1016, %v1133, 0.0
  %1138 = vadd.xlane.f32.xlu0 %v1137
  %v1139 = vpop.xlane.xlu0 %1138
  %vm1140 = vcmp.ne.s32.totalorder %v1116, 4294967295
  %vm1141 = vcmp.ne.s32.totalorder %v1117, 4294967295
  %v1142 = vsel %vm1140, 1, 0
  %v1143 = vsel %vm1141, 1, 0
  %v1144 = vcvt.s32.f32 %v1142
  %v1145 = vcvt.s32.f32 %v1143
  %v1146 = vsub.f32 %v1122, %v1136
  %v1147 = vsub.f32 %v1123, %v1139
  %v1148 = vmul.f32 %v1146, %v1144
  %v1149 = vmul.f32 %v1147, %v1145
  %v1150 = vsel %vm1080, %v1148, 0.0
  %v1151 = vsel %vm1080, %v1149, 0.0
  %v1152 = vadd.f32 %v1150, %v1151
  %v1153 = vrot.slane %v1152, 4
  %v1154 = vadd.f32 %v1152, %v1153
  %v1155 = vrot.slane %v1154, 2
  %v1156 = vadd.f32 %v1154, %v1155
  %v1157 = vrot.slane %v1156, 1
  %v1158 = vadd.f32 %v1156, %v1157
  %v1159 = vsel %vm1080, %v1144, 0.0
  %v1160 = vsel %vm1080, %v1145, 0.0
  %v1161 = vadd.f32 %v1159, %v1160
  %v1162 = vrot.slane %v1161, 4
  %v1163 = vadd.f32 %v1161, %v1162
  %v1164 = vrot.slane %v1163, 2
  %v1165 = vadd.f32 %v1163, %v1164
  %v1166 = vrot.slane %v1165, 1
  %v1167 = vadd.f32 %v1165, %v1166
  %v1168 = vmax.f32 %v1167, 1.0
  %v1169 = vrcp.pop %v1168
  %v1170 = vmul.f32 %v1158, %v1169
  %v1171 = vmul.f32 %v1170, 0.5
  %v1172 = vld [vmem:[%s17] sm:$0xff]
  %v1173 = vld [vmem:[%s17 + $0x8] sm:$0xff]
  %v1174 = vlog2.pop %v1054
  %v1175 = vmul.f32 %v1174, 0.6931472
  %v1176 = vlog2.pop %v1057
  %v1177 = vmul.f32 %v1176, 0.6931472
  %v1178 = vadd.f32 %v1175, %v1042
  %v1179 = vadd.f32 %v1177, %v1045
  %1180 = vset.pattern.permute.xlu0 0
  %1181 = vperm.xlu0 %1180, %v1172
  %v1182 = vpop.permute.xlu0 %1181
  %1183 = vset.pattern.permute.xlu0 0
  %1184 = vperm.xlu0 %1183, %v1173
  %v1185 = vpop.permute.xlu0 %1184
  %vm1186 = vcmp.eq.s32.totalorder %v1063, %v1182
  %vm1187 = vcmp.eq.s32.totalorder %v1063, %v1185
  %v1188 = vsel %vm1186, %v1010, 0.0
  %v1189 = vsel %vm1187, %v1013, 0.0
  %v1190 = vsel %vm1039, %v1188, 0.0
  %1191 = vadd.xlane.f32.xlu0 %v1190
  %v1192 = vpop.xlane.xlu0 %1191
  %v1193 = vsel %vm1039, %v1189, 0.0
  %1194 = vadd.xlane.f32.xlu0 %v1193
  %v1195 = vpop.xlane.xlu0 %1194
  %vm1196 = vcmp.ne.s32.totalorder %v1172, 4294967295
  %vm1197 = vcmp.ne.s32.totalorder %v1173, 4294967295
  %v1198 = vsel %vm1196, 1, 0
  %v1199 = vsel %vm1197, 1, 0
  %v1200 = vcvt.s32.f32 %v1198
  %v1201 = vcvt.s32.f32 %v1199
  %v1202 = vsub.f32 %v1178, %v1192
  %v1203 = vsub.f32 %v1179, %v1195
  %v1204 = vmul.f32 %v1202, %v1200
  %v1205 = vmul.f32 %v1203, %v1201
  %v1206 = vsel %vm1080, %v1204, 0.0
  %v1207 = vsel %vm1080, %v1205, 0.0
  %v1208 = vadd.f32 %v1206, %v1207
  %v1209 = vrot.slane %v1208, 4
  %v1210 = vadd.f32 %v1208, %v1209
  %v1211 = vrot.slane %v1210, 2
  %v1212 = vadd.f32 %v1210, %v1211
  %v1213 = vrot.slane %v1212, 1
  %v1214 = vadd.f32 %v1212, %v1213
  %v1215 = vsel %vm1080, %v1200, 0.0
  %v1216 = vsel %vm1080, %v1201, 0.0
  %v1217 = vadd.f32 %v1215, %v1216
  %v1218 = vrot.slane %v1217, 4
  %v1219 = vadd.f32 %v1217, %v1218
  %v1220 = vrot.slane %v1219, 2
  %v1221 = vadd.f32 %v1219, %v1220
  %v1222 = vrot.slane %v1221, 1
  %v1223 = vadd.f32 %v1221, %v1222
  %v1224 = vmax.f32 %v1223, 1.0
  %v1225 = vrcp.pop %v1224
  %v1226 = vmul.f32 %v1214, %v1225
  %v1227 = vmul.f32 %v1226, 0.5
  %v1228 = vadd.f32 %v1171, %v1227
  %vm1229 = vcmask 1041408
  %v1230 = vsel %vm1229, %v1114, 0.0
  %v1231 = vsel %vm1229, %v1115, 0.0
  %v1232 = vsel %vm1113, %v1228, 0.0
  %1235 = vrot.lane.b32.xlu0 %v1010, 16
  %v1236 = vpop.permute.xlu0 %1235
  %1237 = vrot.lane.b32.xlu0 %v1013, 16
  %v1238 = vpop.permute.xlu0 %1237
  %1243 = vrot.lane.b32.xlu0 %v1036, 32
  %v1244 = vpop.permute.xlu0 %1243
  %1245 = vrot.lane.b32.xlu0 %v1038, 32
  %v1246 = vpop.permute.xlu0 %1245
  %1251 = vrot.lane.b32.xlu0 %v1059, 48
  %v1252 = vpop.permute.xlu0 %1251
  %1253 = vrot.lane.b32.xlu0 %v1061, 48
  %v1254 = vpop.permute.xlu0 %1253
  %1259 = vrot.lane.b32.xlu0 %v1230, 64
  %v1260 = vpop.permute.xlu0 %1259
  %1261 = vrot.lane.b32.xlu0 0.0, 64
  %v1262 = vpop.permute.xlu0 %1261
  %1266 = vrot.lane.b32.xlu0 %v1231, 65
  %v1267 = vpop.permute.xlu0 %1266
  %1268 = vrot.lane.b32.xlu0 0.0, 65
  %v1269 = vpop.permute.xlu0 %1268
  %1273 = vrot.lane.b32.xlu0 %v1232, 66
  %v1274 = vpop.permute.xlu0 %1273
  %1275 = vrot.lane.b32.xlu0 0.0, 66
  %v1276 = vpop.permute.xlu0 %1275
  %v1279 = vsel %vm1016, %v942, %v1236
  %v1280 = vsel %vm1016, %v945, %v1238
  %vm1281 = vcmask 162816
  %v1282 = vsel %vm1281, %v1279, 0.0
  %v1283 = vsel %vm1281, %v1280, 0.0
  %v1284 = vsel %vm832, %v1282, %v1244
  %v1285 = vsel %vm832, %v1283, %v1246
  %vm1286 = vcmask 392192
  %v1287 = vsel %vm1286, %v1284, %v1252
  %v1288 = vsel %vm1286, %v1285, %v1254
  %vm1289 = vcmask 424960
  %v1290 = vsel %vm1289, %v1287, 0.0
  %v1291 = vsel %vm1289, %v1288, 0.0
  %v1292 = vsel %vm781, %v1290, %v1260
  %v1293 = vsel %vm781, %v1291, %v1262
  %vm1294 = vcmask 531456
  %v1295 = vsel %vm1294, %v1292, %v1267
  %v1296 = vsel %vm1294, %v1293, %v1269
  %vm1297 = vcmask 539648
  %v1298 = vsel %vm1297, %v1295, %v1274
  %v1299 = vsel %vm1297, %v1296, %v1276
  %vm1300 = vcmask 547840
  %v1301 = vsel %vm1300, %v1298, 0.0
  %v1302 = vsel %vm1300, %v1299, 0.0
  %1303 = vst [vmem:[%s18] sm:$0xff] %v1301
  %1304 = vst [vmem:[%s18 + $0x8] sm:$0xff] %v1302
  // Predicated region
  $region74: #{mectec_forward.5} parent=0 // pred_check
    _
  $region75: #{mectec_forward.5} parent=0 // pred_check_branch
    %1306 = sbr.rel (0) target = $region77
  $region76: #{mectec_forward.5} parent=0 // pred_region
    _
  $region77: #{mectec_forward.5} parent=0 // pred_fallthru
    _
  // Predicated region
  $region78: #{mectec_forward.5} parent=0 // pred_check
    _
  $region79: #{mectec_forward.5} parent=0 // pred_check_branch
    %1308 = sbr.rel (0) target = $region81
  $region80: #{mectec_forward.5} parent=0 // pred_region
    _
  $region81: #{mectec_forward.5} parent=0 // pred_fallthru
    _

</llo_original>
